<compile_context>
chip_gen: v7x
topology: tpu7x:2x2x1
jax: 0.10.0
libtpu: 0.0.40
codegen_flags: <defaults>
</compile_context>

<pallas_src>
import functools

import jax
import jax.numpy as jnp
from jax.experimental import pallas as pl
from jax.experimental.pallas import tpu as pltpu

LANE = 128  # lane width; real ResNet channel counts are multiples of this


def _round_up(x, m):
    return (x + m - 1) // m * m


def _pick_tile(H, W, p, max_rows=2048):
    """Pick (tile_h, padded_H).  Prefer a divisor of H near the row budget;
    otherwise pad H up to a multiple of the chosen tile (the kernel zero-masks
    the padded rows and the wrapper slices them off)."""
    budget = max(8, max_rows // max(W, 1))
    if H <= budget:
        return H, H
    best = 1
    for t in range(1, budget + 1):
        if H % t == 0:
            best = t
    if 2 * best >= budget:
        return best, H
    t = budget
    # Keep the last partial tile at least p rows tall so no interior tile's
    # conv2 halo reaches into the zero-padded alignment rows.
    while t > 8 and 0 < H % t < p:
        t -= 1
    return t, _round_up(H, t)


def _identity_block_kernel(x_hbm, w1_ref, b1_ref, w2_ref, b2_ref, w3_ref,
                           b3_ref, o_ref, xbuf, sem, t1w_ref, *,
                           p, tile_h, pad_e):
    """One (image, row-tile) per grid step.

    x_hbm  : (N, Hp + 2p, W, Cp) in HBM (pl.ANY) - halo windows DMA'd manually
    w1_ref : (Cp, F1p)             conv1 weight, BN1 scale folded, bf16
    w2_ref : (K, K*F1p, F2p)       conv2 weight, BN2 scale folded, bf16,
                                   rows ordered (dj, in_channel) per row offset
    w3_ref : (F2p, Cp)             conv3 weight, BN3 scale folded, bf16
    b*_ref : (1, F)                folded BN biases, f32
    o_ref  : (tile_h, W, C)        output tile (only the real C channels)
    xbuf   : (2, tile_h+2p, W, Cp) VMEM double buffer for the x halo window
    sem    : DMA semaphores, shape (2,)
    t1w_ref: (tile_h+2p, W, K*F1p) W-expanded conv1 activations (im2col), bf16
    """
    K = w2_ref.shape[0]
    th2p = tile_h + 2 * p
    W = o_ref.shape[1]
    C = o_ref.shape[2]
    Cp = xbuf.shape[-1]
    F1p = w1_ref.shape[-1]

    n = pl.program_id(0)
    h = pl.program_id(1)
    n_ht = pl.num_programs(1)
    slot = h & 1

    # ---- manual double-buffered DMA of the (tile_h + 2p)-row halo window ----
    def fetch(hh, s):
        pltpu.make_async_copy(x_hbm.at[n, pl.ds(hh * tile_h, th2p)],
                              xbuf.at[s], sem.at[s]).start()

    @pl.when(h == 0)
    def _():
        fetch(0, 0)                      # prime the pipeline for this image

    pltpu.make_async_copy(x_hbm.at[n, pl.ds(h * tile_h, th2p)],
                          xbuf.at[slot], sem.at[slot]).wait()

    @pl.when(h + 1 < n_ht)
    def _():
        fetch(h + 1, 1 - slot)           # prefetch next row-tile of this image

    x_halo = xbuf[slot]                                    # (th2p, W, Cp) bf16

    # ---- conv1 (1x1) + bn1 + relu: one MXU matmul over the halo window ------
    t1 = jnp.dot(x_halo.reshape(th2p * W, Cp), w1_ref[...],
                 preferred_element_type=jnp.float32)
    t1 = jnp.maximum(t1 + b1_ref[...], 0.0)
    t1 = t1.astype(jnp.bfloat16).reshape(th2p, W, F1p)

    # ---- scatter K W-shifted copies of t1 into the im2col scratch (bf16) ----
    # t1w[r, w, dj*F1p + c] = t1[r, w + dj - p, c]   (0 outside the image in W)
    for dj in range(K):
        lo = max(0, p - dj)
        hi = min(W, W + p - dj)
        blk = slice(dj * F1p, (dj + 1) * F1p)
        t1w_ref[:, lo:hi, blk] = t1[:, lo + dj - p:hi + dj - p, :]
        if lo > 0:
            t1w_ref[:, :lo, blk] = jnp.zeros((th2p, lo, F1p), jnp.bfloat16)
        if hi < W:
            t1w_ref[:, hi:, blk] = jnp.zeros((th2p, W - hi, F1p), jnp.bfloat16)

    # ---- zero the halo rows that fall outside the image (edge tiles only) ---
    if p > 0:
        @pl.when(h == 0)
        def _():
            t1w_ref[:p, :, :] = jnp.zeros((p, W, K * F1p), jnp.bfloat16)
    if p + pad_e > 0:
        @pl.when(h == n_ht - 1)
        def _():
            t1w_ref[tile_h + p - pad_e:, :, :] = jnp.zeros(
                (p + pad_e, W, K * F1p), jnp.bfloat16)

    # ---- conv2 (KxK "same") + bn2 + relu: K deep (K*F1p) matmuls ------------
    acc = jnp.dot(t1w_ref[0:tile_h, :, :].reshape(tile_h * W, K * F1p),
                  w2_ref[0], preferred_element_type=jnp.float32)
    for di in range(1, K):
        acc += jnp.dot(
            t1w_ref[di:di + tile_h, :, :].reshape(tile_h * W, K * F1p),
            w2_ref[di], preferred_element_type=jnp.float32)
    t2 = jnp.maximum(acc + b2_ref[...], 0.0).astype(jnp.bfloat16)

    # ---- conv3 (1x1) + bn3 ---------------------------------------------------
    t3 = jnp.dot(t2, w3_ref[...], preferred_element_type=jnp.float32)
    t3 = (t3 + b3_ref[...]).reshape(tile_h, W, Cp)

    # ---- residual add + relu, store only the real C channels ----------------
    shortcut = x_halo[p:p + tile_h, :, :C].astype(jnp.float32)
    o_ref[...] = jnp.maximum(t3[:, :, :C] + shortcut, 0.0).astype(o_ref.dtype)


def prepare_params(w1, s1, b1, w2, s2, b2, w3, s3, b3):
    """One-time host transform: fold BN scales into the conv weights, pad all
    channel dims to a multiple of 128 (lane width), reorder the KxK weight to
    (row_offset, kw*F1p + c, F2p) for the one-axis im2col, cast to bf16."""
    C, F1 = w1.shape
    K = w2.shape[0]
    F2 = w2.shape[3]
    F3 = w3.shape[1]
    assert F3 == C, "filters3 must equal in_channels for the residual add"
    Cp, F1p, F2p = _round_up(C, LANE), _round_up(F1, LANE), _round_up(F2, LANE)

    def pad_axis(a, axis, n):
        pad = [(0, 0)] * a.ndim
        pad[axis] = (0, n - a.shape[axis])
        return jnp.pad(a, pad)

    w1f = pad_axis(pad_axis(w1 * s1, 1, F1p), 0, Cp).astype(jnp.bfloat16)

    w2f = w2 * s2.reshape(1, 1, 1, F2)                      # fold bn2 scale
    w2f = pad_axis(pad_axis(w2f, 3, F2p), 2, F1p)           # (K, K, F1p, F2p)
    w2f = w2f.reshape(K, K * F1p, F2p).astype(jnp.bfloat16)  # rows = (dj, c)

    w3f = pad_axis(pad_axis(w3 * s3, 1, Cp), 0, F2p).astype(jnp.bfloat16)

    b1f = pad_axis(b1, 1, F1p)
    b2f = pad_axis(b2, 1, F2p)
    b3f = pad_axis(b3, 1, Cp)
    return w1f, b1f, w2f, b2f, w3f, b3f


def identity_block(x, w1f, b1f, w2f, b2f, w3f, b3f, *, kernel_size,
                   io_dtype=jnp.bfloat16):
    """x: (N, H, W, C) f32.  Weights/biases from prepare_params.
    Returns (N, H, W, C) in io_dtype (bf16 HBM I/O by default)."""
    N, H, W, C = x.shape
    K = kernel_size
    # TODO(synk): even kernel_size with padding=(K-1)//2 changes the output
    # shape in PyTorch too (residual add would fail); only odd K supported.
    assert K % 2 == 1, "kernel_size must be odd"
    p = (K - 1) // 2
    Cp, F1p = w1f.shape
    Kw, KF1p, F2p = w2f.shape
    assert Kw == K and KF1p == K * F1p
    assert w3f.shape == (F2p, Cp)

    tile_h, Hp = _pick_tile(H, W, p)
    pad_e = Hp - H
    n_ht = Hp // tile_h
    th2p = tile_h + 2 * p

    io_bytes = jnp.dtype(io_dtype).itemsize
    # Host-side: cast to the HBM I/O dtype, zero-pad H by the conv2 halo (plus
    # any tile-alignment rows) and the channel dim up to the lane width.
    xp = jnp.pad(x.astype(io_dtype),
                 ((0, 0), (p, pad_e + p), (0, 0), (0, Cp - C)))

    kern = functools.partial(_identity_block_kernel, p=p, tile_h=tile_h,
                             pad_e=pad_e)

    # VMEM budget from the actual buffers (scratch + double-buffered output +
    # weights + live intermediates), with headroom; never request > 56 MiB so
    # it also fits v7x's 64 MiB physical VMEM.
    scratch_b = 2 * th2p * W * Cp * io_bytes + th2p * W * K * F1p * 2
    out_b = 2 * tile_h * W * C * io_bytes
    w_b = 2 * ((w1f.size + w2f.size + w3f.size) * 2
               + (b1f.size + b2f.size + b3f.size) * 4)
    val_b = (th2p * W * F1p + 2 * tile_h * W * F2p + tile_h * W * Cp) * 4
    vmem_limit = int(min(56 * 2 ** 20,
                         max(32 * 2 ** 20,
                             scratch_b + out_b + w_b + val_b + 8 * 2 ** 20)))

    flops = 2 * N * Hp * W * (Cp * F1p + K * K * F1p * F2p + F2p * Cp)
    bytes_accessed = int(xp.size * io_bytes * (tile_h + 2 * p) / max(tile_h, 1)
                         + N * Hp * W * C * io_bytes
                         + (w1f.size + w2f.size + w3f.size) * 2
                         + (b1f.size + b2f.size + b3f.size) * 4)

    def build(single_buffer_weights):
        def wspec(shape):
            if single_buffer_weights:
                return pl.BlockSpec(shape, lambda n, h: (0,) * len(shape),
                                    pipeline_mode=pl.Buffered(1))
            return pl.BlockSpec(shape, lambda n, h: (0,) * len(shape))

        return pl.pallas_call(
            kern,
            out_shape=jax.ShapeDtypeStruct((N, Hp, W, C), io_dtype),
            grid_spec=pltpu.PrefetchScalarGridSpec(
                num_scalar_prefetch=0,
                grid=(N, n_ht),
                in_specs=[
                    pl.BlockSpec(memory_space=pl.ANY),          # x: manual DMA
                    wspec((Cp, F1p)), wspec((1, F1p)),          # conv1 / bn1
                    wspec((K, K * F1p, F2p)), wspec((1, F2p)),  # conv2 / bn2
                    wspec((F2p, Cp)), wspec((1, Cp)),           # conv3 / bn3
                ],
                out_specs=pl.BlockSpec((None, tile_h, W, C),
                                       lambda n, h: (n, h, 0, 0)),
                scratch_shapes=[
                    pltpu.VMEM((2, th2p, W, Cp), io_dtype),     # x halo windows
                    pltpu.SemaphoreType.DMA((2,)),
                    pltpu.VMEM((th2p, W, K * F1p), jnp.bfloat16),  # im2col
                ]),
            compiler_params=pltpu.CompilerParams(
                dimension_semantics=("parallel", "arbitrary"),
                vmem_limit_bytes=vmem_limit),
            cost_estimate=pl.CostEstimate(flops=flops, transcendentals=0,
                                          bytes_accessed=bytes_accessed),
        )

    try:
        out = build(True)(xp, w1f, b1f, w2f, b2f, w3f, b3f)
    except Exception:
        # pl.Buffered(1) (single-buffered resident weights) not accepted by
        # this JAX version -> fall back to default double-buffered weights.
        out = build(False)(xp, w1f, b1f, w2f, b2f, w3f, b3f)

    if pad_e:
        out = out[:, :H]
    return out


def _fold_bn(gamma, beta, mean, var, eps=1e-5):
    scale = gamma / jnp.sqrt(var + eps)
    bias = beta - mean * scale
    return scale.reshape(1, -1), bias.reshape(1, -1)


def _reference(x, w1, s1, b1, w2, s2, b2, w3, s3, b3, K):
    """Pure-JAX NHWC f32 reference for verification."""
    def conv1x1(t, w):
        return jnp.einsum('nhwc,cf->nhwf', t, w)

    p = (K - 1) // 2
    t = jnp.maximum(conv1x1(x, w1) * s1 + b1, 0.0)
    t = jax.lax.conv_general_dilated(
        t, w2, window_strides=(1, 1), padding=[(p, p), (p, p)],
        dimension_numbers=('NHWC', 'HWIO', 'NHWC'))
    t = jnp.maximum(t * s2 + b2, 0.0)
    t = conv1x1(t, w3) * s3 + b3
    return jnp.maximum(t + x, 0.0)


if __name__ == "__main__":
    key = jax.random.PRNGKey(0)
    N, H, W, C = 2, 16, 16, 4
    F1, F2, F3 = 8, 8, C          # filters=(8, 8, 4); filters3 == in_channels
    K = 3

    keys = jax.random.split(key, 16)
    x = jax.random.normal(keys[0], (N, H, W, C), jnp.float32)

    # Conv weights (matmul / HWIO layouts), deterministic init.
    w1 = jax.random.normal(keys[1], (C, F1), jnp.float32) * 0.1
    w2 = jax.random.normal(keys[2], (K, K, F1, F2), jnp.float32) * 0.1
    w3 = jax.random.normal(keys[3], (F2, F3), jnp.float32) * 0.1

    # BatchNorm (eval mode) parameters, deterministic and non-trivial.
    def bn_params(kg, kb, km, kv, f):
        gamma = 1.0 + 0.1 * jax.random.normal(kg, (f,), jnp.float32)
        beta = 0.1 * jax.random.normal(kb, (f,), jnp.float32)
        mean = 0.1 * jax.random.normal(km, (f,), jnp.float32)
        var = 1.0 + 0.1 * jax.random.uniform(kv, (f,), jnp.float32)
        return _fold_bn(gamma, beta, mean, var)

    s1, b1 = bn_params(keys[4], keys[5], keys[6], keys[7], F1)
    s2, b2 = bn_params(keys[8], keys[9], keys[10], keys[11], F2)
    s3, b3 = bn_params(keys[12], keys[13], keys[14], keys[15], F3)

    # One-time host-side prep (fold BN scales, pad channels, bf16, im2col w2).
    w1f, b1f, w2f, b2f, w3f, b3f = prepare_params(
        w1, s1, b1, w2, s2, b2, w3, s3, b3)

    out = identity_block(x, w1f, b1f, w2f, b2f, w3f, b3f, kernel_size=K)
    out = jax.block_until_ready(out)

    ref = _reference(x, w1, s1, b1, w2, s2, b2, w3, s3, b3, K)
    assert out.shape == (N, H, W, C)
    out_f32 = out.astype(jnp.float32)
    max_err = float(jnp.max(jnp.abs(out_f32 - ref)))
    # bf16 HBM I/O + bf16 matmul operands (f32 accumulation) -> ~4e-2 tolerance.
    assert jnp.allclose(out_f32, ref, atol=4e-2, rtol=4e-2), (
        f"mismatch vs reference (max abs err {max_err})")

    print("KERNEL_OK")
</pallas_src>

<mosaic_0001>
module attributes {stable_mosaic.version = 11 : i64} {
  func.func @_identity_block_kernel(%arg0: i32, %arg1: i32, %arg2: memref<2x18x16x128xbf16, #tpu.memory_space<any>>, %arg3: memref<128x128xbf16, #tpu.memory_space<vmem>>, %arg4: memref<1x128xf32, #tpu.memory_space<vmem>>, %arg5: memref<3x384x128xbf16, #tpu.memory_space<vmem>>, %arg6: memref<1x128xf32, #tpu.memory_space<vmem>>, %arg7: memref<128x128xbf16, #tpu.memory_space<vmem>>, %arg8: memref<1x128xf32, #tpu.memory_space<vmem>>, %arg9: memref<1x16x16x4xbf16, #tpu.memory_space<vmem>>, %arg10: memref<2x18x16x128xbf16, #tpu.memory_space<vmem>>, %arg11: memref<2x!tpu.dma_semaphore, #tpu.memory_space<semaphore_mem>>, %arg12: memref<18x16x384xbf16, #tpu.memory_space<vmem>>) attributes {dimension_semantics = [#tpu.dimension_semantics<parallel>, #tpu.dimension_semantics<arbitrary>], iteration_bounds = array<i64: 2, 1>, scalar_prefetch = 0 : i64, scratch_operands = 3 : i64, tpu.core_type = #tpu.core_type<tc>, window_params = [{}, {pipeline_mode = #tpu.pipeline_mode<synchronous>, transform_indices = @transform_1, window_bounds = array<i64: 128, 128>}, {pipeline_mode = #tpu.pipeline_mode<synchronous>, transform_indices = @transform_2, window_bounds = array<i64: 1, 128>}, {pipeline_mode = #tpu.pipeline_mode<synchronous>, transform_indices = @transform_3, window_bounds = array<i64: 3, 384, 128>}, {pipeline_mode = #tpu.pipeline_mode<synchronous>, transform_indices = @transform_4, window_bounds = array<i64: 1, 128>}, {pipeline_mode = #tpu.pipeline_mode<synchronous>, transform_indices = @transform_5, window_bounds = array<i64: 128, 128>}, {pipeline_mode = #tpu.pipeline_mode<synchronous>, transform_indices = @transform_6, window_bounds = array<i64: 1, 128>}, {transform_indices = @transform_7, window_bounds = array<i64: 1, 16, 16, 4>}]} {
    %c1_i32 = arith.constant 1 : i32
    %0 = arith.andi %arg1, %c1_i32 : i32
    %c0_i32 = arith.constant 0 : i32
    %1 = arith.cmpi eq, %arg1, %c0_i32 : i32
    %2 = arith.extui %1 : i1 to i32
    %c0_i32_0 = arith.constant 0 : i32
    %3 = arith.cmpi ne, %2, %c0_i32_0 : i32
    scf.if %3 {
      %c0_i32_66 = arith.constant 0 : i32
      %c0_i32_67 = arith.constant 0 : i32
      %c0_i32_68 = arith.constant 0 : i32
      %c0_i32_69 = arith.constant 0 : i32
      %c0_i32_70 = arith.constant 0 : i32
      %82 = tpu.memref_slice %arg2[%arg0, %c0_i32_68, %c0_i32_69, %c0_i32_70] : memref<2x18x16x128xbf16, #tpu.memory_space<any>> -> memref<1x18x16x128xbf16, #tpu.memory_space<any>>
      %83 = tpu.memref_squeeze %82 : memref<1x18x16x128xbf16, #tpu.memory_space<any>> -> memref<18x16x128xbf16, #tpu.memory_space<any>>
      %c0_i32_71 = arith.constant 0 : i32
      %c0_i32_72 = arith.constant 0 : i32
      %c0_i32_73 = arith.constant 0 : i32
      %84 = tpu.memref_slice %arg10[%c0_i32_66, %c0_i32_71, %c0_i32_72, %c0_i32_73] : memref<2x18x16x128xbf16, #tpu.memory_space<vmem>> -> memref<1x18x16x128xbf16, #tpu.memory_space<vmem>>
      %85 = tpu.memref_squeeze %84 : memref<1x18x16x128xbf16, #tpu.memory_space<vmem>> -> memref<18x16x128xbf16, #tpu.memory_space<vmem>>
      %86 = tpu.memref_slice %arg11[%c0_i32_67] : memref<2x!tpu.dma_semaphore, #tpu.memory_space<semaphore_mem>> -> memref<1x!tpu.dma_semaphore, #tpu.memory_space<semaphore_mem>>
      %87 = tpu.memref_squeeze %86 : memref<1x!tpu.dma_semaphore, #tpu.memory_space<semaphore_mem>> -> memref<!tpu.dma_semaphore, #tpu.memory_space<semaphore_mem>>
      tpu.enqueue_dma source(%83 : memref<18x16x128xbf16, #tpu.memory_space<any>>) target(%85 : memref<18x16x128xbf16, #tpu.memory_space<vmem>>) target_semaphore(%87 : memref<!tpu.dma_semaphore, #tpu.memory_space<semaphore_mem>>)
    } else {
    }
    %c16_i32 = arith.constant 16 : i32
    %4 = arith.muli %arg1, %c16_i32 : i32
    %c0_i32_1 = arith.constant 0 : i32
    %c0_i32_2 = arith.constant 0 : i32
    %5 = tpu.memref_slice %arg2[%arg0, %4, %c0_i32_1, %c0_i32_2] : memref<2x18x16x128xbf16, #tpu.memory_space<any>> -> memref<1x18x16x128xbf16, #tpu.memory_space<any>>
    %6 = tpu.memref_squeeze %5 : memref<1x18x16x128xbf16, #tpu.memory_space<any>> -> memref<18x16x128xbf16, #tpu.memory_space<any>>
    %c0_i32_3 = arith.constant 0 : i32
    %c0_i32_4 = arith.constant 0 : i32
    %c0_i32_5 = arith.constant 0 : i32
    %7 = tpu.memref_slice %arg10[%0, %c0_i32_3, %c0_i32_4, %c0_i32_5] : memref<2x18x16x128xbf16, #tpu.memory_space<vmem>> -> memref<1x18x16x128xbf16, #tpu.memory_space<vmem>>
    %8 = tpu.memref_squeeze %7 : memref<1x18x16x128xbf16, #tpu.memory_space<vmem>> -> memref<18x16x128xbf16, #tpu.memory_space<vmem>>
    %9 = tpu.memref_slice %arg11[%0] : memref<2x!tpu.dma_semaphore, #tpu.memory_space<semaphore_mem>> -> memref<1x!tpu.dma_semaphore, #tpu.memory_space<semaphore_mem>>
    %10 = tpu.memref_squeeze %9 : memref<1x!tpu.dma_semaphore, #tpu.memory_space<semaphore_mem>> -> memref<!tpu.dma_semaphore, #tpu.memory_space<semaphore_mem>>
    tpu.wait_dma2 semaphore(%10 : memref<!tpu.dma_semaphore, #tpu.memory_space<semaphore_mem>>) src(%6 : memref<18x16x128xbf16, #tpu.memory_space<any>>) dst(%8 : memref<18x16x128xbf16, #tpu.memory_space<vmem>>)
    %c1_i32_6 = arith.constant 1 : i32
    %11 = arith.addi %arg1, %c1_i32_6 : i32
    %c1_i32_7 = arith.constant 1 : i32
    %12 = arith.cmpi slt, %11, %c1_i32_7 : i32
    %13 = arith.extui %12 : i1 to i32
    %c0_i32_8 = arith.constant 0 : i32
    %14 = arith.cmpi ne, %13, %c0_i32_8 : i32
    scf.if %14 {
      %c1_i32_66 = arith.constant 1 : i32
      %82 = arith.addi %arg1, %c1_i32_66 : i32
      %c1_i32_67 = arith.constant 1 : i32
      %83 = arith.subi %c1_i32_67, %0 : i32
      %c16_i32_68 = arith.constant 16 : i32
      %84 = arith.muli %82, %c16_i32_68 : i32
      %c0_i32_69 = arith.constant 0 : i32
      %c0_i32_70 = arith.constant 0 : i32
      %85 = tpu.memref_slice %arg2[%arg0, %84, %c0_i32_69, %c0_i32_70] : memref<2x18x16x128xbf16, #tpu.memory_space<any>> -> memref<1x18x16x128xbf16, #tpu.memory_space<any>>
      %86 = tpu.memref_squeeze %85 : memref<1x18x16x128xbf16, #tpu.memory_space<any>> -> memref<18x16x128xbf16, #tpu.memory_space<any>>
      %c0_i32_71 = arith.constant 0 : i32
      %c0_i32_72 = arith.constant 0 : i32
      %c0_i32_73 = arith.constant 0 : i32
      %87 = tpu.memref_slice %arg10[%83, %c0_i32_71, %c0_i32_72, %c0_i32_73] : memref<2x18x16x128xbf16, #tpu.memory_space<vmem>> -> memref<1x18x16x128xbf16, #tpu.memory_space<vmem>>
      %88 = tpu.memref_squeeze %87 : memref<1x18x16x128xbf16, #tpu.memory_space<vmem>> -> memref<18x16x128xbf16, #tpu.memory_space<vmem>>
      %89 = tpu.memref_slice %arg11[%83] : memref<2x!tpu.dma_semaphore, #tpu.memory_space<semaphore_mem>> -> memref<1x!tpu.dma_semaphore, #tpu.memory_space<semaphore_mem>>
      %90 = tpu.memref_squeeze %89 : memref<1x!tpu.dma_semaphore, #tpu.memory_space<semaphore_mem>> -> memref<!tpu.dma_semaphore, #tpu.memory_space<semaphore_mem>>
      tpu.enqueue_dma source(%86 : memref<18x16x128xbf16, #tpu.memory_space<any>>) target(%88 : memref<18x16x128xbf16, #tpu.memory_space<vmem>>) target_semaphore(%90 : memref<!tpu.dma_semaphore, #tpu.memory_space<semaphore_mem>>)
    } else {
    }
    %15 = arith.index_cast %0 : i32 to index
    %c0 = arith.constant 0 : index
    %c0_9 = arith.constant 0 : index
    %c0_10 = arith.constant 0 : index
    %16 = vector.load %arg10[%15, %c0, %c0_9, %c0_10] : memref<2x18x16x128xbf16, #tpu.memory_space<vmem>>, vector<1x18x16x128xbf16>
    %17 = vector.shape_cast %16 : vector<1x18x16x128xbf16> to vector<18x16x128xbf16>
    %18 = vector.shape_cast %17 : vector<18x16x128xbf16> to vector<288x128xbf16>
    %c0_11 = arith.constant 0 : index
    %c0_12 = arith.constant 0 : index
    %19 = vector.load %arg3[%c0_11, %c0_12] : memref<128x128xbf16, #tpu.memory_space<vmem>>, vector<128x128xbf16>
    %cst = arith.constant dense<0.000000e+00> : vector<288x128xf32>
    %20 = tpu.matmul %18, %19, %cst {dimension_numbers = #tpu.dot_dimension_numbers<[1], [0], [0], [1], [0, 0, 1, 1], [], []>} : vector<288x128xbf16>, vector<128x128xbf16>, vector<288x128xf32> -> vector<288x128xf32>
    %c0_13 = arith.constant 0 : index
    %c0_14 = arith.constant 0 : index
    %21 = vector.load %arg4[%c0_13, %c0_14] : memref<1x128xf32, #tpu.memory_space<vmem>>, vector<1x128xf32>
    %22 = vector.broadcast %21 : vector<1x128xf32> to vector<288x128xf32>
    %23 = arith.addf %20, %22 : vector<288x128xf32>
    %cst_15 = arith.constant 0.000000e+00 : f32
    %24 = vector.broadcast %cst_15 : f32 to vector<288x128xf32>
    %25 = arith.maximumf %23, %24 : vector<288x128xf32>
    %26 = arith.truncf %25 : vector<288x128xf32> to vector<288x128xbf16>
    %27 = vector.shape_cast %26 : vector<288x128xbf16> to vector<18x16x128xbf16>
    %28 = vector.extract_strided_slice %27 {offsets = [0, 0, 0], sizes = [18, 15, 128], strides = [1, 1, 1]} : vector<18x16x128xbf16> to vector<18x15x128xbf16>
    %c0_16 = arith.constant 0 : index
    %c1 = arith.constant 1 : index
    %c0_17 = arith.constant 0 : index
    %29 = vector.load %arg12[%c0_16, %c1, %c0_17] : memref<18x16x384xbf16, #tpu.memory_space<vmem>>, vector<18x15x128xbf16>
    tpu.vector_store %arg12[%c0_16, %c1, %c0_17], %28 {strides = array<i32>} : memref<18x16x384xbf16, #tpu.memory_space<vmem>>, vector<18x15x128xbf16>,
    %cst_18 = arith.constant 0.000000e+00 : bf16
    %30 = vector.broadcast %cst_18 : bf16 to vector<18x1x128xbf16>
    %c0_19 = arith.constant 0 : index
    %c0_20 = arith.constant 0 : index
    %c0_21 = arith.constant 0 : index
    %31 = vector.load %arg12[%c0_19, %c0_20, %c0_21] : memref<18x16x384xbf16, #tpu.memory_space<vmem>>, vector<18x1x128xbf16>
    tpu.vector_store %arg12[%c0_19, %c0_20, %c0_21], %30 {strides = array<i32>} : memref<18x16x384xbf16, #tpu.memory_space<vmem>>, vector<18x1x128xbf16>,
    %c0_22 = arith.constant 0 : index
    %c0_23 = arith.constant 0 : index
    %c128 = arith.constant 128 : index
    %32 = vector.load %arg12[%c0_22, %c0_23, %c128] : memref<18x16x384xbf16, #tpu.memory_space<vmem>>, vector<18x16x128xbf16>
    tpu.vector_store %arg12[%c0_22, %c0_23, %c128], %27 {strides = array<i32>} : memref<18x16x384xbf16, #tpu.memory_space<vmem>>, vector<18x16x128xbf16>,
    %33 = vector.extract_strided_slice %27 {offsets = [0, 1, 0], sizes = [18, 15, 128], strides = [1, 1, 1]} : vector<18x16x128xbf16> to vector<18x15x128xbf16>
    %c0_24 = arith.constant 0 : index
    %c0_25 = arith.constant 0 : index
    %c256 = arith.constant 256 : index
    %34 = vector.load %arg12[%c0_24, %c0_25, %c256] : memref<18x16x384xbf16, #tpu.memory_space<vmem>>, vector<18x15x128xbf16>
    tpu.vector_store %arg12[%c0_24, %c0_25, %c256], %33 {strides = array<i32>} : memref<18x16x384xbf16, #tpu.memory_space<vmem>>, vector<18x15x128xbf16>,
    %cst_26 = arith.constant 0.000000e+00 : bf16
    %35 = vector.broadcast %cst_26 : bf16 to vector<18x1x128xbf16>
    %c0_27 = arith.constant 0 : index
    %c15 = arith.constant 15 : index
    %c256_28 = arith.constant 256 : index
    %36 = vector.load %arg12[%c0_27, %c15, %c256_28] : memref<18x16x384xbf16, #tpu.memory_space<vmem>>, vector<18x1x128xbf16>
    tpu.vector_store %arg12[%c0_27, %c15, %c256_28], %35 {strides = array<i32>} : memref<18x16x384xbf16, #tpu.memory_space<vmem>>, vector<18x1x128xbf16>,
    %c0_i32_29 = arith.constant 0 : i32
    %37 = arith.cmpi eq, %arg1, %c0_i32_29 : i32
    %38 = arith.extui %37 : i1 to i32
    %c0_i32_30 = arith.constant 0 : i32
    %39 = arith.cmpi ne, %38, %c0_i32_30 : i32
    scf.if %39 {
      %cst_66 = arith.constant 0.000000e+00 : bf16
      %82 = vector.broadcast %cst_66 : bf16 to vector<1x16x384xbf16>
      %c0_67 = arith.constant 0 : index
      %c0_68 = arith.constant 0 : index
      %c0_69 = arith.constant 0 : index
      %83 = vector.load %arg12[%c0_67, %c0_68, %c0_69] : memref<18x16x384xbf16, #tpu.memory_space<vmem>>, vector<1x16x384xbf16>
      tpu.vector_store %arg12[%c0_67, %c0_68, %c0_69], %82 {strides = array<i32>} : memref<18x16x384xbf16, #tpu.memory_space<vmem>>, vector<1x16x384xbf16>,
    } else {
    }
    %c0_i32_31 = arith.constant 0 : i32
    %40 = arith.cmpi eq, %arg1, %c0_i32_31 : i32
    %41 = arith.extui %40 : i1 to i32
    %c0_i32_32 = arith.constant 0 : i32
    %42 = arith.cmpi ne, %41, %c0_i32_32 : i32
    scf.if %42 {
      %cst_66 = arith.constant 0.000000e+00 : bf16
      %82 = vector.broadcast %cst_66 : bf16 to vector<1x16x384xbf16>
      %c17 = arith.constant 17 : index
      %c0_67 = arith.constant 0 : index
      %c0_68 = arith.constant 0 : index
      %83 = vector.load %arg12[%c17, %c0_67, %c0_68] : memref<18x16x384xbf16, #tpu.memory_space<vmem>>, vector<1x16x384xbf16>
      tpu.vector_store %arg12[%c17, %c0_67, %c0_68], %82 {strides = array<i32>} : memref<18x16x384xbf16, #tpu.memory_space<vmem>>, vector<1x16x384xbf16>,
    } else {
    }
    %c0_33 = arith.constant 0 : index
    %c0_34 = arith.constant 0 : index
    %c0_35 = arith.constant 0 : index
    %43 = vector.load %arg12[%c0_33, %c0_34, %c0_35] : memref<18x16x384xbf16, #tpu.memory_space<vmem>>, vector<16x16x384xbf16>
    %44 = vector.shape_cast %43 : vector<16x16x384xbf16> to vector<256x384xbf16>
    %c0_36 = arith.constant 0 : index
    %c0_37 = arith.constant 0 : index
    %c0_38 = arith.constant 0 : index
    %45 = vector.load %arg5[%c0_36, %c0_37, %c0_38] : memref<3x384x128xbf16, #tpu.memory_space<vmem>>, vector<1x384x128xbf16>
    %46 = vector.shape_cast %45 : vector<1x384x128xbf16> to vector<384x128xbf16>
    %cst_39 = arith.constant dense<0.000000e+00> : vector<256x128xf32>
    %47 = tpu.matmul %44, %46, %cst_39 {dimension_numbers = #tpu.dot_dimension_numbers<[1], [0], [0], [1], [0, 0, 1, 1], [], []>} : vector<256x384xbf16>, vector<384x128xbf16>, vector<256x128xf32> -> vector<256x128xf32>
    %c1_40 = arith.constant 1 : index
    %c0_41 = arith.constant 0 : index
    %c0_42 = arith.constant 0 : index
    %48 = vector.load %arg12[%c1_40, %c0_41, %c0_42] : memref<18x16x384xbf16, #tpu.memory_space<vmem>>, vector<16x16x384xbf16>
    %49 = vector.shape_cast %48 : vector<16x16x384xbf16> to vector<256x384xbf16>
    %c1_43 = arith.constant 1 : index
    %c0_44 = arith.constant 0 : index
    %c0_45 = arith.constant 0 : index
    %50 = vector.load %arg5[%c1_43, %c0_44, %c0_45] : memref<3x384x128xbf16, #tpu.memory_space<vmem>>, vector<1x384x128xbf16>
    %51 = vector.shape_cast %50 : vector<1x384x128xbf16> to vector<384x128xbf16>
    %cst_46 = arith.constant dense<0.000000e+00> : vector<256x128xf32>
    %52 = tpu.matmul %49, %51, %cst_46 {dimension_numbers = #tpu.dot_dimension_numbers<[1], [0], [0], [1], [0, 0, 1, 1], [], []>} : vector<256x384xbf16>, vector<384x128xbf16>, vector<256x128xf32> -> vector<256x128xf32>
    %53 = arith.addf %47, %52 : vector<256x128xf32>
    %c2 = arith.constant 2 : index
    %c0_47 = arith.constant 0 : index
    %c0_48 = arith.constant 0 : index
    %54 = vector.load %arg12[%c2, %c0_47, %c0_48] : memref<18x16x384xbf16, #tpu.memory_space<vmem>>, vector<16x16x384xbf16>
    %55 = vector.shape_cast %54 : vector<16x16x384xbf16> to vector<256x384xbf16>
    %c2_49 = arith.constant 2 : index
    %c0_50 = arith.constant 0 : index
    %c0_51 = arith.constant 0 : index
    %56 = vector.load %arg5[%c2_49, %c0_50, %c0_51] : memref<3x384x128xbf16, #tpu.memory_space<vmem>>, vector<1x384x128xbf16>
    %57 = vector.shape_cast %56 : vector<1x384x128xbf16> to vector<384x128xbf16>
    %cst_52 = arith.constant dense<0.000000e+00> : vector<256x128xf32>
    %58 = tpu.matmul %55, %57, %cst_52 {dimension_numbers = #tpu.dot_dimension_numbers<[1], [0], [0], [1], [0, 0, 1, 1], [], []>} : vector<256x384xbf16>, vector<384x128xbf16>, vector<256x128xf32> -> vector<256x128xf32>
    %59 = arith.addf %53, %58 : vector<256x128xf32>
    %c0_53 = arith.constant 0 : index
    %c0_54 = arith.constant 0 : index
    %60 = vector.load %arg6[%c0_53, %c0_54] : memref<1x128xf32, #tpu.memory_space<vmem>>, vector<1x128xf32>
    %61 = vector.broadcast %60 : vector<1x128xf32> to vector<256x128xf32>
    %62 = arith.addf %59, %61 : vector<256x128xf32>
    %cst_55 = arith.constant 0.000000e+00 : f32
    %63 = vector.broadcast %cst_55 : f32 to vector<256x128xf32>
    %64 = arith.maximumf %62, %63 : vector<256x128xf32>
    %65 = arith.truncf %64 : vector<256x128xf32> to vector<256x128xbf16>
    %c0_56 = arith.constant 0 : index
    %c0_57 = arith.constant 0 : index
    %66 = vector.load %arg7[%c0_56, %c0_57] : memref<128x128xbf16, #tpu.memory_space<vmem>>, vector<128x128xbf16>
    %cst_58 = arith.constant dense<0.000000e+00> : vector<256x128xf32>
    %67 = tpu.matmul %65, %66, %cst_58 {dimension_numbers = #tpu.dot_dimension_numbers<[1], [0], [0], [1], [0, 0, 1, 1], [], []>} : vector<256x128xbf16>, vector<128x128xbf16>, vector<256x128xf32> -> vector<256x128xf32>
    %c0_59 = arith.constant 0 : index
    %c0_60 = arith.constant 0 : index
    %68 = vector.load %arg8[%c0_59, %c0_60] : memref<1x128xf32, #tpu.memory_space<vmem>>, vector<1x128xf32>
    %69 = vector.broadcast %68 : vector<1x128xf32> to vector<256x128xf32>
    %70 = arith.addf %67, %69 : vector<256x128xf32>
    %71 = vector.shape_cast %70 : vector<256x128xf32> to vector<16x16x128xf32>
    %72 = vector.extract_strided_slice %17 {offsets = [1, 0, 0], sizes = [16, 16, 4], strides = [1, 1, 1]} : vector<18x16x128xbf16> to vector<16x16x4xbf16>
    %73 = arith.extf %72 : vector<16x16x4xbf16> to vector<16x16x4xf32>
    %74 = vector.extract_strided_slice %71 {offsets = [0, 0, 0], sizes = [16, 16, 4], strides = [1, 1, 1]} : vector<16x16x128xf32> to vector<16x16x4xf32>
    %75 = arith.addf %74, %73 : vector<16x16x4xf32>
    %cst_61 = arith.constant 0.000000e+00 : f32
    %76 = vector.broadcast %cst_61 : f32 to vector<16x16x4xf32>
    %77 = arith.maximumf %75, %76 : vector<16x16x4xf32>
    %78 = arith.truncf %77 : vector<16x16x4xf32> to vector<16x16x4xbf16>
    %c0_62 = arith.constant 0 : index
    %c0_63 = arith.constant 0 : index
    %c0_64 = arith.constant 0 : index
    %c0_65 = arith.constant 0 : index
    %79 = vector.load %arg9[%c0_62, %c0_63, %c0_64, %c0_65] : memref<1x16x16x4xbf16, #tpu.memory_space<vmem>>, vector<1x16x16x4xbf16>
    %80 = vector.shape_cast %79 : vector<1x16x16x4xbf16> to vector<16x16x4xbf16>
    %81 = vector.shape_cast %78 : vector<16x16x4xbf16> to vector<1x16x16x4xbf16>
    tpu.vector_store %arg9[%c0_62, %c0_63, %c0_64, %c0_65], %81 {strides = array<i32>} : memref<1x16x16x4xbf16, #tpu.memory_space<vmem>>, vector<1x16x16x4xbf16>,
    return
  }
  func.func @transform_1(%arg0: i32, %arg1: i32) -> (i32, i32) {
    %c0_i32 = arith.constant 0 : i32
    %c0_i32_0 = arith.constant 0 : i32
    %c0_i32_1 = arith.constant 0 : i32
    return %c0_i32, %c0_i32_0 : i32, i32
  }
  func.func @transform_2(%arg0: i32, %arg1: i32) -> (i32, i32) {
    %c0_i32 = arith.constant 0 : i32
    %c0_i32_0 = arith.constant 0 : i32
    %c0_i32_1 = arith.constant 0 : i32
    return %c0_i32, %c0_i32_0 : i32, i32
  }
  func.func @transform_3(%arg0: i32, %arg1: i32) -> (i32, i32, i32) {
    %c0_i32 = arith.constant 0 : i32
    %c0_i32_0 = arith.constant 0 : i32
    %c0_i32_1 = arith.constant 0 : i32
    %c0_i32_2 = arith.constant 0 : i32
    return %c0_i32, %c0_i32_0, %c0_i32_1 : i32, i32, i32
  }
  func.func @transform_4(%arg0: i32, %arg1: i32) -> (i32, i32) {
    %c0_i32 = arith.constant 0 : i32
    %c0_i32_0 = arith.constant 0 : i32
    %c0_i32_1 = arith.constant 0 : i32
    return %c0_i32, %c0_i32_0 : i32, i32
  }
  func.func @transform_5(%arg0: i32, %arg1: i32) -> (i32, i32) {
    %c0_i32 = arith.constant 0 : i32
    %c0_i32_0 = arith.constant 0 : i32
    %c0_i32_1 = arith.constant 0 : i32
    return %c0_i32, %c0_i32_0 : i32, i32
  }
  func.func @transform_6(%arg0: i32, %arg1: i32) -> (i32, i32) {
    %c0_i32 = arith.constant 0 : i32
    %c0_i32_0 = arith.constant 0 : i32
    %c0_i32_1 = arith.constant 0 : i32
    return %c0_i32, %c0_i32_0 : i32, i32
  }
  func.func @transform_7(%arg0: i32, %arg1: i32) -> (i32, i32, i32, i32) {
    %c0_i32 = arith.constant 0 : i32
    %c0_i32_0 = arith.constant 0 : i32
    %c0_i32_1 = arith.constant 0 : i32
    return %arg0, %arg1, %c0_i32, %c0_i32_0 : i32, i32, i32, i32
  }
}

module attributes {stable_mosaic.version = 11 : i64} {
  func.func @_identity_block_kernel(%arg0: i32, %arg1: i32, %arg2: memref<2x18x16x128xbf16, #tpu.memory_space<any>>, %arg3: memref<128x128xbf16, #tpu.memory_space<vmem>>, %arg4: memref<1x128xf32, #tpu.memory_space<vmem>>, %arg5: memref<3x384x128xbf16, #tpu.memory_space<vmem>>, %arg6: memref<1x128xf32, #tpu.memory_space<vmem>>, %arg7: memref<128x128xbf16, #tpu.memory_space<vmem>>, %arg8: memref<1x128xf32, #tpu.memory_space<vmem>>, %arg9: memref<1x16x16x4xbf16, #tpu.memory_space<vmem>>, %arg10: memref<2x18x16x128xbf16, #tpu.memory_space<vmem>>, %arg11: memref<2x!tpu.dma_semaphore, #tpu.memory_space<semaphore_mem>>, %arg12: memref<18x16x384xbf16, #tpu.memory_space<vmem>>) attributes {dimension_semantics = [#tpu.dimension_semantics<parallel>, #tpu.dimension_semantics<arbitrary>], iteration_bounds = array<i64: 2, 1>, scalar_prefetch = 0 : i64, scratch_operands = 3 : i64, tpu.core_type = #tpu.core_type<tc>, window_params = [{}, {pipeline_mode = #tpu.pipeline_mode<synchronous>, transform_indices = @transform_1, window_bounds = array<i64: 128, 128>}, {pipeline_mode = #tpu.pipeline_mode<synchronous>, transform_indices = @transform_2, window_bounds = array<i64: 1, 128>}, {pipeline_mode = #tpu.pipeline_mode<synchronous>, transform_indices = @transform_3, window_bounds = array<i64: 3, 384, 128>}, {pipeline_mode = #tpu.pipeline_mode<synchronous>, transform_indices = @transform_4, window_bounds = array<i64: 1, 128>}, {pipeline_mode = #tpu.pipeline_mode<synchronous>, transform_indices = @transform_5, window_bounds = array<i64: 128, 128>}, {pipeline_mode = #tpu.pipeline_mode<synchronous>, transform_indices = @transform_6, window_bounds = array<i64: 1, 128>}, {transform_indices = @transform_7, window_bounds = array<i64: 1, 16, 16, 4>}]} {
    %c1_i32 = arith.constant 1 : i32
    %0 = arith.andi %arg1, %c1_i32 : i32
    %c0_i32 = arith.constant 0 : i32
    %1 = arith.cmpi eq, %arg1, %c0_i32 : i32
    %2 = arith.extui %1 : i1 to i32
    %c0_i32_0 = arith.constant 0 : i32
    %3 = arith.cmpi ne, %2, %c0_i32_0 : i32
    scf.if %3 {
      %c0_i32_66 = arith.constant 0 : i32
      %c0_i32_67 = arith.constant 0 : i32
      %c0_i32_68 = arith.constant 0 : i32
      %c0_i32_69 = arith.constant 0 : i32
      %c0_i32_70 = arith.constant 0 : i32
      %82 = tpu.memref_slice %arg2[%arg0, %c0_i32_68, %c0_i32_69, %c0_i32_70] : memref<2x18x16x128xbf16, #tpu.memory_space<any>> -> memref<1x18x16x128xbf16, #tpu.memory_space<any>>
      %83 = tpu.memref_squeeze %82 : memref<1x18x16x128xbf16, #tpu.memory_space<any>> -> memref<18x16x128xbf16, #tpu.memory_space<any>>
      %c0_i32_71 = arith.constant 0 : i32
      %c0_i32_72 = arith.constant 0 : i32
      %c0_i32_73 = arith.constant 0 : i32
      %84 = tpu.memref_slice %arg10[%c0_i32_66, %c0_i32_71, %c0_i32_72, %c0_i32_73] : memref<2x18x16x128xbf16, #tpu.memory_space<vmem>> -> memref<1x18x16x128xbf16, #tpu.memory_space<vmem>>
      %85 = tpu.memref_squeeze %84 : memref<1x18x16x128xbf16, #tpu.memory_space<vmem>> -> memref<18x16x128xbf16, #tpu.memory_space<vmem>>
      %86 = tpu.memref_slice %arg11[%c0_i32_67] : memref<2x!tpu.dma_semaphore, #tpu.memory_space<semaphore_mem>> -> memref<1x!tpu.dma_semaphore, #tpu.memory_space<semaphore_mem>>
      %87 = tpu.memref_squeeze %86 : memref<1x!tpu.dma_semaphore, #tpu.memory_space<semaphore_mem>> -> memref<!tpu.dma_semaphore, #tpu.memory_space<semaphore_mem>>
      tpu.enqueue_dma source(%83 : memref<18x16x128xbf16, #tpu.memory_space<any>>) target(%85 : memref<18x16x128xbf16, #tpu.memory_space<vmem>>) target_semaphore(%87 : memref<!tpu.dma_semaphore, #tpu.memory_space<semaphore_mem>>)
    } else {
    }
    %c16_i32 = arith.constant 16 : i32
    %4 = arith.muli %arg1, %c16_i32 : i32
    %c0_i32_1 = arith.constant 0 : i32
    %c0_i32_2 = arith.constant 0 : i32
    %5 = tpu.memref_slice %arg2[%arg0, %4, %c0_i32_1, %c0_i32_2] : memref<2x18x16x128xbf16, #tpu.memory_space<any>> -> memref<1x18x16x128xbf16, #tpu.memory_space<any>>
    %6 = tpu.memref_squeeze %5 : memref<1x18x16x128xbf16, #tpu.memory_space<any>> -> memref<18x16x128xbf16, #tpu.memory_space<any>>
    %c0_i32_3 = arith.constant 0 : i32
    %c0_i32_4 = arith.constant 0 : i32
    %c0_i32_5 = arith.constant 0 : i32
    %7 = tpu.memref_slice %arg10[%0, %c0_i32_3, %c0_i32_4, %c0_i32_5] : memref<2x18x16x128xbf16, #tpu.memory_space<vmem>> -> memref<1x18x16x128xbf16, #tpu.memory_space<vmem>>
    %8 = tpu.memref_squeeze %7 : memref<1x18x16x128xbf16, #tpu.memory_space<vmem>> -> memref<18x16x128xbf16, #tpu.memory_space<vmem>>
    %9 = tpu.memref_slice %arg11[%0] : memref<2x!tpu.dma_semaphore, #tpu.memory_space<semaphore_mem>> -> memref<1x!tpu.dma_semaphore, #tpu.memory_space<semaphore_mem>>
    %10 = tpu.memref_squeeze %9 : memref<1x!tpu.dma_semaphore, #tpu.memory_space<semaphore_mem>> -> memref<!tpu.dma_semaphore, #tpu.memory_space<semaphore_mem>>
    tpu.wait_dma2 semaphore(%10 : memref<!tpu.dma_semaphore, #tpu.memory_space<semaphore_mem>>) src(%6 : memref<18x16x128xbf16, #tpu.memory_space<any>>) dst(%8 : memref<18x16x128xbf16, #tpu.memory_space<vmem>>)
    %c1_i32_6 = arith.constant 1 : i32
    %11 = arith.addi %arg1, %c1_i32_6 : i32
    %c1_i32_7 = arith.constant 1 : i32
    %12 = arith.cmpi slt, %11, %c1_i32_7 : i32
    %13 = arith.extui %12 : i1 to i32
    %c0_i32_8 = arith.constant 0 : i32
    %14 = arith.cmpi ne, %13, %c0_i32_8 : i32
    scf.if %14 {
      %c1_i32_66 = arith.constant 1 : i32
      %82 = arith.addi %arg1, %c1_i32_66 : i32
      %c1_i32_67 = arith.constant 1 : i32
      %83 = arith.subi %c1_i32_67, %0 : i32
      %c16_i32_68 = arith.constant 16 : i32
      %84 = arith.muli %82, %c16_i32_68 : i32
      %c0_i32_69 = arith.constant 0 : i32
      %c0_i32_70 = arith.constant 0 : i32
      %85 = tpu.memref_slice %arg2[%arg0, %84, %c0_i32_69, %c0_i32_70] : memref<2x18x16x128xbf16, #tpu.memory_space<any>> -> memref<1x18x16x128xbf16, #tpu.memory_space<any>>
      %86 = tpu.memref_squeeze %85 : memref<1x18x16x128xbf16, #tpu.memory_space<any>> -> memref<18x16x128xbf16, #tpu.memory_space<any>>
      %c0_i32_71 = arith.constant 0 : i32
      %c0_i32_72 = arith.constant 0 : i32
      %c0_i32_73 = arith.constant 0 : i32
      %87 = tpu.memref_slice %arg10[%83, %c0_i32_71, %c0_i32_72, %c0_i32_73] : memref<2x18x16x128xbf16, #tpu.memory_space<vmem>> -> memref<1x18x16x128xbf16, #tpu.memory_space<vmem>>
      %88 = tpu.memref_squeeze %87 : memref<1x18x16x128xbf16, #tpu.memory_space<vmem>> -> memref<18x16x128xbf16, #tpu.memory_space<vmem>>
      %89 = tpu.memref_slice %arg11[%83] : memref<2x!tpu.dma_semaphore, #tpu.memory_space<semaphore_mem>> -> memref<1x!tpu.dma_semaphore, #tpu.memory_space<semaphore_mem>>
      %90 = tpu.memref_squeeze %89 : memref<1x!tpu.dma_semaphore, #tpu.memory_space<semaphore_mem>> -> memref<!tpu.dma_semaphore, #tpu.memory_space<semaphore_mem>>
      tpu.enqueue_dma source(%86 : memref<18x16x128xbf16, #tpu.memory_space<any>>) target(%88 : memref<18x16x128xbf16, #tpu.memory_space<vmem>>) target_semaphore(%90 : memref<!tpu.dma_semaphore, #tpu.memory_space<semaphore_mem>>)
    } else {
    }
    %15 = arith.index_cast %0 : i32 to index
    %c0 = arith.constant 0 : index
    %c0_9 = arith.constant 0 : index
    %c0_10 = arith.constant 0 : index
    %16 = vector.load %arg10[%15, %c0, %c0_9, %c0_10] : memref<2x18x16x128xbf16, #tpu.memory_space<vmem>>, vector<1x18x16x128xbf16>
    %17 = vector.shape_cast %16 : vector<1x18x16x128xbf16> to vector<18x16x128xbf16>
    %18 = vector.shape_cast %17 : vector<18x16x128xbf16> to vector<288x128xbf16>
    %c0_11 = arith.constant 0 : index
    %c0_12 = arith.constant 0 : index
    %19 = vector.load %arg3[%c0_11, %c0_12] : memref<128x128xbf16, #tpu.memory_space<vmem>>, vector<128x128xbf16>
    %cst = arith.constant dense<0.000000e+00> : vector<288x128xf32>
    %20 = tpu.matmul %18, %19, %cst {dimension_numbers = #tpu.dot_dimension_numbers<[1], [0], [0], [1], [0, 0, 1, 1], [], []>} : vector<288x128xbf16>, vector<128x128xbf16>, vector<288x128xf32> -> vector<288x128xf32>
    %c0_13 = arith.constant 0 : index
    %c0_14 = arith.constant 0 : index
    %21 = vector.load %arg4[%c0_13, %c0_14] : memref<1x128xf32, #tpu.memory_space<vmem>>, vector<1x128xf32>
    %22 = vector.broadcast %21 : vector<1x128xf32> to vector<288x128xf32>
    %23 = arith.addf %20, %22 : vector<288x128xf32>
    %cst_15 = arith.constant 0.000000e+00 : f32
    %24 = vector.broadcast %cst_15 : f32 to vector<288x128xf32>
    %25 = arith.maximumf %23, %24 : vector<288x128xf32>
    %26 = arith.truncf %25 : vector<288x128xf32> to vector<288x128xbf16>
    %27 = vector.shape_cast %26 : vector<288x128xbf16> to vector<18x16x128xbf16>
    %28 = vector.extract_strided_slice %27 {offsets = [0, 0, 0], sizes = [18, 15, 128], strides = [1, 1, 1]} : vector<18x16x128xbf16> to vector<18x15x128xbf16>
    %c0_16 = arith.constant 0 : index
    %c1 = arith.constant 1 : index
    %c0_17 = arith.constant 0 : index
    %29 = vector.load %arg12[%c0_16, %c1, %c0_17] : memref<18x16x384xbf16, #tpu.memory_space<vmem>>, vector<18x15x128xbf16>
    tpu.vector_store %arg12[%c0_16, %c1, %c0_17], %28 {strides = array<i32>} : memref<18x16x384xbf16, #tpu.memory_space<vmem>>, vector<18x15x128xbf16>,
    %cst_18 = arith.constant 0.000000e+00 : bf16
    %30 = vector.broadcast %cst_18 : bf16 to vector<18x1x128xbf16>
    %c0_19 = arith.constant 0 : index
    %c0_20 = arith.constant 0 : index
    %c0_21 = arith.constant 0 : index
    %31 = vector.load %arg12[%c0_19, %c0_20, %c0_21] : memref<18x16x384xbf16, #tpu.memory_space<vmem>>, vector<18x1x128xbf16>
    tpu.vector_store %arg12[%c0_19, %c0_20, %c0_21], %30 {strides = array<i32>} : memref<18x16x384xbf16, #tpu.memory_space<vmem>>, vector<18x1x128xbf16>,
    %c0_22 = arith.constant 0 : index
    %c0_23 = arith.constant 0 : index
    %c128 = arith.constant 128 : index
    %32 = vector.load %arg12[%c0_22, %c0_23, %c128] : memref<18x16x384xbf16, #tpu.memory_space<vmem>>, vector<18x16x128xbf16>
    tpu.vector_store %arg12[%c0_22, %c0_23, %c128], %27 {strides = array<i32>} : memref<18x16x384xbf16, #tpu.memory_space<vmem>>, vector<18x16x128xbf16>,
    %33 = vector.extract_strided_slice %27 {offsets = [0, 1, 0], sizes = [18, 15, 128], strides = [1, 1, 1]} : vector<18x16x128xbf16> to vector<18x15x128xbf16>
    %c0_24 = arith.constant 0 : index
    %c0_25 = arith.constant 0 : index
    %c256 = arith.constant 256 : index
    %34 = vector.load %arg12[%c0_24, %c0_25, %c256] : memref<18x16x384xbf16, #tpu.memory_space<vmem>>, vector<18x15x128xbf16>
    tpu.vector_store %arg12[%c0_24, %c0_25, %c256], %33 {strides = array<i32>} : memref<18x16x384xbf16, #tpu.memory_space<vmem>>, vector<18x15x128xbf16>,
    %cst_26 = arith.constant 0.000000e+00 : bf16
    %35 = vector.broadcast %cst_26 : bf16 to vector<18x1x128xbf16>
    %c0_27 = arith.constant 0 : index
    %c15 = arith.constant 15 : index
    %c256_28 = arith.constant 256 : index
    %36 = vector.load %arg12[%c0_27, %c15, %c256_28] : memref<18x16x384xbf16, #tpu.memory_space<vmem>>, vector<18x1x128xbf16>
    tpu.vector_store %arg12[%c0_27, %c15, %c256_28], %35 {strides = array<i32>} : memref<18x16x384xbf16, #tpu.memory_space<vmem>>, vector<18x1x128xbf16>,
    %c0_i32_29 = arith.constant 0 : i32
    %37 = arith.cmpi eq, %arg1, %c0_i32_29 : i32
    %38 = arith.extui %37 : i1 to i32
    %c0_i32_30 = arith.constant 0 : i32
    %39 = arith.cmpi ne, %38, %c0_i32_30 : i32
    scf.if %39 {
      %cst_66 = arith.constant 0.000000e+00 : bf16
      %82 = vector.broadcast %cst_66 : bf16 to vector<1x16x384xbf16>
      %c0_67 = arith.constant 0 : index
      %c0_68 = arith.constant 0 : index
      %c0_69 = arith.constant 0 : index
      %83 = vector.load %arg12[%c0_67, %c0_68, %c0_69] : memref<18x16x384xbf16, #tpu.memory_space<vmem>>, vector<1x16x384xbf16>
      tpu.vector_store %arg12[%c0_67, %c0_68, %c0_69], %82 {strides = array<i32>} : memref<18x16x384xbf16, #tpu.memory_space<vmem>>, vector<1x16x384xbf16>,
    } else {
    }
    %c0_i32_31 = arith.constant 0 : i32
    %40 = arith.cmpi eq, %arg1, %c0_i32_31 : i32
    %41 = arith.extui %40 : i1 to i32
    %c0_i32_32 = arith.constant 0 : i32
    %42 = arith.cmpi ne, %41, %c0_i32_32 : i32
    scf.if %42 {
      %cst_66 = arith.constant 0.000000e+00 : bf16
      %82 = vector.broadcast %cst_66 : bf16 to vector<1x16x384xbf16>
      %c17 = arith.constant 17 : index
      %c0_67 = arith.constant 0 : index
      %c0_68 = arith.constant 0 : index
      %83 = vector.load %arg12[%c17, %c0_67, %c0_68] : memref<18x16x384xbf16, #tpu.memory_space<vmem>>, vector<1x16x384xbf16>
      tpu.vector_store %arg12[%c17, %c0_67, %c0_68], %82 {strides = array<i32>} : memref<18x16x384xbf16, #tpu.memory_space<vmem>>, vector<1x16x384xbf16>,
    } else {
    }
    %c0_33 = arith.constant 0 : index
    %c0_34 = arith.constant 0 : index
    %c0_35 = arith.constant 0 : index
    %43 = vector.load %arg12[%c0_33, %c0_34, %c0_35] : memref<18x16x384xbf16, #tpu.memory_space<vmem>>, vector<16x16x384xbf16>
    %44 = vector.shape_cast %43 : vector<16x16x384xbf16> to vector<256x384xbf16>
    %c0_36 = arith.constant 0 : index
    %c0_37 = arith.constant 0 : index
    %c0_38 = arith.constant 0 : index
    %45 = vector.load %arg5[%c0_36, %c0_37, %c0_38] : memref<3x384x128xbf16, #tpu.memory_space<vmem>>, vector<1x384x128xbf16>
    %46 = vector.shape_cast %45 : vector<1x384x128xbf16> to vector<384x128xbf16>
    %cst_39 = arith.constant dense<0.000000e+00> : vector<256x128xf32>
    %47 = tpu.matmul %44, %46, %cst_39 {dimension_numbers = #tpu.dot_dimension_numbers<[1], [0], [0], [1], [0, 0, 1, 1], [], []>} : vector<256x384xbf16>, vector<384x128xbf16>, vector<256x128xf32> -> vector<256x128xf32>
    %c1_40 = arith.constant 1 : index
    %c0_41 = arith.constant 0 : index
    %c0_42 = arith.constant 0 : index
    %48 = vector.load %arg12[%c1_40, %c0_41, %c0_42] : memref<18x16x384xbf16, #tpu.memory_space<vmem>>, vector<16x16x384xbf16>
    %49 = vector.shape_cast %48 : vector<16x16x384xbf16> to vector<256x384xbf16>
    %c1_43 = arith.constant 1 : index
    %c0_44 = arith.constant 0 : index
    %c0_45 = arith.constant 0 : index
    %50 = vector.load %arg5[%c1_43, %c0_44, %c0_45] : memref<3x384x128xbf16, #tpu.memory_space<vmem>>, vector<1x384x128xbf16>
    %51 = vector.shape_cast %50 : vector<1x384x128xbf16> to vector<384x128xbf16>
    %cst_46 = arith.constant dense<0.000000e+00> : vector<256x128xf32>
    %52 = tpu.matmul %49, %51, %cst_46 {dimension_numbers = #tpu.dot_dimension_numbers<[1], [0], [0], [1], [0, 0, 1, 1], [], []>} : vector<256x384xbf16>, vector<384x128xbf16>, vector<256x128xf32> -> vector<256x128xf32>
    %53 = arith.addf %47, %52 : vector<256x128xf32>
    %c2 = arith.constant 2 : index
    %c0_47 = arith.constant 0 : index
    %c0_48 = arith.constant 0 : index
    %54 = vector.load %arg12[%c2, %c0_47, %c0_48] : memref<18x16x384xbf16, #tpu.memory_space<vmem>>, vector<16x16x384xbf16>
    %55 = vector.shape_cast %54 : vector<16x16x384xbf16> to vector<256x384xbf16>
    %c2_49 = arith.constant 2 : index
    %c0_50 = arith.constant 0 : index
    %c0_51 = arith.constant 0 : index
    %56 = vector.load %arg5[%c2_49, %c0_50, %c0_51] : memref<3x384x128xbf16, #tpu.memory_space<vmem>>, vector<1x384x128xbf16>
    %57 = vector.shape_cast %56 : vector<1x384x128xbf16> to vector<384x128xbf16>
    %cst_52 = arith.constant dense<0.000000e+00> : vector<256x128xf32>
    %58 = tpu.matmul %55, %57, %cst_52 {dimension_numbers = #tpu.dot_dimension_numbers<[1], [0], [0], [1], [0, 0, 1, 1], [], []>} : vector<256x384xbf16>, vector<384x128xbf16>, vector<256x128xf32> -> vector<256x128xf32>
    %59 = arith.addf %53, %58 : vector<256x128xf32>
    %c0_53 = arith.constant 0 : index
    %c0_54 = arith.constant 0 : index
    %60 = vector.load %arg6[%c0_53, %c0_54] : memref<1x128xf32, #tpu.memory_space<vmem>>, vector<1x128xf32>
    %61 = vector.broadcast %60 : vector<1x128xf32> to vector<256x128xf32>
    %62 = arith.addf %59, %61 : vector<256x128xf32>
    %cst_55 = arith.constant 0.000000e+00 : f32
    %63 = vector.broadcast %cst_55 : f32 to vector<256x128xf32>
    %64 = arith.maximumf %62, %63 : vector<256x128xf32>
    %65 = arith.truncf %64 : vector<256x128xf32> to vector<256x128xbf16>
    %c0_56 = arith.constant 0 : index
    %c0_57 = arith.constant 0 : index
    %66 = vector.load %arg7[%c0_56, %c0_57] : memref<128x128xbf16, #tpu.memory_space<vmem>>, vector<128x128xbf16>
    %cst_58 = arith.constant dense<0.000000e+00> : vector<256x128xf32>
    %67 = tpu.matmul %65, %66, %cst_58 {dimension_numbers = #tpu.dot_dimension_numbers<[1], [0], [0], [1], [0, 0, 1, 1], [], []>} : vector<256x128xbf16>, vector<128x128xbf16>, vector<256x128xf32> -> vector<256x128xf32>
    %c0_59 = arith.constant 0 : index
    %c0_60 = arith.constant 0 : index
    %68 = vector.load %arg8[%c0_59, %c0_60] : memref<1x128xf32, #tpu.memory_space<vmem>>, vector<1x128xf32>
    %69 = vector.broadcast %68 : vector<1x128xf32> to vector<256x128xf32>
    %70 = arith.addf %67, %69 : vector<256x128xf32>
    %71 = vector.shape_cast %70 : vector<256x128xf32> to vector<16x16x128xf32>
    %72 = vector.extract_strided_slice %17 {offsets = [1, 0, 0], sizes = [16, 16, 4], strides = [1, 1, 1]} : vector<18x16x128xbf16> to vector<16x16x4xbf16>
    %73 = arith.extf %72 : vector<16x16x4xbf16> to vector<16x16x4xf32>
    %74 = vector.extract_strided_slice %71 {offsets = [0, 0, 0], sizes = [16, 16, 4], strides = [1, 1, 1]} : vector<16x16x128xf32> to vector<16x16x4xf32>
    %75 = arith.addf %74, %73 : vector<16x16x4xf32>
    %cst_61 = arith.constant 0.000000e+00 : f32
    %76 = vector.broadcast %cst_61 : f32 to vector<16x16x4xf32>
    %77 = arith.maximumf %75, %76 : vector<16x16x4xf32>
    %78 = arith.truncf %77 : vector<16x16x4xf32> to vector<16x16x4xbf16>
    %c0_62 = arith.constant 0 : index
    %c0_63 = arith.constant 0 : index
    %c0_64 = arith.constant 0 : index
    %c0_65 = arith.constant 0 : index
    %79 = vector.load %arg9[%c0_62, %c0_63, %c0_64, %c0_65] : memref<1x16x16x4xbf16, #tpu.memory_space<vmem>>, vector<1x16x16x4xbf16>
    %80 = vector.shape_cast %79 : vector<1x16x16x4xbf16> to vector<16x16x4xbf16>
    %81 = vector.shape_cast %78 : vector<16x16x4xbf16> to vector<1x16x16x4xbf16>
    tpu.vector_store %arg9[%c0_62, %c0_63, %c0_64, %c0_65], %81 {strides = array<i32>} : memref<1x16x16x4xbf16, #tpu.memory_space<vmem>>, vector<1x16x16x4xbf16>,
    return
  }
  func.func @transform_1(%arg0: i32, %arg1: i32) -> (i32, i32) {
    %c0_i32 = arith.constant 0 : i32
    %c0_i32_0 = arith.constant 0 : i32
    %c0_i32_1 = arith.constant 0 : i32
    return %c0_i32, %c0_i32_0 : i32, i32
  }
  func.func @transform_2(%arg0: i32, %arg1: i32) -> (i32, i32) {
    %c0_i32 = arith.constant 0 : i32
    %c0_i32_0 = arith.constant 0 : i32
    %c0_i32_1 = arith.constant 0 : i32
    return %c0_i32, %c0_i32_0 : i32, i32
  }
  func.func @transform_3(%arg0: i32, %arg1: i32) -> (i32, i32, i32) {
    %c0_i32 = arith.constant 0 : i32
    %c0_i32_0 = arith.constant 0 : i32
    %c0_i32_1 = arith.constant 0 : i32
    %c0_i32_2 = arith.constant 0 : i32
    return %c0_i32, %c0_i32_0, %c0_i32_1 : i32, i32, i32
  }
  func.func @transform_4(%arg0: i32, %arg1: i32) -> (i32, i32) {
    %c0_i32 = arith.constant 0 : i32
    %c0_i32_0 = arith.constant 0 : i32
    %c0_i32_1 = arith.constant 0 : i32
    return %c0_i32, %c0_i32_0 : i32, i32
  }
  func.func @transform_5(%arg0: i32, %arg1: i32) -> (i32, i32) {
    %c0_i32 = arith.constant 0 : i32
    %c0_i32_0 = arith.constant 0 : i32
    %c0_i32_1 = arith.constant 0 : i32
    return %c0_i32, %c0_i32_0 : i32, i32
  }
  func.func @transform_6(%arg0: i32, %arg1: i32) -> (i32, i32) {
    %c0_i32 = arith.constant 0 : i32
    %c0_i32_0 = arith.constant 0 : i32
    %c0_i32_1 = arith.constant 0 : i32
    return %c0_i32, %c0_i32_0 : i32, i32
  }
  func.func @transform_7(%arg0: i32, %arg1: i32) -> (i32, i32, i32, i32) {
    %c0_i32 = arith.constant 0 : i32
    %c0_i32_0 = arith.constant 0 : i32
    %c0_i32_1 = arith.constant 0 : i32
    return %arg0, %arg1, %c0_i32, %c0_i32_0 : i32, i32, i32, i32
  }
}

</mosaic_0001>

<llo_original>
// kernel: tpu_custom_call.1
$region0: #{tpu_custom_call.1}
  #allocation0 [shape = 'u32[]', space=smem, size = 0x4, offset = 0x4, fixed_abs, tag = 'smem constant byte address 0x4 - core index']
  #allocation1 [shape = 'u32[144,128]{1,0:T(1,128)}', space=vmem, size = 0x12000, scoped, tag = 'internal scratch']
  #allocation2 [shape = 'bf16[2,18,16,128]{3,2,1,0:T(16,128)(2,1)}', space=vmem, size = 0x24000, scoped, tag = 'scratch operand']
  #allocation3 [shape = 's32[2]{0}', space=sflag, size = 0x8, scoped, tag = 'scratch operand']
  #allocation4 [shape = 'bf16[18,16,384]{2,1,0:T(16,128)(2,1)}', space=vmem, size = 0x36000, scoped, tag = 'scratch operand']
  #allocation10 [shape = 's32[]', space=sflag, size = 0x4, offset = 0, fixed_abs, tag = 'sflag constant byte address 0x0 - dummy sync flag']
  #allocation11 [shape = 's32[]', space=sflag, size = 0x4, offset = 0, fixed_abs, tag = 'sflag constant byte address 0x0 - dummy sync flag']
  #allocation12 [shape = 'u32[]', space=smem, size = 0x4, offset = 0x44, fixed_abs, tag = 'smem constant byte address 0x44 - assertion arg 0']
  #allocation13 [shape = 'u32[]', space=smem, size = 0x4, offset = 0x48, fixed_abs, tag = 'smem constant byte address 0x48 - assertion arg 1']
  #allocation14 [shape = 's32[]', space=sflag, size = 0x4, offset = 0, fixed_abs, tag = 'sflag constant byte address 0x0 - dummy sync flag']
  #allocation15 [shape = 's32[]', space=sflag, size = 0x4, offset = 0, fixed_abs, tag = 'sflag constant byte address 0x0 - dummy sync flag']
  %s0 = inlined_call_operand.hbm [shape: bf16[2,18,16,128], index: 0, kind: input, shape index: {}]
  %s1 = inlined_call_operand.hbm [shape: bf16[128,128], index: 1, kind: input, shape index: {}]
  %s2 = inlined_call_operand.vmem [shape: f32[1,128], index: 2, kind: input, shape index: {}]
  %s3 = inlined_call_operand.hbm [shape: bf16[3,384,128], index: 3, kind: input, shape index: {}]
  %s4 = inlined_call_operand.vmem [shape: f32[1,128], index: 4, kind: input, shape index: {}]
  %s5 = inlined_call_operand.hbm [shape: bf16[128,128], index: 5, kind: input, shape index: {}]
  %s6 = inlined_call_operand.vmem [shape: f32[1,128], index: 6, kind: input, shape index: {}]
  %s7 = inlined_call_operand.vmem [shape: bf16[2,16,16,4], index: 7, kind: output, shape index: {}]
  %s8 = sld [smem:[#allocation0]]
  $region89: #{tpu_custom_call.1} parent=0
    _
  %s10 = ssub.s32 1, %s8
  %s11 = scalar_select 0, %s10, %s8
  $region1: #{tpu_custom_call.1} parent=0
    #allocation5 [shape = 'u8[32768]{0}', space=vmem, size = 0x8000, scoped, tag = 'input window, operand 1, single buffered']
    #allocation6 [shape = 's32[2]{0}', space=sflag, size = 0x8, scoped, tag = 'scoped memory for tpu_custom_call.1']
    #allocation7 [shape = 'u8[294912]{0}', space=vmem, size = 0x48000, scoped, tag = 'input window, operand 3, single buffered']
    #allocation8 [shape = 's32[1]{0}', space=sflag, size = 0x4, scoped, tag = 'scoped memory for tpu_custom_call.1']
    #allocation9 [shape = 'u8[32768]{0}', space=vmem, size = 0x8000, scoped, tag = 'input window, operand 5, single buffered']
    %12 = vsyncpa [#allocation6], 0
    %13 = vsyncpa [#allocation8], 0
    loop: start=0, step=1, limit=4
    $region2: #{tpu_custom_call.1} parent=1 // loop_pre_header
      _
    $region3: #{tpu_custom_call.1} parent=1 // loop_header
      %s15 = sphi 0, %s19
      %p16 = scmp.ge.s32.totalorder %s15, 4
      %s22 = sphi 0, %s34
      %s23 = sphi 0, %s30
      %s24 = sphi 0, %s22
      %s25 = sphi 0, %s23
      %s26 = sphi 0, %s24
      %s27 = sphi 0, %s25
      %s35 = sphi 0, %s35
      %s37 = sphi 0, %s35
      %s38 = sphi 0, %s37
      %s52 = sphi 0, %s38
      %s56 = sphi 0, %s56
      %s58 = sphi 0, %s56
      %s59 = sphi 0, %s58
      %s73 = sphi 0, %s59
      %s77 = sphi 0, %s77
      %s79 = sphi 0, %s77
      %s80 = sphi 0, %s79
      %s94 = sphi 0, %s80
      %s98 = sphi 0, %s98
      %s100 = sphi 0, %s98
      %s101 = sphi 0, %s100
      %s115 = sphi 0, %s101
      %s119 = sphi 0, %s119
      %s121 = sphi 0, %s119
      %s122 = sphi 0, %s121
      %s136 = sphi 0, %s122
      %s140 = sphi 0, %s140
      %s142 = sphi 0, %s140
      %s143 = sphi 0, %s142
      %s157 = sphi 0, %s143
      %s165 = sphi 0, %s167
      %s168 = sphi 0, %s165
      %s169 = sphi 0, %s168
      %s185 = sphi 0, %s169
    $region4: #{tpu_custom_call.1} parent=1 // loop_header_branch
      %18 = sbr.rel (%p16) target = $region8
    $region5: #{tpu_custom_call.1} parent=1 // loop_body
      %s20 = ssub.s32 %s15, 1
      %s21 = ssub.s32 %s15, 2
      %s28 = sadd.s32 1, %s23
      %p29 = scmp.ge.s32.totalorder %s28, 1
      %s30 = scalar_select %p29, 0, %s28
      %s31 = sadd.s32 1, %s22
      %s32 = scalar_select %p29, %s31, %s22
      %p33 = scmp.ge.s32.totalorder %s32, 2
      %s34 = scalar_select %p33, 0, %s32
      %s36 = sadd.s32 %s35, 1
      %p39 = scmp.eq.s32.totalorder %s15, 1
      %p40 = scmp.ne.s32.totalorder %s35, %s37
      %p41 = scmp.eq.s32.totalorder %s15, 0
      %p42 = por %p40, %p41
      %p43 = scmp.ne.s32.totalorder %s35, %s37
      %p44 = scmp.eq.s32.totalorder %s20, 1
      %p45 = por %p43, %p44
      %p46 = scmp.ne.s32.totalorder %s37, %s38
      %p47 = scmp.eq.s32.totalorder %s20, 0
      %p48 = por %p46, %p47
      %p49 = scmp.ne.s32.totalorder %s37, %s38
      %p50 = scmp.eq.s32.totalorder %s21, 1
      %p51 = por %p49, %p50
      %p53 = scmp.ne.s32.totalorder %s38, %s52
      %p54 = scmp.eq.s32.totalorder %s21, 0
      %p55 = por %p53, %p54
      %s57 = sadd.s32 %s56, 1
      %p60 = scmp.eq.s32.totalorder %s15, 1
      %p61 = scmp.ne.s32.totalorder %s56, %s58
      %p62 = scmp.eq.s32.totalorder %s15, 0
      %p63 = por %p61, %p62
      %p64 = scmp.ne.s32.totalorder %s56, %s58
      %p65 = scmp.eq.s32.totalorder %s20, 1
      %p66 = por %p64, %p65
      %p67 = scmp.ne.s32.totalorder %s58, %s59
      %p68 = scmp.eq.s32.totalorder %s20, 0
      %p69 = por %p67, %p68
      %p70 = scmp.ne.s32.totalorder %s58, %s59
      %p71 = scmp.eq.s32.totalorder %s21, 1
      %p72 = por %p70, %p71
      %p74 = scmp.ne.s32.totalorder %s59, %s73
      %p75 = scmp.eq.s32.totalorder %s21, 0
      %p76 = por %p74, %p75
      %s78 = sadd.s32 %s77, 1
      %p81 = scmp.eq.s32.totalorder %s15, 1
      %p82 = scmp.ne.s32.totalorder %s77, %s79
      %p83 = scmp.eq.s32.totalorder %s15, 0
      %p84 = por %p82, %p83
      %p85 = scmp.ne.s32.totalorder %s77, %s79
      %p86 = scmp.eq.s32.totalorder %s20, 1
      %p87 = por %p85, %p86
      %p88 = scmp.ne.s32.totalorder %s79, %s80
      %p89 = scmp.eq.s32.totalorder %s20, 0
      %p90 = por %p88, %p89
      %p91 = scmp.ne.s32.totalorder %s79, %s80
      %p92 = scmp.eq.s32.totalorder %s21, 1
      %p93 = por %p91, %p92
      %p95 = scmp.ne.s32.totalorder %s80, %s94
      %p96 = scmp.eq.s32.totalorder %s21, 0
      %p97 = por %p95, %p96
      %s99 = sadd.s32 %s98, 1
      %p102 = scmp.eq.s32.totalorder %s15, 1
      %p103 = scmp.ne.s32.totalorder %s98, %s100
      %p104 = scmp.eq.s32.totalorder %s15, 0
      %p105 = por %p103, %p104
      %p106 = scmp.ne.s32.totalorder %s98, %s100
      %p107 = scmp.eq.s32.totalorder %s20, 1
      %p108 = por %p106, %p107
      %p109 = scmp.ne.s32.totalorder %s100, %s101
      %p110 = scmp.eq.s32.totalorder %s20, 0
      %p111 = por %p109, %p110
      %p112 = scmp.ne.s32.totalorder %s100, %s101
      %p113 = scmp.eq.s32.totalorder %s21, 1
      %p114 = por %p112, %p113
      %p116 = scmp.ne.s32.totalorder %s101, %s115
      %p117 = scmp.eq.s32.totalorder %s21, 0
      %p118 = por %p116, %p117
      %s120 = sadd.s32 %s119, 1
      %p123 = scmp.eq.s32.totalorder %s15, 1
      %p124 = scmp.ne.s32.totalorder %s119, %s121
      %p125 = scmp.eq.s32.totalorder %s15, 0
      %p126 = por %p124, %p125
      %p127 = scmp.ne.s32.totalorder %s119, %s121
      %p128 = scmp.eq.s32.totalorder %s20, 1
      %p129 = por %p127, %p128
      %p130 = scmp.ne.s32.totalorder %s121, %s122
      %p131 = scmp.eq.s32.totalorder %s20, 0
      %p132 = por %p130, %p131
      %p133 = scmp.ne.s32.totalorder %s121, %s122
      %p134 = scmp.eq.s32.totalorder %s21, 1
      %p135 = por %p133, %p134
      %p137 = scmp.ne.s32.totalorder %s122, %s136
      %p138 = scmp.eq.s32.totalorder %s21, 0
      %p139 = por %p137, %p138
      %s141 = sadd.s32 %s140, 1
      %p144 = scmp.eq.s32.totalorder %s15, 1
      %p145 = scmp.ne.s32.totalorder %s140, %s142
      %p146 = scmp.eq.s32.totalorder %s15, 0
      %p147 = por %p145, %p146
      %p148 = scmp.ne.s32.totalorder %s140, %s142
      %p149 = scmp.eq.s32.totalorder %s20, 1
      %p150 = por %p148, %p149
      %p151 = scmp.ne.s32.totalorder %s142, %s143
      %p152 = scmp.eq.s32.totalorder %s20, 0
      %p153 = por %p151, %p152
      %p154 = scmp.ne.s32.totalorder %s142, %s143
      %p155 = scmp.eq.s32.totalorder %s21, 1
      %p156 = por %p154, %p155
      %p158 = scmp.ne.s32.totalorder %s143, %s157
      %p159 = scmp.eq.s32.totalorder %s21, 0
      %p160 = por %p158, %p159
      %s161 = ssub.s32 %s22, %s34
      %s162 = ssub.s32 %s23, %s30
      %s163 = sor.u32 %s161, %s162
      %p164 = scmp.eq.s32.totalorder %s163, 0
      %s166 = sadd.s32 %s165, 1
      %s167 = scalar_select %p164, %s165, %s166
      %p170 = pneg %p164
      %p171 = scmp.eq.s32.totalorder %s15, 1
      %p172 = por %p170, %p171
      %p173 = scmp.ne.s32.totalorder %s165, %s168
      %p174 = scmp.eq.s32.totalorder %s15, 0
      %p175 = por %p173, %p174
      %p176 = scmp.ne.s32.totalorder %s165, %s168
      %p177 = scmp.eq.s32.totalorder %s20, 1
      %p178 = por %p176, %p177
      %p179 = scmp.ne.s32.totalorder %s168, %s169
      %p180 = scmp.eq.s32.totalorder %s20, 0
      %p181 = por %p179, %p180
      %p182 = scmp.ne.s32.totalorder %s168, %s169
      %p183 = scmp.eq.s32.totalorder %s21, 1
      %p184 = por %p182, %p183
      %p186 = scmp.ne.s32.totalorder %s169, %s185
      %p187 = scmp.eq.s32.totalorder %s21, 0
      %p188 = por %p186, %p187
      %p189 = scmp.le.s32.totalorder 1, %s15
      %p190 = scmp.lt.s32.totalorder %s15, 3
      %p191 = pnand %p189, %p190
      %p192 = pneg %p191
      // Predicated region
      $region9: #{tpu_custom_call.1} parent=5 // pred_check
        _
      $region10: #{tpu_custom_call.1} parent=5 // pred_check_branch
        %194 = sbr.rel (%p191) target = $region12
      $region11: #{tpu_custom_call.1} parent=5 // pred_region
        %s195 = ssub.s32 %s15, 1
        // Predicated region
        $region13: #{tpu_custom_call.1} parent=11 // pred_check
          %p196 = pneg %p48
        $region14: #{tpu_custom_call.1} parent=11 // pred_check_branch
          %198 = sbr.rel (%p196) target = $region16
        $region15: #{tpu_custom_call.1} parent=11 // pred_region
          %s200 = ssub.s32 1024, 1024
          %201 = vsyncadd [#allocation6], %s200
          %s202 = sshll.u32 [#allocation5], 4
          %s203 = int_to_ptr.vmem [resolvable:$true] %s202
          %208 = dma.hbm_to_vmem [thread:$0]  %s1, 1024, %s203, [#allocation6], 64, 64, 4
        $region16: #{tpu_custom_call.1} parent=11 // pred_fallthru
          _
        // Predicated region
        $region17: #{tpu_custom_call.1} parent=11 // pred_check
          %p209 = pneg %p69
        $region18: #{tpu_custom_call.1} parent=11 // pred_check_branch
          %211 = sbr.rel (%p209) target = $region20
        $region19: #{tpu_custom_call.1} parent=11 // pred_region
          _
        $region20: #{tpu_custom_call.1} parent=11 // pred_fallthru
          _
        // Predicated region
        $region21: #{tpu_custom_call.1} parent=11 // pred_check
          %p212 = pneg %p90
        $region22: #{tpu_custom_call.1} parent=11 // pred_check_branch
          %214 = sbr.rel (%p212) target = $region24
        $region23: #{tpu_custom_call.1} parent=11 // pred_region
          %s216 = ssub.s32 9216, 9216
          %217 = vsyncadd [#allocation8], %s216
          %s218 = sshll.u32 [#allocation7], 4
          %s219 = int_to_ptr.vmem [resolvable:$true] %s218
          %224 = dma.hbm_to_vmem [thread:$0]  %s3, 9216, %s219, [#allocation8], 64, 64, 4
        $region24: #{tpu_custom_call.1} parent=11 // pred_fallthru
          _
        // Predicated region
        $region25: #{tpu_custom_call.1} parent=11 // pred_check
          %p225 = pneg %p111
        $region26: #{tpu_custom_call.1} parent=11 // pred_check_branch
          %227 = sbr.rel (%p225) target = $region28
        $region27: #{tpu_custom_call.1} parent=11 // pred_region
          _
        $region28: #{tpu_custom_call.1} parent=11 // pred_fallthru
          _
        // Predicated region
        $region29: #{tpu_custom_call.1} parent=11 // pred_check
          %p228 = pneg %p132
        $region30: #{tpu_custom_call.1} parent=11 // pred_check_branch
          %230 = sbr.rel (%p228) target = $region32
        $region31: #{tpu_custom_call.1} parent=11 // pred_region
          %s232 = ssub.s32 1024, 1024
          %233 = vsyncadd [#allocation8], %s232
          %s234 = sshll.u32 [#allocation9], 4
          %s235 = int_to_ptr.vmem [resolvable:$true] %s234
          %240 = dma.hbm_to_vmem [thread:$0]  %s5, 1024, %s235, [#allocation8], 64, 64, 4
        $region32: #{tpu_custom_call.1} parent=11 // pred_fallthru
          _
        // Predicated region
        $region33: #{tpu_custom_call.1} parent=11 // pred_check
          %p241 = pneg %p153
        $region34: #{tpu_custom_call.1} parent=11 // pred_check_branch
          %243 = sbr.rel (%p241) target = $region36
        $region35: #{tpu_custom_call.1} parent=11 // pred_region
          _
        $region36: #{tpu_custom_call.1} parent=11 // pred_fallthru
          _
      $region12: #{tpu_custom_call.1} parent=5 // pred_fallthru
        _
      %p244 = scmp.lt.s32.totalorder %s15, 2
      // Predicated region
      $region37: #{tpu_custom_call.1} parent=5 // pred_check
        %p245 = pneg %p244
      $region38: #{tpu_custom_call.1} parent=5 // pred_check_branch
        %247 = sbr.rel (%p245) target = $region40
      $region39: #{tpu_custom_call.1} parent=5 // pred_region
        _
      $region40: #{tpu_custom_call.1} parent=5 // pred_fallthru
        _
      %p248 = scmp.le.s32.totalorder 1, %s15
      %p249 = scmp.lt.s32.totalorder %s15, 3
      %p250 = pnand %p248, %p249
      %p251 = pneg %p250
      // Predicated region
      $region41: #{tpu_custom_call.1} parent=5 // pred_check
        _
      $region42: #{tpu_custom_call.1} parent=5 // pred_check_branch
        %253 = sbr.rel (%p250) target = $region44
      $region43: #{tpu_custom_call.1} parent=5 // pred_region
        %s254 = ssub.s32 %s15, 1
        // Predicated region
        $region45: #{tpu_custom_call.1} parent=43 // pred_check
          %p255 = pneg %p48
        $region46: #{tpu_custom_call.1} parent=43 // pred_check_branch
          %257 = sbr.rel (%p255) target = $region48
        $region47: #{tpu_custom_call.1} parent=43 // pred_region
          %258 = dma.done [#allocation6], 1024
        $region48: #{tpu_custom_call.1} parent=43 // pred_fallthru
          _
        // Predicated region
        $region49: #{tpu_custom_call.1} parent=43 // pred_check
          %p259 = pneg %p90
        $region50: #{tpu_custom_call.1} parent=43 // pred_check_branch
          %261 = sbr.rel (%p259) target = $region52
        $region51: #{tpu_custom_call.1} parent=43 // pred_region
          %262 = dma.done [#allocation8], 9216
        $region52: #{tpu_custom_call.1} parent=43 // pred_fallthru
          _
        // Predicated region
        $region53: #{tpu_custom_call.1} parent=43 // pred_check
          %p263 = pneg %p132
        $region54: #{tpu_custom_call.1} parent=43 // pred_check_branch
          %265 = sbr.rel (%p263) target = $region56
        $region55: #{tpu_custom_call.1} parent=43 // pred_region
          %266 = dma.done [#allocation8], 1024
        $region56: #{tpu_custom_call.1} parent=43 // pred_fallthru
          _
        %p267 = pneg %p48
        %p268 = pneg %p45
        %p269 = pneg %p69
        %p270 = pneg %p66
        %p271 = pneg %p90
        %p272 = pneg %p87
        %p273 = pneg %p111
        %p274 = pneg %p108
        %p275 = pneg %p132
        %p276 = pneg %p129
        %p277 = pneg %p153
        %p278 = pneg %p150
        %p279 = pneg %p181
        %p280 = pneg %p178
        %s281 = smul.u32 16, %s25
        %p282 = scmp.lt.s32.totalorder %s24, 1
        %s283 = scalar_select %p282, %s24, 1
        %p284 = scmp.lt.s32.totalorder %s281, 15
        %s285 = scalar_select %p284, %s281, 15
        %s286 = smul.addr %s285, 2
        %s287 = smul.addr %s283, 32
        %s288 = sadd.s32 %s286, %s287
        %s289 = smul.addr %s288, 4
        %s290 = scalar_lea.vmem %s7, %s289
        %s291 = smul.u32 16, %s25
        %p292 = scmp.lt.s32.totalorder %s24, 1
        %s293 = scalar_select %p292, %s24, 1
        %p294 = scmp.lt.s32.totalorder %s291, 15
        %s295 = scalar_select %p294, %s291, 15
        %s296 = smul.addr %s295, 2
        %s297 = smul.addr %s293, 32
        %s298 = sadd.s32 %s296, %s297
        %s299 = smul.addr %s298, 4
        %s300 = scalar_lea.vmem %s7, %s299
        %s301 = smul.u32 16, %s25
        %s303 = sand.u32 %s25, 1
        %p304 = scmp.eq.s32.totalorder %s25, 0
        // Predicated region
        $region57: #{tpu_custom_call.1} parent=43 // pred_check
          %p305 = pneg %p304
        $region58: #{tpu_custom_call.1} parent=43 // pred_check_branch
          %307 = sbr.rel (%p305) target = $region60
        $region59: #{tpu_custom_call.1} parent=43 // pred_region
          %s308 = smul.u32 %s24, 36
          %s309 = smul.addr %s308, 64
          %s310 = scalar_lea.hbm %s0, %s309
          // Predicated region
          $region61: #{tpu_custom_call.1} parent=59 // pred_check
            _
          $region62: #{tpu_custom_call.1} parent=59 // pred_check_branch
            %312 = sbr.rel target = $region64
          $region63: #{tpu_custom_call.1} parent=59 // pred_region
            %313 = sst [smem:[#allocation12]] [#allocation11]
            %314 = sst [smem:[#allocation13]] [#allocation10]
          $region64: #{tpu_custom_call.1} parent=59 // pred_fallthru
            _
          %316 = shalt.err (0)
          %s318 = sshll.u32 [#allocation2], 4
          %s319 = int_to_ptr.vmem [resolvable:$true] %s318
          %321 = dma.hbm_to_vmem [thread:$0]  %s310, 2304, %s319, [#allocation3]
        $region60: #{tpu_custom_call.1} parent=43 // pred_fallthru
          _
        %s322 = smul.u32 %s303, 18
        %s323 = smul.addr %s322, 8
        %s324 = scalar_lea.vmem [#allocation2], %s323
        %s325 = scalar_lea.sflag [#allocation3], %s303
        %s326 = smul.u32 4, 18
        %s327 = smul.u32 %s326, 2
        %s328 = smul.u32 %s327, 1
        %s329 = sshll.u32 %s328, 4
        %330 = dma.done %s325, %s329
        %s331 = sadd.s32 %s25, 1
        %p332 = scmp.lt.s32.totalorder %s331, 1
        // Predicated region
        $region65: #{tpu_custom_call.1} parent=43 // pred_check
          %p333 = pneg %p332
        $region66: #{tpu_custom_call.1} parent=43 // pred_check_branch
          %335 = sbr.rel (%p333) target = $region68
        $region67: #{tpu_custom_call.1} parent=43 // pred_region
          %s336 = ssub.s32 1, %s303
          %s337 = smul.u32 %s331, 16
          %s338 = smul.u32 %s337, 2
          %s339 = smul.u32 %s24, 36
          %s340 = sadd.s32 %s338, %s339
          %s341 = smul.addr %s340, 64
          %s342 = scalar_lea.hbm %s0, %s341
          %s343 = smul.u32 %s336, 18
          %s344 = smul.addr %s343, 8
          %s345 = scalar_lea.vmem [#allocation2], %s344
          %s346 = scalar_lea.sflag [#allocation3], %s336
          // Predicated region
          $region69: #{tpu_custom_call.1} parent=67 // pred_check
            _
          $region70: #{tpu_custom_call.1} parent=67 // pred_check_branch
            %348 = sbr.rel target = $region72
          $region71: #{tpu_custom_call.1} parent=67 // pred_region
            %349 = sst [smem:[#allocation12]] [#allocation15]
            %350 = sst [smem:[#allocation13]] [#allocation14]
          $region72: #{tpu_custom_call.1} parent=67 // pred_fallthru
            _
          %352 = shalt.err (0)
          %s354 = sshll.u32 %s345, 4
          %s355 = int_to_ptr.vmem [resolvable:$true] %s354
          %357 = dma.hbm_to_vmem [thread:$0]  %s342, 2304, %s355, %s346
        $region68: #{tpu_custom_call.1} parent=43 // pred_fallthru
          _
        %v358 = vld [vmem:[%s324] sm:$0xff]
        %v359 = vld [vmem:[%s324 + $0x8] sm:$0xff]
        %v360 = vld [vmem:[%s324 + $0x10] sm:$0xff]
        %v361 = vld [vmem:[%s324 + $0x18] sm:$0xff]
        %v362 = vld [vmem:[%s324 + $0x20] sm:$0xff]
        %v363 = vld [vmem:[%s324 + $0x28] sm:$0xff]
        %v364 = vld [vmem:[%s324 + $0x30] sm:$0xff]
        %v365 = vld [vmem:[%s324 + $0x38] sm:$0xff]
        %v366 = vld [vmem:[%s324 + $0x40] sm:$0xff]
        %v367 = vld [vmem:[%s324 + $0x48] sm:$0xff]
        %v368 = vld [vmem:[%s324 + $0x50] sm:$0xff]
        %v369 = vld [vmem:[%s324 + $0x58] sm:$0xff]
        %v370 = vld [vmem:[%s324 + $0x60] sm:$0xff]
        %v371 = vld [vmem:[%s324 + $0x68] sm:$0xff]
        %v372 = vld [vmem:[%s324 + $0x70] sm:$0xff]
        %v373 = vld [vmem:[%s324 + $0x78] sm:$0xff]
        %v374 = vld [vmem:[%s324 + $0x80] sm:$0xff]
        %v375 = vld [vmem:[%s324 + $0x88] sm:$0xff]
        %v376 = vld [vmem:[#allocation5] sm:$0xf]
        %v377 = vld [vmem:[#allocation5 + $0x4] sm:$0xf]
        %v378 = vld [vmem:[#allocation5 + $0x8] sm:$0xf]
        %v379 = vld [vmem:[#allocation5 + $0xc] sm:$0xf]
        %v380 = vld [vmem:[#allocation5 + $0x10] sm:$0xf]
        %v381 = vld [vmem:[#allocation5 + $0x14] sm:$0xf]
        %v382 = vld [vmem:[#allocation5 + $0x18] sm:$0xf]
        %v383 = vld [vmem:[#allocation5 + $0x1c] sm:$0xf]
        %v384 = vld [vmem:[#allocation5 + $0x20] sm:$0xf]
        %v385 = vld [vmem:[#allocation5 + $0x24] sm:$0xf]
        %v386 = vld [vmem:[#allocation5 + $0x28] sm:$0xf]
        %v387 = vld [vmem:[#allocation5 + $0x2c] sm:$0xf]
        %v388 = vld [vmem:[#allocation5 + $0x30] sm:$0xf]
        %v389 = vld [vmem:[#allocation5 + $0x34] sm:$0xf]
        %v390 = vld [vmem:[#allocation5 + $0x38] sm:$0xf]
        %v391 = vld [vmem:[#allocation5 + $0x3c] sm:$0xf]
        %v392 = vld [vmem:[%s2] sm:$0x1]
        %v394 = vlaneseq
        %v395 = vshrl.u32 %v394, 7
        %v396 = vsub.s32 0, %v395
        %v397 = vrot.slane %v392, %v396
        %v415 = vunpack.c.l.b16 %v376
        %v416 = vunpack.c.l.b16 %v377
        %v417 = vunpack.c.l.b16 %v378
        %v418 = vunpack.c.l.b16 %v379
        %v419 = vunpack.c.l.b16 %v380
        %v420 = vunpack.c.l.b16 %v381
        %v421 = vunpack.c.l.b16 %v382
        %v422 = vunpack.c.l.b16 %v383
        %v423 = vunpack.c.l.b16 %v384
        %v424 = vunpack.c.l.b16 %v385
        %v425 = vunpack.c.l.b16 %v386
        %v426 = vunpack.c.l.b16 %v387
        %v427 = vunpack.c.l.b16 %v388
        %v428 = vunpack.c.l.b16 %v389
        %v429 = vunpack.c.l.b16 %v390
        %v430 = vunpack.c.l.b16 %v391
        %v431 = vpack.c.b16 %v416, %v415
        %v432 = vpack.c.b16 %v418, %v417
        %v433 = vpack.c.b16 %v420, %v419
        %v434 = vpack.c.b16 %v422, %v421
        %v435 = vpack.c.b16 %v424, %v423
        %v436 = vpack.c.b16 %v426, %v425
        %v437 = vpack.c.b16 %v428, %v427
        %v438 = vpack.c.b16 %v430, %v429
        %447 = vmatprep.subr.bf16.mxu0 0
        %448 = vmatpush1.bf16.msra.mxu0 %v431
        %449 = vmatprep.subr.bf16.mxu0 0
        %450 = vmatpush1.bf16.msra.mxu0 %v432
        %451 = vmatprep.subr.bf16.mxu0 0
        %452 = vmatpush1.bf16.msra.mxu0 %v433
        %453 = vmatprep.subr.bf16.mxu0 0
        %454 = vmatpush1.bf16.msra.mxu0 %v434
        %455 = vmatprep.subr.bf16.mxu0 0
        %456 = vmatpush1.bf16.msra.mxu0 %v435
        %457 = vmatprep.subr.bf16.mxu0 0
        %458 = vmatpush1.bf16.msra.mxu0 %v436
        %459 = vmatprep.subr.bf16.mxu0 0
        %460 = vmatpush1.bf16.msra.mxu0 %v437
        %461 = vmatprep.subr.bf16.mxu0 0
        %462 = vmatpush1.bf16.msra.mxu0 %v438
        %463 = vmatprep.subr.bf16.mxu0 0
        %464 = vmatpush1.bf16.msra.mxu0 0
        %465 = vmatprep.subr.bf16.mxu0 0
        %466 = vmatpush1.bf16.msra.mxu0 0
        %467 = vmatprep.subr.bf16.mxu0 0
        %468 = vmatpush1.bf16.msra.mxu0 0
        %469 = vmatprep.subr.bf16.mxu0 0
        %470 = vmatpush1.bf16.msra.mxu0 0
        %471 = vmatprep.subr.bf16.mxu0 0
        %472 = vmatpush1.bf16.msra.mxu0 0
        %473 = vmatprep.subr.bf16.mxu0 0
        %474 = vmatpush1.bf16.msra.mxu0 0
        %475 = vmatprep.subr.bf16.mxu0 0
        %476 = vmatpush1.bf16.msra.mxu0 0
        %477 = vmatprep.subr.bf16.mxu0 0
        %478 = vmatpush1.bf16.msra.mxu0 0
        %479 = vmatprep.mubr.bf16.mxu0 0
        %480 = vmatmul.mubr.bf16.gmra.mrb[0].mxu0 %v358
        %v481 = vpop.f32.mrb[0].mxu0
        %v482 = vadd.f32 %v397, %v481
        %v483 = vpop.f32.mrb[0].mxu0
        %v484 = vpop.f32.mrb[0].mxu0
        %v485 = vadd.f32 %v397, %v484
        %v486 = vpop.f32.mrb[0].mxu0
        %487 = vmatprep.mubr.bf16.mxu0 0
        %488 = vmatmul.mubr.bf16.gmra.mrb[0].mxu0 %v359
        %v489 = vpop.f32.mrb[0].mxu0
        %v490 = vadd.f32 %v397, %v489
        %v491 = vpop.f32.mrb[0].mxu0
        %v492 = vpop.f32.mrb[0].mxu0
        %v493 = vadd.f32 %v397, %v492
        %v494 = vpop.f32.mrb[0].mxu0
        %495 = vmatprep.mubr.bf16.mxu0 0
        %496 = vmatmul.mubr.bf16.gmra.mrb[0].mxu0 %v360
        %v497 = vpop.f32.mrb[0].mxu0
        %v498 = vadd.f32 %v397, %v497
        %v499 = vpop.f32.mrb[0].mxu0
        %v500 = vpop.f32.mrb[0].mxu0
        %v501 = vadd.f32 %v397, %v500
        %v502 = vpop.f32.mrb[0].mxu0
        %503 = vmatprep.mubr.bf16.mxu0 0
        %504 = vmatmul.mubr.bf16.gmra.mrb[0].mxu0 %v361
        %v505 = vpop.f32.mrb[0].mxu0
        %v506 = vadd.f32 %v397, %v505
        %v507 = vpop.f32.mrb[0].mxu0
        %v508 = vpop.f32.mrb[0].mxu0
        %v509 = vadd.f32 %v397, %v508
        %v510 = vpop.f32.mrb[0].mxu0
        %511 = vmatprep.mubr.bf16.mxu0 0
        %512 = vmatmul.mubr.bf16.gmra.mrb[0].mxu0 %v362
        %v513 = vpop.f32.mrb[0].mxu0
        %v514 = vadd.f32 %v397, %v513
        %v515 = vpop.f32.mrb[0].mxu0
        %v516 = vpop.f32.mrb[0].mxu0
        %v517 = vadd.f32 %v397, %v516
        %v518 = vpop.f32.mrb[0].mxu0
        %519 = vmatprep.mubr.bf16.mxu0 0
        %520 = vmatmul.mubr.bf16.gmra.mrb[0].mxu0 %v363
        %v521 = vpop.f32.mrb[0].mxu0
        %v522 = vadd.f32 %v397, %v521
        %v523 = vpop.f32.mrb[0].mxu0
        %v524 = vpop.f32.mrb[0].mxu0
        %v525 = vadd.f32 %v397, %v524
        %v526 = vpop.f32.mrb[0].mxu0
        %527 = vmatprep.mubr.bf16.mxu0 0
        %528 = vmatmul.mubr.bf16.gmra.mrb[0].mxu0 %v364
        %v529 = vpop.f32.mrb[0].mxu0
        %v530 = vadd.f32 %v397, %v529
        %v531 = vpop.f32.mrb[0].mxu0
        %v532 = vpop.f32.mrb[0].mxu0
        %v533 = vadd.f32 %v397, %v532
        %v534 = vpop.f32.mrb[0].mxu0
        %535 = vmatprep.mubr.bf16.mxu0 0
        %536 = vmatmul.mubr.bf16.gmra.mrb[0].mxu0 %v365
        %v537 = vpop.f32.mrb[0].mxu0
        %v538 = vadd.f32 %v397, %v537
        %v539 = vpop.f32.mrb[0].mxu0
        %v540 = vpop.f32.mrb[0].mxu0
        %v541 = vadd.f32 %v397, %v540
        %v542 = vpop.f32.mrb[0].mxu0
        %543 = vmatprep.mubr.bf16.mxu0 0
        %544 = vmatmul.mubr.bf16.gmra.mrb[0].mxu0 %v366
        %v545 = vpop.f32.mrb[0].mxu0
        %v546 = vadd.f32 %v397, %v545
        %v547 = vpop.f32.mrb[0].mxu0
        %v548 = vpop.f32.mrb[0].mxu0
        %v549 = vadd.f32 %v397, %v548
        %v550 = vpop.f32.mrb[0].mxu0
        %551 = vmatprep.mubr.bf16.mxu0 0
        %552 = vmatmul.mubr.bf16.gmra.mrb[0].mxu0 %v367
        %v553 = vpop.f32.mrb[0].mxu0
        %v554 = vadd.f32 %v397, %v553
        %v555 = vpop.f32.mrb[0].mxu0
        %v556 = vpop.f32.mrb[0].mxu0
        %v557 = vadd.f32 %v397, %v556
        %v558 = vpop.f32.mrb[0].mxu0
        %559 = vmatprep.mubr.bf16.mxu0 0
        %560 = vmatmul.mubr.bf16.gmra.mrb[0].mxu0 %v368
        %v561 = vpop.f32.mrb[0].mxu0
        %v562 = vadd.f32 %v397, %v561
        %v563 = vpop.f32.mrb[0].mxu0
        %v564 = vpop.f32.mrb[0].mxu0
        %v565 = vadd.f32 %v397, %v564
        %v566 = vpop.f32.mrb[0].mxu0
        %567 = vmatprep.mubr.bf16.mxu0 0
        %568 = vmatmul.mubr.bf16.gmra.mrb[0].mxu0 %v369
        %v569 = vpop.f32.mrb[0].mxu0
        %v570 = vadd.f32 %v397, %v569
        %v571 = vpop.f32.mrb[0].mxu0
        %v572 = vpop.f32.mrb[0].mxu0
        %v573 = vadd.f32 %v397, %v572
        %v574 = vpop.f32.mrb[0].mxu0
        %575 = vmatprep.mubr.bf16.mxu0 0
        %576 = vmatmul.mubr.bf16.gmra.mrb[0].mxu0 %v370
        %v577 = vpop.f32.mrb[0].mxu0
        %v578 = vadd.f32 %v397, %v577
        %v579 = vpop.f32.mrb[0].mxu0
        %v580 = vpop.f32.mrb[0].mxu0
        %v581 = vadd.f32 %v397, %v580
        %v582 = vpop.f32.mrb[0].mxu0
        %583 = vmatprep.mubr.bf16.mxu0 0
        %584 = vmatmul.mubr.bf16.gmra.mrb[0].mxu0 %v371
        %v585 = vpop.f32.mrb[0].mxu0
        %v586 = vadd.f32 %v397, %v585
        %v587 = vpop.f32.mrb[0].mxu0
        %v588 = vpop.f32.mrb[0].mxu0
        %v589 = vadd.f32 %v397, %v588
        %v590 = vpop.f32.mrb[0].mxu0
        %591 = vmatprep.mubr.bf16.mxu0 0
        %592 = vmatmul.mubr.bf16.gmra.mrb[0].mxu0 %v372
        %v593 = vpop.f32.mrb[0].mxu0
        %v594 = vadd.f32 %v397, %v593
        %v595 = vpop.f32.mrb[0].mxu0
        %v596 = vpop.f32.mrb[0].mxu0
        %v597 = vadd.f32 %v397, %v596
        %v598 = vpop.f32.mrb[0].mxu0
        %599 = vmatprep.mubr.bf16.mxu0 0
        %600 = vmatmul.mubr.bf16.gmra.mrb[0].mxu0 %v373
        %v601 = vpop.f32.mrb[0].mxu0
        %v602 = vadd.f32 %v397, %v601
        %v603 = vpop.f32.mrb[0].mxu0
        %v604 = vpop.f32.mrb[0].mxu0
        %v605 = vadd.f32 %v397, %v604
        %v606 = vpop.f32.mrb[0].mxu0
        %607 = vmatprep.mubr.bf16.mxu0 0
        %608 = vmatmul.mubr.bf16.gmra.mrb[0].mxu0 %v374
        %v609 = vpop.f32.mrb[0].mxu0
        %v610 = vadd.f32 %v397, %v609
        %v611 = vpop.f32.mrb[0].mxu0
        %v612 = vpop.f32.mrb[0].mxu0
        %v613 = vadd.f32 %v397, %v612
        %v614 = vpop.f32.mrb[0].mxu0
        %615 = vmatprep.mubr.bf16.mxu0 0
        %616 = vmatmul.mubr.bf16.gmra.mrb[0].mxu0 %v375
        %v617 = vpop.f32.mrb[0].mxu0
        %v618 = vadd.f32 %v397, %v617
        %v619 = vpop.f32.mrb[0].mxu0
        %v620 = vpop.f32.mrb[0].mxu0
        %v621 = vadd.f32 %v397, %v620
        %v622 = vpop.f32.mrb[0].mxu0
        %623 = vdwg.mxu0
        %v624 = vmax.f32 %v482, 0.0
        %v625 = vmax.f32 %v485, 0.0
        %v626 = vmax.f32 %v490, 0.0
        %v627 = vmax.f32 %v493, 0.0
        %v628 = vmax.f32 %v498, 0.0
        %v629 = vmax.f32 %v501, 0.0
        %v630 = vmax.f32 %v506, 0.0
        %v631 = vmax.f32 %v509, 0.0
        %v632 = vmax.f32 %v514, 0.0
        %v633 = vmax.f32 %v517, 0.0
        %v634 = vmax.f32 %v522, 0.0
        %v635 = vmax.f32 %v525, 0.0
        %v636 = vmax.f32 %v530, 0.0
        %v637 = vmax.f32 %v533, 0.0
        %v638 = vmax.f32 %v538, 0.0
        %v639 = vmax.f32 %v541, 0.0
        %v640 = vmax.f32 %v546, 0.0
        %v641 = vmax.f32 %v549, 0.0
        %v642 = vmax.f32 %v554, 0.0
        %v643 = vmax.f32 %v557, 0.0
        %v644 = vmax.f32 %v562, 0.0
        %v645 = vmax.f32 %v565, 0.0
        %v646 = vmax.f32 %v570, 0.0
        %v647 = vmax.f32 %v573, 0.0
        %v648 = vmax.f32 %v578, 0.0
        %v649 = vmax.f32 %v581, 0.0
        %v650 = vmax.f32 %v586, 0.0
        %v651 = vmax.f32 %v589, 0.0
        %v652 = vmax.f32 %v594, 0.0
        %v653 = vmax.f32 %v597, 0.0
        %v654 = vmax.f32 %v602, 0.0
        %v655 = vmax.f32 %v605, 0.0
        %v656 = vmax.f32 %v610, 0.0
        %v657 = vmax.f32 %v613, 0.0
        %v658 = vmax.f32 %v618, 0.0
        %v659 = vmax.f32 %v621, 0.0
        %v660 = vpack.c.bf16 %v625, %v624
        %v661 = vpack.c.bf16 %v627, %v626
        %v662 = vpack.c.bf16 %v629, %v628
        %v663 = vpack.c.bf16 %v631, %v630
        %v664 = vpack.c.bf16 %v633, %v632
        %v665 = vpack.c.bf16 %v635, %v634
        %v666 = vpack.c.bf16 %v637, %v636
        %v667 = vpack.c.bf16 %v639, %v638
        %v668 = vpack.c.bf16 %v641, %v640
        %v669 = vpack.c.bf16 %v643, %v642
        %v670 = vpack.c.bf16 %v645, %v644
        %v671 = vpack.c.bf16 %v647, %v646
        %v672 = vpack.c.bf16 %v649, %v648
        %v673 = vpack.c.bf16 %v651, %v650
        %v674 = vpack.c.bf16 %v653, %v652
        %v675 = vpack.c.bf16 %v655, %v654
        %v676 = vpack.c.bf16 %v657, %v656
        %v677 = vpack.c.bf16 %v659, %v658
        %v679 = vshrl.u32 %v660, 16
        %v681 = vrot.slane %v679, 7
        %v682 = vshll.u32 %v660, 16
        %v684 = vor.u32 %v681, %v682
        %v686 = vshrl.u32 %v661, 16
        %v688 = vrot.slane %v686, 7
        %v689 = vshll.u32 %v661, 16
        %v691 = vor.u32 %v688, %v689
        %v693 = vshrl.u32 %v662, 16
        %v695 = vrot.slane %v693, 7
        %v696 = vshll.u32 %v662, 16
        %v698 = vor.u32 %v695, %v696
        %v700 = vshrl.u32 %v663, 16
        %v702 = vrot.slane %v700, 7
        %v703 = vshll.u32 %v663, 16
        %v705 = vor.u32 %v702, %v703
        %v707 = vshrl.u32 %v664, 16
        %v709 = vrot.slane %v707, 7
        %v710 = vshll.u32 %v664, 16
        %v712 = vor.u32 %v709, %v710
        %v714 = vshrl.u32 %v665, 16
        %v716 = vrot.slane %v714, 7
        %v717 = vshll.u32 %v665, 16
        %v719 = vor.u32 %v716, %v717
        %v721 = vshrl.u32 %v666, 16
        %v723 = vrot.slane %v721, 7
        %v724 = vshll.u32 %v666, 16
        %v726 = vor.u32 %v723, %v724
        %v728 = vshrl.u32 %v667, 16
        %v730 = vrot.slane %v728, 7
        %v731 = vshll.u32 %v667, 16
        %v733 = vor.u32 %v730, %v731
        %v735 = vshrl.u32 %v668, 16
        %v737 = vrot.slane %v735, 7
        %v738 = vshll.u32 %v668, 16
        %v740 = vor.u32 %v737, %v738
        %v742 = vshrl.u32 %v669, 16
        %v744 = vrot.slane %v742, 7
        %v745 = vshll.u32 %v669, 16
        %v747 = vor.u32 %v744, %v745
        %v749 = vshrl.u32 %v670, 16
        %v751 = vrot.slane %v749, 7
        %v752 = vshll.u32 %v670, 16
        %v754 = vor.u32 %v751, %v752
        %v756 = vshrl.u32 %v671, 16
        %v758 = vrot.slane %v756, 7
        %v759 = vshll.u32 %v671, 16
        %v761 = vor.u32 %v758, %v759
        %v763 = vshrl.u32 %v672, 16
        %v765 = vrot.slane %v763, 7
        %v766 = vshll.u32 %v672, 16
        %v768 = vor.u32 %v765, %v766
        %v770 = vshrl.u32 %v673, 16
        %v772 = vrot.slane %v770, 7
        %v773 = vshll.u32 %v673, 16
        %v775 = vor.u32 %v772, %v773
        %v777 = vshrl.u32 %v674, 16
        %v779 = vrot.slane %v777, 7
        %v780 = vshll.u32 %v674, 16
        %v782 = vor.u32 %v779, %v780
        %v784 = vshrl.u32 %v675, 16
        %v786 = vrot.slane %v784, 7
        %v787 = vshll.u32 %v675, 16
        %v789 = vor.u32 %v786, %v787
        %v791 = vshrl.u32 %v676, 16
        %v793 = vrot.slane %v791, 7
        %v794 = vshll.u32 %v676, 16
        %v796 = vor.u32 %v793, %v794
        %v798 = vshrl.u32 %v677, 16
        %v800 = vrot.slane %v798, 7
        %v801 = vshll.u32 %v677, 16
        %v803 = vor.u32 %v800, %v801
        %vm822 = vcmask 1047552
        %vm823 = vsmask.f32 7938
        %vm824 = vmand %vm822, %vm823
        %v825 = vld [vmem:[#allocation4] sm:$0xff]
        %v826 = vsel %vm824, %v684, %v825
        %827 = vst [vmem:[#allocation4] sm:$0xff] %v826
        %v828 = vld [vmem:[#allocation4 + $0x18] sm:$0xff]
        %v829 = vsel %vm824, %v691, %v828
        %830 = vst [vmem:[#allocation4 + $0x18] sm:$0xff] %v829
        %v831 = vld [vmem:[#allocation4 + $0x30] sm:$0xff]
        %v832 = vsel %vm824, %v698, %v831
        %833 = vst [vmem:[#allocation4 + $0x30] sm:$0xff] %v832
        %v834 = vld [vmem:[#allocation4 + $0x48] sm:$0xff]
        %v835 = vsel %vm824, %v705, %v834
        %836 = vst [vmem:[#allocation4 + $0x48] sm:$0xff] %v835
        %v837 = vld [vmem:[#allocation4 + $0x60] sm:$0xff]
        %v838 = vsel %vm824, %v712, %v837
        %839 = vst [vmem:[#allocation4 + $0x60] sm:$0xff] %v838
        %v840 = vld [vmem:[#allocation4 + $0x78] sm:$0xff]
        %v841 = vsel %vm824, %v719, %v840
        %842 = vst [vmem:[#allocation4 + $0x78] sm:$0xff] %v841
        %v843 = vld [vmem:[#allocation4 + $0x90] sm:$0xff]
        %v844 = vsel %vm824, %v726, %v843
        %845 = vst [vmem:[#allocation4 + $0x90] sm:$0xff] %v844
        %v846 = vld [vmem:[#allocation4 + $0xa8] sm:$0xff]
        %v847 = vsel %vm824, %v733, %v846
        %848 = vst [vmem:[#allocation4 + $0xa8] sm:$0xff] %v847
        %v849 = vld [vmem:[#allocation4 + $0xc0] sm:$0xff]
        %v850 = vsel %vm824, %v740, %v849
        %851 = vst [vmem:[#allocation4 + $0xc0] sm:$0xff] %v850
        %v852 = vld [vmem:[#allocation4 + $0xd8] sm:$0xff]
        %v853 = vsel %vm824, %v747, %v852
        %854 = vst [vmem:[#allocation4 + $0xd8] sm:$0xff] %v853
        %v855 = vld [vmem:[#allocation4 + $0xf0] sm:$0xff]
        %v856 = vsel %vm824, %v754, %v855
        %857 = vst [vmem:[#allocation4 + $0xf0] sm:$0xff] %v856
        %v858 = vld [vmem:[#allocation4 + $0x108] sm:$0xff]
        %v859 = vsel %vm824, %v761, %v858
        %860 = vst [vmem:[#allocation4 + $0x108] sm:$0xff] %v859
        %v861 = vld [vmem:[#allocation4 + $0x120] sm:$0xff]
        %v862 = vsel %vm824, %v768, %v861
        %863 = vst [vmem:[#allocation4 + $0x120] sm:$0xff] %v862
        %v864 = vld [vmem:[#allocation4 + $0x138] sm:$0xff]
        %v865 = vsel %vm824, %v775, %v864
        %866 = vst [vmem:[#allocation4 + $0x138] sm:$0xff] %v865
        %v867 = vld [vmem:[#allocation4 + $0x150] sm:$0xff]
        %v868 = vsel %vm824, %v782, %v867
        %869 = vst [vmem:[#allocation4 + $0x150] sm:$0xff] %v868
        %v870 = vld [vmem:[#allocation4 + $0x168] sm:$0xff]
        %v871 = vsel %vm824, %v789, %v870
        %872 = vst [vmem:[#allocation4 + $0x168] sm:$0xff] %v871
        %v873 = vld [vmem:[#allocation4 + $0x180] sm:$0xff]
        %v874 = vsel %vm824, %v796, %v873
        %875 = vst [vmem:[#allocation4 + $0x180] sm:$0xff] %v874
        %v876 = vld [vmem:[#allocation4 + $0x198] sm:$0xff]
        %v877 = vsel %vm824, %v803, %v876
        %878 = vst [vmem:[#allocation4 + $0x198] sm:$0xff] %v877
        %vm879 = vcmask 1040384
        %vm880 = vsmask.f32 256
        %vm881 = vmand %vm879, %vm880
        %v882 = vld [vmem:[#allocation4] sm:$0x1]
        %v883 = vsel %vm881, 0, %v882
        %884 = vst [vmem:[#allocation4] sm:$0x1] %v883
        %v885 = vld [vmem:[#allocation4 + $0x18] sm:$0x1]
        %v886 = vsel %vm881, 0, %v885
        %887 = vst [vmem:[#allocation4 + $0x18] sm:$0x1] %v886
        %v888 = vld [vmem:[#allocation4 + $0x30] sm:$0x1]
        %v889 = vsel %vm881, 0, %v888
        %890 = vst [vmem:[#allocation4 + $0x30] sm:$0x1] %v889
        %v891 = vld [vmem:[#allocation4 + $0x48] sm:$0x1]
        %v892 = vsel %vm881, 0, %v891
        %893 = vst [vmem:[#allocation4 + $0x48] sm:$0x1] %v892
        %v894 = vld [vmem:[#allocation4 + $0x60] sm:$0x1]
        %v895 = vsel %vm881, 0, %v894
        %896 = vst [vmem:[#allocation4 + $0x60] sm:$0x1] %v895
        %v897 = vld [vmem:[#allocation4 + $0x78] sm:$0x1]
        %v898 = vsel %vm881, 0, %v897
        %899 = vst [vmem:[#allocation4 + $0x78] sm:$0x1] %v898
        %v900 = vld [vmem:[#allocation4 + $0x90] sm:$0x1]
        %v901 = vsel %vm881, 0, %v900
        %902 = vst [vmem:[#allocation4 + $0x90] sm:$0x1] %v901
        %v903 = vld [vmem:[#allocation4 + $0xa8] sm:$0x1]
        %v904 = vsel %vm881, 0, %v903
        %905 = vst [vmem:[#allocation4 + $0xa8] sm:$0x1] %v904
        %v906 = vld [vmem:[#allocation4 + $0xc0] sm:$0x1]
        %v907 = vsel %vm881, 0, %v906
        %908 = vst [vmem:[#allocation4 + $0xc0] sm:$0x1] %v907
        %v909 = vld [vmem:[#allocation4 + $0xd8] sm:$0x1]
        %v910 = vsel %vm881, 0, %v909
        %911 = vst [vmem:[#allocation4 + $0xd8] sm:$0x1] %v910
        %v912 = vld [vmem:[#allocation4 + $0xf0] sm:$0x1]
        %v913 = vsel %vm881, 0, %v912
        %914 = vst [vmem:[#allocation4 + $0xf0] sm:$0x1] %v913
        %v915 = vld [vmem:[#allocation4 + $0x108] sm:$0x1]
        %v916 = vsel %vm881, 0, %v915
        %917 = vst [vmem:[#allocation4 + $0x108] sm:$0x1] %v916
        %v918 = vld [vmem:[#allocation4 + $0x120] sm:$0x1]
        %v919 = vsel %vm881, 0, %v918
        %920 = vst [vmem:[#allocation4 + $0x120] sm:$0x1] %v919
        %v921 = vld [vmem:[#allocation4 + $0x138] sm:$0x1]
        %v922 = vsel %vm881, 0, %v921
        %923 = vst [vmem:[#allocation4 + $0x138] sm:$0x1] %v922
        %v924 = vld [vmem:[#allocation4 + $0x150] sm:$0x1]
        %v925 = vsel %vm881, 0, %v924
        %926 = vst [vmem:[#allocation4 + $0x150] sm:$0x1] %v925
        %v927 = vld [vmem:[#allocation4 + $0x168] sm:$0x1]
        %v928 = vsel %vm881, 0, %v927
        %929 = vst [vmem:[#allocation4 + $0x168] sm:$0x1] %v928
        %v930 = vld [vmem:[#allocation4 + $0x180] sm:$0x1]
        %v931 = vsel %vm881, 0, %v930
        %932 = vst [vmem:[#allocation4 + $0x180] sm:$0x1] %v931
        %v933 = vld [vmem:[#allocation4 + $0x198] sm:$0x1]
        %v934 = vsel %vm881, 0, %v933
        %935 = vst [vmem:[#allocation4 + $0x198] sm:$0x1] %v934
        %936 = vst [vmem:[#allocation4 + $0x8] sm:$0xff] %v660
        %937 = vst [vmem:[#allocation4 + $0x20] sm:$0xff] %v661
        %938 = vst [vmem:[#allocation4 + $0x38] sm:$0xff] %v662
        %939 = vst [vmem:[#allocation4 + $0x50] sm:$0xff] %v663
        %940 = vst [vmem:[#allocation4 + $0x68] sm:$0xff] %v664
        %941 = vst [vmem:[#allocation4 + $0x80] sm:$0xff] %v665
        %942 = vst [vmem:[#allocation4 + $0x98] sm:$0xff] %v666
        %943 = vst [vmem:[#allocation4 + $0xb0] sm:$0xff] %v667
        %944 = vst [vmem:[#allocation4 + $0xc8] sm:$0xff] %v668
        %945 = vst [vmem:[#allocation4 + $0xe0] sm:$0xff] %v669
        %946 = vst [vmem:[#allocation4 + $0xf8] sm:$0xff] %v670
        %947 = vst [vmem:[#allocation4 + $0x110] sm:$0xff] %v671
        %948 = vst [vmem:[#allocation4 + $0x128] sm:$0xff] %v672
        %949 = vst [vmem:[#allocation4 + $0x140] sm:$0xff] %v673
        %950 = vst [vmem:[#allocation4 + $0x158] sm:$0xff] %v674
        %951 = vst [vmem:[#allocation4 + $0x170] sm:$0xff] %v675
        %952 = vst [vmem:[#allocation4 + $0x188] sm:$0xff] %v676
        %953 = vst [vmem:[#allocation4 + $0x1a0] sm:$0xff] %v677
        %v954 = vrot.slane %v682, 1
        %v955 = vor.u32 %v679, %v954
        %v956 = vrot.slane %v689, 1
        %v957 = vor.u32 %v686, %v956
        %v958 = vrot.slane %v696, 1
        %v959 = vor.u32 %v693, %v958
        %v960 = vrot.slane %v703, 1
        %v961 = vor.u32 %v700, %v960
        %v962 = vrot.slane %v710, 1
        %v963 = vor.u32 %v707, %v962
        %v964 = vrot.slane %v717, 1
        %v965 = vor.u32 %v714, %v964
        %v966 = vrot.slane %v724, 1
        %v967 = vor.u32 %v721, %v966
        %v968 = vrot.slane %v731, 1
        %v969 = vor.u32 %v728, %v968
        %v970 = vrot.slane %v738, 1
        %v971 = vor.u32 %v735, %v970
        %v972 = vrot.slane %v745, 1
        %v973 = vor.u32 %v742, %v972
        %v974 = vrot.slane %v752, 1
        %v975 = vor.u32 %v749, %v974
        %v976 = vrot.slane %v759, 1
        %v977 = vor.u32 %v756, %v976
        %v978 = vrot.slane %v766, 1
        %v979 = vor.u32 %v763, %v978
        %v980 = vrot.slane %v773, 1
        %v981 = vor.u32 %v770, %v980
        %v982 = vrot.slane %v780, 1
        %v983 = vor.u32 %v777, %v982
        %v984 = vrot.slane %v787, 1
        %v985 = vor.u32 %v784, %v984
        %v986 = vrot.slane %v794, 1
        %v987 = vor.u32 %v791, %v986
        %v988 = vrot.slane %v801, 1
        %v989 = vor.u32 %v798, %v988
        %vm1008 = vsmask.f32 7424
        %vm1009 = vmand %vm822, %vm1008
        %v1010 = vld [vmem:[#allocation4 + $0x10] sm:$0xff]
        %v1011 = vsel %vm1009, %v955, %v1010
        %1012 = vst [vmem:[#allocation4 + $0x10] sm:$0xff] %v1011
        %v1013 = vld [vmem:[#allocation4 + $0x28] sm:$0xff]
        %v1014 = vsel %vm1009, %v957, %v1013
        %1015 = vst [vmem:[#allocation4 + $0x28] sm:$0xff] %v1014
        %v1016 = vld [vmem:[#allocation4 + $0x40] sm:$0xff]
        %v1017 = vsel %vm1009, %v959, %v1016
        %1018 = vst [vmem:[#allocation4 + $0x40] sm:$0xff] %v1017
        %v1019 = vld [vmem:[#allocation4 + $0x58] sm:$0xff]
        %v1020 = vsel %vm1009, %v961, %v1019
        %1021 = vst [vmem:[#allocation4 + $0x58] sm:$0xff] %v1020
        %v1022 = vld [vmem:[#allocation4 + $0x70] sm:$0xff]
        %v1023 = vsel %vm1009, %v963, %v1022
        %1024 = vst [vmem:[#allocation4 + $0x70] sm:$0xff] %v1023
        %v1025 = vld [vmem:[#allocation4 + $0x88] sm:$0xff]
        %v1026 = vsel %vm1009, %v965, %v1025
        %1027 = vst [vmem:[#allocation4 + $0x88] sm:$0xff] %v1026
        %v1028 = vld [vmem:[#allocation4 + $0xa0] sm:$0xff]
        %v1029 = vsel %vm1009, %v967, %v1028
        %1030 = vst [vmem:[#allocation4 + $0xa0] sm:$0xff] %v1029
        %v1031 = vld [vmem:[#allocation4 + $0xb8] sm:$0xff]
        %v1032 = vsel %vm1009, %v969, %v1031
        %1033 = vst [vmem:[#allocation4 + $0xb8] sm:$0xff] %v1032
        %v1034 = vld [vmem:[#allocation4 + $0xd0] sm:$0xff]
        %v1035 = vsel %vm1009, %v971, %v1034
        %1036 = vst [vmem:[#allocation4 + $0xd0] sm:$0xff] %v1035
        %v1037 = vld [vmem:[#allocation4 + $0xe8] sm:$0xff]
        %v1038 = vsel %vm1009, %v973, %v1037
        %1039 = vst [vmem:[#allocation4 + $0xe8] sm:$0xff] %v1038
        %v1040 = vld [vmem:[#allocation4 + $0x100] sm:$0xff]
        %v1041 = vsel %vm1009, %v975, %v1040
        %1042 = vst [vmem:[#allocation4 + $0x100] sm:$0xff] %v1041
        %v1043 = vld [vmem:[#allocation4 + $0x118] sm:$0xff]
        %v1044 = vsel %vm1009, %v977, %v1043
        %1045 = vst [vmem:[#allocation4 + $0x118] sm:$0xff] %v1044
        %v1046 = vld [vmem:[#allocation4 + $0x130] sm:$0xff]
        %v1047 = vsel %vm1009, %v979, %v1046
        %1048 = vst [vmem:[#allocation4 + $0x130] sm:$0xff] %v1047
        %v1049 = vld [vmem:[#allocation4 + $0x148] sm:$0xff]
        %v1050 = vsel %vm1009, %v981, %v1049
        %1051 = vst [vmem:[#allocation4 + $0x148] sm:$0xff] %v1050
        %v1052 = vld [vmem:[#allocation4 + $0x160] sm:$0xff]
        %v1053 = vsel %vm1009, %v983, %v1052
        %1054 = vst [vmem:[#allocation4 + $0x160] sm:$0xff] %v1053
        %v1055 = vld [vmem:[#allocation4 + $0x178] sm:$0xff]
        %v1056 = vsel %vm1009, %v985, %v1055
        %1057 = vst [vmem:[#allocation4 + $0x178] sm:$0xff] %v1056
        %v1058 = vld [vmem:[#allocation4 + $0x190] sm:$0xff]
        %v1059 = vsel %vm1009, %v987, %v1058
        %1060 = vst [vmem:[#allocation4 + $0x190] sm:$0xff] %v1059
        %v1061 = vld [vmem:[#allocation4 + $0x1a8] sm:$0xff]
        %v1062 = vsel %vm1009, %v989, %v1061
        %1063 = vst [vmem:[#allocation4 + $0x1a8] sm:$0xff] %v1062
        %vm1064 = vcmask 1047559
        %vm1065 = vsmask.f32 7966
        %vm1066 = vmand %vm1064, %vm1065
        %v1067 = vld [vmem:[#allocation4 + $0x10] sm:$0x80]
        %v1068 = vsel %vm1066, 0, %v1067
        %1069 = vst [vmem:[#allocation4 + $0x10] sm:$0x80] %v1068
        %v1070 = vld [vmem:[#allocation4 + $0x28] sm:$0x80]
        %v1071 = vsel %vm1066, 0, %v1070
        %1072 = vst [vmem:[#allocation4 + $0x28] sm:$0x80] %v1071
        %v1073 = vld [vmem:[#allocation4 + $0x40] sm:$0x80]
        %v1074 = vsel %vm1066, 0, %v1073
        %1075 = vst [vmem:[#allocation4 + $0x40] sm:$0x80] %v1074
        %v1076 = vld [vmem:[#allocation4 + $0x58] sm:$0x80]
        %v1077 = vsel %vm1066, 0, %v1076
        %1078 = vst [vmem:[#allocation4 + $0x58] sm:$0x80] %v1077
        %v1079 = vld [vmem:[#allocation4 + $0x70] sm:$0x80]
        %v1080 = vsel %vm1066, 0, %v1079
        %1081 = vst [vmem:[#allocation4 + $0x70] sm:$0x80] %v1080
        %v1082 = vld [vmem:[#allocation4 + $0x88] sm:$0x80]
        %v1083 = vsel %vm1066, 0, %v1082
        %1084 = vst [vmem:[#allocation4 + $0x88] sm:$0x80] %v1083
        %v1085 = vld [vmem:[#allocation4 + $0xa0] sm:$0x80]
        %v1086 = vsel %vm1066, 0, %v1085
        %1087 = vst [vmem:[#allocation4 + $0xa0] sm:$0x80] %v1086
        %v1088 = vld [vmem:[#allocation4 + $0xb8] sm:$0x80]
        %v1089 = vsel %vm1066, 0, %v1088
        %1090 = vst [vmem:[#allocation4 + $0xb8] sm:$0x80] %v1089
        %v1091 = vld [vmem:[#allocation4 + $0xd0] sm:$0x80]
        %v1092 = vsel %vm1066, 0, %v1091
        %1093 = vst [vmem:[#allocation4 + $0xd0] sm:$0x80] %v1092
        %v1094 = vld [vmem:[#allocation4 + $0xe8] sm:$0x80]
        %v1095 = vsel %vm1066, 0, %v1094
        %1096 = vst [vmem:[#allocation4 + $0xe8] sm:$0x80] %v1095
        %v1097 = vld [vmem:[#allocation4 + $0x100] sm:$0x80]
        %v1098 = vsel %vm1066, 0, %v1097
        %1099 = vst [vmem:[#allocation4 + $0x100] sm:$0x80] %v1098
        %v1100 = vld [vmem:[#allocation4 + $0x118] sm:$0x80]
        %v1101 = vsel %vm1066, 0, %v1100
        %1102 = vst [vmem:[#allocation4 + $0x118] sm:$0x80] %v1101
        %v1103 = vld [vmem:[#allocation4 + $0x130] sm:$0x80]
        %v1104 = vsel %vm1066, 0, %v1103
        %1105 = vst [vmem:[#allocation4 + $0x130] sm:$0x80] %v1104
        %v1106 = vld [vmem:[#allocation4 + $0x148] sm:$0x80]
        %v1107 = vsel %vm1066, 0, %v1106
        %1108 = vst [vmem:[#allocation4 + $0x148] sm:$0x80] %v1107
        %v1109 = vld [vmem:[#allocation4 + $0x160] sm:$0x80]
        %v1110 = vsel %vm1066, 0, %v1109
        %1111 = vst [vmem:[#allocation4 + $0x160] sm:$0x80] %v1110
        %v1112 = vld [vmem:[#allocation4 + $0x178] sm:$0x80]
        %v1113 = vsel %vm1066, 0, %v1112
        %1114 = vst [vmem:[#allocation4 + $0x178] sm:$0x80] %v1113
        %v1115 = vld [vmem:[#allocation4 + $0x190] sm:$0x80]
        %v1116 = vsel %vm1066, 0, %v1115
        %1117 = vst [vmem:[#allocation4 + $0x190] sm:$0x80] %v1116
        %v1118 = vld [vmem:[#allocation4 + $0x1a8] sm:$0x80]
        %v1119 = vsel %vm1066, 0, %v1118
        %1120 = vst [vmem:[#allocation4 + $0x1a8] sm:$0x80] %v1119
        // Predicated region
        $region73: #{tpu_custom_call.1} parent=43 // pred_check
          %p1121 = pneg %p304
        $region74: #{tpu_custom_call.1} parent=43 // pred_check_branch
          %1123 = sbr.rel (%p1121) target = $region76
        $region75: #{tpu_custom_call.1} parent=43 // pred_region
          %1124 = vst [vmem:[#allocation4] sm:$0xff] 0
          %1125 = vst [vmem:[#allocation4 + $0x8] sm:$0xff] 0
          %1126 = vst [vmem:[#allocation4 + $0x10] sm:$0xff] 0
          %s1127 = scalar_lea.vmem [#allocation4], 408
          %1128 = vst [vmem:[%s1127] sm:$0xff] 0
          %1129 = vst [vmem:[%s1127 + $0x8] sm:$0xff] 0
          %1130 = vst [vmem:[%s1127 + $0x10] sm:$0xff] 0
        $region76: #{tpu_custom_call.1} parent=43 // pred_fallthru
          _
        %v1131 = vld [vmem:[#allocation4] sm:$0xff]
        %v1132 = vld [vmem:[#allocation4 + $0x8] sm:$0xff]
        %v1133 = vld [vmem:[#allocation4 + $0x10] sm:$0xff]
        %v1134 = vld [vmem:[#allocation4 + $0x18] sm:$0xff]
        %v1135 = vld [vmem:[#allocation4 + $0x20] sm:$0xff]
        %v1136 = vld [vmem:[#allocation4 + $0x28] sm:$0xff]
        %v1137 = vld [vmem:[#allocation4 + $0x30] sm:$0xff]
        %v1138 = vld [vmem:[#allocation4 + $0x38] sm:$0xff]
        %v1139 = vld [vmem:[#allocation4 + $0x40] sm:$0xff]
        %v1140 = vld [vmem:[#allocation4 + $0x48] sm:$0xff]
        %v1141 = vld [vmem:[#allocation4 + $0x50] sm:$0xff]
        %v1142 = vld [vmem:[#allocation4 + $0x58] sm:$0xff]
        %v1143 = vld [vmem:[#allocation4 + $0x60] sm:$0xff]
        %v1144 = vld [vmem:[#allocation4 + $0x68] sm:$0xff]
        %v1145 = vld [vmem:[#allocation4 + $0x70] sm:$0xff]
        %v1146 = vld [vmem:[#allocation4 + $0x78] sm:$0xff]
        %v1147 = vld [vmem:[#allocation4 + $0x80] sm:$0xff]
        %v1148 = vld [vmem:[#allocation4 + $0x88] sm:$0xff]
        %v1149 = vld [vmem:[#allocation4 + $0x90] sm:$0xff]
        %v1150 = vld [vmem:[#allocation4 + $0x98] sm:$0xff]
        %v1151 = vld [vmem:[#allocation4 + $0xa0] sm:$0xff]
        %v1152 = vld [vmem:[#allocation4 + $0xa8] sm:$0xff]
        %v1153 = vld [vmem:[#allocation4 + $0xb0] sm:$0xff]
        %v1154 = vld [vmem:[#allocation4 + $0xb8] sm:$0xff]
        %v1155 = vld [vmem:[#allocation4 + $0xc0] sm:$0xff]
        %v1156 = vld [vmem:[#allocation4 + $0xc8] sm:$0xff]
        %v1157 = vld [vmem:[#allocation4 + $0xd0] sm:$0xff]
        %v1158 = vld [vmem:[#allocation4 + $0xd8] sm:$0xff]
        %v1159 = vld [vmem:[#allocation4 + $0xe0] sm:$0xff]
        %v1160 = vld [vmem:[#allocation4 + $0xe8] sm:$0xff]
        %v1161 = vld [vmem:[#allocation4 + $0xf0] sm:$0xff]
        %v1162 = vld [vmem:[#allocation4 + $0xf8] sm:$0xff]
        %v1163 = vld [vmem:[#allocation4 + $0x100] sm:$0xff]
        %v1164 = vld [vmem:[#allocation4 + $0x108] sm:$0xff]
        %v1165 = vld [vmem:[#allocation4 + $0x110] sm:$0xff]
        %v1166 = vld [vmem:[#allocation4 + $0x118] sm:$0xff]
        %v1167 = vld [vmem:[#allocation4 + $0x120] sm:$0xff]
        %v1168 = vld [vmem:[#allocation4 + $0x128] sm:$0xff]
        %v1169 = vld [vmem:[#allocation4 + $0x130] sm:$0xff]
        %v1170 = vld [vmem:[#allocation4 + $0x138] sm:$0xff]
        %v1171 = vld [vmem:[#allocation4 + $0x140] sm:$0xff]
        %v1172 = vld [vmem:[#allocation4 + $0x148] sm:$0xff]
        %v1173 = vld [vmem:[#allocation4 + $0x150] sm:$0xff]
        %v1174 = vld [vmem:[#allocation4 + $0x158] sm:$0xff]
        %v1175 = vld [vmem:[#allocation4 + $0x160] sm:$0xff]
        %v1176 = vld [vmem:[#allocation4 + $0x168] sm:$0xff]
        %v1177 = vld [vmem:[#allocation4 + $0x170] sm:$0xff]
        %v1178 = vld [vmem:[#allocation4 + $0x178] sm:$0xff]
        %v1179 = vld [vmem:[#allocation7] sm:$0xf]
        %v1180 = vld [vmem:[#allocation7 + $0x4] sm:$0xf]
        %v1181 = vld [vmem:[#allocation7 + $0x8] sm:$0xf]
        %v1182 = vld [vmem:[#allocation7 + $0xc] sm:$0xf]
        %v1183 = vld [vmem:[#allocation7 + $0x10] sm:$0xf]
        %v1184 = vld [vmem:[#allocation7 + $0x14] sm:$0xf]
        %v1185 = vld [vmem:[#allocation7 + $0x18] sm:$0xf]
        %v1186 = vld [vmem:[#allocation7 + $0x1c] sm:$0xf]
        %v1187 = vld [vmem:[#allocation7 + $0x20] sm:$0xf]
        %v1188 = vld [vmem:[#allocation7 + $0x24] sm:$0xf]
        %v1189 = vld [vmem:[#allocation7 + $0x28] sm:$0xf]
        %v1190 = vld [vmem:[#allocation7 + $0x2c] sm:$0xf]
        %v1191 = vld [vmem:[#allocation7 + $0x30] sm:$0xf]
        %v1192 = vld [vmem:[#allocation7 + $0x34] sm:$0xf]
        %v1193 = vld [vmem:[#allocation7 + $0x38] sm:$0xf]
        %v1194 = vld [vmem:[#allocation7 + $0x3c] sm:$0xf]
        %v1195 = vld [vmem:[#allocation7 + $0x40] sm:$0xf]
        %v1196 = vld [vmem:[#allocation7 + $0x44] sm:$0xf]
        %v1197 = vld [vmem:[#allocation7 + $0x48] sm:$0xf]
        %v1198 = vld [vmem:[#allocation7 + $0x4c] sm:$0xf]
        %v1199 = vld [vmem:[#allocation7 + $0x50] sm:$0xf]
        %v1200 = vld [vmem:[#allocation7 + $0x54] sm:$0xf]
        %v1201 = vld [vmem:[#allocation7 + $0x58] sm:$0xf]
        %v1202 = vld [vmem:[#allocation7 + $0x5c] sm:$0xf]
        %v1203 = vld [vmem:[#allocation7 + $0x60] sm:$0xf]
        %v1204 = vld [vmem:[#allocation7 + $0x64] sm:$0xf]
        %v1205 = vld [vmem:[#allocation7 + $0x68] sm:$0xf]
        %v1206 = vld [vmem:[#allocation7 + $0x6c] sm:$0xf]
        %v1207 = vld [vmem:[#allocation7 + $0x70] sm:$0xf]
        %v1208 = vld [vmem:[#allocation7 + $0x74] sm:$0xf]
        %v1209 = vld [vmem:[#allocation7 + $0x78] sm:$0xf]
        %v1210 = vld [vmem:[#allocation7 + $0x7c] sm:$0xf]
        %v1211 = vld [vmem:[#allocation7 + $0x80] sm:$0xf]
        %v1212 = vld [vmem:[#allocation7 + $0x84] sm:$0xf]
        %v1213 = vld [vmem:[#allocation7 + $0x88] sm:$0xf]
        %v1214 = vld [vmem:[#allocation7 + $0x8c] sm:$0xf]
        %v1215 = vld [vmem:[#allocation7 + $0x90] sm:$0xf]
        %v1216 = vld [vmem:[#allocation7 + $0x94] sm:$0xf]
        %v1217 = vld [vmem:[#allocation7 + $0x98] sm:$0xf]
        %v1218 = vld [vmem:[#allocation7 + $0x9c] sm:$0xf]
        %v1219 = vld [vmem:[#allocation7 + $0xa0] sm:$0xf]
        %v1220 = vld [vmem:[#allocation7 + $0xa4] sm:$0xf]
        %v1221 = vld [vmem:[#allocation7 + $0xa8] sm:$0xf]
        %v1222 = vld [vmem:[#allocation7 + $0xac] sm:$0xf]
        %v1223 = vld [vmem:[#allocation7 + $0xb0] sm:$0xf]
        %v1224 = vld [vmem:[#allocation7 + $0xb4] sm:$0xf]
        %v1225 = vld [vmem:[#allocation7 + $0xb8] sm:$0xf]
        %v1226 = vld [vmem:[#allocation7 + $0xbc] sm:$0xf]
        %s1227 = scalar_lea.vmem [#allocation4], 24
        %v1228 = vld [vmem:[%s1227] sm:$0xff]
        %v1229 = vld [vmem:[%s1227 + $0x8] sm:$0xff]
        %v1230 = vld [vmem:[%s1227 + $0x10] sm:$0xff]
        %v1231 = vld [vmem:[%s1227 + $0x18] sm:$0xff]
        %v1232 = vld [vmem:[%s1227 + $0x20] sm:$0xff]
        %v1233 = vld [vmem:[%s1227 + $0x28] sm:$0xff]
        %v1234 = vld [vmem:[%s1227 + $0x30] sm:$0xff]
        %v1235 = vld [vmem:[%s1227 + $0x38] sm:$0xff]
        %v1236 = vld [vmem:[%s1227 + $0x40] sm:$0xff]
        %v1237 = vld [vmem:[%s1227 + $0x48] sm:$0xff]
        %v1238 = vld [vmem:[%s1227 + $0x50] sm:$0xff]
        %v1239 = vld [vmem:[%s1227 + $0x58] sm:$0xff]
        %v1240 = vld [vmem:[%s1227 + $0x60] sm:$0xff]
        %v1241 = vld [vmem:[%s1227 + $0x68] sm:$0xff]
        %v1242 = vld [vmem:[%s1227 + $0x70] sm:$0xff]
        %v1243 = vld [vmem:[%s1227 + $0x78] sm:$0xff]
        %v1244 = vld [vmem:[%s1227 + $0x80] sm:$0xff]
        %v1245 = vld [vmem:[%s1227 + $0x88] sm:$0xff]
        %v1246 = vld [vmem:[%s1227 + $0x90] sm:$0xff]
        %v1247 = vld [vmem:[%s1227 + $0x98] sm:$0xff]
        %v1248 = vld [vmem:[%s1227 + $0xa0] sm:$0xff]
        %v1249 = vld [vmem:[%s1227 + $0xa8] sm:$0xff]
        %v1250 = vld [vmem:[%s1227 + $0xb0] sm:$0xff]
        %v1251 = vld [vmem:[%s1227 + $0xb8] sm:$0xff]
        %v1252 = vld [vmem:[%s1227 + $0xc0] sm:$0xff]
        %v1253 = vld [vmem:[%s1227 + $0xc8] sm:$0xff]
        %v1254 = vld [vmem:[%s1227 + $0xd0] sm:$0xff]
        %v1255 = vld [vmem:[%s1227 + $0xd8] sm:$0xff]
        %v1256 = vld [vmem:[%s1227 + $0xe0] sm:$0xff]
        %v1257 = vld [vmem:[%s1227 + $0xe8] sm:$0xff]
        %v1258 = vld [vmem:[%s1227 + $0xf0] sm:$0xff]
        %v1259 = vld [vmem:[%s1227 + $0xf8] sm:$0xff]
        %v1260 = vld [vmem:[%s1227 + $0x100] sm:$0xff]
        %v1261 = vld [vmem:[%s1227 + $0x108] sm:$0xff]
        %v1262 = vld [vmem:[%s1227 + $0x110] sm:$0xff]
        %v1263 = vld [vmem:[%s1227 + $0x118] sm:$0xff]
        %v1264 = vld [vmem:[%s1227 + $0x120] sm:$0xff]
        %v1265 = vld [vmem:[%s1227 + $0x128] sm:$0xff]
        %v1266 = vld [vmem:[%s1227 + $0x130] sm:$0xff]
        %v1267 = vld [vmem:[%s1227 + $0x138] sm:$0xff]
        %v1268 = vld [vmem:[%s1227 + $0x140] sm:$0xff]
        %v1269 = vld [vmem:[%s1227 + $0x148] sm:$0xff]
        %v1270 = vld [vmem:[%s1227 + $0x150] sm:$0xff]
        %v1271 = vld [vmem:[%s1227 + $0x158] sm:$0xff]
        %v1272 = vld [vmem:[%s1227 + $0x160] sm:$0xff]
        %v1273 = vld [vmem:[%s1227 + $0x168] sm:$0xff]
        %v1274 = vld [vmem:[%s1227 + $0x170] sm:$0xff]
        %v1275 = vld [vmem:[%s1227 + $0x178] sm:$0xff]
        %s1276 = scalar_lea.vmem [#allocation7], 192
        %v1277 = vld [vmem:[%s1276] sm:$0xf]
        %v1278 = vld [vmem:[%s1276 + $0x4] sm:$0xf]
        %v1279 = vld [vmem:[%s1276 + $0x8] sm:$0xf]
        %v1280 = vld [vmem:[%s1276 + $0xc] sm:$0xf]
        %v1281 = vld [vmem:[%s1276 + $0x10] sm:$0xf]
        %v1282 = vld [vmem:[%s1276 + $0x14] sm:$0xf]
        %v1283 = vld [vmem:[%s1276 + $0x18] sm:$0xf]
        %v1284 = vld [vmem:[%s1276 + $0x1c] sm:$0xf]
        %v1285 = vld [vmem:[%s1276 + $0x20] sm:$0xf]
        %v1286 = vld [vmem:[%s1276 + $0x24] sm:$0xf]
        %v1287 = vld [vmem:[%s1276 + $0x28] sm:$0xf]
        %v1288 = vld [vmem:[%s1276 + $0x2c] sm:$0xf]
        %v1289 = vld [vmem:[%s1276 + $0x30] sm:$0xf]
        %v1290 = vld [vmem:[%s1276 + $0x34] sm:$0xf]
        %v1291 = vld [vmem:[%s1276 + $0x38] sm:$0xf]
        %v1292 = vld [vmem:[%s1276 + $0x3c] sm:$0xf]
        %v1293 = vld [vmem:[%s1276 + $0x40] sm:$0xf]
        %v1294 = vld [vmem:[%s1276 + $0x44] sm:$0xf]
        %v1295 = vld [vmem:[%s1276 + $0x48] sm:$0xf]
        %v1296 = vld [vmem:[%s1276 + $0x4c] sm:$0xf]
        %v1297 = vld [vmem:[%s1276 + $0x50] sm:$0xf]
        %v1298 = vld [vmem:[%s1276 + $0x54] sm:$0xf]
        %v1299 = vld [vmem:[%s1276 + $0x58] sm:$0xf]
        %v1300 = vld [vmem:[%s1276 + $0x5c] sm:$0xf]
        %v1301 = vld [vmem:[%s1276 + $0x60] sm:$0xf]
        %v1302 = vld [vmem:[%s1276 + $0x64] sm:$0xf]
        %v1303 = vld [vmem:[%s1276 + $0x68] sm:$0xf]
        %v1304 = vld [vmem:[%s1276 + $0x6c] sm:$0xf]
        %v1305 = vld [vmem:[%s1276 + $0x70] sm:$0xf]
        %v1306 = vld [vmem:[%s1276 + $0x74] sm:$0xf]
        %v1307 = vld [vmem:[%s1276 + $0x78] sm:$0xf]
        %v1308 = vld [vmem:[%s1276 + $0x7c] sm:$0xf]
        %v1309 = vld [vmem:[%s1276 + $0x80] sm:$0xf]
        %v1310 = vld [vmem:[%s1276 + $0x84] sm:$0xf]
        %v1311 = vld [vmem:[%s1276 + $0x88] sm:$0xf]
        %v1312 = vld [vmem:[%s1276 + $0x8c] sm:$0xf]
        %v1313 = vld [vmem:[%s1276 + $0x90] sm:$0xf]
        %v1314 = vld [vmem:[%s1276 + $0x94] sm:$0xf]
        %v1315 = vld [vmem:[%s1276 + $0x98] sm:$0xf]
        %v1316 = vld [vmem:[%s1276 + $0x9c] sm:$0xf]
        %v1317 = vld [vmem:[%s1276 + $0xa0] sm:$0xf]
        %v1318 = vld [vmem:[%s1276 + $0xa4] sm:$0xf]
        %v1319 = vld [vmem:[%s1276 + $0xa8] sm:$0xf]
        %v1320 = vld [vmem:[%s1276 + $0xac] sm:$0xf]
        %v1321 = vld [vmem:[%s1276 + $0xb0] sm:$0xf]
        %v1322 = vld [vmem:[%s1276 + $0xb4] sm:$0xf]
        %v1323 = vld [vmem:[%s1276 + $0xb8] sm:$0xf]
        %v1324 = vld [vmem:[%s1276 + $0xbc] sm:$0xf]
        %v1373 = vunpack.c.l.b16 %v1277
        %v1374 = vunpack.c.l.b16 %v1278
        %v1375 = vunpack.c.l.b16 %v1279
        %v1376 = vunpack.c.l.b16 %v1280
        %v1377 = vunpack.c.l.b16 %v1281
        %v1378 = vunpack.c.l.b16 %v1282
        %v1379 = vunpack.c.l.b16 %v1283
        %v1380 = vunpack.c.l.b16 %v1284
        %v1381 = vunpack.c.l.b16 %v1285
        %v1382 = vunpack.c.l.b16 %v1286
        %v1383 = vunpack.c.l.b16 %v1287
        %v1384 = vunpack.c.l.b16 %v1288
        %v1385 = vunpack.c.l.b16 %v1289
        %v1386 = vunpack.c.l.b16 %v1290
        %v1387 = vunpack.c.l.b16 %v1291
        %v1388 = vunpack.c.l.b16 %v1292
        %v1389 = vunpack.c.l.b16 %v1293
        %v1390 = vunpack.c.l.b16 %v1294
        %v1391 = vunpack.c.l.b16 %v1295
        %v1392 = vunpack.c.l.b16 %v1296
        %v1393 = vunpack.c.l.b16 %v1297
        %v1394 = vunpack.c.l.b16 %v1298
        %v1395 = vunpack.c.l.b16 %v1299
        %v1396 = vunpack.c.l.b16 %v1300
        %v1397 = vunpack.c.l.b16 %v1301
        %v1398 = vunpack.c.l.b16 %v1302
        %v1399 = vunpack.c.l.b16 %v1303
        %v1400 = vunpack.c.l.b16 %v1304
        %v1401 = vunpack.c.l.b16 %v1305
        %v1402 = vunpack.c.l.b16 %v1306
        %v1403 = vunpack.c.l.b16 %v1307
        %v1404 = vunpack.c.l.b16 %v1308
        %v1405 = vunpack.c.l.b16 %v1309
        %v1406 = vunpack.c.l.b16 %v1310
        %v1407 = vunpack.c.l.b16 %v1311
        %v1408 = vunpack.c.l.b16 %v1312
        %v1409 = vunpack.c.l.b16 %v1313
        %v1410 = vunpack.c.l.b16 %v1314
        %v1411 = vunpack.c.l.b16 %v1315
        %v1412 = vunpack.c.l.b16 %v1316
        %v1413 = vunpack.c.l.b16 %v1317
        %v1414 = vunpack.c.l.b16 %v1318
        %v1415 = vunpack.c.l.b16 %v1319
        %v1416 = vunpack.c.l.b16 %v1320
        %v1417 = vunpack.c.l.b16 %v1321
        %v1418 = vunpack.c.l.b16 %v1322
        %v1419 = vunpack.c.l.b16 %v1323
        %v1420 = vunpack.c.l.b16 %v1324
        %v1421 = vpack.c.b16 %v1374, %v1373
        %v1422 = vpack.c.b16 %v1376, %v1375
        %v1423 = vpack.c.b16 %v1378, %v1377
        %v1424 = vpack.c.b16 %v1380, %v1379
        %v1425 = vpack.c.b16 %v1382, %v1381
        %v1426 = vpack.c.b16 %v1384, %v1383
        %v1427 = vpack.c.b16 %v1386, %v1385
        %v1428 = vpack.c.b16 %v1388, %v1387
        %v1429 = vpack.c.b16 %v1390, %v1389
        %v1430 = vpack.c.b16 %v1392, %v1391
        %v1431 = vpack.c.b16 %v1394, %v1393
        %v1432 = vpack.c.b16 %v1396, %v1395
        %v1433 = vpack.c.b16 %v1398, %v1397
        %v1434 = vpack.c.b16 %v1400, %v1399
        %v1435 = vpack.c.b16 %v1402, %v1401
        %v1436 = vpack.c.b16 %v1404, %v1403
        %v1437 = vpack.c.b16 %v1406, %v1405
        %v1438 = vpack.c.b16 %v1408, %v1407
        %v1439 = vpack.c.b16 %v1410, %v1409
        %v1440 = vpack.c.b16 %v1412, %v1411
        %v1441 = vpack.c.b16 %v1414, %v1413
        %v1442 = vpack.c.b16 %v1416, %v1415
        %v1443 = vpack.c.b16 %v1418, %v1417
        %v1444 = vpack.c.b16 %v1420, %v1419
        %1469 = vmatprep.subr.bf16.mxu0 0
        %1470 = vmatpush1.bf16.msra.mxu0 %v1421
        %1471 = vmatprep.subr.bf16.mxu0 0
        %1472 = vmatpush1.bf16.msra.mxu0 %v1422
        %1473 = vmatprep.subr.bf16.mxu0 0
        %1474 = vmatpush1.bf16.msra.mxu0 %v1423
        %1475 = vmatprep.subr.bf16.mxu0 0
        %1476 = vmatpush1.bf16.msra.mxu0 %v1424
        %1477 = vmatprep.subr.bf16.mxu0 0
        %1478 = vmatpush1.bf16.msra.mxu0 %v1425
        %1479 = vmatprep.subr.bf16.mxu0 0
        %1480 = vmatpush1.bf16.msra.mxu0 %v1426
        %1481 = vmatprep.subr.bf16.mxu0 0
        %1482 = vmatpush1.bf16.msra.mxu0 %v1427
        %1483 = vmatprep.subr.bf16.mxu0 0
        %1484 = vmatpush1.bf16.msra.mxu0 %v1428
        %1485 = vmatprep.subr.bf16.mxu0 0
        %1486 = vmatpush1.bf16.msra.mxu0 %v1429
        %1487 = vmatprep.subr.bf16.mxu0 0
        %1488 = vmatpush1.bf16.msra.mxu0 %v1430
        %1489 = vmatprep.subr.bf16.mxu0 0
        %1490 = vmatpush1.bf16.msra.mxu0 %v1431
        %1491 = vmatprep.subr.bf16.mxu0 0
        %1492 = vmatpush1.bf16.msra.mxu0 %v1432
        %1493 = vmatprep.subr.bf16.mxu0 0
        %1494 = vmatpush1.bf16.msra.mxu0 %v1433
        %1495 = vmatprep.subr.bf16.mxu0 0
        %1496 = vmatpush1.bf16.msra.mxu0 %v1434
        %1497 = vmatprep.subr.bf16.mxu0 0
        %1498 = vmatpush1.bf16.msra.mxu0 %v1435
        %1499 = vmatprep.subr.bf16.mxu0 0
        %1500 = vmatpush1.bf16.msra.mxu0 %v1436
        %1501 = vmatprep.mubr.bf16.mxu0 %v1229
        %1502 = vmatmul.mubr.bf16.gmra.mrb[0].mxu0 %v1228
        %v1503 = vpop.f32.mrb[0].mxu0
        %v1504 = vadd.f32 0.0, %v1503
        %v1505 = vpop.f32.mrb[0].mxu0
        %v1506 = vpop.f32.mrb[0].mxu0
        %v1507 = vadd.f32 0.0, %v1506
        %v1508 = vpop.f32.mrb[0].mxu0
        %1509 = vmatprep.mubr.bf16.mxu0 %v1232
        %1510 = vmatmul.mubr.bf16.gmra.mrb[0].mxu0 %v1231
        %v1511 = vpop.f32.mrb[0].mxu0
        %v1512 = vadd.f32 0.0, %v1511
        %v1513 = vpop.f32.mrb[0].mxu0
        %v1514 = vpop.f32.mrb[0].mxu0
        %v1515 = vadd.f32 0.0, %v1514
        %v1516 = vpop.f32.mrb[0].mxu0
        %1517 = vmatprep.mubr.bf16.mxu0 %v1235
        %1518 = vmatmul.mubr.bf16.gmra.mrb[0].mxu0 %v1234
        %v1519 = vpop.f32.mrb[0].mxu0
        %v1520 = vadd.f32 0.0, %v1519
        %v1521 = vpop.f32.mrb[0].mxu0
        %v1522 = vpop.f32.mrb[0].mxu0
        %v1523 = vadd.f32 0.0, %v1522
        %v1524 = vpop.f32.mrb[0].mxu0
        %1525 = vmatprep.mubr.bf16.mxu0 %v1238
        %1526 = vmatmul.mubr.bf16.gmra.mrb[0].mxu0 %v1237
        %v1527 = vpop.f32.mrb[0].mxu0
        %v1528 = vadd.f32 0.0, %v1527
        %v1529 = vpop.f32.mrb[0].mxu0
        %v1530 = vpop.f32.mrb[0].mxu0
        %v1531 = vadd.f32 0.0, %v1530
        %v1532 = vpop.f32.mrb[0].mxu0
        %1533 = vmatprep.mubr.bf16.mxu0 %v1241
        %1534 = vmatmul.mubr.bf16.gmra.mrb[0].mxu0 %v1240
        %v1535 = vpop.f32.mrb[0].mxu0
        %v1536 = vadd.f32 0.0, %v1535
        %v1537 = vpop.f32.mrb[0].mxu0
        %v1538 = vpop.f32.mrb[0].mxu0
        %v1539 = vadd.f32 0.0, %v1538
        %v1540 = vpop.f32.mrb[0].mxu0
        %1541 = vmatprep.mubr.bf16.mxu0 %v1244
        %1542 = vmatmul.mubr.bf16.gmra.mrb[0].mxu0 %v1243
        %v1543 = vpop.f32.mrb[0].mxu0
        %v1544 = vadd.f32 0.0, %v1543
        %v1545 = vpop.f32.mrb[0].mxu0
        %v1546 = vpop.f32.mrb[0].mxu0
        %v1547 = vadd.f32 0.0, %v1546
        %v1548 = vpop.f32.mrb[0].mxu0
        %1549 = vmatprep.mubr.bf16.mxu0 %v1247
        %1550 = vmatmul.mubr.bf16.gmra.mrb[0].mxu0 %v1246
        %v1551 = vpop.f32.mrb[0].mxu0
        %v1552 = vadd.f32 0.0, %v1551
        %v1553 = vpop.f32.mrb[0].mxu0
        %v1554 = vpop.f32.mrb[0].mxu0
        %v1555 = vadd.f32 0.0, %v1554
        %v1556 = vpop.f32.mrb[0].mxu0
        %1557 = vmatprep.mubr.bf16.mxu0 %v1250
        %1558 = vmatmul.mubr.bf16.gmra.mrb[0].mxu0 %v1249
        %v1559 = vpop.f32.mrb[0].mxu0
        %v1560 = vadd.f32 0.0, %v1559
        %v1561 = vpop.f32.mrb[0].mxu0
        %v1562 = vpop.f32.mrb[0].mxu0
        %v1563 = vadd.f32 0.0, %v1562
        %v1564 = vpop.f32.mrb[0].mxu0
        %1565 = vmatprep.mubr.bf16.mxu0 %v1253
        %1566 = vmatmul.mubr.bf16.gmra.mrb[0].mxu0 %v1252
        %v1567 = vpop.f32.mrb[0].mxu0
        %v1568 = vadd.f32 0.0, %v1567
        %v1569 = vpop.f32.mrb[0].mxu0
        %v1570 = vpop.f32.mrb[0].mxu0
        %v1571 = vadd.f32 0.0, %v1570
        %v1572 = vpop.f32.mrb[0].mxu0
        %1573 = vmatprep.mubr.bf16.mxu0 %v1256
        %1574 = vmatmul.mubr.bf16.gmra.mrb[0].mxu0 %v1255
        %v1575 = vpop.f32.mrb[0].mxu0
        %v1576 = vadd.f32 0.0, %v1575
        %v1577 = vpop.f32.mrb[0].mxu0
        %v1578 = vpop.f32.mrb[0].mxu0
        %v1579 = vadd.f32 0.0, %v1578
        %v1580 = vpop.f32.mrb[0].mxu0
        %1581 = vmatprep.mubr.bf16.mxu0 %v1259
        %1582 = vmatmul.mubr.bf16.gmra.mrb[0].mxu0 %v1258
        %v1583 = vpop.f32.mrb[0].mxu0
        %v1584 = vadd.f32 0.0, %v1583
        %v1585 = vpop.f32.mrb[0].mxu0
        %v1586 = vpop.f32.mrb[0].mxu0
        %v1587 = vadd.f32 0.0, %v1586
        %v1588 = vpop.f32.mrb[0].mxu0
        %1589 = vmatprep.mubr.bf16.mxu0 %v1262
        %1590 = vmatmul.mubr.bf16.gmra.mrb[0].mxu0 %v1261
        %v1591 = vpop.f32.mrb[0].mxu0
        %v1592 = vadd.f32 0.0, %v1591
        %v1593 = vpop.f32.mrb[0].mxu0
        %v1594 = vpop.f32.mrb[0].mxu0
        %v1595 = vadd.f32 0.0, %v1594
        %v1596 = vpop.f32.mrb[0].mxu0
        %1597 = vmatprep.mubr.bf16.mxu0 %v1265
        %1598 = vmatmul.mubr.bf16.gmra.mrb[0].mxu0 %v1264
        %v1599 = vpop.f32.mrb[0].mxu0
        %v1600 = vadd.f32 0.0, %v1599
        %v1601 = vpop.f32.mrb[0].mxu0
        %v1602 = vpop.f32.mrb[0].mxu0
        %v1603 = vadd.f32 0.0, %v1602
        %v1604 = vpop.f32.mrb[0].mxu0
        %1605 = vmatprep.mubr.bf16.mxu0 %v1268
        %1606 = vmatmul.mubr.bf16.gmra.mrb[0].mxu0 %v1267
        %v1607 = vpop.f32.mrb[0].mxu0
        %v1608 = vadd.f32 0.0, %v1607
        %v1609 = vpop.f32.mrb[0].mxu0
        %v1610 = vpop.f32.mrb[0].mxu0
        %v1611 = vadd.f32 0.0, %v1610
        %v1612 = vpop.f32.mrb[0].mxu0
        %1613 = vmatprep.mubr.bf16.mxu0 %v1271
        %1614 = vmatmul.mubr.bf16.gmra.mrb[0].mxu0 %v1270
        %v1615 = vpop.f32.mrb[0].mxu0
        %v1616 = vadd.f32 0.0, %v1615
        %v1617 = vpop.f32.mrb[0].mxu0
        %v1618 = vpop.f32.mrb[0].mxu0
        %v1619 = vadd.f32 0.0, %v1618
        %v1620 = vpop.f32.mrb[0].mxu0
        %1621 = vmatprep.mubr.bf16.mxu0 %v1274
        %1622 = vmatmul.mubr.bf16.gmra.mrb[0].mxu0 %v1273
        %v1623 = vpop.f32.mrb[0].mxu0
        %v1624 = vadd.f32 0.0, %v1623
        %v1625 = vpop.f32.mrb[0].mxu0
        %v1626 = vpop.f32.mrb[0].mxu0
        %v1627 = vadd.f32 0.0, %v1626
        %v1628 = vpop.f32.mrb[0].mxu0
        %1629 = vdwg.mxu0
        %1630 = vmatprep.subr.bf16.mxu0 0
        %1631 = vmatpush1.bf16.msra.mxu0 %v1437
        %1632 = vmatprep.subr.bf16.mxu0 0
        %1633 = vmatpush1.bf16.msra.mxu0 %v1438
        %1634 = vmatprep.subr.bf16.mxu0 0
        %1635 = vmatpush1.bf16.msra.mxu0 %v1439
        %1636 = vmatprep.subr.bf16.mxu0 0
        %1637 = vmatpush1.bf16.msra.mxu0 %v1440
        %1638 = vmatprep.subr.bf16.mxu0 0
        %1639 = vmatpush1.bf16.msra.mxu0 %v1441
        %1640 = vmatprep.subr.bf16.mxu0 0
        %1641 = vmatpush1.bf16.msra.mxu0 %v1442
        %1642 = vmatprep.subr.bf16.mxu0 0
        %1643 = vmatpush1.bf16.msra.mxu0 %v1443
        %1644 = vmatprep.subr.bf16.mxu0 0
        %1645 = vmatpush1.bf16.msra.mxu0 %v1444
        %1646 = vmatprep.subr.bf16.mxu0 0
        %1647 = vmatpush1.bf16.msra.mxu0 0
        %1648 = vmatprep.subr.bf16.mxu0 0
        %1649 = vmatpush1.bf16.msra.mxu0 0
        %1650 = vmatprep.subr.bf16.mxu0 0
        %1651 = vmatpush1.bf16.msra.mxu0 0
        %1652 = vmatprep.subr.bf16.mxu0 0
        %1653 = vmatpush1.bf16.msra.mxu0 0
        %1654 = vmatprep.subr.bf16.mxu0 0
        %1655 = vmatpush1.bf16.msra.mxu0 0
        %1656 = vmatprep.subr.bf16.mxu0 0
        %1657 = vmatpush1.bf16.msra.mxu0 0
        %1658 = vmatprep.subr.bf16.mxu0 0
        %1659 = vmatpush1.bf16.msra.mxu0 0
        %1660 = vmatprep.subr.bf16.mxu0 0
        %1661 = vmatpush1.bf16.msra.mxu0 0
        %1662 = vmatprep.mubr.bf16.mxu0 0
        %1663 = vmatmul.mubr.bf16.gmra.mrb[0].mxu0 %v1230
        %v1664 = vpop.f32.mrb[0].mxu0
        %v1665 = vadd.f32 %v1504, %v1664
        %v1666 = vpop.f32.mrb[0].mxu0
        %v1667 = vpop.f32.mrb[0].mxu0
        %v1668 = vadd.f32 %v1507, %v1667
        %v1669 = vpop.f32.mrb[0].mxu0
        %1670 = vmatprep.mubr.bf16.mxu0 0
        %1671 = vmatmul.mubr.bf16.gmra.mrb[0].mxu0 %v1233
        %v1672 = vpop.f32.mrb[0].mxu0
        %v1673 = vadd.f32 %v1512, %v1672
        %v1674 = vpop.f32.mrb[0].mxu0
        %v1675 = vpop.f32.mrb[0].mxu0
        %v1676 = vadd.f32 %v1515, %v1675
        %v1677 = vpop.f32.mrb[0].mxu0
        %1678 = vmatprep.mubr.bf16.mxu0 0
        %1679 = vmatmul.mubr.bf16.gmra.mrb[0].mxu0 %v1236
        %v1680 = vpop.f32.mrb[0].mxu0
        %v1681 = vadd.f32 %v1520, %v1680
        %v1682 = vpop.f32.mrb[0].mxu0
        %v1683 = vpop.f32.mrb[0].mxu0
        %v1684 = vadd.f32 %v1523, %v1683
        %v1685 = vpop.f32.mrb[0].mxu0
        %1686 = vmatprep.mubr.bf16.mxu0 0
        %1687 = vmatmul.mubr.bf16.gmra.mrb[0].mxu0 %v1239
        %v1688 = vpop.f32.mrb[0].mxu0
        %v1689 = vadd.f32 %v1528, %v1688
        %v1690 = vpop.f32.mrb[0].mxu0
        %v1691 = vpop.f32.mrb[0].mxu0
        %v1692 = vadd.f32 %v1531, %v1691
        %v1693 = vpop.f32.mrb[0].mxu0
        %1694 = vmatprep.mubr.bf16.mxu0 0
        %1695 = vmatmul.mubr.bf16.gmra.mrb[0].mxu0 %v1242
        %v1696 = vpop.f32.mrb[0].mxu0
        %v1697 = vadd.f32 %v1536, %v1696
        %v1698 = vpop.f32.mrb[0].mxu0
        %v1699 = vpop.f32.mrb[0].mxu0
        %v1700 = vadd.f32 %v1539, %v1699
        %v1701 = vpop.f32.mrb[0].mxu0
        %1702 = vmatprep.mubr.bf16.mxu0 0
        %1703 = vmatmul.mubr.bf16.gmra.mrb[0].mxu0 %v1245
        %v1704 = vpop.f32.mrb[0].mxu0
        %v1705 = vadd.f32 %v1544, %v1704
        %v1706 = vpop.f32.mrb[0].mxu0
        %v1707 = vpop.f32.mrb[0].mxu0
        %v1708 = vadd.f32 %v1547, %v1707
        %v1709 = vpop.f32.mrb[0].mxu0
        %1710 = vmatprep.mubr.bf16.mxu0 0
        %1711 = vmatmul.mubr.bf16.gmra.mrb[0].mxu0 %v1248
        %v1712 = vpop.f32.mrb[0].mxu0
        %v1713 = vadd.f32 %v1552, %v1712
        %v1714 = vpop.f32.mrb[0].mxu0
        %v1715 = vpop.f32.mrb[0].mxu0
        %v1716 = vadd.f32 %v1555, %v1715
        %v1717 = vpop.f32.mrb[0].mxu0
        %1718 = vmatprep.mubr.bf16.mxu0 0
        %1719 = vmatmul.mubr.bf16.gmra.mrb[0].mxu0 %v1251
        %v1720 = vpop.f32.mrb[0].mxu0
        %v1721 = vadd.f32 %v1560, %v1720
        %v1722 = vpop.f32.mrb[0].mxu0
        %v1723 = vpop.f32.mrb[0].mxu0
        %v1724 = vadd.f32 %v1563, %v1723
        %v1725 = vpop.f32.mrb[0].mxu0
        %1726 = vmatprep.mubr.bf16.mxu0 0
        %1727 = vmatmul.mubr.bf16.gmra.mrb[0].mxu0 %v1254
        %v1728 = vpop.f32.mrb[0].mxu0
        %v1729 = vadd.f32 %v1568, %v1728
        %v1730 = vpop.f32.mrb[0].mxu0
        %v1731 = vpop.f32.mrb[0].mxu0
        %v1732 = vadd.f32 %v1571, %v1731
        %v1733 = vpop.f32.mrb[0].mxu0
        %1734 = vmatprep.mubr.bf16.mxu0 0
        %1735 = vmatmul.mubr.bf16.gmra.mrb[0].mxu0 %v1257
        %v1736 = vpop.f32.mrb[0].mxu0
        %v1737 = vadd.f32 %v1576, %v1736
        %v1738 = vpop.f32.mrb[0].mxu0
        %v1739 = vpop.f32.mrb[0].mxu0
        %v1740 = vadd.f32 %v1579, %v1739
        %v1741 = vpop.f32.mrb[0].mxu0
        %1742 = vmatprep.mubr.bf16.mxu0 0
        %1743 = vmatmul.mubr.bf16.gmra.mrb[0].mxu0 %v1260
        %v1744 = vpop.f32.mrb[0].mxu0
        %v1745 = vadd.f32 %v1584, %v1744
        %v1746 = vpop.f32.mrb[0].mxu0
        %v1747 = vpop.f32.mrb[0].mxu0
        %v1748 = vadd.f32 %v1587, %v1747
        %v1749 = vpop.f32.mrb[0].mxu0
        %1750 = vmatprep.mubr.bf16.mxu0 0
        %1751 = vmatmul.mubr.bf16.gmra.mrb[0].mxu0 %v1263
        %v1752 = vpop.f32.mrb[0].mxu0
        %v1753 = vadd.f32 %v1592, %v1752
        %v1754 = vpop.f32.mrb[0].mxu0
        %v1755 = vpop.f32.mrb[0].mxu0
        %v1756 = vadd.f32 %v1595, %v1755
        %v1757 = vpop.f32.mrb[0].mxu0
        %1758 = vmatprep.mubr.bf16.mxu0 0
        %1759 = vmatmul.mubr.bf16.gmra.mrb[0].mxu0 %v1266
        %v1760 = vpop.f32.mrb[0].mxu0
        %v1761 = vadd.f32 %v1600, %v1760
        %v1762 = vpop.f32.mrb[0].mxu0
        %v1763 = vpop.f32.mrb[0].mxu0
        %v1764 = vadd.f32 %v1603, %v1763
        %v1765 = vpop.f32.mrb[0].mxu0
        %1766 = vmatprep.mubr.bf16.mxu0 0
        %1767 = vmatmul.mubr.bf16.gmra.mrb[0].mxu0 %v1269
        %v1768 = vpop.f32.mrb[0].mxu0
        %v1769 = vadd.f32 %v1608, %v1768
        %v1770 = vpop.f32.mrb[0].mxu0
        %v1771 = vpop.f32.mrb[0].mxu0
        %v1772 = vadd.f32 %v1611, %v1771
        %v1773 = vpop.f32.mrb[0].mxu0
        %1774 = vmatprep.mubr.bf16.mxu0 0
        %1775 = vmatmul.mubr.bf16.gmra.mrb[0].mxu0 %v1272
        %v1776 = vpop.f32.mrb[0].mxu0
        %v1777 = vadd.f32 %v1616, %v1776
        %v1778 = vpop.f32.mrb[0].mxu0
        %v1779 = vpop.f32.mrb[0].mxu0
        %v1780 = vadd.f32 %v1619, %v1779
        %v1781 = vpop.f32.mrb[0].mxu0
        %1782 = vmatprep.mubr.bf16.mxu0 0
        %1783 = vmatmul.mubr.bf16.gmra.mrb[0].mxu0 %v1275
        %v1784 = vpop.f32.mrb[0].mxu0
        %v1785 = vadd.f32 %v1624, %v1784
        %v1786 = vpop.f32.mrb[0].mxu0
        %v1787 = vpop.f32.mrb[0].mxu0
        %v1788 = vadd.f32 %v1627, %v1787
        %v1789 = vpop.f32.mrb[0].mxu0
        %1790 = vdwg.mxu0
        %v1839 = vunpack.c.l.b16 %v1179
        %v1840 = vunpack.c.l.b16 %v1180
        %v1841 = vunpack.c.l.b16 %v1181
        %v1842 = vunpack.c.l.b16 %v1182
        %v1843 = vunpack.c.l.b16 %v1183
        %v1844 = vunpack.c.l.b16 %v1184
        %v1845 = vunpack.c.l.b16 %v1185
        %v1846 = vunpack.c.l.b16 %v1186
        %v1847 = vunpack.c.l.b16 %v1187
        %v1848 = vunpack.c.l.b16 %v1188
        %v1849 = vunpack.c.l.b16 %v1189
        %v1850 = vunpack.c.l.b16 %v1190
        %v1851 = vunpack.c.l.b16 %v1191
        %v1852 = vunpack.c.l.b16 %v1192
        %v1853 = vunpack.c.l.b16 %v1193
        %v1854 = vunpack.c.l.b16 %v1194
        %v1855 = vunpack.c.l.b16 %v1195
        %v1856 = vunpack.c.l.b16 %v1196
        %v1857 = vunpack.c.l.b16 %v1197
        %v1858 = vunpack.c.l.b16 %v1198
        %v1859 = vunpack.c.l.b16 %v1199
        %v1860 = vunpack.c.l.b16 %v1200
        %v1861 = vunpack.c.l.b16 %v1201
        %v1862 = vunpack.c.l.b16 %v1202
        %v1863 = vunpack.c.l.b16 %v1203
        %v1864 = vunpack.c.l.b16 %v1204
        %v1865 = vunpack.c.l.b16 %v1205
        %v1866 = vunpack.c.l.b16 %v1206
        %v1867 = vunpack.c.l.b16 %v1207
        %v1868 = vunpack.c.l.b16 %v1208
        %v1869 = vunpack.c.l.b16 %v1209
        %v1870 = vunpack.c.l.b16 %v1210
        %v1871 = vunpack.c.l.b16 %v1211
        %v1872 = vunpack.c.l.b16 %v1212
        %v1873 = vunpack.c.l.b16 %v1213
        %v1874 = vunpack.c.l.b16 %v1214
        %v1875 = vunpack.c.l.b16 %v1215
        %v1876 = vunpack.c.l.b16 %v1216
        %v1877 = vunpack.c.l.b16 %v1217
        %v1878 = vunpack.c.l.b16 %v1218
        %v1879 = vunpack.c.l.b16 %v1219
        %v1880 = vunpack.c.l.b16 %v1220
        %v1881 = vunpack.c.l.b16 %v1221
        %v1882 = vunpack.c.l.b16 %v1222
        %v1883 = vunpack.c.l.b16 %v1223
        %v1884 = vunpack.c.l.b16 %v1224
        %v1885 = vunpack.c.l.b16 %v1225
        %v1886 = vunpack.c.l.b16 %v1226
        %v1887 = vpack.c.b16 %v1840, %v1839
        %v1888 = vpack.c.b16 %v1842, %v1841
        %v1889 = vpack.c.b16 %v1844, %v1843
        %v1890 = vpack.c.b16 %v1846, %v1845
        %v1891 = vpack.c.b16 %v1848, %v1847
        %v1892 = vpack.c.b16 %v1850, %v1849
        %v1893 = vpack.c.b16 %v1852, %v1851
        %v1894 = vpack.c.b16 %v1854, %v1853
        %v1895 = vpack.c.b16 %v1856, %v1855
        %v1896 = vpack.c.b16 %v1858, %v1857
        %v1897 = vpack.c.b16 %v1860, %v1859
        %v1898 = vpack.c.b16 %v1862, %v1861
        %v1899 = vpack.c.b16 %v1864, %v1863
        %v1900 = vpack.c.b16 %v1866, %v1865
        %v1901 = vpack.c.b16 %v1868, %v1867
        %v1902 = vpack.c.b16 %v1870, %v1869
        %v1903 = vpack.c.b16 %v1872, %v1871
        %v1904 = vpack.c.b16 %v1874, %v1873
        %v1905 = vpack.c.b16 %v1876, %v1875
        %v1906 = vpack.c.b16 %v1878, %v1877
        %v1907 = vpack.c.b16 %v1880, %v1879
        %v1908 = vpack.c.b16 %v1882, %v1881
        %v1909 = vpack.c.b16 %v1884, %v1883
        %v1910 = vpack.c.b16 %v1886, %v1885
        %1935 = vmatprep.subr.bf16.mxu0 0
        %1936 = vmatpush1.bf16.msra.mxu0 %v1887
        %1937 = vmatprep.subr.bf16.mxu0 0
        %1938 = vmatpush1.bf16.msra.mxu0 %v1888
        %1939 = vmatprep.subr.bf16.mxu0 0
        %1940 = vmatpush1.bf16.msra.mxu0 %v1889
        %1941 = vmatprep.subr.bf16.mxu0 0
        %1942 = vmatpush1.bf16.msra.mxu0 %v1890
        %1943 = vmatprep.subr.bf16.mxu0 0
        %1944 = vmatpush1.bf16.msra.mxu0 %v1891
        %1945 = vmatprep.subr.bf16.mxu0 0
        %1946 = vmatpush1.bf16.msra.mxu0 %v1892
        %1947 = vmatprep.subr.bf16.mxu0 0
        %1948 = vmatpush1.bf16.msra.mxu0 %v1893
        %1949 = vmatprep.subr.bf16.mxu0 0
        %1950 = vmatpush1.bf16.msra.mxu0 %v1894
        %1951 = vmatprep.subr.bf16.mxu0 0
        %1952 = vmatpush1.bf16.msra.mxu0 %v1895
        %1953 = vmatprep.subr.bf16.mxu0 0
        %1954 = vmatpush1.bf16.msra.mxu0 %v1896
        %1955 = vmatprep.subr.bf16.mxu0 0
        %1956 = vmatpush1.bf16.msra.mxu0 %v1897
        %1957 = vmatprep.subr.bf16.mxu0 0
        %1958 = vmatpush1.bf16.msra.mxu0 %v1898
        %1959 = vmatprep.subr.bf16.mxu0 0
        %1960 = vmatpush1.bf16.msra.mxu0 %v1899
        %1961 = vmatprep.subr.bf16.mxu0 0
        %1962 = vmatpush1.bf16.msra.mxu0 %v1900
        %1963 = vmatprep.subr.bf16.mxu0 0
        %1964 = vmatpush1.bf16.msra.mxu0 %v1901
        %1965 = vmatprep.subr.bf16.mxu0 0
        %1966 = vmatpush1.bf16.msra.mxu0 %v1902
        %1967 = vmatprep.mubr.bf16.mxu0 %v1132
        %1968 = vmatmul.mubr.bf16.gmra.mrb[0].mxu0 %v1131
        %v1969 = vpop.f32.mrb[0].mxu0
        %v1970 = vadd.f32 %v1665, %v1969
        %v1971 = vpop.f32.mrb[0].mxu0
        %v1972 = vpop.f32.mrb[0].mxu0
        %v1973 = vadd.f32 %v1668, %v1972
        %v1974 = vpop.f32.mrb[0].mxu0
        %1975 = vmatprep.mubr.bf16.mxu0 %v1135
        %1976 = vmatmul.mubr.bf16.gmra.mrb[0].mxu0 %v1134
        %v1977 = vpop.f32.mrb[0].mxu0
        %v1978 = vadd.f32 %v1673, %v1977
        %v1979 = vpop.f32.mrb[0].mxu0
        %v1980 = vpop.f32.mrb[0].mxu0
        %v1981 = vadd.f32 %v1676, %v1980
        %v1982 = vpop.f32.mrb[0].mxu0
        %1983 = vmatprep.mubr.bf16.mxu0 %v1138
        %1984 = vmatmul.mubr.bf16.gmra.mrb[0].mxu0 %v1137
        %v1985 = vpop.f32.mrb[0].mxu0
        %v1986 = vadd.f32 %v1681, %v1985
        %v1987 = vpop.f32.mrb[0].mxu0
        %v1988 = vpop.f32.mrb[0].mxu0
        %v1989 = vadd.f32 %v1684, %v1988
        %v1990 = vpop.f32.mrb[0].mxu0
        %1991 = vmatprep.mubr.bf16.mxu0 %v1141
        %1992 = vmatmul.mubr.bf16.gmra.mrb[0].mxu0 %v1140
        %v1993 = vpop.f32.mrb[0].mxu0
        %v1994 = vadd.f32 %v1689, %v1993
        %v1995 = vpop.f32.mrb[0].mxu0
        %v1996 = vpop.f32.mrb[0].mxu0
        %v1997 = vadd.f32 %v1692, %v1996
        %v1998 = vpop.f32.mrb[0].mxu0
        %1999 = vmatprep.mubr.bf16.mxu0 %v1144
        %2000 = vmatmul.mubr.bf16.gmra.mrb[0].mxu0 %v1143
        %v2001 = vpop.f32.mrb[0].mxu0
        %v2002 = vadd.f32 %v1697, %v2001
        %v2003 = vpop.f32.mrb[0].mxu0
        %v2004 = vpop.f32.mrb[0].mxu0
        %v2005 = vadd.f32 %v1700, %v2004
        %v2006 = vpop.f32.mrb[0].mxu0
        %2007 = vmatprep.mubr.bf16.mxu0 %v1147
        %2008 = vmatmul.mubr.bf16.gmra.mrb[0].mxu0 %v1146
        %v2009 = vpop.f32.mrb[0].mxu0
        %v2010 = vadd.f32 %v1705, %v2009
        %v2011 = vpop.f32.mrb[0].mxu0
        %v2012 = vpop.f32.mrb[0].mxu0
        %v2013 = vadd.f32 %v1708, %v2012
        %v2014 = vpop.f32.mrb[0].mxu0
        %2015 = vmatprep.mubr.bf16.mxu0 %v1150
        %2016 = vmatmul.mubr.bf16.gmra.mrb[0].mxu0 %v1149
        %v2017 = vpop.f32.mrb[0].mxu0
        %v2018 = vadd.f32 %v1713, %v2017
        %v2019 = vpop.f32.mrb[0].mxu0
        %v2020 = vpop.f32.mrb[0].mxu0
        %v2021 = vadd.f32 %v1716, %v2020
        %v2022 = vpop.f32.mrb[0].mxu0
        %2023 = vmatprep.mubr.bf16.mxu0 %v1153
        %2024 = vmatmul.mubr.bf16.gmra.mrb[0].mxu0 %v1152
        %v2025 = vpop.f32.mrb[0].mxu0
        %v2026 = vadd.f32 %v1721, %v2025
        %v2027 = vpop.f32.mrb[0].mxu0
        %v2028 = vpop.f32.mrb[0].mxu0
        %v2029 = vadd.f32 %v1724, %v2028
        %v2030 = vpop.f32.mrb[0].mxu0
        %2031 = vmatprep.mubr.bf16.mxu0 %v1156
        %2032 = vmatmul.mubr.bf16.gmra.mrb[0].mxu0 %v1155
        %v2033 = vpop.f32.mrb[0].mxu0
        %v2034 = vadd.f32 %v1729, %v2033
        %v2035 = vpop.f32.mrb[0].mxu0
        %v2036 = vpop.f32.mrb[0].mxu0
        %v2037 = vadd.f32 %v1732, %v2036
        %v2038 = vpop.f32.mrb[0].mxu0
        %2039 = vmatprep.mubr.bf16.mxu0 %v1159
        %2040 = vmatmul.mubr.bf16.gmra.mrb[0].mxu0 %v1158
        %v2041 = vpop.f32.mrb[0].mxu0
        %v2042 = vadd.f32 %v1737, %v2041
        %v2043 = vpop.f32.mrb[0].mxu0
        %v2044 = vpop.f32.mrb[0].mxu0
        %v2045 = vadd.f32 %v1740, %v2044
        %v2046 = vpop.f32.mrb[0].mxu0
        %2047 = vmatprep.mubr.bf16.mxu0 %v1162
        %2048 = vmatmul.mubr.bf16.gmra.mrb[0].mxu0 %v1161
        %v2049 = vpop.f32.mrb[0].mxu0
        %v2050 = vadd.f32 %v1745, %v2049
        %v2051 = vpop.f32.mrb[0].mxu0
        %v2052 = vpop.f32.mrb[0].mxu0
        %v2053 = vadd.f32 %v1748, %v2052
        %v2054 = vpop.f32.mrb[0].mxu0
        %2055 = vmatprep.mubr.bf16.mxu0 %v1165
        %2056 = vmatmul.mubr.bf16.gmra.mrb[0].mxu0 %v1164
        %v2057 = vpop.f32.mrb[0].mxu0
        %v2058 = vadd.f32 %v1753, %v2057
        %v2059 = vpop.f32.mrb[0].mxu0
        %v2060 = vpop.f32.mrb[0].mxu0
        %v2061 = vadd.f32 %v1756, %v2060
        %v2062 = vpop.f32.mrb[0].mxu0
        %2063 = vmatprep.mubr.bf16.mxu0 %v1168
        %2064 = vmatmul.mubr.bf16.gmra.mrb[0].mxu0 %v1167
        %v2065 = vpop.f32.mrb[0].mxu0
        %v2066 = vadd.f32 %v1761, %v2065
        %v2067 = vpop.f32.mrb[0].mxu0
        %v2068 = vpop.f32.mrb[0].mxu0
        %v2069 = vadd.f32 %v1764, %v2068
        %v2070 = vpop.f32.mrb[0].mxu0
        %2071 = vmatprep.mubr.bf16.mxu0 %v1171
        %2072 = vmatmul.mubr.bf16.gmra.mrb[0].mxu0 %v1170
        %v2073 = vpop.f32.mrb[0].mxu0
        %v2074 = vadd.f32 %v1769, %v2073
        %v2075 = vpop.f32.mrb[0].mxu0
        %v2076 = vpop.f32.mrb[0].mxu0
        %v2077 = vadd.f32 %v1772, %v2076
        %v2078 = vpop.f32.mrb[0].mxu0
        %2079 = vmatprep.mubr.bf16.mxu0 %v1174
        %2080 = vmatmul.mubr.bf16.gmra.mrb[0].mxu0 %v1173
        %v2081 = vpop.f32.mrb[0].mxu0
        %v2082 = vadd.f32 %v1777, %v2081
        %v2083 = vpop.f32.mrb[0].mxu0
        %v2084 = vpop.f32.mrb[0].mxu0
        %v2085 = vadd.f32 %v1780, %v2084
        %v2086 = vpop.f32.mrb[0].mxu0
        %2087 = vmatprep.mubr.bf16.mxu0 %v1177
        %2088 = vmatmul.mubr.bf16.gmra.mrb[0].mxu0 %v1176
        %v2089 = vpop.f32.mrb[0].mxu0
        %v2090 = vadd.f32 %v1785, %v2089
        %v2091 = vpop.f32.mrb[0].mxu0
        %v2092 = vpop.f32.mrb[0].mxu0
        %v2093 = vadd.f32 %v1788, %v2092
        %v2094 = vpop.f32.mrb[0].mxu0
        %2095 = vdwg.mxu0
        %2096 = vmatprep.subr.bf16.mxu0 0
        %2097 = vmatpush1.bf16.msra.mxu0 %v1903
        %2098 = vmatprep.subr.bf16.mxu0 0
        %2099 = vmatpush1.bf16.msra.mxu0 %v1904
        %2100 = vmatprep.subr.bf16.mxu0 0
        %2101 = vmatpush1.bf16.msra.mxu0 %v1905
        %2102 = vmatprep.subr.bf16.mxu0 0
        %2103 = vmatpush1.bf16.msra.mxu0 %v1906
        %2104 = vmatprep.subr.bf16.mxu0 0
        %2105 = vmatpush1.bf16.msra.mxu0 %v1907
        %2106 = vmatprep.subr.bf16.mxu0 0
        %2107 = vmatpush1.bf16.msra.mxu0 %v1908
        %2108 = vmatprep.subr.bf16.mxu0 0
        %2109 = vmatpush1.bf16.msra.mxu0 %v1909
        %2110 = vmatprep.subr.bf16.mxu0 0
        %2111 = vmatpush1.bf16.msra.mxu0 %v1910
        %2112 = vmatprep.subr.bf16.mxu0 0
        %2113 = vmatpush1.bf16.msra.mxu0 0
        %2114 = vmatprep.subr.bf16.mxu0 0
        %2115 = vmatpush1.bf16.msra.mxu0 0
        %2116 = vmatprep.subr.bf16.mxu0 0
        %2117 = vmatpush1.bf16.msra.mxu0 0
        %2118 = vmatprep.subr.bf16.mxu0 0
        %2119 = vmatpush1.bf16.msra.mxu0 0
        %2120 = vmatprep.subr.bf16.mxu0 0
        %2121 = vmatpush1.bf16.msra.mxu0 0
        %2122 = vmatprep.subr.bf16.mxu0 0
        %2123 = vmatpush1.bf16.msra.mxu0 0
        %2124 = vmatprep.subr.bf16.mxu0 0
        %2125 = vmatpush1.bf16.msra.mxu0 0
        %2126 = vmatprep.subr.bf16.mxu0 0
        %2127 = vmatpush1.bf16.msra.mxu0 0
        %2128 = vmatprep.mubr.bf16.mxu0 0
        %2129 = vmatmul.mubr.bf16.gmra.mrb[0].mxu0 %v1133
        %v2130 = vpop.f32.mrb[0].mxu0
        %v2131 = vadd.f32 %v1970, %v2130
        %v2132 = vpop.f32.mrb[0].mxu0
        %v2133 = vpop.f32.mrb[0].mxu0
        %v2134 = vadd.f32 %v1973, %v2133
        %v2135 = vpop.f32.mrb[0].mxu0
        %2136 = vmatprep.mubr.bf16.mxu0 0
        %2137 = vmatmul.mubr.bf16.gmra.mrb[0].mxu0 %v1136
        %v2138 = vpop.f32.mrb[0].mxu0
        %v2139 = vadd.f32 %v1978, %v2138
        %v2140 = vpop.f32.mrb[0].mxu0
        %v2141 = vpop.f32.mrb[0].mxu0
        %v2142 = vadd.f32 %v1981, %v2141
        %v2143 = vpop.f32.mrb[0].mxu0
        %2144 = vmatprep.mubr.bf16.mxu0 0
        %2145 = vmatmul.mubr.bf16.gmra.mrb[0].mxu0 %v1139
        %v2146 = vpop.f32.mrb[0].mxu0
        %v2147 = vadd.f32 %v1986, %v2146
        %v2148 = vpop.f32.mrb[0].mxu0
        %v2149 = vpop.f32.mrb[0].mxu0
        %v2150 = vadd.f32 %v1989, %v2149
        %v2151 = vpop.f32.mrb[0].mxu0
        %2152 = vmatprep.mubr.bf16.mxu0 0
        %2153 = vmatmul.mubr.bf16.gmra.mrb[0].mxu0 %v1142
        %v2154 = vpop.f32.mrb[0].mxu0
        %v2155 = vadd.f32 %v1994, %v2154
        %v2156 = vpop.f32.mrb[0].mxu0
        %v2157 = vpop.f32.mrb[0].mxu0
        %v2158 = vadd.f32 %v1997, %v2157
        %v2159 = vpop.f32.mrb[0].mxu0
        %2160 = vmatprep.mubr.bf16.mxu0 0
        %2161 = vmatmul.mubr.bf16.gmra.mrb[0].mxu0 %v1145
        %v2162 = vpop.f32.mrb[0].mxu0
        %v2163 = vadd.f32 %v2002, %v2162
        %v2164 = vpop.f32.mrb[0].mxu0
        %v2165 = vpop.f32.mrb[0].mxu0
        %v2166 = vadd.f32 %v2005, %v2165
        %v2167 = vpop.f32.mrb[0].mxu0
        %2168 = vmatprep.mubr.bf16.mxu0 0
        %2169 = vmatmul.mubr.bf16.gmra.mrb[0].mxu0 %v1148
        %v2170 = vpop.f32.mrb[0].mxu0
        %v2171 = vadd.f32 %v2010, %v2170
        %v2172 = vpop.f32.mrb[0].mxu0
        %v2173 = vpop.f32.mrb[0].mxu0
        %v2174 = vadd.f32 %v2013, %v2173
        %v2175 = vpop.f32.mrb[0].mxu0
        %2176 = vmatprep.mubr.bf16.mxu0 0
        %2177 = vmatmul.mubr.bf16.gmra.mrb[0].mxu0 %v1151
        %v2178 = vpop.f32.mrb[0].mxu0
        %v2179 = vadd.f32 %v2018, %v2178
        %v2180 = vpop.f32.mrb[0].mxu0
        %v2181 = vpop.f32.mrb[0].mxu0
        %v2182 = vadd.f32 %v2021, %v2181
        %v2183 = vpop.f32.mrb[0].mxu0
        %2184 = vmatprep.mubr.bf16.mxu0 0
        %2185 = vmatmul.mubr.bf16.gmra.mrb[0].mxu0 %v1154
        %v2186 = vpop.f32.mrb[0].mxu0
        %v2187 = vadd.f32 %v2026, %v2186
        %v2188 = vpop.f32.mrb[0].mxu0
        %v2189 = vpop.f32.mrb[0].mxu0
        %v2190 = vadd.f32 %v2029, %v2189
        %v2191 = vpop.f32.mrb[0].mxu0
        %2192 = vmatprep.mubr.bf16.mxu0 0
        %2193 = vmatmul.mubr.bf16.gmra.mrb[0].mxu0 %v1157
        %v2194 = vpop.f32.mrb[0].mxu0
        %v2195 = vadd.f32 %v2034, %v2194
        %v2196 = vpop.f32.mrb[0].mxu0
        %v2197 = vpop.f32.mrb[0].mxu0
        %v2198 = vadd.f32 %v2037, %v2197
        %v2199 = vpop.f32.mrb[0].mxu0
        %2200 = vmatprep.mubr.bf16.mxu0 0
        %2201 = vmatmul.mubr.bf16.gmra.mrb[0].mxu0 %v1160
        %v2202 = vpop.f32.mrb[0].mxu0
        %v2203 = vadd.f32 %v2042, %v2202
        %v2204 = vpop.f32.mrb[0].mxu0
        %v2205 = vpop.f32.mrb[0].mxu0
        %v2206 = vadd.f32 %v2045, %v2205
        %v2207 = vpop.f32.mrb[0].mxu0
        %2208 = vmatprep.mubr.bf16.mxu0 0
        %2209 = vmatmul.mubr.bf16.gmra.mrb[0].mxu0 %v1163
        %v2210 = vpop.f32.mrb[0].mxu0
        %v2211 = vadd.f32 %v2050, %v2210
        %v2212 = vpop.f32.mrb[0].mxu0
        %v2213 = vpop.f32.mrb[0].mxu0
        %v2214 = vadd.f32 %v2053, %v2213
        %v2215 = vpop.f32.mrb[0].mxu0
        %2216 = vmatprep.mubr.bf16.mxu0 0
        %2217 = vmatmul.mubr.bf16.gmra.mrb[0].mxu0 %v1166
        %v2218 = vpop.f32.mrb[0].mxu0
        %v2219 = vadd.f32 %v2058, %v2218
        %v2220 = vpop.f32.mrb[0].mxu0
        %v2221 = vpop.f32.mrb[0].mxu0
        %v2222 = vadd.f32 %v2061, %v2221
        %v2223 = vpop.f32.mrb[0].mxu0
        %2224 = vmatprep.mubr.bf16.mxu0 0
        %2225 = vmatmul.mubr.bf16.gmra.mrb[0].mxu0 %v1169
        %v2226 = vpop.f32.mrb[0].mxu0
        %v2227 = vadd.f32 %v2066, %v2226
        %v2228 = vpop.f32.mrb[0].mxu0
        %v2229 = vpop.f32.mrb[0].mxu0
        %v2230 = vadd.f32 %v2069, %v2229
        %v2231 = vpop.f32.mrb[0].mxu0
        %2232 = vmatprep.mubr.bf16.mxu0 0
        %2233 = vmatmul.mubr.bf16.gmra.mrb[0].mxu0 %v1172
        %v2234 = vpop.f32.mrb[0].mxu0
        %v2235 = vadd.f32 %v2074, %v2234
        %v2236 = vpop.f32.mrb[0].mxu0
        %v2237 = vpop.f32.mrb[0].mxu0
        %v2238 = vadd.f32 %v2077, %v2237
        %v2239 = vpop.f32.mrb[0].mxu0
        %2240 = vmatprep.mubr.bf16.mxu0 0
        %2241 = vmatmul.mubr.bf16.gmra.mrb[0].mxu0 %v1175
        %v2242 = vpop.f32.mrb[0].mxu0
        %v2243 = vadd.f32 %v2082, %v2242
        %v2244 = vpop.f32.mrb[0].mxu0
        %v2245 = vpop.f32.mrb[0].mxu0
        %v2246 = vadd.f32 %v2085, %v2245
        %v2247 = vpop.f32.mrb[0].mxu0
        %2248 = vmatprep.mubr.bf16.mxu0 0
        %2249 = vmatmul.mubr.bf16.gmra.mrb[0].mxu0 %v1178
        %v2250 = vpop.f32.mrb[0].mxu0
        %v2251 = vadd.f32 %v2090, %v2250
        %v2252 = vpop.f32.mrb[0].mxu0
        %v2253 = vpop.f32.mrb[0].mxu0
        %v2254 = vadd.f32 %v2093, %v2253
        %v2255 = vpop.f32.mrb[0].mxu0
        %2256 = vdwg.mxu0
        %s2257 = scalar_lea.vmem [#allocation4], 48
        %v2258 = vld [vmem:[%s2257] sm:$0xff]
        %v2259 = vld [vmem:[%s2257 + $0x8] sm:$0xff]
        %v2260 = vld [vmem:[%s2257 + $0x10] sm:$0xff]
        %v2261 = vld [vmem:[%s2257 + $0x18] sm:$0xff]
        %v2262 = vld [vmem:[%s2257 + $0x20] sm:$0xff]
        %v2263 = vld [vmem:[%s2257 + $0x28] sm:$0xff]
        %v2264 = vld [vmem:[%s2257 + $0x30] sm:$0xff]
        %v2265 = vld [vmem:[%s2257 + $0x38] sm:$0xff]
        %v2266 = vld [vmem:[%s2257 + $0x40] sm:$0xff]
        %v2267 = vld [vmem:[%s2257 + $0x48] sm:$0xff]
        %v2268 = vld [vmem:[%s2257 + $0x50] sm:$0xff]
        %v2269 = vld [vmem:[%s2257 + $0x58] sm:$0xff]
        %v2270 = vld [vmem:[%s2257 + $0x60] sm:$0xff]
        %v2271 = vld [vmem:[%s2257 + $0x68] sm:$0xff]
        %v2272 = vld [vmem:[%s2257 + $0x70] sm:$0xff]
        %v2273 = vld [vmem:[%s2257 + $0x78] sm:$0xff]
        %v2274 = vld [vmem:[%s2257 + $0x80] sm:$0xff]
        %v2275 = vld [vmem:[%s2257 + $0x88] sm:$0xff]
        %v2276 = vld [vmem:[%s2257 + $0x90] sm:$0xff]
        %v2277 = vld [vmem:[%s2257 + $0x98] sm:$0xff]
        %v2278 = vld [vmem:[%s2257 + $0xa0] sm:$0xff]
        %v2279 = vld [vmem:[%s2257 + $0xa8] sm:$0xff]
        %v2280 = vld [vmem:[%s2257 + $0xb0] sm:$0xff]
        %v2281 = vld [vmem:[%s2257 + $0xb8] sm:$0xff]
        %v2282 = vld [vmem:[%s2257 + $0xc0] sm:$0xff]
        %v2283 = vld [vmem:[%s2257 + $0xc8] sm:$0xff]
        %v2284 = vld [vmem:[%s2257 + $0xd0] sm:$0xff]
        %v2285 = vld [vmem:[%s2257 + $0xd8] sm:$0xff]
        %v2286 = vld [vmem:[%s2257 + $0xe0] sm:$0xff]
        %v2287 = vld [vmem:[%s2257 + $0xe8] sm:$0xff]
        %v2288 = vld [vmem:[%s2257 + $0xf0] sm:$0xff]
        %v2289 = vld [vmem:[%s2257 + $0xf8] sm:$0xff]
        %v2290 = vld [vmem:[%s2257 + $0x100] sm:$0xff]
        %v2291 = vld [vmem:[%s2257 + $0x108] sm:$0xff]
        %v2292 = vld [vmem:[%s2257 + $0x110] sm:$0xff]
        %v2293 = vld [vmem:[%s2257 + $0x118] sm:$0xff]
        %v2294 = vld [vmem:[%s2257 + $0x120] sm:$0xff]
        %v2295 = vld [vmem:[%s2257 + $0x128] sm:$0xff]
        %v2296 = vld [vmem:[%s2257 + $0x130] sm:$0xff]
        %v2297 = vld [vmem:[%s2257 + $0x138] sm:$0xff]
        %v2298 = vld [vmem:[%s2257 + $0x140] sm:$0xff]
        %v2299 = vld [vmem:[%s2257 + $0x148] sm:$0xff]
        %v2300 = vld [vmem:[%s2257 + $0x150] sm:$0xff]
        %v2301 = vld [vmem:[%s2257 + $0x158] sm:$0xff]
        %v2302 = vld [vmem:[%s2257 + $0x160] sm:$0xff]
        %v2303 = vld [vmem:[%s2257 + $0x168] sm:$0xff]
        %v2304 = vld [vmem:[%s2257 + $0x170] sm:$0xff]
        %v2305 = vld [vmem:[%s2257 + $0x178] sm:$0xff]
        %s2306 = scalar_lea.vmem [#allocation7], 384
        %v2307 = vld [vmem:[%s2306] sm:$0xf]
        %v2308 = vld [vmem:[%s2306 + $0x4] sm:$0xf]
        %v2309 = vld [vmem:[%s2306 + $0x8] sm:$0xf]
        %v2310 = vld [vmem:[%s2306 + $0xc] sm:$0xf]
        %v2311 = vld [vmem:[%s2306 + $0x10] sm:$0xf]
        %v2312 = vld [vmem:[%s2306 + $0x14] sm:$0xf]
        %v2313 = vld [vmem:[%s2306 + $0x18] sm:$0xf]
        %v2314 = vld [vmem:[%s2306 + $0x1c] sm:$0xf]
        %v2315 = vld [vmem:[%s2306 + $0x20] sm:$0xf]
        %v2316 = vld [vmem:[%s2306 + $0x24] sm:$0xf]
        %v2317 = vld [vmem:[%s2306 + $0x28] sm:$0xf]
        %v2318 = vld [vmem:[%s2306 + $0x2c] sm:$0xf]
        %v2319 = vld [vmem:[%s2306 + $0x30] sm:$0xf]
        %v2320 = vld [vmem:[%s2306 + $0x34] sm:$0xf]
        %v2321 = vld [vmem:[%s2306 + $0x38] sm:$0xf]
        %v2322 = vld [vmem:[%s2306 + $0x3c] sm:$0xf]
        %v2323 = vld [vmem:[%s2306 + $0x40] sm:$0xf]
        %v2324 = vld [vmem:[%s2306 + $0x44] sm:$0xf]
        %v2325 = vld [vmem:[%s2306 + $0x48] sm:$0xf]
        %v2326 = vld [vmem:[%s2306 + $0x4c] sm:$0xf]
        %v2327 = vld [vmem:[%s2306 + $0x50] sm:$0xf]
        %v2328 = vld [vmem:[%s2306 + $0x54] sm:$0xf]
        %v2329 = vld [vmem:[%s2306 + $0x58] sm:$0xf]
        %v2330 = vld [vmem:[%s2306 + $0x5c] sm:$0xf]
        %v2331 = vld [vmem:[%s2306 + $0x60] sm:$0xf]
        %v2332 = vld [vmem:[%s2306 + $0x64] sm:$0xf]
        %v2333 = vld [vmem:[%s2306 + $0x68] sm:$0xf]
        %v2334 = vld [vmem:[%s2306 + $0x6c] sm:$0xf]
        %v2335 = vld [vmem:[%s2306 + $0x70] sm:$0xf]
        %v2336 = vld [vmem:[%s2306 + $0x74] sm:$0xf]
        %v2337 = vld [vmem:[%s2306 + $0x78] sm:$0xf]
        %v2338 = vld [vmem:[%s2306 + $0x7c] sm:$0xf]
        %v2339 = vld [vmem:[%s2306 + $0x80] sm:$0xf]
        %v2340 = vld [vmem:[%s2306 + $0x84] sm:$0xf]
        %v2341 = vld [vmem:[%s2306 + $0x88] sm:$0xf]
        %v2342 = vld [vmem:[%s2306 + $0x8c] sm:$0xf]
        %v2343 = vld [vmem:[%s2306 + $0x90] sm:$0xf]
        %v2344 = vld [vmem:[%s2306 + $0x94] sm:$0xf]
        %v2345 = vld [vmem:[%s2306 + $0x98] sm:$0xf]
        %v2346 = vld [vmem:[%s2306 + $0x9c] sm:$0xf]
        %v2347 = vld [vmem:[%s2306 + $0xa0] sm:$0xf]
        %v2348 = vld [vmem:[%s2306 + $0xa4] sm:$0xf]
        %v2349 = vld [vmem:[%s2306 + $0xa8] sm:$0xf]
        %v2350 = vld [vmem:[%s2306 + $0xac] sm:$0xf]
        %v2351 = vld [vmem:[%s2306 + $0xb0] sm:$0xf]
        %v2352 = vld [vmem:[%s2306 + $0xb4] sm:$0xf]
        %v2353 = vld [vmem:[%s2306 + $0xb8] sm:$0xf]
        %v2354 = vld [vmem:[%s2306 + $0xbc] sm:$0xf]
        %v2403 = vunpack.c.l.b16 %v2307
        %v2404 = vunpack.c.l.b16 %v2308
        %v2405 = vunpack.c.l.b16 %v2309
        %v2406 = vunpack.c.l.b16 %v2310
        %v2407 = vunpack.c.l.b16 %v2311
        %v2408 = vunpack.c.l.b16 %v2312
        %v2409 = vunpack.c.l.b16 %v2313
        %v2410 = vunpack.c.l.b16 %v2314
        %v2411 = vunpack.c.l.b16 %v2315
        %v2412 = vunpack.c.l.b16 %v2316
        %v2413 = vunpack.c.l.b16 %v2317
        %v2414 = vunpack.c.l.b16 %v2318
        %v2415 = vunpack.c.l.b16 %v2319
        %v2416 = vunpack.c.l.b16 %v2320
        %v2417 = vunpack.c.l.b16 %v2321
        %v2418 = vunpack.c.l.b16 %v2322
        %v2419 = vunpack.c.l.b16 %v2323
        %v2420 = vunpack.c.l.b16 %v2324
        %v2421 = vunpack.c.l.b16 %v2325
        %v2422 = vunpack.c.l.b16 %v2326
        %v2423 = vunpack.c.l.b16 %v2327
        %v2424 = vunpack.c.l.b16 %v2328
        %v2425 = vunpack.c.l.b16 %v2329
        %v2426 = vunpack.c.l.b16 %v2330
        %v2427 = vunpack.c.l.b16 %v2331
        %v2428 = vunpack.c.l.b16 %v2332
        %v2429 = vunpack.c.l.b16 %v2333
        %v2430 = vunpack.c.l.b16 %v2334
        %v2431 = vunpack.c.l.b16 %v2335
        %v2432 = vunpack.c.l.b16 %v2336
        %v2433 = vunpack.c.l.b16 %v2337
        %v2434 = vunpack.c.l.b16 %v2338
        %v2435 = vunpack.c.l.b16 %v2339
        %v2436 = vunpack.c.l.b16 %v2340
        %v2437 = vunpack.c.l.b16 %v2341
        %v2438 = vunpack.c.l.b16 %v2342
        %v2439 = vunpack.c.l.b16 %v2343
        %v2440 = vunpack.c.l.b16 %v2344
        %v2441 = vunpack.c.l.b16 %v2345
        %v2442 = vunpack.c.l.b16 %v2346
        %v2443 = vunpack.c.l.b16 %v2347
        %v2444 = vunpack.c.l.b16 %v2348
        %v2445 = vunpack.c.l.b16 %v2349
        %v2446 = vunpack.c.l.b16 %v2350
        %v2447 = vunpack.c.l.b16 %v2351
        %v2448 = vunpack.c.l.b16 %v2352
        %v2449 = vunpack.c.l.b16 %v2353
        %v2450 = vunpack.c.l.b16 %v2354
        %v2451 = vpack.c.b16 %v2404, %v2403
        %v2452 = vpack.c.b16 %v2406, %v2405
        %v2453 = vpack.c.b16 %v2408, %v2407
        %v2454 = vpack.c.b16 %v2410, %v2409
        %v2455 = vpack.c.b16 %v2412, %v2411
        %v2456 = vpack.c.b16 %v2414, %v2413
        %v2457 = vpack.c.b16 %v2416, %v2415
        %v2458 = vpack.c.b16 %v2418, %v2417
        %v2459 = vpack.c.b16 %v2420, %v2419
        %v2460 = vpack.c.b16 %v2422, %v2421
        %v2461 = vpack.c.b16 %v2424, %v2423
        %v2462 = vpack.c.b16 %v2426, %v2425
        %v2463 = vpack.c.b16 %v2428, %v2427
        %v2464 = vpack.c.b16 %v2430, %v2429
        %v2465 = vpack.c.b16 %v2432, %v2431
        %v2466 = vpack.c.b16 %v2434, %v2433
        %v2467 = vpack.c.b16 %v2436, %v2435
        %v2468 = vpack.c.b16 %v2438, %v2437
        %v2469 = vpack.c.b16 %v2440, %v2439
        %v2470 = vpack.c.b16 %v2442, %v2441
        %v2471 = vpack.c.b16 %v2444, %v2443
        %v2472 = vpack.c.b16 %v2446, %v2445
        %v2473 = vpack.c.b16 %v2448, %v2447
        %v2474 = vpack.c.b16 %v2450, %v2449
        %2499 = vmatprep.subr.bf16.mxu0 0
        %2500 = vmatpush1.bf16.msra.mxu0 %v2451
        %2501 = vmatprep.subr.bf16.mxu0 0
        %2502 = vmatpush1.bf16.msra.mxu0 %v2452
        %2503 = vmatprep.subr.bf16.mxu0 0
        %2504 = vmatpush1.bf16.msra.mxu0 %v2453
        %2505 = vmatprep.subr.bf16.mxu0 0
        %2506 = vmatpush1.bf16.msra.mxu0 %v2454
        %2507 = vmatprep.subr.bf16.mxu0 0
        %2508 = vmatpush1.bf16.msra.mxu0 %v2455
        %2509 = vmatprep.subr.bf16.mxu0 0
        %2510 = vmatpush1.bf16.msra.mxu0 %v2456
        %2511 = vmatprep.subr.bf16.mxu0 0
        %2512 = vmatpush1.bf16.msra.mxu0 %v2457
        %2513 = vmatprep.subr.bf16.mxu0 0
        %2514 = vmatpush1.bf16.msra.mxu0 %v2458
        %2515 = vmatprep.subr.bf16.mxu0 0
        %2516 = vmatpush1.bf16.msra.mxu0 %v2459
        %2517 = vmatprep.subr.bf16.mxu0 0
        %2518 = vmatpush1.bf16.msra.mxu0 %v2460
        %2519 = vmatprep.subr.bf16.mxu0 0
        %2520 = vmatpush1.bf16.msra.mxu0 %v2461
        %2521 = vmatprep.subr.bf16.mxu0 0
        %2522 = vmatpush1.bf16.msra.mxu0 %v2462
        %2523 = vmatprep.subr.bf16.mxu0 0
        %2524 = vmatpush1.bf16.msra.mxu0 %v2463
        %2525 = vmatprep.subr.bf16.mxu0 0
        %2526 = vmatpush1.bf16.msra.mxu0 %v2464
        %2527 = vmatprep.subr.bf16.mxu0 0
        %2528 = vmatpush1.bf16.msra.mxu0 %v2465
        %2529 = vmatprep.subr.bf16.mxu0 0
        %2530 = vmatpush1.bf16.msra.mxu0 %v2466
        %2531 = vmatprep.mubr.bf16.mxu0 %v2259
        %2532 = vmatmul.mubr.bf16.gmra.mrb[0].mxu0 %v2258
        %v2533 = vpop.f32.mrb[0].mxu0
        %v2534 = vadd.f32 0.0, %v2533
        %v2535 = vpop.f32.mrb[0].mxu0
        %v2536 = vpop.f32.mrb[0].mxu0
        %v2537 = vadd.f32 0.0, %v2536
        %v2538 = vpop.f32.mrb[0].mxu0
        %2539 = vmatprep.mubr.bf16.mxu0 %v2262
        %2540 = vmatmul.mubr.bf16.gmra.mrb[0].mxu0 %v2261
        %v2541 = vpop.f32.mrb[0].mxu0
        %v2542 = vadd.f32 0.0, %v2541
        %v2543 = vpop.f32.mrb[0].mxu0
        %v2544 = vpop.f32.mrb[0].mxu0
        %v2545 = vadd.f32 0.0, %v2544
        %v2546 = vpop.f32.mrb[0].mxu0
        %2547 = vmatprep.mubr.bf16.mxu0 %v2265
        %2548 = vmatmul.mubr.bf16.gmra.mrb[0].mxu0 %v2264
        %v2549 = vpop.f32.mrb[0].mxu0
        %v2550 = vadd.f32 0.0, %v2549
        %v2551 = vpop.f32.mrb[0].mxu0
        %v2552 = vpop.f32.mrb[0].mxu0
        %v2553 = vadd.f32 0.0, %v2552
        %v2554 = vpop.f32.mrb[0].mxu0
        %2555 = vmatprep.mubr.bf16.mxu0 %v2268
        %2556 = vmatmul.mubr.bf16.gmra.mrb[0].mxu0 %v2267
        %v2557 = vpop.f32.mrb[0].mxu0
        %v2558 = vadd.f32 0.0, %v2557
        %v2559 = vpop.f32.mrb[0].mxu0
        %v2560 = vpop.f32.mrb[0].mxu0
        %v2561 = vadd.f32 0.0, %v2560
        %v2562 = vpop.f32.mrb[0].mxu0
        %2563 = vmatprep.mubr.bf16.mxu0 %v2271
        %2564 = vmatmul.mubr.bf16.gmra.mrb[0].mxu0 %v2270
        %v2565 = vpop.f32.mrb[0].mxu0
        %v2566 = vadd.f32 0.0, %v2565
        %v2567 = vpop.f32.mrb[0].mxu0
        %v2568 = vpop.f32.mrb[0].mxu0
        %v2569 = vadd.f32 0.0, %v2568
        %v2570 = vpop.f32.mrb[0].mxu0
        %2571 = vmatprep.mubr.bf16.mxu0 %v2274
        %2572 = vmatmul.mubr.bf16.gmra.mrb[0].mxu0 %v2273
        %v2573 = vpop.f32.mrb[0].mxu0
        %v2574 = vadd.f32 0.0, %v2573
        %v2575 = vpop.f32.mrb[0].mxu0
        %v2576 = vpop.f32.mrb[0].mxu0
        %v2577 = vadd.f32 0.0, %v2576
        %v2578 = vpop.f32.mrb[0].mxu0
        %2579 = vmatprep.mubr.bf16.mxu0 %v2277
        %2580 = vmatmul.mubr.bf16.gmra.mrb[0].mxu0 %v2276
        %v2581 = vpop.f32.mrb[0].mxu0
        %v2582 = vadd.f32 0.0, %v2581
        %v2583 = vpop.f32.mrb[0].mxu0
        %v2584 = vpop.f32.mrb[0].mxu0
        %v2585 = vadd.f32 0.0, %v2584
        %v2586 = vpop.f32.mrb[0].mxu0
        %2587 = vmatprep.mubr.bf16.mxu0 %v2280
        %2588 = vmatmul.mubr.bf16.gmra.mrb[0].mxu0 %v2279
        %v2589 = vpop.f32.mrb[0].mxu0
        %v2590 = vadd.f32 0.0, %v2589
        %v2591 = vpop.f32.mrb[0].mxu0
        %v2592 = vpop.f32.mrb[0].mxu0
        %v2593 = vadd.f32 0.0, %v2592
        %v2594 = vpop.f32.mrb[0].mxu0
        %2595 = vmatprep.mubr.bf16.mxu0 %v2283
        %2596 = vmatmul.mubr.bf16.gmra.mrb[0].mxu0 %v2282
        %v2597 = vpop.f32.mrb[0].mxu0
        %v2598 = vadd.f32 0.0, %v2597
        %v2599 = vpop.f32.mrb[0].mxu0
        %v2600 = vpop.f32.mrb[0].mxu0
        %v2601 = vadd.f32 0.0, %v2600
        %v2602 = vpop.f32.mrb[0].mxu0
        %2603 = vmatprep.mubr.bf16.mxu0 %v2286
        %2604 = vmatmul.mubr.bf16.gmra.mrb[0].mxu0 %v2285
        %v2605 = vpop.f32.mrb[0].mxu0
        %v2606 = vadd.f32 0.0, %v2605
        %v2607 = vpop.f32.mrb[0].mxu0
        %v2608 = vpop.f32.mrb[0].mxu0
        %v2609 = vadd.f32 0.0, %v2608
        %v2610 = vpop.f32.mrb[0].mxu0
        %2611 = vmatprep.mubr.bf16.mxu0 %v2289
        %2612 = vmatmul.mubr.bf16.gmra.mrb[0].mxu0 %v2288
        %v2613 = vpop.f32.mrb[0].mxu0
        %v2614 = vadd.f32 0.0, %v2613
        %v2615 = vpop.f32.mrb[0].mxu0
        %v2616 = vpop.f32.mrb[0].mxu0
        %v2617 = vadd.f32 0.0, %v2616
        %v2618 = vpop.f32.mrb[0].mxu0
        %2619 = vmatprep.mubr.bf16.mxu0 %v2292
        %2620 = vmatmul.mubr.bf16.gmra.mrb[0].mxu0 %v2291
        %v2621 = vpop.f32.mrb[0].mxu0
        %v2622 = vadd.f32 0.0, %v2621
        %v2623 = vpop.f32.mrb[0].mxu0
        %v2624 = vpop.f32.mrb[0].mxu0
        %v2625 = vadd.f32 0.0, %v2624
        %v2626 = vpop.f32.mrb[0].mxu0
        %2627 = vmatprep.mubr.bf16.mxu0 %v2295
        %2628 = vmatmul.mubr.bf16.gmra.mrb[0].mxu0 %v2294
        %v2629 = vpop.f32.mrb[0].mxu0
        %v2630 = vadd.f32 0.0, %v2629
        %v2631 = vpop.f32.mrb[0].mxu0
        %v2632 = vpop.f32.mrb[0].mxu0
        %v2633 = vadd.f32 0.0, %v2632
        %v2634 = vpop.f32.mrb[0].mxu0
        %2635 = vmatprep.mubr.bf16.mxu0 %v2298
        %2636 = vmatmul.mubr.bf16.gmra.mrb[0].mxu0 %v2297
        %v2637 = vpop.f32.mrb[0].mxu0
        %v2638 = vadd.f32 0.0, %v2637
        %v2639 = vpop.f32.mrb[0].mxu0
        %v2640 = vpop.f32.mrb[0].mxu0
        %v2641 = vadd.f32 0.0, %v2640
        %v2642 = vpop.f32.mrb[0].mxu0
        %2643 = vmatprep.mubr.bf16.mxu0 %v2301
        %2644 = vmatmul.mubr.bf16.gmra.mrb[0].mxu0 %v2300
        %v2645 = vpop.f32.mrb[0].mxu0
        %v2646 = vadd.f32 0.0, %v2645
        %v2647 = vpop.f32.mrb[0].mxu0
        %v2648 = vpop.f32.mrb[0].mxu0
        %v2649 = vadd.f32 0.0, %v2648
        %v2650 = vpop.f32.mrb[0].mxu0
        %2651 = vmatprep.mubr.bf16.mxu0 %v2304
        %2652 = vmatmul.mubr.bf16.gmra.mrb[0].mxu0 %v2303
        %v2653 = vpop.f32.mrb[0].mxu0
        %v2654 = vadd.f32 0.0, %v2653
        %v2655 = vpop.f32.mrb[0].mxu0
        %v2656 = vpop.f32.mrb[0].mxu0
        %v2657 = vadd.f32 0.0, %v2656
        %v2658 = vpop.f32.mrb[0].mxu0
        %2659 = vdwg.mxu0
        %2660 = vmatprep.subr.bf16.mxu0 0
        %2661 = vmatpush1.bf16.msra.mxu0 %v2467
        %2662 = vmatprep.subr.bf16.mxu0 0
        %2663 = vmatpush1.bf16.msra.mxu0 %v2468
        %2664 = vmatprep.subr.bf16.mxu0 0
        %2665 = vmatpush1.bf16.msra.mxu0 %v2469
        %2666 = vmatprep.subr.bf16.mxu0 0
        %2667 = vmatpush1.bf16.msra.mxu0 %v2470
        %2668 = vmatprep.subr.bf16.mxu0 0
        %2669 = vmatpush1.bf16.msra.mxu0 %v2471
        %2670 = vmatprep.subr.bf16.mxu0 0
        %2671 = vmatpush1.bf16.msra.mxu0 %v2472
        %2672 = vmatprep.subr.bf16.mxu0 0
        %2673 = vmatpush1.bf16.msra.mxu0 %v2473
        %2674 = vmatprep.subr.bf16.mxu0 0
        %2675 = vmatpush1.bf16.msra.mxu0 %v2474
        %2676 = vmatprep.subr.bf16.mxu0 0
        %2677 = vmatpush1.bf16.msra.mxu0 0
        %2678 = vmatprep.subr.bf16.mxu0 0
        %2679 = vmatpush1.bf16.msra.mxu0 0
        %2680 = vmatprep.subr.bf16.mxu0 0
        %2681 = vmatpush1.bf16.msra.mxu0 0
        %2682 = vmatprep.subr.bf16.mxu0 0
        %2683 = vmatpush1.bf16.msra.mxu0 0
        %2684 = vmatprep.subr.bf16.mxu0 0
        %2685 = vmatpush1.bf16.msra.mxu0 0
        %2686 = vmatprep.subr.bf16.mxu0 0
        %2687 = vmatpush1.bf16.msra.mxu0 0
        %2688 = vmatprep.subr.bf16.mxu0 0
        %2689 = vmatpush1.bf16.msra.mxu0 0
        %2690 = vmatprep.subr.bf16.mxu0 0
        %2691 = vmatpush1.bf16.msra.mxu0 0
        %2692 = vmatprep.mubr.bf16.mxu0 0
        %2693 = vmatmul.mubr.bf16.gmra.mrb[0].mxu0 %v2260
        %v2694 = vpop.f32.mrb[0].mxu0
        %v2695 = vadd.f32 %v2534, %v2694
        %v2696 = vpop.f32.mrb[0].mxu0
        %v2697 = vpop.f32.mrb[0].mxu0
        %v2698 = vadd.f32 %v2537, %v2697
        %v2699 = vpop.f32.mrb[0].mxu0
        %2700 = vmatprep.mubr.bf16.mxu0 0
        %2701 = vmatmul.mubr.bf16.gmra.mrb[0].mxu0 %v2263
        %v2702 = vpop.f32.mrb[0].mxu0
        %v2703 = vadd.f32 %v2542, %v2702
        %v2704 = vpop.f32.mrb[0].mxu0
        %v2705 = vpop.f32.mrb[0].mxu0
        %v2706 = vadd.f32 %v2545, %v2705
        %v2707 = vpop.f32.mrb[0].mxu0
        %2708 = vmatprep.mubr.bf16.mxu0 0
        %2709 = vmatmul.mubr.bf16.gmra.mrb[0].mxu0 %v2266
        %v2710 = vpop.f32.mrb[0].mxu0
        %v2711 = vadd.f32 %v2550, %v2710
        %v2712 = vpop.f32.mrb[0].mxu0
        %v2713 = vpop.f32.mrb[0].mxu0
        %v2714 = vadd.f32 %v2553, %v2713
        %v2715 = vpop.f32.mrb[0].mxu0
        %2716 = vmatprep.mubr.bf16.mxu0 0
        %2717 = vmatmul.mubr.bf16.gmra.mrb[0].mxu0 %v2269
        %v2718 = vpop.f32.mrb[0].mxu0
        %v2719 = vadd.f32 %v2558, %v2718
        %v2720 = vpop.f32.mrb[0].mxu0
        %v2721 = vpop.f32.mrb[0].mxu0
        %v2722 = vadd.f32 %v2561, %v2721
        %v2723 = vpop.f32.mrb[0].mxu0
        %2724 = vmatprep.mubr.bf16.mxu0 0
        %2725 = vmatmul.mubr.bf16.gmra.mrb[0].mxu0 %v2272
        %v2726 = vpop.f32.mrb[0].mxu0
        %v2727 = vadd.f32 %v2566, %v2726
        %v2728 = vpop.f32.mrb[0].mxu0
        %v2729 = vpop.f32.mrb[0].mxu0
        %v2730 = vadd.f32 %v2569, %v2729
        %v2731 = vpop.f32.mrb[0].mxu0
        %2732 = vmatprep.mubr.bf16.mxu0 0
        %2733 = vmatmul.mubr.bf16.gmra.mrb[0].mxu0 %v2275
        %v2734 = vpop.f32.mrb[0].mxu0
        %v2735 = vadd.f32 %v2574, %v2734
        %v2736 = vpop.f32.mrb[0].mxu0
        %v2737 = vpop.f32.mrb[0].mxu0
        %v2738 = vadd.f32 %v2577, %v2737
        %v2739 = vpop.f32.mrb[0].mxu0
        %2740 = vmatprep.mubr.bf16.mxu0 0
        %2741 = vmatmul.mubr.bf16.gmra.mrb[0].mxu0 %v2278
        %v2742 = vpop.f32.mrb[0].mxu0
        %v2743 = vadd.f32 %v2582, %v2742
        %v2744 = vpop.f32.mrb[0].mxu0
        %v2745 = vpop.f32.mrb[0].mxu0
        %v2746 = vadd.f32 %v2585, %v2745
        %v2747 = vpop.f32.mrb[0].mxu0
        %2748 = vmatprep.mubr.bf16.mxu0 0
        %2749 = vmatmul.mubr.bf16.gmra.mrb[0].mxu0 %v2281
        %v2750 = vpop.f32.mrb[0].mxu0
        %v2751 = vadd.f32 %v2590, %v2750
        %v2752 = vpop.f32.mrb[0].mxu0
        %v2753 = vpop.f32.mrb[0].mxu0
        %v2754 = vadd.f32 %v2593, %v2753
        %v2755 = vpop.f32.mrb[0].mxu0
        %2756 = vmatprep.mubr.bf16.mxu0 0
        %2757 = vmatmul.mubr.bf16.gmra.mrb[0].mxu0 %v2284
        %v2758 = vpop.f32.mrb[0].mxu0
        %v2759 = vadd.f32 %v2598, %v2758
        %v2760 = vpop.f32.mrb[0].mxu0
        %v2761 = vpop.f32.mrb[0].mxu0
        %v2762 = vadd.f32 %v2601, %v2761
        %v2763 = vpop.f32.mrb[0].mxu0
        %2764 = vmatprep.mubr.bf16.mxu0 0
        %2765 = vmatmul.mubr.bf16.gmra.mrb[0].mxu0 %v2287
        %v2766 = vpop.f32.mrb[0].mxu0
        %v2767 = vadd.f32 %v2606, %v2766
        %v2768 = vpop.f32.mrb[0].mxu0
        %v2769 = vpop.f32.mrb[0].mxu0
        %v2770 = vadd.f32 %v2609, %v2769
        %v2771 = vpop.f32.mrb[0].mxu0
        %2772 = vmatprep.mubr.bf16.mxu0 0
        %2773 = vmatmul.mubr.bf16.gmra.mrb[0].mxu0 %v2290
        %v2774 = vpop.f32.mrb[0].mxu0
        %v2775 = vadd.f32 %v2614, %v2774
        %v2776 = vpop.f32.mrb[0].mxu0
        %v2777 = vpop.f32.mrb[0].mxu0
        %v2778 = vadd.f32 %v2617, %v2777
        %v2779 = vpop.f32.mrb[0].mxu0
        %2780 = vmatprep.mubr.bf16.mxu0 0
        %2781 = vmatmul.mubr.bf16.gmra.mrb[0].mxu0 %v2293
        %v2782 = vpop.f32.mrb[0].mxu0
        %v2783 = vadd.f32 %v2622, %v2782
        %v2784 = vpop.f32.mrb[0].mxu0
        %v2785 = vpop.f32.mrb[0].mxu0
        %v2786 = vadd.f32 %v2625, %v2785
        %v2787 = vpop.f32.mrb[0].mxu0
        %2788 = vmatprep.mubr.bf16.mxu0 0
        %2789 = vmatmul.mubr.bf16.gmra.mrb[0].mxu0 %v2296
        %v2790 = vpop.f32.mrb[0].mxu0
        %v2791 = vadd.f32 %v2630, %v2790
        %v2792 = vpop.f32.mrb[0].mxu0
        %v2793 = vpop.f32.mrb[0].mxu0
        %v2794 = vadd.f32 %v2633, %v2793
        %v2795 = vpop.f32.mrb[0].mxu0
        %2796 = vmatprep.mubr.bf16.mxu0 0
        %2797 = vmatmul.mubr.bf16.gmra.mrb[0].mxu0 %v2299
        %v2798 = vpop.f32.mrb[0].mxu0
        %v2799 = vadd.f32 %v2638, %v2798
        %v2800 = vpop.f32.mrb[0].mxu0
        %v2801 = vpop.f32.mrb[0].mxu0
        %v2802 = vadd.f32 %v2641, %v2801
        %v2803 = vpop.f32.mrb[0].mxu0
        %2804 = vmatprep.mubr.bf16.mxu0 0
        %2805 = vmatmul.mubr.bf16.gmra.mrb[0].mxu0 %v2302
        %v2806 = vpop.f32.mrb[0].mxu0
        %v2807 = vadd.f32 %v2646, %v2806
        %v2808 = vpop.f32.mrb[0].mxu0
        %v2809 = vpop.f32.mrb[0].mxu0
        %v2810 = vadd.f32 %v2649, %v2809
        %v2811 = vpop.f32.mrb[0].mxu0
        %2812 = vmatprep.mubr.bf16.mxu0 0
        %2813 = vmatmul.mubr.bf16.gmra.mrb[0].mxu0 %v2305
        %v2814 = vpop.f32.mrb[0].mxu0
        %v2815 = vadd.f32 %v2654, %v2814
        %v2816 = vpop.f32.mrb[0].mxu0
        %v2817 = vpop.f32.mrb[0].mxu0
        %v2818 = vadd.f32 %v2657, %v2817
        %v2819 = vpop.f32.mrb[0].mxu0
        %2820 = vdwg.mxu0
        %v2821 = vadd.f32 %v2131, %v2695
        %v2822 = vadd.f32 %v2134, %v2698
        %v2823 = vadd.f32 %v2139, %v2703
        %v2824 = vadd.f32 %v2142, %v2706
        %v2825 = vadd.f32 %v2147, %v2711
        %v2826 = vadd.f32 %v2150, %v2714
        %v2827 = vadd.f32 %v2155, %v2719
        %v2828 = vadd.f32 %v2158, %v2722
        %v2829 = vadd.f32 %v2163, %v2727
        %v2830 = vadd.f32 %v2166, %v2730
        %v2831 = vadd.f32 %v2171, %v2735
        %v2832 = vadd.f32 %v2174, %v2738
        %v2833 = vadd.f32 %v2179, %v2743
        %v2834 = vadd.f32 %v2182, %v2746
        %v2835 = vadd.f32 %v2187, %v2751
        %v2836 = vadd.f32 %v2190, %v2754
        %v2837 = vadd.f32 %v2195, %v2759
        %v2838 = vadd.f32 %v2198, %v2762
        %v2839 = vadd.f32 %v2203, %v2767
        %v2840 = vadd.f32 %v2206, %v2770
        %v2841 = vadd.f32 %v2211, %v2775
        %v2842 = vadd.f32 %v2214, %v2778
        %v2843 = vadd.f32 %v2219, %v2783
        %v2844 = vadd.f32 %v2222, %v2786
        %v2845 = vadd.f32 %v2227, %v2791
        %v2846 = vadd.f32 %v2230, %v2794
        %v2847 = vadd.f32 %v2235, %v2799
        %v2848 = vadd.f32 %v2238, %v2802
        %v2849 = vadd.f32 %v2243, %v2807
        %v2850 = vadd.f32 %v2246, %v2810
        %v2851 = vadd.f32 %v2251, %v2815
        %v2852 = vadd.f32 %v2254, %v2818
        %v2853 = vld [vmem:[%s4] sm:$0x1]
        %v2855 = vlaneseq
        %v2856 = vshrl.u32 %v2855, 7
        %v2857 = vsub.s32 0, %v2856
        %v2858 = vrot.slane %v2853, %v2857
        %v2860 = vadd.f32 %v2821, %v2858
        %v2861 = vadd.f32 %v2822, %v2858
        %v2862 = vadd.f32 %v2823, %v2858
        %v2863 = vadd.f32 %v2824, %v2858
        %v2864 = vadd.f32 %v2825, %v2858
        %v2865 = vadd.f32 %v2826, %v2858
        %v2866 = vadd.f32 %v2827, %v2858
        %v2867 = vadd.f32 %v2828, %v2858
        %v2868 = vadd.f32 %v2829, %v2858
        %v2869 = vadd.f32 %v2830, %v2858
        %v2870 = vadd.f32 %v2831, %v2858
        %v2871 = vadd.f32 %v2832, %v2858
        %v2872 = vadd.f32 %v2833, %v2858
        %v2873 = vadd.f32 %v2834, %v2858
        %v2874 = vadd.f32 %v2835, %v2858
        %v2875 = vadd.f32 %v2836, %v2858
        %v2876 = vadd.f32 %v2837, %v2858
        %v2877 = vadd.f32 %v2838, %v2858
        %v2878 = vadd.f32 %v2839, %v2858
        %v2879 = vadd.f32 %v2840, %v2858
        %v2880 = vadd.f32 %v2841, %v2858
        %v2881 = vadd.f32 %v2842, %v2858
        %v2882 = vadd.f32 %v2843, %v2858
        %v2883 = vadd.f32 %v2844, %v2858
        %v2884 = vadd.f32 %v2845, %v2858
        %v2885 = vadd.f32 %v2846, %v2858
        %v2886 = vadd.f32 %v2847, %v2858
        %v2887 = vadd.f32 %v2848, %v2858
        %v2888 = vadd.f32 %v2849, %v2858
        %v2889 = vadd.f32 %v2850, %v2858
        %v2890 = vadd.f32 %v2851, %v2858
        %v2891 = vadd.f32 %v2852, %v2858
        %v2892 = vmax.f32 %v2860, 0.0
        %v2893 = vmax.f32 %v2861, 0.0
        %v2894 = vmax.f32 %v2862, 0.0
        %v2895 = vmax.f32 %v2863, 0.0
        %v2896 = vmax.f32 %v2864, 0.0
        %v2897 = vmax.f32 %v2865, 0.0
        %v2898 = vmax.f32 %v2866, 0.0
        %v2899 = vmax.f32 %v2867, 0.0
        %v2900 = vmax.f32 %v2868, 0.0
        %v2901 = vmax.f32 %v2869, 0.0
        %v2902 = vmax.f32 %v2870, 0.0
        %v2903 = vmax.f32 %v2871, 0.0
        %v2904 = vmax.f32 %v2872, 0.0
        %v2905 = vmax.f32 %v2873, 0.0
        %v2906 = vmax.f32 %v2874, 0.0
        %v2907 = vmax.f32 %v2875, 0.0
        %v2908 = vmax.f32 %v2876, 0.0
        %v2909 = vmax.f32 %v2877, 0.0
        %v2910 = vmax.f32 %v2878, 0.0
        %v2911 = vmax.f32 %v2879, 0.0
        %v2912 = vmax.f32 %v2880, 0.0
        %v2913 = vmax.f32 %v2881, 0.0
        %v2914 = vmax.f32 %v2882, 0.0
        %v2915 = vmax.f32 %v2883, 0.0
        %v2916 = vmax.f32 %v2884, 0.0
        %v2917 = vmax.f32 %v2885, 0.0
        %v2918 = vmax.f32 %v2886, 0.0
        %v2919 = vmax.f32 %v2887, 0.0
        %v2920 = vmax.f32 %v2888, 0.0
        %v2921 = vmax.f32 %v2889, 0.0
        %v2922 = vmax.f32 %v2890, 0.0
        %v2923 = vmax.f32 %v2891, 0.0
        %v2924 = vpack.c.bf16 %v2893, %v2892
        %v2925 = vpack.c.bf16 %v2895, %v2894
        %v2926 = vpack.c.bf16 %v2897, %v2896
        %v2927 = vpack.c.bf16 %v2899, %v2898
        %v2928 = vpack.c.bf16 %v2901, %v2900
        %v2929 = vpack.c.bf16 %v2903, %v2902
        %v2930 = vpack.c.bf16 %v2905, %v2904
        %v2931 = vpack.c.bf16 %v2907, %v2906
        %v2932 = vpack.c.bf16 %v2909, %v2908
        %v2933 = vpack.c.bf16 %v2911, %v2910
        %v2934 = vpack.c.bf16 %v2913, %v2912
        %v2935 = vpack.c.bf16 %v2915, %v2914
        %v2936 = vpack.c.bf16 %v2917, %v2916
        %v2937 = vpack.c.bf16 %v2919, %v2918
        %v2938 = vpack.c.bf16 %v2921, %v2920
        %v2939 = vpack.c.bf16 %v2923, %v2922
        %v2940 = vld [vmem:[#allocation9] sm:$0xf]
        %v2941 = vld [vmem:[#allocation9 + $0x4] sm:$0xf]
        %v2942 = vld [vmem:[#allocation9 + $0x8] sm:$0xf]
        %v2943 = vld [vmem:[#allocation9 + $0xc] sm:$0xf]
        %v2944 = vld [vmem:[#allocation9 + $0x10] sm:$0xf]
        %v2945 = vld [vmem:[#allocation9 + $0x14] sm:$0xf]
        %v2946 = vld [vmem:[#allocation9 + $0x18] sm:$0xf]
        %v2947 = vld [vmem:[#allocation9 + $0x1c] sm:$0xf]
        %v2948 = vld [vmem:[#allocation9 + $0x20] sm:$0xf]
        %v2949 = vld [vmem:[#allocation9 + $0x24] sm:$0xf]
        %v2950 = vld [vmem:[#allocation9 + $0x28] sm:$0xf]
        %v2951 = vld [vmem:[#allocation9 + $0x2c] sm:$0xf]
        %v2952 = vld [vmem:[#allocation9 + $0x30] sm:$0xf]
        %v2953 = vld [vmem:[#allocation9 + $0x34] sm:$0xf]
        %v2954 = vld [vmem:[#allocation9 + $0x38] sm:$0xf]
        %v2955 = vld [vmem:[#allocation9 + $0x3c] sm:$0xf]
        %v2956 = vld [vmem:[%s6] sm:$0x1]
        %v2958 = vlaneseq
        %v2959 = vshrl.u32 %v2958, 7
        %v2960 = vsub.s32 0, %v2959
        %v2961 = vrot.slane %v2956, %v2960
        %v2979 = vunpack.c.l.b16 %v2940
        %v2980 = vunpack.c.l.b16 %v2941
        %v2981 = vunpack.c.l.b16 %v2942
        %v2982 = vunpack.c.l.b16 %v2943
        %v2983 = vunpack.c.l.b16 %v2944
        %v2984 = vunpack.c.l.b16 %v2945
        %v2985 = vunpack.c.l.b16 %v2946
        %v2986 = vunpack.c.l.b16 %v2947
        %v2987 = vunpack.c.l.b16 %v2948
        %v2988 = vunpack.c.l.b16 %v2949
        %v2989 = vunpack.c.l.b16 %v2950
        %v2990 = vunpack.c.l.b16 %v2951
        %v2991 = vunpack.c.l.b16 %v2952
        %v2992 = vunpack.c.l.b16 %v2953
        %v2993 = vunpack.c.l.b16 %v2954
        %v2994 = vunpack.c.l.b16 %v2955
        %v2995 = vpack.c.b16 %v2980, %v2979
        %v2996 = vpack.c.b16 %v2982, %v2981
        %v2997 = vpack.c.b16 %v2984, %v2983
        %v2998 = vpack.c.b16 %v2986, %v2985
        %v2999 = vpack.c.b16 %v2988, %v2987
        %v3000 = vpack.c.b16 %v2990, %v2989
        %v3001 = vpack.c.b16 %v2992, %v2991
        %v3002 = vpack.c.b16 %v2994, %v2993
        %3011 = vmatprep.subr.bf16.mxu0 0
        %3012 = vmatpush1.bf16.msra.mxu0 %v2995
        %3013 = vmatprep.subr.bf16.mxu0 0
        %3014 = vmatpush1.bf16.msra.mxu0 %v2996
        %3015 = vmatprep.subr.bf16.mxu0 0
        %3016 = vmatpush1.bf16.msra.mxu0 %v2997
        %3017 = vmatprep.subr.bf16.mxu0 0
        %3018 = vmatpush1.bf16.msra.mxu0 %v2998
        %3019 = vmatprep.subr.bf16.mxu0 0
        %3020 = vmatpush1.bf16.msra.mxu0 %v2999
        %3021 = vmatprep.subr.bf16.mxu0 0
        %3022 = vmatpush1.bf16.msra.mxu0 %v3000
        %3023 = vmatprep.subr.bf16.mxu0 0
        %3024 = vmatpush1.bf16.msra.mxu0 %v3001
        %3025 = vmatprep.subr.bf16.mxu0 0
        %3026 = vmatpush1.bf16.msra.mxu0 %v3002
        %3027 = vmatprep.subr.bf16.mxu0 0
        %3028 = vmatpush1.bf16.msra.mxu0 0
        %3029 = vmatprep.subr.bf16.mxu0 0
        %3030 = vmatpush1.bf16.msra.mxu0 0
        %3031 = vmatprep.subr.bf16.mxu0 0
        %3032 = vmatpush1.bf16.msra.mxu0 0
        %3033 = vmatprep.subr.bf16.mxu0 0
        %3034 = vmatpush1.bf16.msra.mxu0 0
        %3035 = vmatprep.subr.bf16.mxu0 0
        %3036 = vmatpush1.bf16.msra.mxu0 0
        %3037 = vmatprep.subr.bf16.mxu0 0
        %3038 = vmatpush1.bf16.msra.mxu0 0
        %3039 = vmatprep.subr.bf16.mxu0 0
        %3040 = vmatpush1.bf16.msra.mxu0 0
        %3041 = vmatprep.subr.bf16.mxu0 0
        %3042 = vmatpush1.bf16.msra.mxu0 0
        %3043 = vmatprep.mubr.bf16.mxu0 0
        %3044 = vmatmul.mubr.bf16.gmra.mrb[0].mxu0 %v2924
        %v3045 = vpop.f32.mrb[0].mxu0
        %v3046 = vadd.f32 %v2961, %v3045
        %v3047 = vpop.f32.mrb[0].mxu0
        %v3048 = vpop.f32.mrb[0].mxu0
        %v3049 = vadd.f32 %v2961, %v3048
        %v3050 = vpop.f32.mrb[0].mxu0
        %3051 = vmatprep.mubr.bf16.mxu0 0
        %3052 = vmatmul.mubr.bf16.gmra.mrb[0].mxu0 %v2925
        %v3053 = vpop.f32.mrb[0].mxu0
        %v3054 = vadd.f32 %v2961, %v3053
        %v3055 = vpop.f32.mrb[0].mxu0
        %v3056 = vpop.f32.mrb[0].mxu0
        %v3057 = vadd.f32 %v2961, %v3056
        %v3058 = vpop.f32.mrb[0].mxu0
        %3059 = vmatprep.mubr.bf16.mxu0 0
        %3060 = vmatmul.mubr.bf16.gmra.mrb[0].mxu0 %v2926
        %v3061 = vpop.f32.mrb[0].mxu0
        %v3062 = vadd.f32 %v2961, %v3061
        %v3063 = vpop.f32.mrb[0].mxu0
        %v3064 = vpop.f32.mrb[0].mxu0
        %v3065 = vadd.f32 %v2961, %v3064
        %v3066 = vpop.f32.mrb[0].mxu0
        %3067 = vmatprep.mubr.bf16.mxu0 0
        %3068 = vmatmul.mubr.bf16.gmra.mrb[0].mxu0 %v2927
        %v3069 = vpop.f32.mrb[0].mxu0
        %v3070 = vadd.f32 %v2961, %v3069
        %v3071 = vpop.f32.mrb[0].mxu0
        %v3072 = vpop.f32.mrb[0].mxu0
        %v3073 = vadd.f32 %v2961, %v3072
        %v3074 = vpop.f32.mrb[0].mxu0
        %3075 = vmatprep.mubr.bf16.mxu0 0
        %3076 = vmatmul.mubr.bf16.gmra.mrb[0].mxu0 %v2928
        %v3077 = vpop.f32.mrb[0].mxu0
        %v3078 = vadd.f32 %v2961, %v3077
        %v3079 = vpop.f32.mrb[0].mxu0
        %v3080 = vpop.f32.mrb[0].mxu0
        %v3081 = vadd.f32 %v2961, %v3080
        %v3082 = vpop.f32.mrb[0].mxu0
        %3083 = vmatprep.mubr.bf16.mxu0 0
        %3084 = vmatmul.mubr.bf16.gmra.mrb[0].mxu0 %v2929
        %v3085 = vpop.f32.mrb[0].mxu0
        %v3086 = vadd.f32 %v2961, %v3085
        %v3087 = vpop.f32.mrb[0].mxu0
        %v3088 = vpop.f32.mrb[0].mxu0
        %v3089 = vadd.f32 %v2961, %v3088
        %v3090 = vpop.f32.mrb[0].mxu0
        %3091 = vmatprep.mubr.bf16.mxu0 0
        %3092 = vmatmul.mubr.bf16.gmra.mrb[0].mxu0 %v2930
        %v3093 = vpop.f32.mrb[0].mxu0
        %v3094 = vadd.f32 %v2961, %v3093
        %v3095 = vpop.f32.mrb[0].mxu0
        %v3096 = vpop.f32.mrb[0].mxu0
        %v3097 = vadd.f32 %v2961, %v3096
        %v3098 = vpop.f32.mrb[0].mxu0
        %3099 = vmatprep.mubr.bf16.mxu0 0
        %3100 = vmatmul.mubr.bf16.gmra.mrb[0].mxu0 %v2931
        %v3101 = vpop.f32.mrb[0].mxu0
        %v3102 = vadd.f32 %v2961, %v3101
        %v3103 = vpop.f32.mrb[0].mxu0
        %v3104 = vpop.f32.mrb[0].mxu0
        %v3105 = vadd.f32 %v2961, %v3104
        %v3106 = vpop.f32.mrb[0].mxu0
        %3107 = vmatprep.mubr.bf16.mxu0 0
        %3108 = vmatmul.mubr.bf16.gmra.mrb[0].mxu0 %v2932
        %v3109 = vpop.f32.mrb[0].mxu0
        %v3110 = vadd.f32 %v2961, %v3109
        %v3111 = vpop.f32.mrb[0].mxu0
        %v3112 = vpop.f32.mrb[0].mxu0
        %v3113 = vadd.f32 %v2961, %v3112
        %v3114 = vpop.f32.mrb[0].mxu0
        %3115 = vmatprep.mubr.bf16.mxu0 0
        %3116 = vmatmul.mubr.bf16.gmra.mrb[0].mxu0 %v2933
        %v3117 = vpop.f32.mrb[0].mxu0
        %v3118 = vadd.f32 %v2961, %v3117
        %v3119 = vpop.f32.mrb[0].mxu0
        %v3120 = vpop.f32.mrb[0].mxu0
        %v3121 = vadd.f32 %v2961, %v3120
        %v3122 = vpop.f32.mrb[0].mxu0
        %3123 = vmatprep.mubr.bf16.mxu0 0
        %3124 = vmatmul.mubr.bf16.gmra.mrb[0].mxu0 %v2934
        %v3125 = vpop.f32.mrb[0].mxu0
        %v3126 = vadd.f32 %v2961, %v3125
        %v3127 = vpop.f32.mrb[0].mxu0
        %v3128 = vpop.f32.mrb[0].mxu0
        %v3129 = vadd.f32 %v2961, %v3128
        %v3130 = vpop.f32.mrb[0].mxu0
        %3131 = vmatprep.mubr.bf16.mxu0 0
        %3132 = vmatmul.mubr.bf16.gmra.mrb[0].mxu0 %v2935
        %v3133 = vpop.f32.mrb[0].mxu0
        %v3134 = vadd.f32 %v2961, %v3133
        %v3135 = vpop.f32.mrb[0].mxu0
        %v3136 = vpop.f32.mrb[0].mxu0
        %v3137 = vadd.f32 %v2961, %v3136
        %v3138 = vpop.f32.mrb[0].mxu0
        %3139 = vmatprep.mubr.bf16.mxu0 0
        %3140 = vmatmul.mubr.bf16.gmra.mrb[0].mxu0 %v2936
        %v3141 = vpop.f32.mrb[0].mxu0
        %v3142 = vadd.f32 %v2961, %v3141
        %v3143 = vpop.f32.mrb[0].mxu0
        %v3144 = vpop.f32.mrb[0].mxu0
        %v3145 = vadd.f32 %v2961, %v3144
        %v3146 = vpop.f32.mrb[0].mxu0
        %3147 = vmatprep.mubr.bf16.mxu0 0
        %3148 = vmatmul.mubr.bf16.gmra.mrb[0].mxu0 %v2937
        %v3149 = vpop.f32.mrb[0].mxu0
        %v3150 = vadd.f32 %v2961, %v3149
        %v3151 = vpop.f32.mrb[0].mxu0
        %v3152 = vpop.f32.mrb[0].mxu0
        %v3153 = vadd.f32 %v2961, %v3152
        %v3154 = vpop.f32.mrb[0].mxu0
        %3155 = vmatprep.mubr.bf16.mxu0 0
        %3156 = vmatmul.mubr.bf16.gmra.mrb[0].mxu0 %v2938
        %v3157 = vpop.f32.mrb[0].mxu0
        %v3158 = vadd.f32 %v2961, %v3157
        %v3159 = vpop.f32.mrb[0].mxu0
        %v3160 = vpop.f32.mrb[0].mxu0
        %v3161 = vadd.f32 %v2961, %v3160
        %v3162 = vpop.f32.mrb[0].mxu0
        %3163 = vmatprep.mubr.bf16.mxu0 0
        %3164 = vmatmul.mubr.bf16.gmra.mrb[0].mxu0 %v2939
        %v3165 = vpop.f32.mrb[0].mxu0
        %v3166 = vadd.f32 %v2961, %v3165
        %v3167 = vpop.f32.mrb[0].mxu0
        %v3168 = vpop.f32.mrb[0].mxu0
        %v3169 = vadd.f32 %v2961, %v3168
        %v3170 = vpop.f32.mrb[0].mxu0
        %3171 = vdwg.mxu0
        %v3172 = vunpack.c.l.bf16 %v359
        %v3173 = vunpack.c.h.bf16 %v359
        %v3174 = vunpack.c.l.bf16 %v360
        %v3175 = vunpack.c.h.bf16 %v360
        %v3176 = vunpack.c.l.bf16 %v361
        %v3177 = vunpack.c.h.bf16 %v361
        %v3178 = vunpack.c.l.bf16 %v362
        %v3179 = vunpack.c.h.bf16 %v362
        %v3180 = vunpack.c.l.bf16 %v363
        %v3181 = vunpack.c.h.bf16 %v363
        %v3182 = vunpack.c.l.bf16 %v364
        %v3183 = vunpack.c.h.bf16 %v364
        %v3184 = vunpack.c.l.bf16 %v365
        %v3185 = vunpack.c.h.bf16 %v365
        %v3186 = vunpack.c.l.bf16 %v366
        %v3187 = vunpack.c.h.bf16 %v366
        %v3188 = vunpack.c.l.bf16 %v367
        %v3189 = vunpack.c.h.bf16 %v367
        %v3190 = vunpack.c.l.bf16 %v368
        %v3191 = vunpack.c.h.bf16 %v368
        %v3192 = vunpack.c.l.bf16 %v369
        %v3193 = vunpack.c.h.bf16 %v369
        %v3194 = vunpack.c.l.bf16 %v370
        %v3195 = vunpack.c.h.bf16 %v370
        %v3196 = vunpack.c.l.bf16 %v371
        %v3197 = vunpack.c.h.bf16 %v371
        %v3198 = vunpack.c.l.bf16 %v372
        %v3199 = vunpack.c.h.bf16 %v372
        %v3200 = vunpack.c.l.bf16 %v373
        %v3201 = vunpack.c.h.bf16 %v373
        %v3202 = vunpack.c.l.bf16 %v374
        %v3203 = vunpack.c.h.bf16 %v374
        %v3204 = vadd.f32 %v3046, %v3172
        %v3205 = vadd.f32 %v3049, %v3173
        %v3206 = vadd.f32 %v3054, %v3174
        %v3207 = vadd.f32 %v3057, %v3175
        %v3208 = vadd.f32 %v3062, %v3176
        %v3209 = vadd.f32 %v3065, %v3177
        %v3210 = vadd.f32 %v3070, %v3178
        %v3211 = vadd.f32 %v3073, %v3179
        %v3212 = vadd.f32 %v3078, %v3180
        %v3213 = vadd.f32 %v3081, %v3181
        %v3214 = vadd.f32 %v3086, %v3182
        %v3215 = vadd.f32 %v3089, %v3183
        %v3216 = vadd.f32 %v3094, %v3184
        %v3217 = vadd.f32 %v3097, %v3185
        %v3218 = vadd.f32 %v3102, %v3186
        %v3219 = vadd.f32 %v3105, %v3187
        %v3220 = vadd.f32 %v3110, %v3188
        %v3221 = vadd.f32 %v3113, %v3189
        %v3222 = vadd.f32 %v3118, %v3190
        %v3223 = vadd.f32 %v3121, %v3191
        %v3224 = vadd.f32 %v3126, %v3192
        %v3225 = vadd.f32 %v3129, %v3193
        %v3226 = vadd.f32 %v3134, %v3194
        %v3227 = vadd.f32 %v3137, %v3195
        %v3228 = vadd.f32 %v3142, %v3196
        %v3229 = vadd.f32 %v3145, %v3197
        %v3230 = vadd.f32 %v3150, %v3198
        %v3231 = vadd.f32 %v3153, %v3199
        %v3232 = vadd.f32 %v3158, %v3200
        %v3233 = vadd.f32 %v3161, %v3201
        %v3234 = vadd.f32 %v3166, %v3202
        %v3235 = vadd.f32 %v3169, %v3203
        %v3236 = vmax.f32 %v3204, 0.0
        %v3237 = vmax.f32 %v3205, 0.0
        %v3238 = vmax.f32 %v3206, 0.0
        %v3239 = vmax.f32 %v3207, 0.0
        %v3240 = vmax.f32 %v3208, 0.0
        %v3241 = vmax.f32 %v3209, 0.0
        %v3242 = vmax.f32 %v3210, 0.0
        %v3243 = vmax.f32 %v3211, 0.0
        %v3244 = vmax.f32 %v3212, 0.0
        %v3245 = vmax.f32 %v3213, 0.0
        %v3246 = vmax.f32 %v3214, 0.0
        %v3247 = vmax.f32 %v3215, 0.0
        %v3248 = vmax.f32 %v3216, 0.0
        %v3249 = vmax.f32 %v3217, 0.0
        %v3250 = vmax.f32 %v3218, 0.0
        %v3251 = vmax.f32 %v3219, 0.0
        %v3252 = vmax.f32 %v3220, 0.0
        %v3253 = vmax.f32 %v3221, 0.0
        %v3254 = vmax.f32 %v3222, 0.0
        %v3255 = vmax.f32 %v3223, 0.0
        %v3256 = vmax.f32 %v3224, 0.0
        %v3257 = vmax.f32 %v3225, 0.0
        %v3258 = vmax.f32 %v3226, 0.0
        %v3259 = vmax.f32 %v3227, 0.0
        %v3260 = vmax.f32 %v3228, 0.0
        %v3261 = vmax.f32 %v3229, 0.0
        %v3262 = vmax.f32 %v3230, 0.0
        %v3263 = vmax.f32 %v3231, 0.0
        %v3264 = vmax.f32 %v3232, 0.0
        %v3265 = vmax.f32 %v3233, 0.0
        %v3266 = vmax.f32 %v3234, 0.0
        %v3267 = vmax.f32 %v3235, 0.0
        %v3268 = vpack.c.bf16 %v3237, %v3236
        %v3269 = vpack.c.bf16 %v3239, %v3238
        %v3270 = vpack.c.bf16 %v3241, %v3240
        %v3271 = vpack.c.bf16 %v3243, %v3242
        %v3272 = vpack.c.bf16 %v3245, %v3244
        %v3273 = vpack.c.bf16 %v3247, %v3246
        %v3274 = vpack.c.bf16 %v3249, %v3248
        %v3275 = vpack.c.bf16 %v3251, %v3250
        %v3276 = vpack.c.bf16 %v3253, %v3252
        %v3277 = vpack.c.bf16 %v3255, %v3254
        %v3278 = vpack.c.bf16 %v3257, %v3256
        %v3279 = vpack.c.bf16 %v3259, %v3258
        %v3280 = vpack.c.bf16 %v3261, %v3260
        %v3281 = vpack.c.bf16 %v3263, %v3262
        %v3282 = vpack.c.bf16 %v3265, %v3264
        %v3283 = vpack.c.bf16 %v3267, %v3266
        %v3300 = vunpack.c.l.b16 %v3268
        %v3301 = vunpack.c.h.b16 %v3268
        %v3302 = vunpack.c.l.b16 %v3269
        %v3303 = vunpack.c.h.b16 %v3269
        %v3304 = vunpack.c.l.b16 %v3270
        %v3305 = vunpack.c.h.b16 %v3270
        %v3306 = vunpack.c.l.b16 %v3271
        %v3307 = vunpack.c.h.b16 %v3271
        %v3308 = vunpack.c.l.b16 %v3272
        %v3309 = vunpack.c.h.b16 %v3272
        %v3310 = vunpack.c.l.b16 %v3273
        %v3311 = vunpack.c.h.b16 %v3273
        %v3312 = vunpack.c.l.b16 %v3274
        %v3313 = vunpack.c.h.b16 %v3274
        %v3314 = vunpack.c.l.b16 %v3275
        %v3315 = vunpack.c.h.b16 %v3275
        %v3316 = vunpack.c.l.b16 %v3276
        %v3317 = vunpack.c.h.b16 %v3276
        %v3318 = vunpack.c.l.b16 %v3277
        %v3319 = vunpack.c.h.b16 %v3277
        %v3320 = vunpack.c.l.b16 %v3278
        %v3321 = vunpack.c.h.b16 %v3278
        %v3322 = vunpack.c.l.b16 %v3279
        %v3323 = vunpack.c.h.b16 %v3279
        %v3324 = vunpack.c.l.b16 %v3280
        %v3325 = vunpack.c.h.b16 %v3280
        %v3326 = vunpack.c.l.b16 %v3281
        %v3327 = vunpack.c.h.b16 %v3281
        %v3328 = vunpack.c.l.b16 %v3282
        %v3329 = vunpack.c.h.b16 %v3282
        %v3330 = vunpack.c.l.b16 %v3283
        %v3331 = vunpack.c.h.b16 %v3283
        %v3332 = vpack.c.b16 %v3300, %v3300
        %v3333 = vpack.c.b16 %v3301, %v3301
        %v3334 = vpack.c.b16 %v3302, %v3302
        %v3335 = vpack.c.b16 %v3303, %v3303
        %v3336 = vpack.c.b16 %v3304, %v3304
        %v3337 = vpack.c.b16 %v3305, %v3305
        %v3338 = vpack.c.b16 %v3306, %v3306
        %v3339 = vpack.c.b16 %v3307, %v3307
        %v3340 = vpack.c.b16 %v3308, %v3308
        %v3341 = vpack.c.b16 %v3309, %v3309
        %v3342 = vpack.c.b16 %v3310, %v3310
        %v3343 = vpack.c.b16 %v3311, %v3311
        %v3344 = vpack.c.b16 %v3312, %v3312
        %v3345 = vpack.c.b16 %v3313, %v3313
        %v3346 = vpack.c.b16 %v3314, %v3314
        %v3347 = vpack.c.b16 %v3315, %v3315
        %v3348 = vpack.c.b16 %v3316, %v3316
        %v3349 = vpack.c.b16 %v3317, %v3317
        %v3350 = vpack.c.b16 %v3318, %v3318
        %v3351 = vpack.c.b16 %v3319, %v3319
        %v3352 = vpack.c.b16 %v3320, %v3320
        %v3353 = vpack.c.b16 %v3321, %v3321
        %v3354 = vpack.c.b16 %v3322, %v3322
        %v3355 = vpack.c.b16 %v3323, %v3323
        %v3356 = vpack.c.b16 %v3324, %v3324
        %v3357 = vpack.c.b16 %v3325, %v3325
        %v3358 = vpack.c.b16 %v3326, %v3326
        %v3359 = vpack.c.b16 %v3327, %v3327
        %v3360 = vpack.c.b16 %v3328, %v3328
        %v3361 = vpack.c.b16 %v3329, %v3329
        %v3362 = vpack.c.b16 %v3330, %v3330
        %v3363 = vpack.c.b16 %v3331, %v3331
        %vm3396 = vcmask 27648
        %3397 = vst.msk [vmem:[%s300] sm:$0xf] %vm3396, %v3332
        %3398 = vst.msk [vmem:[%s300 + $0x4] sm:$0xf] %vm3396, %v3333
        %3399 = vst.msk [vmem:[%s300 + $0x8] sm:$0xf] %vm3396, %v3334
        %3400 = vst.msk [vmem:[%s300 + $0xc] sm:$0xf] %vm3396, %v3335
        %3401 = vst.msk [vmem:[%s300 + $0x10] sm:$0xf] %vm3396, %v3336
        %3402 = vst.msk [vmem:[%s300 + $0x14] sm:$0xf] %vm3396, %v3337
        %3403 = vst.msk [vmem:[%s300 + $0x18] sm:$0xf] %vm3396, %v3338
        %3404 = vst.msk [vmem:[%s300 + $0x1c] sm:$0xf] %vm3396, %v3339
        %3405 = vst.msk [vmem:[%s300 + $0x20] sm:$0xf] %vm3396, %v3340
        %3406 = vst.msk [vmem:[%s300 + $0x24] sm:$0xf] %vm3396, %v3341
        %3407 = vst.msk [vmem:[%s300 + $0x28] sm:$0xf] %vm3396, %v3342
        %3408 = vst.msk [vmem:[%s300 + $0x2c] sm:$0xf] %vm3396, %v3343
        %3409 = vst.msk [vmem:[%s300 + $0x30] sm:$0xf] %vm3396, %v3344
        %3410 = vst.msk [vmem:[%s300 + $0x34] sm:$0xf] %vm3396, %v3345
        %3411 = vst.msk [vmem:[%s300 + $0x38] sm:$0xf] %vm3396, %v3346
        %3412 = vst.msk [vmem:[%s300 + $0x3c] sm:$0xf] %vm3396, %v3347
        %3413 = vst.msk [vmem:[%s300 + $0x40] sm:$0xf] %vm3396, %v3348
        %3414 = vst.msk [vmem:[%s300 + $0x44] sm:$0xf] %vm3396, %v3349
        %3415 = vst.msk [vmem:[%s300 + $0x48] sm:$0xf] %vm3396, %v3350
        %3416 = vst.msk [vmem:[%s300 + $0x4c] sm:$0xf] %vm3396, %v3351
        %3417 = vst.msk [vmem:[%s300 + $0x50] sm:$0xf] %vm3396, %v3352
        %3418 = vst.msk [vmem:[%s300 + $0x54] sm:$0xf] %vm3396, %v3353
        %3419 = vst.msk [vmem:[%s300 + $0x58] sm:$0xf] %vm3396, %v3354
        %3420 = vst.msk [vmem:[%s300 + $0x5c] sm:$0xf] %vm3396, %v3355
        %3421 = vst.msk [vmem:[%s300 + $0x60] sm:$0xf] %vm3396, %v3356
        %3422 = vst.msk [vmem:[%s300 + $0x64] sm:$0xf] %vm3396, %v3357
        %3423 = vst.msk [vmem:[%s300 + $0x68] sm:$0xf] %vm3396, %v3358
        %3424 = vst.msk [vmem:[%s300 + $0x6c] sm:$0xf] %vm3396, %v3359
        %3425 = vst.msk [vmem:[%s300 + $0x70] sm:$0xf] %vm3396, %v3360
        %3426 = vst.msk [vmem:[%s300 + $0x74] sm:$0xf] %vm3396, %v3361
        %3427 = vst.msk [vmem:[%s300 + $0x78] sm:$0xf] %vm3396, %v3362
        %3428 = vst.msk [vmem:[%s300 + $0x7c] sm:$0xf] %vm3396, %v3363
        %s3429 = smul.u32 16, %s25
        %p3430 = scmp.lt.s32.totalorder %s24, 1
        %s3431 = scalar_select %p3430, %s24, 1
        %p3432 = scmp.lt.s32.totalorder %s3429, 15
        %s3433 = scalar_select %p3432, %s3429, 15
        %s3434 = smul.addr %s3433, 2
        %s3435 = smul.addr %s3431, 32
        %s3436 = sadd.s32 %s3434, %s3435
        %s3437 = smul.addr %s3436, 4
        %s3438 = scalar_lea.vmem %s7, %s3437
        // Predicated region
        $region77: #{tpu_custom_call.1} parent=43 // pred_check
          %p3439 = pneg %p178
        $region78: #{tpu_custom_call.1} parent=43 // pred_check_branch
          %3441 = sbr.rel (%p3439) target = $region80
        $region79: #{tpu_custom_call.1} parent=43 // pred_region
          %s3442 = smul.u32 16, %s25
        $region80: #{tpu_custom_call.1} parent=43 // pred_fallthru
          _
      $region44: #{tpu_custom_call.1} parent=5 // pred_fallthru
        _
      %p3443 = scmp.le.s32.totalorder 2, %s15
      // Predicated region
      $region81: #{tpu_custom_call.1} parent=5 // pred_check
        %p3444 = pneg %p3443
      $region82: #{tpu_custom_call.1} parent=5 // pred_check_branch
        %3446 = sbr.rel (%p3444) target = $region84
      $region83: #{tpu_custom_call.1} parent=5 // pred_region
        %s3447 = ssub.s32 %s15, 2
        // Predicated region
        $region85: #{tpu_custom_call.1} parent=83 // pred_check
          %p3448 = pneg %p184
        $region86: #{tpu_custom_call.1} parent=83 // pred_check_branch
          %3450 = sbr.rel (%p3448) target = $region88
        $region87: #{tpu_custom_call.1} parent=83 // pred_region
          %s3451 = smul.u32 16, %s27
          %p3452 = scmp.lt.s32.totalorder %s26, 1
          %s3453 = scalar_select %p3452, %s26, 1
          %p3454 = scmp.lt.s32.totalorder %s3451, 15
          %s3455 = scalar_select %p3454, %s3451, 15
          %s3456 = smul.addr %s3455, 2
          %s3457 = smul.addr %s3453, 32
          %s3458 = sadd.s32 %s3456, %s3457
          %s3459 = smul.addr %s3458, 4
          %s3460 = scalar_lea.vmem %s7, %s3459
        $region88: #{tpu_custom_call.1} parent=83 // pred_fallthru
          _
      $region84: #{tpu_custom_call.1} parent=5 // pred_fallthru
        _
    $region6: #{tpu_custom_call.1} parent=1 // loop_footer
      %s19 = sadd.s32 1, %s15
    $region7: #{tpu_custom_call.1} parent=1 // loop_footer_branch
      %14 = sbr.rel target = $region3
    $region8: #{tpu_custom_call.1} parent=1 // loop_exit
      _
    %3461 = vsyncpa [#allocation6], 1
    %s3462 = scalar_lea.sflag [#allocation6], 1
    %3463 = vsyncpa %s3462, 1
    %3464 = vsyncpa [#allocation8], 1
  %3465 = vsyncmov [#allocation3]
  %s3466 = vpop.sfrf %3465
  %p3467 = scmp.eq.s32.totalorder %s3466, 0
  %p3468 = pneg %p3467
  %3470 = shalt.err (%p3468)
  %s3471 = scalar_lea.sflag [#allocation3], 1
  %3472 = vsyncmov %s3471
  %s3473 = vpop.sfrf %3472
  %p3474 = scmp.eq.s32.totalorder %s3473, 0
  %p3475 = pneg %p3474
  %3477 = shalt.err (%p3475)

// kernel: tpu_custom_call.1
$region0: #{tpu_custom_call.1}
  #allocation0 [shape = 'u32[]', space=smem, size = 0x4, offset = 0x4, fixed_abs, tag = 'smem constant byte address 0x4 - core index']
  #allocation1 [shape = 'u32[144,128]{1,0:T(1,128)}', space=vmem, size = 0x12000, scoped, tag = 'internal scratch']
  #allocation2 [shape = 'bf16[2,18,16,128]{3,2,1,0:T(16,128)(2,1)}', space=vmem, size = 0x24000, scoped, tag = 'scratch operand']
  #allocation3 [shape = 's32[2]{0}', space=sflag, size = 0x8, scoped, tag = 'scratch operand']
  #allocation4 [shape = 'bf16[18,16,384]{2,1,0:T(16,128)(2,1)}', space=vmem, size = 0x36000, scoped, tag = 'scratch operand']
  #allocation10 [shape = 's32[]', space=sflag, size = 0x4, offset = 0, fixed_abs, tag = 'sflag constant byte address 0x0 - dummy sync flag']
  #allocation11 [shape = 's32[]', space=sflag, size = 0x4, offset = 0, fixed_abs, tag = 'sflag constant byte address 0x0 - dummy sync flag']
  #allocation12 [shape = 'u32[]', space=smem, size = 0x4, offset = 0x44, fixed_abs, tag = 'smem constant byte address 0x44 - assertion arg 0']
  #allocation13 [shape = 'u32[]', space=smem, size = 0x4, offset = 0x48, fixed_abs, tag = 'smem constant byte address 0x48 - assertion arg 1']
  #allocation14 [shape = 's32[]', space=sflag, size = 0x4, offset = 0, fixed_abs, tag = 'sflag constant byte address 0x0 - dummy sync flag']
  #allocation15 [shape = 's32[]', space=sflag, size = 0x4, offset = 0, fixed_abs, tag = 'sflag constant byte address 0x0 - dummy sync flag']
  %s0 = inlined_call_operand.hbm [shape: bf16[2,18,16,128], index: 0, kind: input, shape index: {}]
  %s1 = inlined_call_operand.hbm [shape: bf16[128,128], index: 1, kind: input, shape index: {}]
  %s2 = inlined_call_operand.vmem [shape: f32[1,128], index: 2, kind: input, shape index: {}]
  %s3 = inlined_call_operand.hbm [shape: bf16[3,384,128], index: 3, kind: input, shape index: {}]
  %s4 = inlined_call_operand.vmem [shape: f32[1,128], index: 4, kind: input, shape index: {}]
  %s5 = inlined_call_operand.hbm [shape: bf16[128,128], index: 5, kind: input, shape index: {}]
  %s6 = inlined_call_operand.vmem [shape: f32[1,128], index: 6, kind: input, shape index: {}]
  %s7 = inlined_call_operand.vmem [shape: bf16[2,16,16,4], index: 7, kind: output, shape index: {}]
  %s8 = sld [smem:[#allocation0]]
  $region89: #{tpu_custom_call.1} parent=0
    _
  %s10 = ssub.s32 1, %s8
  %s11 = scalar_select 0, %s10, %s8
  $region1: #{tpu_custom_call.1} parent=0
    #allocation5 [shape = 'u8[32768]{0}', space=vmem, size = 0x8000, scoped, tag = 'input window, operand 1, single buffered']
    #allocation6 [shape = 's32[2]{0}', space=sflag, size = 0x8, scoped, tag = 'scoped memory for tpu_custom_call.1']
    #allocation7 [shape = 'u8[294912]{0}', space=vmem, size = 0x48000, scoped, tag = 'input window, operand 3, single buffered']
    #allocation8 [shape = 's32[1]{0}', space=sflag, size = 0x4, scoped, tag = 'scoped memory for tpu_custom_call.1']
    #allocation9 [shape = 'u8[32768]{0}', space=vmem, size = 0x8000, scoped, tag = 'input window, operand 5, single buffered']
    %12 = vsyncpa [#allocation6], 0
    %13 = vsyncpa [#allocation8], 0
    loop: start=0, step=1, limit=4
    $region2: #{tpu_custom_call.1} parent=1 // loop_pre_header
      _
    $region3: #{tpu_custom_call.1} parent=1 // loop_header
      %s15 = sphi 0, %s19
      %p16 = scmp.ge.s32.totalorder %s15, 4
      %s22 = sphi 0, %s34
      %s23 = sphi 0, %s30
      %s24 = sphi 0, %s22
      %s25 = sphi 0, %s23
      %s26 = sphi 0, %s24
      %s27 = sphi 0, %s25
      %s35 = sphi 0, %s35
      %s37 = sphi 0, %s35
      %s38 = sphi 0, %s37
      %s52 = sphi 0, %s38
      %s56 = sphi 0, %s56
      %s58 = sphi 0, %s56
      %s59 = sphi 0, %s58
      %s73 = sphi 0, %s59
      %s77 = sphi 0, %s77
      %s79 = sphi 0, %s77
      %s80 = sphi 0, %s79
      %s94 = sphi 0, %s80
      %s98 = sphi 0, %s98
      %s100 = sphi 0, %s98
      %s101 = sphi 0, %s100
      %s115 = sphi 0, %s101
      %s119 = sphi 0, %s119
      %s121 = sphi 0, %s119
      %s122 = sphi 0, %s121
      %s136 = sphi 0, %s122
      %s140 = sphi 0, %s140
      %s142 = sphi 0, %s140
      %s143 = sphi 0, %s142
      %s157 = sphi 0, %s143
      %s165 = sphi 0, %s167
      %s168 = sphi 0, %s165
      %s169 = sphi 0, %s168
      %s185 = sphi 0, %s169
    $region4: #{tpu_custom_call.1} parent=1 // loop_header_branch
      %18 = sbr.rel (%p16) target = $region8
    $region5: #{tpu_custom_call.1} parent=1 // loop_body
      %s20 = ssub.s32 %s15, 1
      %s21 = ssub.s32 %s15, 2
      %s28 = sadd.s32 1, %s23
      %p29 = scmp.ge.s32.totalorder %s28, 1
      %s30 = scalar_select %p29, 0, %s28
      %s31 = sadd.s32 1, %s22
      %s32 = scalar_select %p29, %s31, %s22
      %p33 = scmp.ge.s32.totalorder %s32, 2
      %s34 = scalar_select %p33, 0, %s32
      %s36 = sadd.s32 %s35, 1
      %p39 = scmp.eq.s32.totalorder %s15, 1
      %p40 = scmp.ne.s32.totalorder %s35, %s37
      %p41 = scmp.eq.s32.totalorder %s15, 0
      %p42 = por %p40, %p41
      %p43 = scmp.ne.s32.totalorder %s35, %s37
      %p44 = scmp.eq.s32.totalorder %s20, 1
      %p45 = por %p43, %p44
      %p46 = scmp.ne.s32.totalorder %s37, %s38
      %p47 = scmp.eq.s32.totalorder %s20, 0
      %p48 = por %p46, %p47
      %p49 = scmp.ne.s32.totalorder %s37, %s38
      %p50 = scmp.eq.s32.totalorder %s21, 1
      %p51 = por %p49, %p50
      %p53 = scmp.ne.s32.totalorder %s38, %s52
      %p54 = scmp.eq.s32.totalorder %s21, 0
      %p55 = por %p53, %p54
      %s57 = sadd.s32 %s56, 1
      %p60 = scmp.eq.s32.totalorder %s15, 1
      %p61 = scmp.ne.s32.totalorder %s56, %s58
      %p62 = scmp.eq.s32.totalorder %s15, 0
      %p63 = por %p61, %p62
      %p64 = scmp.ne.s32.totalorder %s56, %s58
      %p65 = scmp.eq.s32.totalorder %s20, 1
      %p66 = por %p64, %p65
      %p67 = scmp.ne.s32.totalorder %s58, %s59
      %p68 = scmp.eq.s32.totalorder %s20, 0
      %p69 = por %p67, %p68
      %p70 = scmp.ne.s32.totalorder %s58, %s59
      %p71 = scmp.eq.s32.totalorder %s21, 1
      %p72 = por %p70, %p71
      %p74 = scmp.ne.s32.totalorder %s59, %s73
      %p75 = scmp.eq.s32.totalorder %s21, 0
      %p76 = por %p74, %p75
      %s78 = sadd.s32 %s77, 1
      %p81 = scmp.eq.s32.totalorder %s15, 1
      %p82 = scmp.ne.s32.totalorder %s77, %s79
      %p83 = scmp.eq.s32.totalorder %s15, 0
      %p84 = por %p82, %p83
      %p85 = scmp.ne.s32.totalorder %s77, %s79
      %p86 = scmp.eq.s32.totalorder %s20, 1
      %p87 = por %p85, %p86
      %p88 = scmp.ne.s32.totalorder %s79, %s80
      %p89 = scmp.eq.s32.totalorder %s20, 0
      %p90 = por %p88, %p89
      %p91 = scmp.ne.s32.totalorder %s79, %s80
      %p92 = scmp.eq.s32.totalorder %s21, 1
      %p93 = por %p91, %p92
      %p95 = scmp.ne.s32.totalorder %s80, %s94
      %p96 = scmp.eq.s32.totalorder %s21, 0
      %p97 = por %p95, %p96
      %s99 = sadd.s32 %s98, 1
      %p102 = scmp.eq.s32.totalorder %s15, 1
      %p103 = scmp.ne.s32.totalorder %s98, %s100
      %p104 = scmp.eq.s32.totalorder %s15, 0
      %p105 = por %p103, %p104
      %p106 = scmp.ne.s32.totalorder %s98, %s100
      %p107 = scmp.eq.s32.totalorder %s20, 1
      %p108 = por %p106, %p107
      %p109 = scmp.ne.s32.totalorder %s100, %s101
      %p110 = scmp.eq.s32.totalorder %s20, 0
      %p111 = por %p109, %p110
      %p112 = scmp.ne.s32.totalorder %s100, %s101
      %p113 = scmp.eq.s32.totalorder %s21, 1
      %p114 = por %p112, %p113
      %p116 = scmp.ne.s32.totalorder %s101, %s115
      %p117 = scmp.eq.s32.totalorder %s21, 0
      %p118 = por %p116, %p117
      %s120 = sadd.s32 %s119, 1
      %p123 = scmp.eq.s32.totalorder %s15, 1
      %p124 = scmp.ne.s32.totalorder %s119, %s121
      %p125 = scmp.eq.s32.totalorder %s15, 0
      %p126 = por %p124, %p125
      %p127 = scmp.ne.s32.totalorder %s119, %s121
      %p128 = scmp.eq.s32.totalorder %s20, 1
      %p129 = por %p127, %p128
      %p130 = scmp.ne.s32.totalorder %s121, %s122
      %p131 = scmp.eq.s32.totalorder %s20, 0
      %p132 = por %p130, %p131
      %p133 = scmp.ne.s32.totalorder %s121, %s122
      %p134 = scmp.eq.s32.totalorder %s21, 1
      %p135 = por %p133, %p134
      %p137 = scmp.ne.s32.totalorder %s122, %s136
      %p138 = scmp.eq.s32.totalorder %s21, 0
      %p139 = por %p137, %p138
      %s141 = sadd.s32 %s140, 1
      %p144 = scmp.eq.s32.totalorder %s15, 1
      %p145 = scmp.ne.s32.totalorder %s140, %s142
      %p146 = scmp.eq.s32.totalorder %s15, 0
      %p147 = por %p145, %p146
      %p148 = scmp.ne.s32.totalorder %s140, %s142
      %p149 = scmp.eq.s32.totalorder %s20, 1
      %p150 = por %p148, %p149
      %p151 = scmp.ne.s32.totalorder %s142, %s143
      %p152 = scmp.eq.s32.totalorder %s20, 0
      %p153 = por %p151, %p152
      %p154 = scmp.ne.s32.totalorder %s142, %s143
      %p155 = scmp.eq.s32.totalorder %s21, 1
      %p156 = por %p154, %p155
      %p158 = scmp.ne.s32.totalorder %s143, %s157
      %p159 = scmp.eq.s32.totalorder %s21, 0
      %p160 = por %p158, %p159
      %s161 = ssub.s32 %s22, %s34
      %s162 = ssub.s32 %s23, %s30
      %s163 = sor.u32 %s161, %s162
      %p164 = scmp.eq.s32.totalorder %s163, 0
      %s166 = sadd.s32 %s165, 1
      %s167 = scalar_select %p164, %s165, %s166
      %p170 = pneg %p164
      %p171 = scmp.eq.s32.totalorder %s15, 1
      %p172 = por %p170, %p171
      %p173 = scmp.ne.s32.totalorder %s165, %s168
      %p174 = scmp.eq.s32.totalorder %s15, 0
      %p175 = por %p173, %p174
      %p176 = scmp.ne.s32.totalorder %s165, %s168
      %p177 = scmp.eq.s32.totalorder %s20, 1
      %p178 = por %p176, %p177
      %p179 = scmp.ne.s32.totalorder %s168, %s169
      %p180 = scmp.eq.s32.totalorder %s20, 0
      %p181 = por %p179, %p180
      %p182 = scmp.ne.s32.totalorder %s168, %s169
      %p183 = scmp.eq.s32.totalorder %s21, 1
      %p184 = por %p182, %p183
      %p186 = scmp.ne.s32.totalorder %s169, %s185
      %p187 = scmp.eq.s32.totalorder %s21, 0
      %p188 = por %p186, %p187
      %p189 = scmp.le.s32.totalorder 1, %s15
      %p190 = scmp.lt.s32.totalorder %s15, 3
      %p191 = pnand %p189, %p190
      %p192 = pneg %p191
      // Predicated region
      $region9: #{tpu_custom_call.1} parent=5 // pred_check
        _
      $region10: #{tpu_custom_call.1} parent=5 // pred_check_branch
        %194 = sbr.rel (%p191) target = $region12
      $region11: #{tpu_custom_call.1} parent=5 // pred_region
        %s195 = ssub.s32 %s15, 1
        // Predicated region
        $region13: #{tpu_custom_call.1} parent=11 // pred_check
          %p196 = pneg %p48
        $region14: #{tpu_custom_call.1} parent=11 // pred_check_branch
          %198 = sbr.rel (%p196) target = $region16
        $region15: #{tpu_custom_call.1} parent=11 // pred_region
          %s200 = ssub.s32 1024, 1024
          %201 = vsyncadd [#allocation6], %s200
          %s202 = sshll.u32 [#allocation5], 4
          %s203 = int_to_ptr.vmem [resolvable:$true] %s202
          %208 = dma.hbm_to_vmem [thread:$0]  %s1, 1024, %s203, [#allocation6], 64, 64, 4
        $region16: #{tpu_custom_call.1} parent=11 // pred_fallthru
          _
        // Predicated region
        $region17: #{tpu_custom_call.1} parent=11 // pred_check
          %p209 = pneg %p69
        $region18: #{tpu_custom_call.1} parent=11 // pred_check_branch
          %211 = sbr.rel (%p209) target = $region20
        $region19: #{tpu_custom_call.1} parent=11 // pred_region
          _
        $region20: #{tpu_custom_call.1} parent=11 // pred_fallthru
          _
        // Predicated region
        $region21: #{tpu_custom_call.1} parent=11 // pred_check
          %p212 = pneg %p90
        $region22: #{tpu_custom_call.1} parent=11 // pred_check_branch
          %214 = sbr.rel (%p212) target = $region24
        $region23: #{tpu_custom_call.1} parent=11 // pred_region
          %s216 = ssub.s32 9216, 9216
          %217 = vsyncadd [#allocation8], %s216
          %s218 = sshll.u32 [#allocation7], 4
          %s219 = int_to_ptr.vmem [resolvable:$true] %s218
          %224 = dma.hbm_to_vmem [thread:$0]  %s3, 9216, %s219, [#allocation8], 64, 64, 4
        $region24: #{tpu_custom_call.1} parent=11 // pred_fallthru
          _
        // Predicated region
        $region25: #{tpu_custom_call.1} parent=11 // pred_check
          %p225 = pneg %p111
        $region26: #{tpu_custom_call.1} parent=11 // pred_check_branch
          %227 = sbr.rel (%p225) target = $region28
        $region27: #{tpu_custom_call.1} parent=11 // pred_region
          _
        $region28: #{tpu_custom_call.1} parent=11 // pred_fallthru
          _
        // Predicated region
        $region29: #{tpu_custom_call.1} parent=11 // pred_check
          %p228 = pneg %p132
        $region30: #{tpu_custom_call.1} parent=11 // pred_check_branch
          %230 = sbr.rel (%p228) target = $region32
        $region31: #{tpu_custom_call.1} parent=11 // pred_region
          %s232 = ssub.s32 1024, 1024
          %233 = vsyncadd [#allocation8], %s232
          %s234 = sshll.u32 [#allocation9], 4
          %s235 = int_to_ptr.vmem [resolvable:$true] %s234
          %240 = dma.hbm_to_vmem [thread:$0]  %s5, 1024, %s235, [#allocation8], 64, 64, 4
        $region32: #{tpu_custom_call.1} parent=11 // pred_fallthru
          _
        // Predicated region
        $region33: #{tpu_custom_call.1} parent=11 // pred_check
          %p241 = pneg %p153
        $region34: #{tpu_custom_call.1} parent=11 // pred_check_branch
          %243 = sbr.rel (%p241) target = $region36
        $region35: #{tpu_custom_call.1} parent=11 // pred_region
          _
        $region36: #{tpu_custom_call.1} parent=11 // pred_fallthru
          _
      $region12: #{tpu_custom_call.1} parent=5 // pred_fallthru
        _
      %p244 = scmp.lt.s32.totalorder %s15, 2
      // Predicated region
      $region37: #{tpu_custom_call.1} parent=5 // pred_check
        %p245 = pneg %p244
      $region38: #{tpu_custom_call.1} parent=5 // pred_check_branch
        %247 = sbr.rel (%p245) target = $region40
      $region39: #{tpu_custom_call.1} parent=5 // pred_region
        _
      $region40: #{tpu_custom_call.1} parent=5 // pred_fallthru
        _
      %p248 = scmp.le.s32.totalorder 1, %s15
      %p249 = scmp.lt.s32.totalorder %s15, 3
      %p250 = pnand %p248, %p249
      %p251 = pneg %p250
      // Predicated region
      $region41: #{tpu_custom_call.1} parent=5 // pred_check
        _
      $region42: #{tpu_custom_call.1} parent=5 // pred_check_branch
        %253 = sbr.rel (%p250) target = $region44
      $region43: #{tpu_custom_call.1} parent=5 // pred_region
        %s254 = ssub.s32 %s15, 1
        // Predicated region
        $region45: #{tpu_custom_call.1} parent=43 // pred_check
          %p255 = pneg %p48
        $region46: #{tpu_custom_call.1} parent=43 // pred_check_branch
          %257 = sbr.rel (%p255) target = $region48
        $region47: #{tpu_custom_call.1} parent=43 // pred_region
          %258 = dma.done [#allocation6], 1024
        $region48: #{tpu_custom_call.1} parent=43 // pred_fallthru
          _
        // Predicated region
        $region49: #{tpu_custom_call.1} parent=43 // pred_check
          %p259 = pneg %p90
        $region50: #{tpu_custom_call.1} parent=43 // pred_check_branch
          %261 = sbr.rel (%p259) target = $region52
        $region51: #{tpu_custom_call.1} parent=43 // pred_region
          %262 = dma.done [#allocation8], 9216
        $region52: #{tpu_custom_call.1} parent=43 // pred_fallthru
          _
        // Predicated region
        $region53: #{tpu_custom_call.1} parent=43 // pred_check
          %p263 = pneg %p132
        $region54: #{tpu_custom_call.1} parent=43 // pred_check_branch
          %265 = sbr.rel (%p263) target = $region56
        $region55: #{tpu_custom_call.1} parent=43 // pred_region
          %266 = dma.done [#allocation8], 1024
        $region56: #{tpu_custom_call.1} parent=43 // pred_fallthru
          _
        %p267 = pneg %p48
        %p268 = pneg %p45
        %p269 = pneg %p69
        %p270 = pneg %p66
        %p271 = pneg %p90
        %p272 = pneg %p87
        %p273 = pneg %p111
        %p274 = pneg %p108
        %p275 = pneg %p132
        %p276 = pneg %p129
        %p277 = pneg %p153
        %p278 = pneg %p150
        %p279 = pneg %p181
        %p280 = pneg %p178
        %s281 = smul.u32 16, %s25
        %p282 = scmp.lt.s32.totalorder %s24, 1
        %s283 = scalar_select %p282, %s24, 1
        %p284 = scmp.lt.s32.totalorder %s281, 15
        %s285 = scalar_select %p284, %s281, 15
        %s286 = smul.addr %s285, 2
        %s287 = smul.addr %s283, 32
        %s288 = sadd.s32 %s286, %s287
        %s289 = smul.addr %s288, 4
        %s290 = scalar_lea.vmem %s7, %s289
        %s291 = smul.u32 16, %s25
        %p292 = scmp.lt.s32.totalorder %s24, 1
        %s293 = scalar_select %p292, %s24, 1
        %p294 = scmp.lt.s32.totalorder %s291, 15
        %s295 = scalar_select %p294, %s291, 15
        %s296 = smul.addr %s295, 2
        %s297 = smul.addr %s293, 32
        %s298 = sadd.s32 %s296, %s297
        %s299 = smul.addr %s298, 4
        %s300 = scalar_lea.vmem %s7, %s299
        %s301 = smul.u32 16, %s25
        %s303 = sand.u32 %s25, 1
        %p304 = scmp.eq.s32.totalorder %s25, 0
        // Predicated region
        $region57: #{tpu_custom_call.1} parent=43 // pred_check
          %p305 = pneg %p304
        $region58: #{tpu_custom_call.1} parent=43 // pred_check_branch
          %307 = sbr.rel (%p305) target = $region60
        $region59: #{tpu_custom_call.1} parent=43 // pred_region
          %s308 = smul.u32 %s24, 36
          %s309 = smul.addr %s308, 64
          %s310 = scalar_lea.hbm %s0, %s309
          // Predicated region
          $region61: #{tpu_custom_call.1} parent=59 // pred_check
            _
          $region62: #{tpu_custom_call.1} parent=59 // pred_check_branch
            %312 = sbr.rel target = $region64
          $region63: #{tpu_custom_call.1} parent=59 // pred_region
            %313 = sst [smem:[#allocation12]] [#allocation11]
            %314 = sst [smem:[#allocation13]] [#allocation10]
          $region64: #{tpu_custom_call.1} parent=59 // pred_fallthru
            _
          %316 = shalt.err (0)
          %s318 = sshll.u32 [#allocation2], 4
          %s319 = int_to_ptr.vmem [resolvable:$true] %s318
          %321 = dma.hbm_to_vmem [thread:$0]  %s310, 2304, %s319, [#allocation3]
        $region60: #{tpu_custom_call.1} parent=43 // pred_fallthru
          _
        %s322 = smul.u32 %s303, 18
        %s323 = smul.addr %s322, 8
        %s324 = scalar_lea.vmem [#allocation2], %s323
        %s325 = scalar_lea.sflag [#allocation3], %s303
        %s326 = smul.u32 4, 18
        %s327 = smul.u32 %s326, 2
        %s328 = smul.u32 %s327, 1
        %s329 = sshll.u32 %s328, 4
        %330 = dma.done %s325, %s329
        %s331 = sadd.s32 %s25, 1
        %p332 = scmp.lt.s32.totalorder %s331, 1
        // Predicated region
        $region65: #{tpu_custom_call.1} parent=43 // pred_check
          %p333 = pneg %p332
        $region66: #{tpu_custom_call.1} parent=43 // pred_check_branch
          %335 = sbr.rel (%p333) target = $region68
        $region67: #{tpu_custom_call.1} parent=43 // pred_region
          %s336 = ssub.s32 1, %s303
          %s337 = smul.u32 %s331, 16
          %s338 = smul.u32 %s337, 2
          %s339 = smul.u32 %s24, 36
          %s340 = sadd.s32 %s338, %s339
          %s341 = smul.addr %s340, 64
          %s342 = scalar_lea.hbm %s0, %s341
          %s343 = smul.u32 %s336, 18
          %s344 = smul.addr %s343, 8
          %s345 = scalar_lea.vmem [#allocation2], %s344
          %s346 = scalar_lea.sflag [#allocation3], %s336
          // Predicated region
          $region69: #{tpu_custom_call.1} parent=67 // pred_check
            _
          $region70: #{tpu_custom_call.1} parent=67 // pred_check_branch
            %348 = sbr.rel target = $region72
          $region71: #{tpu_custom_call.1} parent=67 // pred_region
            %349 = sst [smem:[#allocation12]] [#allocation15]
            %350 = sst [smem:[#allocation13]] [#allocation14]
          $region72: #{tpu_custom_call.1} parent=67 // pred_fallthru
            _
          %352 = shalt.err (0)
          %s354 = sshll.u32 %s345, 4
          %s355 = int_to_ptr.vmem [resolvable:$true] %s354
          %357 = dma.hbm_to_vmem [thread:$0]  %s342, 2304, %s355, %s346
        $region68: #{tpu_custom_call.1} parent=43 // pred_fallthru
          _
        %v358 = vld [vmem:[%s324] sm:$0xff]
        %v359 = vld [vmem:[%s324 + $0x8] sm:$0xff]
        %v360 = vld [vmem:[%s324 + $0x10] sm:$0xff]
        %v361 = vld [vmem:[%s324 + $0x18] sm:$0xff]
        %v362 = vld [vmem:[%s324 + $0x20] sm:$0xff]
        %v363 = vld [vmem:[%s324 + $0x28] sm:$0xff]
        %v364 = vld [vmem:[%s324 + $0x30] sm:$0xff]
        %v365 = vld [vmem:[%s324 + $0x38] sm:$0xff]
        %v366 = vld [vmem:[%s324 + $0x40] sm:$0xff]
        %v367 = vld [vmem:[%s324 + $0x48] sm:$0xff]
        %v368 = vld [vmem:[%s324 + $0x50] sm:$0xff]
        %v369 = vld [vmem:[%s324 + $0x58] sm:$0xff]
        %v370 = vld [vmem:[%s324 + $0x60] sm:$0xff]
        %v371 = vld [vmem:[%s324 + $0x68] sm:$0xff]
        %v372 = vld [vmem:[%s324 + $0x70] sm:$0xff]
        %v373 = vld [vmem:[%s324 + $0x78] sm:$0xff]
        %v374 = vld [vmem:[%s324 + $0x80] sm:$0xff]
        %v375 = vld [vmem:[%s324 + $0x88] sm:$0xff]
        %v376 = vld [vmem:[#allocation5] sm:$0xf]
        %v377 = vld [vmem:[#allocation5 + $0x4] sm:$0xf]
        %v378 = vld [vmem:[#allocation5 + $0x8] sm:$0xf]
        %v379 = vld [vmem:[#allocation5 + $0xc] sm:$0xf]
        %v380 = vld [vmem:[#allocation5 + $0x10] sm:$0xf]
        %v381 = vld [vmem:[#allocation5 + $0x14] sm:$0xf]
        %v382 = vld [vmem:[#allocation5 + $0x18] sm:$0xf]
        %v383 = vld [vmem:[#allocation5 + $0x1c] sm:$0xf]
        %v384 = vld [vmem:[#allocation5 + $0x20] sm:$0xf]
        %v385 = vld [vmem:[#allocation5 + $0x24] sm:$0xf]
        %v386 = vld [vmem:[#allocation5 + $0x28] sm:$0xf]
        %v387 = vld [vmem:[#allocation5 + $0x2c] sm:$0xf]
        %v388 = vld [vmem:[#allocation5 + $0x30] sm:$0xf]
        %v389 = vld [vmem:[#allocation5 + $0x34] sm:$0xf]
        %v390 = vld [vmem:[#allocation5 + $0x38] sm:$0xf]
        %v391 = vld [vmem:[#allocation5 + $0x3c] sm:$0xf]
        %v392 = vld [vmem:[%s2] sm:$0x1]
        %v394 = vlaneseq
        %v395 = vshrl.u32 %v394, 7
        %v396 = vsub.s32 0, %v395
        %v397 = vrot.slane %v392, %v396
        %v415 = vunpack.c.l.b16 %v376
        %v416 = vunpack.c.l.b16 %v377
        %v417 = vunpack.c.l.b16 %v378
        %v418 = vunpack.c.l.b16 %v379
        %v419 = vunpack.c.l.b16 %v380
        %v420 = vunpack.c.l.b16 %v381
        %v421 = vunpack.c.l.b16 %v382
        %v422 = vunpack.c.l.b16 %v383
        %v423 = vunpack.c.l.b16 %v384
        %v424 = vunpack.c.l.b16 %v385
        %v425 = vunpack.c.l.b16 %v386
        %v426 = vunpack.c.l.b16 %v387
        %v427 = vunpack.c.l.b16 %v388
        %v428 = vunpack.c.l.b16 %v389
        %v429 = vunpack.c.l.b16 %v390
        %v430 = vunpack.c.l.b16 %v391
        %v431 = vpack.c.b16 %v416, %v415
        %v432 = vpack.c.b16 %v418, %v417
        %v433 = vpack.c.b16 %v420, %v419
        %v434 = vpack.c.b16 %v422, %v421
        %v435 = vpack.c.b16 %v424, %v423
        %v436 = vpack.c.b16 %v426, %v425
        %v437 = vpack.c.b16 %v428, %v427
        %v438 = vpack.c.b16 %v430, %v429
        %447 = vmatprep.subr.bf16.mxu0 0
        %448 = vmatpush1.bf16.msra.mxu0 %v431
        %449 = vmatprep.subr.bf16.mxu0 0
        %450 = vmatpush1.bf16.msra.mxu0 %v432
        %451 = vmatprep.subr.bf16.mxu0 0
        %452 = vmatpush1.bf16.msra.mxu0 %v433
        %453 = vmatprep.subr.bf16.mxu0 0
        %454 = vmatpush1.bf16.msra.mxu0 %v434
        %455 = vmatprep.subr.bf16.mxu0 0
        %456 = vmatpush1.bf16.msra.mxu0 %v435
        %457 = vmatprep.subr.bf16.mxu0 0
        %458 = vmatpush1.bf16.msra.mxu0 %v436
        %459 = vmatprep.subr.bf16.mxu0 0
        %460 = vmatpush1.bf16.msra.mxu0 %v437
        %461 = vmatprep.subr.bf16.mxu0 0
        %462 = vmatpush1.bf16.msra.mxu0 %v438
        %463 = vmatprep.subr.bf16.mxu0 0
        %464 = vmatpush1.bf16.msra.mxu0 0
        %465 = vmatprep.subr.bf16.mxu0 0
        %466 = vmatpush1.bf16.msra.mxu0 0
        %467 = vmatprep.subr.bf16.mxu0 0
        %468 = vmatpush1.bf16.msra.mxu0 0
        %469 = vmatprep.subr.bf16.mxu0 0
        %470 = vmatpush1.bf16.msra.mxu0 0
        %471 = vmatprep.subr.bf16.mxu0 0
        %472 = vmatpush1.bf16.msra.mxu0 0
        %473 = vmatprep.subr.bf16.mxu0 0
        %474 = vmatpush1.bf16.msra.mxu0 0
        %475 = vmatprep.subr.bf16.mxu0 0
        %476 = vmatpush1.bf16.msra.mxu0 0
        %477 = vmatprep.subr.bf16.mxu0 0
        %478 = vmatpush1.bf16.msra.mxu0 0
        %479 = vmatprep.mubr.bf16.mxu0 0
        %480 = vmatmul.mubr.bf16.gmra.mrb[0].mxu0 %v358
        %v481 = vpop.f32.mrb[0].mxu0
        %v482 = vadd.f32 %v397, %v481
        %v483 = vpop.f32.mrb[0].mxu0
        %v484 = vpop.f32.mrb[0].mxu0
        %v485 = vadd.f32 %v397, %v484
        %v486 = vpop.f32.mrb[0].mxu0
        %487 = vmatprep.mubr.bf16.mxu0 0
        %488 = vmatmul.mubr.bf16.gmra.mrb[0].mxu0 %v359
        %v489 = vpop.f32.mrb[0].mxu0
        %v490 = vadd.f32 %v397, %v489
        %v491 = vpop.f32.mrb[0].mxu0
        %v492 = vpop.f32.mrb[0].mxu0
        %v493 = vadd.f32 %v397, %v492
        %v494 = vpop.f32.mrb[0].mxu0
        %495 = vmatprep.mubr.bf16.mxu0 0
        %496 = vmatmul.mubr.bf16.gmra.mrb[0].mxu0 %v360
        %v497 = vpop.f32.mrb[0].mxu0
        %v498 = vadd.f32 %v397, %v497
        %v499 = vpop.f32.mrb[0].mxu0
        %v500 = vpop.f32.mrb[0].mxu0
        %v501 = vadd.f32 %v397, %v500
        %v502 = vpop.f32.mrb[0].mxu0
        %503 = vmatprep.mubr.bf16.mxu0 0
        %504 = vmatmul.mubr.bf16.gmra.mrb[0].mxu0 %v361
        %v505 = vpop.f32.mrb[0].mxu0
        %v506 = vadd.f32 %v397, %v505
        %v507 = vpop.f32.mrb[0].mxu0
        %v508 = vpop.f32.mrb[0].mxu0
        %v509 = vadd.f32 %v397, %v508
        %v510 = vpop.f32.mrb[0].mxu0
        %511 = vmatprep.mubr.bf16.mxu0 0
        %512 = vmatmul.mubr.bf16.gmra.mrb[0].mxu0 %v362
        %v513 = vpop.f32.mrb[0].mxu0
        %v514 = vadd.f32 %v397, %v513
        %v515 = vpop.f32.mrb[0].mxu0
        %v516 = vpop.f32.mrb[0].mxu0
        %v517 = vadd.f32 %v397, %v516
        %v518 = vpop.f32.mrb[0].mxu0
        %519 = vmatprep.mubr.bf16.mxu0 0
        %520 = vmatmul.mubr.bf16.gmra.mrb[0].mxu0 %v363
        %v521 = vpop.f32.mrb[0].mxu0
        %v522 = vadd.f32 %v397, %v521
        %v523 = vpop.f32.mrb[0].mxu0
        %v524 = vpop.f32.mrb[0].mxu0
        %v525 = vadd.f32 %v397, %v524
        %v526 = vpop.f32.mrb[0].mxu0
        %527 = vmatprep.mubr.bf16.mxu0 0
        %528 = vmatmul.mubr.bf16.gmra.mrb[0].mxu0 %v364
        %v529 = vpop.f32.mrb[0].mxu0
        %v530 = vadd.f32 %v397, %v529
        %v531 = vpop.f32.mrb[0].mxu0
        %v532 = vpop.f32.mrb[0].mxu0
        %v533 = vadd.f32 %v397, %v532
        %v534 = vpop.f32.mrb[0].mxu0
        %535 = vmatprep.mubr.bf16.mxu0 0
        %536 = vmatmul.mubr.bf16.gmra.mrb[0].mxu0 %v365
        %v537 = vpop.f32.mrb[0].mxu0
        %v538 = vadd.f32 %v397, %v537
        %v539 = vpop.f32.mrb[0].mxu0
        %v540 = vpop.f32.mrb[0].mxu0
        %v541 = vadd.f32 %v397, %v540
        %v542 = vpop.f32.mrb[0].mxu0
        %543 = vmatprep.mubr.bf16.mxu0 0
        %544 = vmatmul.mubr.bf16.gmra.mrb[0].mxu0 %v366
        %v545 = vpop.f32.mrb[0].mxu0
        %v546 = vadd.f32 %v397, %v545
        %v547 = vpop.f32.mrb[0].mxu0
        %v548 = vpop.f32.mrb[0].mxu0
        %v549 = vadd.f32 %v397, %v548
        %v550 = vpop.f32.mrb[0].mxu0
        %551 = vmatprep.mubr.bf16.mxu0 0
        %552 = vmatmul.mubr.bf16.gmra.mrb[0].mxu0 %v367
        %v553 = vpop.f32.mrb[0].mxu0
        %v554 = vadd.f32 %v397, %v553
        %v555 = vpop.f32.mrb[0].mxu0
        %v556 = vpop.f32.mrb[0].mxu0
        %v557 = vadd.f32 %v397, %v556
        %v558 = vpop.f32.mrb[0].mxu0
        %559 = vmatprep.mubr.bf16.mxu0 0
        %560 = vmatmul.mubr.bf16.gmra.mrb[0].mxu0 %v368
        %v561 = vpop.f32.mrb[0].mxu0
        %v562 = vadd.f32 %v397, %v561
        %v563 = vpop.f32.mrb[0].mxu0
        %v564 = vpop.f32.mrb[0].mxu0
        %v565 = vadd.f32 %v397, %v564
        %v566 = vpop.f32.mrb[0].mxu0
        %567 = vmatprep.mubr.bf16.mxu0 0
        %568 = vmatmul.mubr.bf16.gmra.mrb[0].mxu0 %v369
        %v569 = vpop.f32.mrb[0].mxu0
        %v570 = vadd.f32 %v397, %v569
        %v571 = vpop.f32.mrb[0].mxu0
        %v572 = vpop.f32.mrb[0].mxu0
        %v573 = vadd.f32 %v397, %v572
        %v574 = vpop.f32.mrb[0].mxu0
        %575 = vmatprep.mubr.bf16.mxu0 0
        %576 = vmatmul.mubr.bf16.gmra.mrb[0].mxu0 %v370
        %v577 = vpop.f32.mrb[0].mxu0
        %v578 = vadd.f32 %v397, %v577
        %v579 = vpop.f32.mrb[0].mxu0
        %v580 = vpop.f32.mrb[0].mxu0
        %v581 = vadd.f32 %v397, %v580
        %v582 = vpop.f32.mrb[0].mxu0
        %583 = vmatprep.mubr.bf16.mxu0 0
        %584 = vmatmul.mubr.bf16.gmra.mrb[0].mxu0 %v371
        %v585 = vpop.f32.mrb[0].mxu0
        %v586 = vadd.f32 %v397, %v585
        %v587 = vpop.f32.mrb[0].mxu0
        %v588 = vpop.f32.mrb[0].mxu0
        %v589 = vadd.f32 %v397, %v588
        %v590 = vpop.f32.mrb[0].mxu0
        %591 = vmatprep.mubr.bf16.mxu0 0
        %592 = vmatmul.mubr.bf16.gmra.mrb[0].mxu0 %v372
        %v593 = vpop.f32.mrb[0].mxu0
        %v594 = vadd.f32 %v397, %v593
        %v595 = vpop.f32.mrb[0].mxu0
        %v596 = vpop.f32.mrb[0].mxu0
        %v597 = vadd.f32 %v397, %v596
        %v598 = vpop.f32.mrb[0].mxu0
        %599 = vmatprep.mubr.bf16.mxu0 0
        %600 = vmatmul.mubr.bf16.gmra.mrb[0].mxu0 %v373
        %v601 = vpop.f32.mrb[0].mxu0
        %v602 = vadd.f32 %v397, %v601
        %v603 = vpop.f32.mrb[0].mxu0
        %v604 = vpop.f32.mrb[0].mxu0
        %v605 = vadd.f32 %v397, %v604
        %v606 = vpop.f32.mrb[0].mxu0
        %607 = vmatprep.mubr.bf16.mxu0 0
        %608 = vmatmul.mubr.bf16.gmra.mrb[0].mxu0 %v374
        %v609 = vpop.f32.mrb[0].mxu0
        %v610 = vadd.f32 %v397, %v609
        %v611 = vpop.f32.mrb[0].mxu0
        %v612 = vpop.f32.mrb[0].mxu0
        %v613 = vadd.f32 %v397, %v612
        %v614 = vpop.f32.mrb[0].mxu0
        %615 = vmatprep.mubr.bf16.mxu0 0
        %616 = vmatmul.mubr.bf16.gmra.mrb[0].mxu0 %v375
        %v617 = vpop.f32.mrb[0].mxu0
        %v618 = vadd.f32 %v397, %v617
        %v619 = vpop.f32.mrb[0].mxu0
        %v620 = vpop.f32.mrb[0].mxu0
        %v621 = vadd.f32 %v397, %v620
        %v622 = vpop.f32.mrb[0].mxu0
        %623 = vdwg.mxu0
        %v624 = vmax.f32 %v482, 0.0
        %v625 = vmax.f32 %v485, 0.0
        %v626 = vmax.f32 %v490, 0.0
        %v627 = vmax.f32 %v493, 0.0
        %v628 = vmax.f32 %v498, 0.0
        %v629 = vmax.f32 %v501, 0.0
        %v630 = vmax.f32 %v506, 0.0
        %v631 = vmax.f32 %v509, 0.0
        %v632 = vmax.f32 %v514, 0.0
        %v633 = vmax.f32 %v517, 0.0
        %v634 = vmax.f32 %v522, 0.0
        %v635 = vmax.f32 %v525, 0.0
        %v636 = vmax.f32 %v530, 0.0
        %v637 = vmax.f32 %v533, 0.0
        %v638 = vmax.f32 %v538, 0.0
        %v639 = vmax.f32 %v541, 0.0
        %v640 = vmax.f32 %v546, 0.0
        %v641 = vmax.f32 %v549, 0.0
        %v642 = vmax.f32 %v554, 0.0
        %v643 = vmax.f32 %v557, 0.0
        %v644 = vmax.f32 %v562, 0.0
        %v645 = vmax.f32 %v565, 0.0
        %v646 = vmax.f32 %v570, 0.0
        %v647 = vmax.f32 %v573, 0.0
        %v648 = vmax.f32 %v578, 0.0
        %v649 = vmax.f32 %v581, 0.0
        %v650 = vmax.f32 %v586, 0.0
        %v651 = vmax.f32 %v589, 0.0
        %v652 = vmax.f32 %v594, 0.0
        %v653 = vmax.f32 %v597, 0.0
        %v654 = vmax.f32 %v602, 0.0
        %v655 = vmax.f32 %v605, 0.0
        %v656 = vmax.f32 %v610, 0.0
        %v657 = vmax.f32 %v613, 0.0
        %v658 = vmax.f32 %v618, 0.0
        %v659 = vmax.f32 %v621, 0.0
        %v660 = vpack.c.bf16 %v625, %v624
        %v661 = vpack.c.bf16 %v627, %v626
        %v662 = vpack.c.bf16 %v629, %v628
        %v663 = vpack.c.bf16 %v631, %v630
        %v664 = vpack.c.bf16 %v633, %v632
        %v665 = vpack.c.bf16 %v635, %v634
        %v666 = vpack.c.bf16 %v637, %v636
        %v667 = vpack.c.bf16 %v639, %v638
        %v668 = vpack.c.bf16 %v641, %v640
        %v669 = vpack.c.bf16 %v643, %v642
        %v670 = vpack.c.bf16 %v645, %v644
        %v671 = vpack.c.bf16 %v647, %v646
        %v672 = vpack.c.bf16 %v649, %v648
        %v673 = vpack.c.bf16 %v651, %v650
        %v674 = vpack.c.bf16 %v653, %v652
        %v675 = vpack.c.bf16 %v655, %v654
        %v676 = vpack.c.bf16 %v657, %v656
        %v677 = vpack.c.bf16 %v659, %v658
        %v679 = vshrl.u32 %v660, 16
        %v681 = vrot.slane %v679, 7
        %v682 = vshll.u32 %v660, 16
        %v684 = vor.u32 %v681, %v682
        %v686 = vshrl.u32 %v661, 16
        %v688 = vrot.slane %v686, 7
        %v689 = vshll.u32 %v661, 16
        %v691 = vor.u32 %v688, %v689
        %v693 = vshrl.u32 %v662, 16
        %v695 = vrot.slane %v693, 7
        %v696 = vshll.u32 %v662, 16
        %v698 = vor.u32 %v695, %v696
        %v700 = vshrl.u32 %v663, 16
        %v702 = vrot.slane %v700, 7
        %v703 = vshll.u32 %v663, 16
        %v705 = vor.u32 %v702, %v703
        %v707 = vshrl.u32 %v664, 16
        %v709 = vrot.slane %v707, 7
        %v710 = vshll.u32 %v664, 16
        %v712 = vor.u32 %v709, %v710
        %v714 = vshrl.u32 %v665, 16
        %v716 = vrot.slane %v714, 7
        %v717 = vshll.u32 %v665, 16
        %v719 = vor.u32 %v716, %v717
        %v721 = vshrl.u32 %v666, 16
        %v723 = vrot.slane %v721, 7
        %v724 = vshll.u32 %v666, 16
        %v726 = vor.u32 %v723, %v724
        %v728 = vshrl.u32 %v667, 16
        %v730 = vrot.slane %v728, 7
        %v731 = vshll.u32 %v667, 16
        %v733 = vor.u32 %v730, %v731
        %v735 = vshrl.u32 %v668, 16
        %v737 = vrot.slane %v735, 7
        %v738 = vshll.u32 %v668, 16
        %v740 = vor.u32 %v737, %v738
        %v742 = vshrl.u32 %v669, 16
        %v744 = vrot.slane %v742, 7
        %v745 = vshll.u32 %v669, 16
        %v747 = vor.u32 %v744, %v745
        %v749 = vshrl.u32 %v670, 16
        %v751 = vrot.slane %v749, 7
        %v752 = vshll.u32 %v670, 16
        %v754 = vor.u32 %v751, %v752
        %v756 = vshrl.u32 %v671, 16
        %v758 = vrot.slane %v756, 7
        %v759 = vshll.u32 %v671, 16
        %v761 = vor.u32 %v758, %v759
        %v763 = vshrl.u32 %v672, 16
        %v765 = vrot.slane %v763, 7
        %v766 = vshll.u32 %v672, 16
        %v768 = vor.u32 %v765, %v766
        %v770 = vshrl.u32 %v673, 16
        %v772 = vrot.slane %v770, 7
        %v773 = vshll.u32 %v673, 16
        %v775 = vor.u32 %v772, %v773
        %v777 = vshrl.u32 %v674, 16
        %v779 = vrot.slane %v777, 7
        %v780 = vshll.u32 %v674, 16
        %v782 = vor.u32 %v779, %v780
        %v784 = vshrl.u32 %v675, 16
        %v786 = vrot.slane %v784, 7
        %v787 = vshll.u32 %v675, 16
        %v789 = vor.u32 %v786, %v787
        %v791 = vshrl.u32 %v676, 16
        %v793 = vrot.slane %v791, 7
        %v794 = vshll.u32 %v676, 16
        %v796 = vor.u32 %v793, %v794
        %v798 = vshrl.u32 %v677, 16
        %v800 = vrot.slane %v798, 7
        %v801 = vshll.u32 %v677, 16
        %v803 = vor.u32 %v800, %v801
        %vm822 = vcmask 1047552
        %vm823 = vsmask.f32 7938
        %vm824 = vmand %vm822, %vm823
        %v825 = vld [vmem:[#allocation4] sm:$0xff]
        %v826 = vsel %vm824, %v684, %v825
        %827 = vst [vmem:[#allocation4] sm:$0xff] %v826
        %v828 = vld [vmem:[#allocation4 + $0x18] sm:$0xff]
        %v829 = vsel %vm824, %v691, %v828
        %830 = vst [vmem:[#allocation4 + $0x18] sm:$0xff] %v829
        %v831 = vld [vmem:[#allocation4 + $0x30] sm:$0xff]
        %v832 = vsel %vm824, %v698, %v831
        %833 = vst [vmem:[#allocation4 + $0x30] sm:$0xff] %v832
        %v834 = vld [vmem:[#allocation4 + $0x48] sm:$0xff]
        %v835 = vsel %vm824, %v705, %v834
        %836 = vst [vmem:[#allocation4 + $0x48] sm:$0xff] %v835
        %v837 = vld [vmem:[#allocation4 + $0x60] sm:$0xff]
        %v838 = vsel %vm824, %v712, %v837
        %839 = vst [vmem:[#allocation4 + $0x60] sm:$0xff] %v838
        %v840 = vld [vmem:[#allocation4 + $0x78] sm:$0xff]
        %v841 = vsel %vm824, %v719, %v840
        %842 = vst [vmem:[#allocation4 + $0x78] sm:$0xff] %v841
        %v843 = vld [vmem:[#allocation4 + $0x90] sm:$0xff]
        %v844 = vsel %vm824, %v726, %v843
        %845 = vst [vmem:[#allocation4 + $0x90] sm:$0xff] %v844
        %v846 = vld [vmem:[#allocation4 + $0xa8] sm:$0xff]
        %v847 = vsel %vm824, %v733, %v846
        %848 = vst [vmem:[#allocation4 + $0xa8] sm:$0xff] %v847
        %v849 = vld [vmem:[#allocation4 + $0xc0] sm:$0xff]
        %v850 = vsel %vm824, %v740, %v849
        %851 = vst [vmem:[#allocation4 + $0xc0] sm:$0xff] %v850
        %v852 = vld [vmem:[#allocation4 + $0xd8] sm:$0xff]
        %v853 = vsel %vm824, %v747, %v852
        %854 = vst [vmem:[#allocation4 + $0xd8] sm:$0xff] %v853
        %v855 = vld [vmem:[#allocation4 + $0xf0] sm:$0xff]
        %v856 = vsel %vm824, %v754, %v855
        %857 = vst [vmem:[#allocation4 + $0xf0] sm:$0xff] %v856
        %v858 = vld [vmem:[#allocation4 + $0x108] sm:$0xff]
        %v859 = vsel %vm824, %v761, %v858
        %860 = vst [vmem:[#allocation4 + $0x108] sm:$0xff] %v859
        %v861 = vld [vmem:[#allocation4 + $0x120] sm:$0xff]
        %v862 = vsel %vm824, %v768, %v861
        %863 = vst [vmem:[#allocation4 + $0x120] sm:$0xff] %v862
        %v864 = vld [vmem:[#allocation4 + $0x138] sm:$0xff]
        %v865 = vsel %vm824, %v775, %v864
        %866 = vst [vmem:[#allocation4 + $0x138] sm:$0xff] %v865
        %v867 = vld [vmem:[#allocation4 + $0x150] sm:$0xff]
        %v868 = vsel %vm824, %v782, %v867
        %869 = vst [vmem:[#allocation4 + $0x150] sm:$0xff] %v868
        %v870 = vld [vmem:[#allocation4 + $0x168] sm:$0xff]
        %v871 = vsel %vm824, %v789, %v870
        %872 = vst [vmem:[#allocation4 + $0x168] sm:$0xff] %v871
        %v873 = vld [vmem:[#allocation4 + $0x180] sm:$0xff]
        %v874 = vsel %vm824, %v796, %v873
        %875 = vst [vmem:[#allocation4 + $0x180] sm:$0xff] %v874
        %v876 = vld [vmem:[#allocation4 + $0x198] sm:$0xff]
        %v877 = vsel %vm824, %v803, %v876
        %878 = vst [vmem:[#allocation4 + $0x198] sm:$0xff] %v877
        %vm879 = vcmask 1040384
        %vm880 = vsmask.f32 256
        %vm881 = vmand %vm879, %vm880
        %v882 = vld [vmem:[#allocation4] sm:$0x1]
        %v883 = vsel %vm881, 0, %v882
        %884 = vst [vmem:[#allocation4] sm:$0x1] %v883
        %v885 = vld [vmem:[#allocation4 + $0x18] sm:$0x1]
        %v886 = vsel %vm881, 0, %v885
        %887 = vst [vmem:[#allocation4 + $0x18] sm:$0x1] %v886
        %v888 = vld [vmem:[#allocation4 + $0x30] sm:$0x1]
        %v889 = vsel %vm881, 0, %v888
        %890 = vst [vmem:[#allocation4 + $0x30] sm:$0x1] %v889
        %v891 = vld [vmem:[#allocation4 + $0x48] sm:$0x1]
        %v892 = vsel %vm881, 0, %v891
        %893 = vst [vmem:[#allocation4 + $0x48] sm:$0x1] %v892
        %v894 = vld [vmem:[#allocation4 + $0x60] sm:$0x1]
        %v895 = vsel %vm881, 0, %v894
        %896 = vst [vmem:[#allocation4 + $0x60] sm:$0x1] %v895
        %v897 = vld [vmem:[#allocation4 + $0x78] sm:$0x1]
        %v898 = vsel %vm881, 0, %v897
        %899 = vst [vmem:[#allocation4 + $0x78] sm:$0x1] %v898
        %v900 = vld [vmem:[#allocation4 + $0x90] sm:$0x1]
        %v901 = vsel %vm881, 0, %v900
        %902 = vst [vmem:[#allocation4 + $0x90] sm:$0x1] %v901
        %v903 = vld [vmem:[#allocation4 + $0xa8] sm:$0x1]
        %v904 = vsel %vm881, 0, %v903
        %905 = vst [vmem:[#allocation4 + $0xa8] sm:$0x1] %v904
        %v906 = vld [vmem:[#allocation4 + $0xc0] sm:$0x1]
        %v907 = vsel %vm881, 0, %v906
        %908 = vst [vmem:[#allocation4 + $0xc0] sm:$0x1] %v907
        %v909 = vld [vmem:[#allocation4 + $0xd8] sm:$0x1]
        %v910 = vsel %vm881, 0, %v909
        %911 = vst [vmem:[#allocation4 + $0xd8] sm:$0x1] %v910
        %v912 = vld [vmem:[#allocation4 + $0xf0] sm:$0x1]
        %v913 = vsel %vm881, 0, %v912
        %914 = vst [vmem:[#allocation4 + $0xf0] sm:$0x1] %v913
        %v915 = vld [vmem:[#allocation4 + $0x108] sm:$0x1]
        %v916 = vsel %vm881, 0, %v915
        %917 = vst [vmem:[#allocation4 + $0x108] sm:$0x1] %v916
        %v918 = vld [vmem:[#allocation4 + $0x120] sm:$0x1]
        %v919 = vsel %vm881, 0, %v918
        %920 = vst [vmem:[#allocation4 + $0x120] sm:$0x1] %v919
        %v921 = vld [vmem:[#allocation4 + $0x138] sm:$0x1]
        %v922 = vsel %vm881, 0, %v921
        %923 = vst [vmem:[#allocation4 + $0x138] sm:$0x1] %v922
        %v924 = vld [vmem:[#allocation4 + $0x150] sm:$0x1]
        %v925 = vsel %vm881, 0, %v924
        %926 = vst [vmem:[#allocation4 + $0x150] sm:$0x1] %v925
        %v927 = vld [vmem:[#allocation4 + $0x168] sm:$0x1]
        %v928 = vsel %vm881, 0, %v927
        %929 = vst [vmem:[#allocation4 + $0x168] sm:$0x1] %v928
        %v930 = vld [vmem:[#allocation4 + $0x180] sm:$0x1]
        %v931 = vsel %vm881, 0, %v930
        %932 = vst [vmem:[#allocation4 + $0x180] sm:$0x1] %v931
        %v933 = vld [vmem:[#allocation4 + $0x198] sm:$0x1]
        %v934 = vsel %vm881, 0, %v933
        %935 = vst [vmem:[#allocation4 + $0x198] sm:$0x1] %v934
        %936 = vst [vmem:[#allocation4 + $0x8] sm:$0xff] %v660
        %937 = vst [vmem:[#allocation4 + $0x20] sm:$0xff] %v661
        %938 = vst [vmem:[#allocation4 + $0x38] sm:$0xff] %v662
        %939 = vst [vmem:[#allocation4 + $0x50] sm:$0xff] %v663
        %940 = vst [vmem:[#allocation4 + $0x68] sm:$0xff] %v664
        %941 = vst [vmem:[#allocation4 + $0x80] sm:$0xff] %v665
        %942 = vst [vmem:[#allocation4 + $0x98] sm:$0xff] %v666
        %943 = vst [vmem:[#allocation4 + $0xb0] sm:$0xff] %v667
        %944 = vst [vmem:[#allocation4 + $0xc8] sm:$0xff] %v668
        %945 = vst [vmem:[#allocation4 + $0xe0] sm:$0xff] %v669
        %946 = vst [vmem:[#allocation4 + $0xf8] sm:$0xff] %v670
        %947 = vst [vmem:[#allocation4 + $0x110] sm:$0xff] %v671
        %948 = vst [vmem:[#allocation4 + $0x128] sm:$0xff] %v672
        %949 = vst [vmem:[#allocation4 + $0x140] sm:$0xff] %v673
        %950 = vst [vmem:[#allocation4 + $0x158] sm:$0xff] %v674
        %951 = vst [vmem:[#allocation4 + $0x170] sm:$0xff] %v675
        %952 = vst [vmem:[#allocation4 + $0x188] sm:$0xff] %v676
        %953 = vst [vmem:[#allocation4 + $0x1a0] sm:$0xff] %v677
        %v954 = vrot.slane %v682, 1
        %v955 = vor.u32 %v679, %v954
        %v956 = vrot.slane %v689, 1
        %v957 = vor.u32 %v686, %v956
        %v958 = vrot.slane %v696, 1
        %v959 = vor.u32 %v693, %v958
        %v960 = vrot.slane %v703, 1
        %v961 = vor.u32 %v700, %v960
        %v962 = vrot.slane %v710, 1
        %v963 = vor.u32 %v707, %v962
        %v964 = vrot.slane %v717, 1
        %v965 = vor.u32 %v714, %v964
        %v966 = vrot.slane %v724, 1
        %v967 = vor.u32 %v721, %v966
        %v968 = vrot.slane %v731, 1
        %v969 = vor.u32 %v728, %v968
        %v970 = vrot.slane %v738, 1
        %v971 = vor.u32 %v735, %v970
        %v972 = vrot.slane %v745, 1
        %v973 = vor.u32 %v742, %v972
        %v974 = vrot.slane %v752, 1
        %v975 = vor.u32 %v749, %v974
        %v976 = vrot.slane %v759, 1
        %v977 = vor.u32 %v756, %v976
        %v978 = vrot.slane %v766, 1
        %v979 = vor.u32 %v763, %v978
        %v980 = vrot.slane %v773, 1
        %v981 = vor.u32 %v770, %v980
        %v982 = vrot.slane %v780, 1
        %v983 = vor.u32 %v777, %v982
        %v984 = vrot.slane %v787, 1
        %v985 = vor.u32 %v784, %v984
        %v986 = vrot.slane %v794, 1
        %v987 = vor.u32 %v791, %v986
        %v988 = vrot.slane %v801, 1
        %v989 = vor.u32 %v798, %v988
        %vm1008 = vsmask.f32 7424
        %vm1009 = vmand %vm822, %vm1008
        %v1010 = vld [vmem:[#allocation4 + $0x10] sm:$0xff]
        %v1011 = vsel %vm1009, %v955, %v1010
        %1012 = vst [vmem:[#allocation4 + $0x10] sm:$0xff] %v1011
        %v1013 = vld [vmem:[#allocation4 + $0x28] sm:$0xff]
        %v1014 = vsel %vm1009, %v957, %v1013
        %1015 = vst [vmem:[#allocation4 + $0x28] sm:$0xff] %v1014
        %v1016 = vld [vmem:[#allocation4 + $0x40] sm:$0xff]
        %v1017 = vsel %vm1009, %v959, %v1016
        %1018 = vst [vmem:[#allocation4 + $0x40] sm:$0xff] %v1017
        %v1019 = vld [vmem:[#allocation4 + $0x58] sm:$0xff]
        %v1020 = vsel %vm1009, %v961, %v1019
        %1021 = vst [vmem:[#allocation4 + $0x58] sm:$0xff] %v1020
        %v1022 = vld [vmem:[#allocation4 + $0x70] sm:$0xff]
        %v1023 = vsel %vm1009, %v963, %v1022
        %1024 = vst [vmem:[#allocation4 + $0x70] sm:$0xff] %v1023
        %v1025 = vld [vmem:[#allocation4 + $0x88] sm:$0xff]
        %v1026 = vsel %vm1009, %v965, %v1025
        %1027 = vst [vmem:[#allocation4 + $0x88] sm:$0xff] %v1026
        %v1028 = vld [vmem:[#allocation4 + $0xa0] sm:$0xff]
        %v1029 = vsel %vm1009, %v967, %v1028
        %1030 = vst [vmem:[#allocation4 + $0xa0] sm:$0xff] %v1029
        %v1031 = vld [vmem:[#allocation4 + $0xb8] sm:$0xff]
        %v1032 = vsel %vm1009, %v969, %v1031
        %1033 = vst [vmem:[#allocation4 + $0xb8] sm:$0xff] %v1032
        %v1034 = vld [vmem:[#allocation4 + $0xd0] sm:$0xff]
        %v1035 = vsel %vm1009, %v971, %v1034
        %1036 = vst [vmem:[#allocation4 + $0xd0] sm:$0xff] %v1035
        %v1037 = vld [vmem:[#allocation4 + $0xe8] sm:$0xff]
        %v1038 = vsel %vm1009, %v973, %v1037
        %1039 = vst [vmem:[#allocation4 + $0xe8] sm:$0xff] %v1038
        %v1040 = vld [vmem:[#allocation4 + $0x100] sm:$0xff]
        %v1041 = vsel %vm1009, %v975, %v1040
        %1042 = vst [vmem:[#allocation4 + $0x100] sm:$0xff] %v1041
        %v1043 = vld [vmem:[#allocation4 + $0x118] sm:$0xff]
        %v1044 = vsel %vm1009, %v977, %v1043
        %1045 = vst [vmem:[#allocation4 + $0x118] sm:$0xff] %v1044
        %v1046 = vld [vmem:[#allocation4 + $0x130] sm:$0xff]
        %v1047 = vsel %vm1009, %v979, %v1046
        %1048 = vst [vmem:[#allocation4 + $0x130] sm:$0xff] %v1047
        %v1049 = vld [vmem:[#allocation4 + $0x148] sm:$0xff]
        %v1050 = vsel %vm1009, %v981, %v1049
        %1051 = vst [vmem:[#allocation4 + $0x148] sm:$0xff] %v1050
        %v1052 = vld [vmem:[#allocation4 + $0x160] sm:$0xff]
        %v1053 = vsel %vm1009, %v983, %v1052
        %1054 = vst [vmem:[#allocation4 + $0x160] sm:$0xff] %v1053
        %v1055 = vld [vmem:[#allocation4 + $0x178] sm:$0xff]
        %v1056 = vsel %vm1009, %v985, %v1055
        %1057 = vst [vmem:[#allocation4 + $0x178] sm:$0xff] %v1056
        %v1058 = vld [vmem:[#allocation4 + $0x190] sm:$0xff]
        %v1059 = vsel %vm1009, %v987, %v1058
        %1060 = vst [vmem:[#allocation4 + $0x190] sm:$0xff] %v1059
        %v1061 = vld [vmem:[#allocation4 + $0x1a8] sm:$0xff]
        %v1062 = vsel %vm1009, %v989, %v1061
        %1063 = vst [vmem:[#allocation4 + $0x1a8] sm:$0xff] %v1062
        %vm1064 = vcmask 1047559
        %vm1065 = vsmask.f32 7966
        %vm1066 = vmand %vm1064, %vm1065
        %v1067 = vld [vmem:[#allocation4 + $0x10] sm:$0x80]
        %v1068 = vsel %vm1066, 0, %v1067
        %1069 = vst [vmem:[#allocation4 + $0x10] sm:$0x80] %v1068
        %v1070 = vld [vmem:[#allocation4 + $0x28] sm:$0x80]
        %v1071 = vsel %vm1066, 0, %v1070
        %1072 = vst [vmem:[#allocation4 + $0x28] sm:$0x80] %v1071
        %v1073 = vld [vmem:[#allocation4 + $0x40] sm:$0x80]
        %v1074 = vsel %vm1066, 0, %v1073
        %1075 = vst [vmem:[#allocation4 + $0x40] sm:$0x80] %v1074
        %v1076 = vld [vmem:[#allocation4 + $0x58] sm:$0x80]
        %v1077 = vsel %vm1066, 0, %v1076
        %1078 = vst [vmem:[#allocation4 + $0x58] sm:$0x80] %v1077
        %v1079 = vld [vmem:[#allocation4 + $0x70] sm:$0x80]
        %v1080 = vsel %vm1066, 0, %v1079
        %1081 = vst [vmem:[#allocation4 + $0x70] sm:$0x80] %v1080
        %v1082 = vld [vmem:[#allocation4 + $0x88] sm:$0x80]
        %v1083 = vsel %vm1066, 0, %v1082
        %1084 = vst [vmem:[#allocation4 + $0x88] sm:$0x80] %v1083
        %v1085 = vld [vmem:[#allocation4 + $0xa0] sm:$0x80]
        %v1086 = vsel %vm1066, 0, %v1085
        %1087 = vst [vmem:[#allocation4 + $0xa0] sm:$0x80] %v1086
        %v1088 = vld [vmem:[#allocation4 + $0xb8] sm:$0x80]
        %v1089 = vsel %vm1066, 0, %v1088
        %1090 = vst [vmem:[#allocation4 + $0xb8] sm:$0x80] %v1089
        %v1091 = vld [vmem:[#allocation4 + $0xd0] sm:$0x80]
        %v1092 = vsel %vm1066, 0, %v1091
        %1093 = vst [vmem:[#allocation4 + $0xd0] sm:$0x80] %v1092
        %v1094 = vld [vmem:[#allocation4 + $0xe8] sm:$0x80]
        %v1095 = vsel %vm1066, 0, %v1094
        %1096 = vst [vmem:[#allocation4 + $0xe8] sm:$0x80] %v1095
        %v1097 = vld [vmem:[#allocation4 + $0x100] sm:$0x80]
        %v1098 = vsel %vm1066, 0, %v1097
        %1099 = vst [vmem:[#allocation4 + $0x100] sm:$0x80] %v1098
        %v1100 = vld [vmem:[#allocation4 + $0x118] sm:$0x80]
        %v1101 = vsel %vm1066, 0, %v1100
        %1102 = vst [vmem:[#allocation4 + $0x118] sm:$0x80] %v1101
        %v1103 = vld [vmem:[#allocation4 + $0x130] sm:$0x80]
        %v1104 = vsel %vm1066, 0, %v1103
        %1105 = vst [vmem:[#allocation4 + $0x130] sm:$0x80] %v1104
        %v1106 = vld [vmem:[#allocation4 + $0x148] sm:$0x80]
        %v1107 = vsel %vm1066, 0, %v1106
        %1108 = vst [vmem:[#allocation4 + $0x148] sm:$0x80] %v1107
        %v1109 = vld [vmem:[#allocation4 + $0x160] sm:$0x80]
        %v1110 = vsel %vm1066, 0, %v1109
        %1111 = vst [vmem:[#allocation4 + $0x160] sm:$0x80] %v1110
        %v1112 = vld [vmem:[#allocation4 + $0x178] sm:$0x80]
        %v1113 = vsel %vm1066, 0, %v1112
        %1114 = vst [vmem:[#allocation4 + $0x178] sm:$0x80] %v1113
        %v1115 = vld [vmem:[#allocation4 + $0x190] sm:$0x80]
        %v1116 = vsel %vm1066, 0, %v1115
        %1117 = vst [vmem:[#allocation4 + $0x190] sm:$0x80] %v1116
        %v1118 = vld [vmem:[#allocation4 + $0x1a8] sm:$0x80]
        %v1119 = vsel %vm1066, 0, %v1118
        %1120 = vst [vmem:[#allocation4 + $0x1a8] sm:$0x80] %v1119
        // Predicated region
        $region73: #{tpu_custom_call.1} parent=43 // pred_check
          %p1121 = pneg %p304
        $region74: #{tpu_custom_call.1} parent=43 // pred_check_branch
          %1123 = sbr.rel (%p1121) target = $region76
        $region75: #{tpu_custom_call.1} parent=43 // pred_region
          %1124 = vst [vmem:[#allocation4] sm:$0xff] 0
          %1125 = vst [vmem:[#allocation4 + $0x8] sm:$0xff] 0
          %1126 = vst [vmem:[#allocation4 + $0x10] sm:$0xff] 0
          %s1127 = scalar_lea.vmem [#allocation4], 408
          %1128 = vst [vmem:[%s1127] sm:$0xff] 0
          %1129 = vst [vmem:[%s1127 + $0x8] sm:$0xff] 0
          %1130 = vst [vmem:[%s1127 + $0x10] sm:$0xff] 0
        $region76: #{tpu_custom_call.1} parent=43 // pred_fallthru
          _
        %v1131 = vld [vmem:[#allocation4] sm:$0xff]
        %v1132 = vld [vmem:[#allocation4 + $0x8] sm:$0xff]
        %v1133 = vld [vmem:[#allocation4 + $0x10] sm:$0xff]
        %v1134 = vld [vmem:[#allocation4 + $0x18] sm:$0xff]
        %v1135 = vld [vmem:[#allocation4 + $0x20] sm:$0xff]
        %v1136 = vld [vmem:[#allocation4 + $0x28] sm:$0xff]
        %v1137 = vld [vmem:[#allocation4 + $0x30] sm:$0xff]
        %v1138 = vld [vmem:[#allocation4 + $0x38] sm:$0xff]
        %v1139 = vld [vmem:[#allocation4 + $0x40] sm:$0xff]
        %v1140 = vld [vmem:[#allocation4 + $0x48] sm:$0xff]
        %v1141 = vld [vmem:[#allocation4 + $0x50] sm:$0xff]
        %v1142 = vld [vmem:[#allocation4 + $0x58] sm:$0xff]
        %v1143 = vld [vmem:[#allocation4 + $0x60] sm:$0xff]
        %v1144 = vld [vmem:[#allocation4 + $0x68] sm:$0xff]
        %v1145 = vld [vmem:[#allocation4 + $0x70] sm:$0xff]
        %v1146 = vld [vmem:[#allocation4 + $0x78] sm:$0xff]
        %v1147 = vld [vmem:[#allocation4 + $0x80] sm:$0xff]
        %v1148 = vld [vmem:[#allocation4 + $0x88] sm:$0xff]
        %v1149 = vld [vmem:[#allocation4 + $0x90] sm:$0xff]
        %v1150 = vld [vmem:[#allocation4 + $0x98] sm:$0xff]
        %v1151 = vld [vmem:[#allocation4 + $0xa0] sm:$0xff]
        %v1152 = vld [vmem:[#allocation4 + $0xa8] sm:$0xff]
        %v1153 = vld [vmem:[#allocation4 + $0xb0] sm:$0xff]
        %v1154 = vld [vmem:[#allocation4 + $0xb8] sm:$0xff]
        %v1155 = vld [vmem:[#allocation4 + $0xc0] sm:$0xff]
        %v1156 = vld [vmem:[#allocation4 + $0xc8] sm:$0xff]
        %v1157 = vld [vmem:[#allocation4 + $0xd0] sm:$0xff]
        %v1158 = vld [vmem:[#allocation4 + $0xd8] sm:$0xff]
        %v1159 = vld [vmem:[#allocation4 + $0xe0] sm:$0xff]
        %v1160 = vld [vmem:[#allocation4 + $0xe8] sm:$0xff]
        %v1161 = vld [vmem:[#allocation4 + $0xf0] sm:$0xff]
        %v1162 = vld [vmem:[#allocation4 + $0xf8] sm:$0xff]
        %v1163 = vld [vmem:[#allocation4 + $0x100] sm:$0xff]
        %v1164 = vld [vmem:[#allocation4 + $0x108] sm:$0xff]
        %v1165 = vld [vmem:[#allocation4 + $0x110] sm:$0xff]
        %v1166 = vld [vmem:[#allocation4 + $0x118] sm:$0xff]
        %v1167 = vld [vmem:[#allocation4 + $0x120] sm:$0xff]
        %v1168 = vld [vmem:[#allocation4 + $0x128] sm:$0xff]
        %v1169 = vld [vmem:[#allocation4 + $0x130] sm:$0xff]
        %v1170 = vld [vmem:[#allocation4 + $0x138] sm:$0xff]
        %v1171 = vld [vmem:[#allocation4 + $0x140] sm:$0xff]
        %v1172 = vld [vmem:[#allocation4 + $0x148] sm:$0xff]
        %v1173 = vld [vmem:[#allocation4 + $0x150] sm:$0xff]
        %v1174 = vld [vmem:[#allocation4 + $0x158] sm:$0xff]
        %v1175 = vld [vmem:[#allocation4 + $0x160] sm:$0xff]
        %v1176 = vld [vmem:[#allocation4 + $0x168] sm:$0xff]
        %v1177 = vld [vmem:[#allocation4 + $0x170] sm:$0xff]
        %v1178 = vld [vmem:[#allocation4 + $0x178] sm:$0xff]
        %v1179 = vld [vmem:[#allocation7] sm:$0xf]
        %v1180 = vld [vmem:[#allocation7 + $0x4] sm:$0xf]
        %v1181 = vld [vmem:[#allocation7 + $0x8] sm:$0xf]
        %v1182 = vld [vmem:[#allocation7 + $0xc] sm:$0xf]
        %v1183 = vld [vmem:[#allocation7 + $0x10] sm:$0xf]
        %v1184 = vld [vmem:[#allocation7 + $0x14] sm:$0xf]
        %v1185 = vld [vmem:[#allocation7 + $0x18] sm:$0xf]
        %v1186 = vld [vmem:[#allocation7 + $0x1c] sm:$0xf]
        %v1187 = vld [vmem:[#allocation7 + $0x20] sm:$0xf]
        %v1188 = vld [vmem:[#allocation7 + $0x24] sm:$0xf]
        %v1189 = vld [vmem:[#allocation7 + $0x28] sm:$0xf]
        %v1190 = vld [vmem:[#allocation7 + $0x2c] sm:$0xf]
        %v1191 = vld [vmem:[#allocation7 + $0x30] sm:$0xf]
        %v1192 = vld [vmem:[#allocation7 + $0x34] sm:$0xf]
        %v1193 = vld [vmem:[#allocation7 + $0x38] sm:$0xf]
        %v1194 = vld [vmem:[#allocation7 + $0x3c] sm:$0xf]
        %v1195 = vld [vmem:[#allocation7 + $0x40] sm:$0xf]
        %v1196 = vld [vmem:[#allocation7 + $0x44] sm:$0xf]
        %v1197 = vld [vmem:[#allocation7 + $0x48] sm:$0xf]
        %v1198 = vld [vmem:[#allocation7 + $0x4c] sm:$0xf]
        %v1199 = vld [vmem:[#allocation7 + $0x50] sm:$0xf]
        %v1200 = vld [vmem:[#allocation7 + $0x54] sm:$0xf]
        %v1201 = vld [vmem:[#allocation7 + $0x58] sm:$0xf]
        %v1202 = vld [vmem:[#allocation7 + $0x5c] sm:$0xf]
        %v1203 = vld [vmem:[#allocation7 + $0x60] sm:$0xf]
        %v1204 = vld [vmem:[#allocation7 + $0x64] sm:$0xf]
        %v1205 = vld [vmem:[#allocation7 + $0x68] sm:$0xf]
        %v1206 = vld [vmem:[#allocation7 + $0x6c] sm:$0xf]
        %v1207 = vld [vmem:[#allocation7 + $0x70] sm:$0xf]
        %v1208 = vld [vmem:[#allocation7 + $0x74] sm:$0xf]
        %v1209 = vld [vmem:[#allocation7 + $0x78] sm:$0xf]
        %v1210 = vld [vmem:[#allocation7 + $0x7c] sm:$0xf]
        %v1211 = vld [vmem:[#allocation7 + $0x80] sm:$0xf]
        %v1212 = vld [vmem:[#allocation7 + $0x84] sm:$0xf]
        %v1213 = vld [vmem:[#allocation7 + $0x88] sm:$0xf]
        %v1214 = vld [vmem:[#allocation7 + $0x8c] sm:$0xf]
        %v1215 = vld [vmem:[#allocation7 + $0x90] sm:$0xf]
        %v1216 = vld [vmem:[#allocation7 + $0x94] sm:$0xf]
        %v1217 = vld [vmem:[#allocation7 + $0x98] sm:$0xf]
        %v1218 = vld [vmem:[#allocation7 + $0x9c] sm:$0xf]
        %v1219 = vld [vmem:[#allocation7 + $0xa0] sm:$0xf]
        %v1220 = vld [vmem:[#allocation7 + $0xa4] sm:$0xf]
        %v1221 = vld [vmem:[#allocation7 + $0xa8] sm:$0xf]
        %v1222 = vld [vmem:[#allocation7 + $0xac] sm:$0xf]
        %v1223 = vld [vmem:[#allocation7 + $0xb0] sm:$0xf]
        %v1224 = vld [vmem:[#allocation7 + $0xb4] sm:$0xf]
        %v1225 = vld [vmem:[#allocation7 + $0xb8] sm:$0xf]
        %v1226 = vld [vmem:[#allocation7 + $0xbc] sm:$0xf]
        %s1227 = scalar_lea.vmem [#allocation4], 24
        %v1228 = vld [vmem:[%s1227] sm:$0xff]
        %v1229 = vld [vmem:[%s1227 + $0x8] sm:$0xff]
        %v1230 = vld [vmem:[%s1227 + $0x10] sm:$0xff]
        %v1231 = vld [vmem:[%s1227 + $0x18] sm:$0xff]
        %v1232 = vld [vmem:[%s1227 + $0x20] sm:$0xff]
        %v1233 = vld [vmem:[%s1227 + $0x28] sm:$0xff]
        %v1234 = vld [vmem:[%s1227 + $0x30] sm:$0xff]
        %v1235 = vld [vmem:[%s1227 + $0x38] sm:$0xff]
        %v1236 = vld [vmem:[%s1227 + $0x40] sm:$0xff]
        %v1237 = vld [vmem:[%s1227 + $0x48] sm:$0xff]
        %v1238 = vld [vmem:[%s1227 + $0x50] sm:$0xff]
        %v1239 = vld [vmem:[%s1227 + $0x58] sm:$0xff]
        %v1240 = vld [vmem:[%s1227 + $0x60] sm:$0xff]
        %v1241 = vld [vmem:[%s1227 + $0x68] sm:$0xff]
        %v1242 = vld [vmem:[%s1227 + $0x70] sm:$0xff]
        %v1243 = vld [vmem:[%s1227 + $0x78] sm:$0xff]
        %v1244 = vld [vmem:[%s1227 + $0x80] sm:$0xff]
        %v1245 = vld [vmem:[%s1227 + $0x88] sm:$0xff]
        %v1246 = vld [vmem:[%s1227 + $0x90] sm:$0xff]
        %v1247 = vld [vmem:[%s1227 + $0x98] sm:$0xff]
        %v1248 = vld [vmem:[%s1227 + $0xa0] sm:$0xff]
        %v1249 = vld [vmem:[%s1227 + $0xa8] sm:$0xff]
        %v1250 = vld [vmem:[%s1227 + $0xb0] sm:$0xff]
        %v1251 = vld [vmem:[%s1227 + $0xb8] sm:$0xff]
        %v1252 = vld [vmem:[%s1227 + $0xc0] sm:$0xff]
        %v1253 = vld [vmem:[%s1227 + $0xc8] sm:$0xff]
        %v1254 = vld [vmem:[%s1227 + $0xd0] sm:$0xff]
        %v1255 = vld [vmem:[%s1227 + $0xd8] sm:$0xff]
        %v1256 = vld [vmem:[%s1227 + $0xe0] sm:$0xff]
        %v1257 = vld [vmem:[%s1227 + $0xe8] sm:$0xff]
        %v1258 = vld [vmem:[%s1227 + $0xf0] sm:$0xff]
        %v1259 = vld [vmem:[%s1227 + $0xf8] sm:$0xff]
        %v1260 = vld [vmem:[%s1227 + $0x100] sm:$0xff]
        %v1261 = vld [vmem:[%s1227 + $0x108] sm:$0xff]
        %v1262 = vld [vmem:[%s1227 + $0x110] sm:$0xff]
        %v1263 = vld [vmem:[%s1227 + $0x118] sm:$0xff]
        %v1264 = vld [vmem:[%s1227 + $0x120] sm:$0xff]
        %v1265 = vld [vmem:[%s1227 + $0x128] sm:$0xff]
        %v1266 = vld [vmem:[%s1227 + $0x130] sm:$0xff]
        %v1267 = vld [vmem:[%s1227 + $0x138] sm:$0xff]
        %v1268 = vld [vmem:[%s1227 + $0x140] sm:$0xff]
        %v1269 = vld [vmem:[%s1227 + $0x148] sm:$0xff]
        %v1270 = vld [vmem:[%s1227 + $0x150] sm:$0xff]
        %v1271 = vld [vmem:[%s1227 + $0x158] sm:$0xff]
        %v1272 = vld [vmem:[%s1227 + $0x160] sm:$0xff]
        %v1273 = vld [vmem:[%s1227 + $0x168] sm:$0xff]
        %v1274 = vld [vmem:[%s1227 + $0x170] sm:$0xff]
        %v1275 = vld [vmem:[%s1227 + $0x178] sm:$0xff]
        %s1276 = scalar_lea.vmem [#allocation7], 192
        %v1277 = vld [vmem:[%s1276] sm:$0xf]
        %v1278 = vld [vmem:[%s1276 + $0x4] sm:$0xf]
        %v1279 = vld [vmem:[%s1276 + $0x8] sm:$0xf]
        %v1280 = vld [vmem:[%s1276 + $0xc] sm:$0xf]
        %v1281 = vld [vmem:[%s1276 + $0x10] sm:$0xf]
        %v1282 = vld [vmem:[%s1276 + $0x14] sm:$0xf]
        %v1283 = vld [vmem:[%s1276 + $0x18] sm:$0xf]
        %v1284 = vld [vmem:[%s1276 + $0x1c] sm:$0xf]
        %v1285 = vld [vmem:[%s1276 + $0x20] sm:$0xf]
        %v1286 = vld [vmem:[%s1276 + $0x24] sm:$0xf]
        %v1287 = vld [vmem:[%s1276 + $0x28] sm:$0xf]
        %v1288 = vld [vmem:[%s1276 + $0x2c] sm:$0xf]
        %v1289 = vld [vmem:[%s1276 + $0x30] sm:$0xf]
        %v1290 = vld [vmem:[%s1276 + $0x34] sm:$0xf]
        %v1291 = vld [vmem:[%s1276 + $0x38] sm:$0xf]
        %v1292 = vld [vmem:[%s1276 + $0x3c] sm:$0xf]
        %v1293 = vld [vmem:[%s1276 + $0x40] sm:$0xf]
        %v1294 = vld [vmem:[%s1276 + $0x44] sm:$0xf]
        %v1295 = vld [vmem:[%s1276 + $0x48] sm:$0xf]
        %v1296 = vld [vmem:[%s1276 + $0x4c] sm:$0xf]
        %v1297 = vld [vmem:[%s1276 + $0x50] sm:$0xf]
        %v1298 = vld [vmem:[%s1276 + $0x54] sm:$0xf]
        %v1299 = vld [vmem:[%s1276 + $0x58] sm:$0xf]
        %v1300 = vld [vmem:[%s1276 + $0x5c] sm:$0xf]
        %v1301 = vld [vmem:[%s1276 + $0x60] sm:$0xf]
        %v1302 = vld [vmem:[%s1276 + $0x64] sm:$0xf]
        %v1303 = vld [vmem:[%s1276 + $0x68] sm:$0xf]
        %v1304 = vld [vmem:[%s1276 + $0x6c] sm:$0xf]
        %v1305 = vld [vmem:[%s1276 + $0x70] sm:$0xf]
        %v1306 = vld [vmem:[%s1276 + $0x74] sm:$0xf]
        %v1307 = vld [vmem:[%s1276 + $0x78] sm:$0xf]
        %v1308 = vld [vmem:[%s1276 + $0x7c] sm:$0xf]
        %v1309 = vld [vmem:[%s1276 + $0x80] sm:$0xf]
        %v1310 = vld [vmem:[%s1276 + $0x84] sm:$0xf]
        %v1311 = vld [vmem:[%s1276 + $0x88] sm:$0xf]
        %v1312 = vld [vmem:[%s1276 + $0x8c] sm:$0xf]
        %v1313 = vld [vmem:[%s1276 + $0x90] sm:$0xf]
        %v1314 = vld [vmem:[%s1276 + $0x94] sm:$0xf]
        %v1315 = vld [vmem:[%s1276 + $0x98] sm:$0xf]
        %v1316 = vld [vmem:[%s1276 + $0x9c] sm:$0xf]
        %v1317 = vld [vmem:[%s1276 + $0xa0] sm:$0xf]
        %v1318 = vld [vmem:[%s1276 + $0xa4] sm:$0xf]
        %v1319 = vld [vmem:[%s1276 + $0xa8] sm:$0xf]
        %v1320 = vld [vmem:[%s1276 + $0xac] sm:$0xf]
        %v1321 = vld [vmem:[%s1276 + $0xb0] sm:$0xf]
        %v1322 = vld [vmem:[%s1276 + $0xb4] sm:$0xf]
        %v1323 = vld [vmem:[%s1276 + $0xb8] sm:$0xf]
        %v1324 = vld [vmem:[%s1276 + $0xbc] sm:$0xf]
        %v1373 = vunpack.c.l.b16 %v1277
        %v1374 = vunpack.c.l.b16 %v1278
        %v1375 = vunpack.c.l.b16 %v1279
        %v1376 = vunpack.c.l.b16 %v1280
        %v1377 = vunpack.c.l.b16 %v1281
        %v1378 = vunpack.c.l.b16 %v1282
        %v1379 = vunpack.c.l.b16 %v1283
        %v1380 = vunpack.c.l.b16 %v1284
        %v1381 = vunpack.c.l.b16 %v1285
        %v1382 = vunpack.c.l.b16 %v1286
        %v1383 = vunpack.c.l.b16 %v1287
        %v1384 = vunpack.c.l.b16 %v1288
        %v1385 = vunpack.c.l.b16 %v1289
        %v1386 = vunpack.c.l.b16 %v1290
        %v1387 = vunpack.c.l.b16 %v1291
        %v1388 = vunpack.c.l.b16 %v1292
        %v1389 = vunpack.c.l.b16 %v1293
        %v1390 = vunpack.c.l.b16 %v1294
        %v1391 = vunpack.c.l.b16 %v1295
        %v1392 = vunpack.c.l.b16 %v1296
        %v1393 = vunpack.c.l.b16 %v1297
        %v1394 = vunpack.c.l.b16 %v1298
        %v1395 = vunpack.c.l.b16 %v1299
        %v1396 = vunpack.c.l.b16 %v1300
        %v1397 = vunpack.c.l.b16 %v1301
        %v1398 = vunpack.c.l.b16 %v1302
        %v1399 = vunpack.c.l.b16 %v1303
        %v1400 = vunpack.c.l.b16 %v1304
        %v1401 = vunpack.c.l.b16 %v1305
        %v1402 = vunpack.c.l.b16 %v1306
        %v1403 = vunpack.c.l.b16 %v1307
        %v1404 = vunpack.c.l.b16 %v1308
        %v1405 = vunpack.c.l.b16 %v1309
        %v1406 = vunpack.c.l.b16 %v1310
        %v1407 = vunpack.c.l.b16 %v1311
        %v1408 = vunpack.c.l.b16 %v1312
        %v1409 = vunpack.c.l.b16 %v1313
        %v1410 = vunpack.c.l.b16 %v1314
        %v1411 = vunpack.c.l.b16 %v1315
        %v1412 = vunpack.c.l.b16 %v1316
        %v1413 = vunpack.c.l.b16 %v1317
        %v1414 = vunpack.c.l.b16 %v1318
        %v1415 = vunpack.c.l.b16 %v1319
        %v1416 = vunpack.c.l.b16 %v1320
        %v1417 = vunpack.c.l.b16 %v1321
        %v1418 = vunpack.c.l.b16 %v1322
        %v1419 = vunpack.c.l.b16 %v1323
        %v1420 = vunpack.c.l.b16 %v1324
        %v1421 = vpack.c.b16 %v1374, %v1373
        %v1422 = vpack.c.b16 %v1376, %v1375
        %v1423 = vpack.c.b16 %v1378, %v1377
        %v1424 = vpack.c.b16 %v1380, %v1379
        %v1425 = vpack.c.b16 %v1382, %v1381
        %v1426 = vpack.c.b16 %v1384, %v1383
        %v1427 = vpack.c.b16 %v1386, %v1385
        %v1428 = vpack.c.b16 %v1388, %v1387
        %v1429 = vpack.c.b16 %v1390, %v1389
        %v1430 = vpack.c.b16 %v1392, %v1391
        %v1431 = vpack.c.b16 %v1394, %v1393
        %v1432 = vpack.c.b16 %v1396, %v1395
        %v1433 = vpack.c.b16 %v1398, %v1397
        %v1434 = vpack.c.b16 %v1400, %v1399
        %v1435 = vpack.c.b16 %v1402, %v1401
        %v1436 = vpack.c.b16 %v1404, %v1403
        %v1437 = vpack.c.b16 %v1406, %v1405
        %v1438 = vpack.c.b16 %v1408, %v1407
        %v1439 = vpack.c.b16 %v1410, %v1409
        %v1440 = vpack.c.b16 %v1412, %v1411
        %v1441 = vpack.c.b16 %v1414, %v1413
        %v1442 = vpack.c.b16 %v1416, %v1415
        %v1443 = vpack.c.b16 %v1418, %v1417
        %v1444 = vpack.c.b16 %v1420, %v1419
        %1469 = vmatprep.subr.bf16.mxu0 0
        %1470 = vmatpush1.bf16.msra.mxu0 %v1421
        %1471 = vmatprep.subr.bf16.mxu0 0
        %1472 = vmatpush1.bf16.msra.mxu0 %v1422
        %1473 = vmatprep.subr.bf16.mxu0 0
        %1474 = vmatpush1.bf16.msra.mxu0 %v1423
        %1475 = vmatprep.subr.bf16.mxu0 0
        %1476 = vmatpush1.bf16.msra.mxu0 %v1424
        %1477 = vmatprep.subr.bf16.mxu0 0
        %1478 = vmatpush1.bf16.msra.mxu0 %v1425
        %1479 = vmatprep.subr.bf16.mxu0 0
        %1480 = vmatpush1.bf16.msra.mxu0 %v1426
        %1481 = vmatprep.subr.bf16.mxu0 0
        %1482 = vmatpush1.bf16.msra.mxu0 %v1427
        %1483 = vmatprep.subr.bf16.mxu0 0
        %1484 = vmatpush1.bf16.msra.mxu0 %v1428
        %1485 = vmatprep.subr.bf16.mxu0 0
        %1486 = vmatpush1.bf16.msra.mxu0 %v1429
        %1487 = vmatprep.subr.bf16.mxu0 0
        %1488 = vmatpush1.bf16.msra.mxu0 %v1430
        %1489 = vmatprep.subr.bf16.mxu0 0
        %1490 = vmatpush1.bf16.msra.mxu0 %v1431
        %1491 = vmatprep.subr.bf16.mxu0 0
        %1492 = vmatpush1.bf16.msra.mxu0 %v1432
        %1493 = vmatprep.subr.bf16.mxu0 0
        %1494 = vmatpush1.bf16.msra.mxu0 %v1433
        %1495 = vmatprep.subr.bf16.mxu0 0
        %1496 = vmatpush1.bf16.msra.mxu0 %v1434
        %1497 = vmatprep.subr.bf16.mxu0 0
        %1498 = vmatpush1.bf16.msra.mxu0 %v1435
        %1499 = vmatprep.subr.bf16.mxu0 0
        %1500 = vmatpush1.bf16.msra.mxu0 %v1436
        %1501 = vmatprep.mubr.bf16.mxu0 %v1229
        %1502 = vmatmul.mubr.bf16.gmra.mrb[0].mxu0 %v1228
        %v1503 = vpop.f32.mrb[0].mxu0
        %v1504 = vadd.f32 0.0, %v1503
        %v1505 = vpop.f32.mrb[0].mxu0
        %v1506 = vpop.f32.mrb[0].mxu0
        %v1507 = vadd.f32 0.0, %v1506
        %v1508 = vpop.f32.mrb[0].mxu0
        %1509 = vmatprep.mubr.bf16.mxu0 %v1232
        %1510 = vmatmul.mubr.bf16.gmra.mrb[0].mxu0 %v1231
        %v1511 = vpop.f32.mrb[0].mxu0
        %v1512 = vadd.f32 0.0, %v1511
        %v1513 = vpop.f32.mrb[0].mxu0
        %v1514 = vpop.f32.mrb[0].mxu0
        %v1515 = vadd.f32 0.0, %v1514
        %v1516 = vpop.f32.mrb[0].mxu0
        %1517 = vmatprep.mubr.bf16.mxu0 %v1235
        %1518 = vmatmul.mubr.bf16.gmra.mrb[0].mxu0 %v1234
        %v1519 = vpop.f32.mrb[0].mxu0
        %v1520 = vadd.f32 0.0, %v1519
        %v1521 = vpop.f32.mrb[0].mxu0
        %v1522 = vpop.f32.mrb[0].mxu0
        %v1523 = vadd.f32 0.0, %v1522
        %v1524 = vpop.f32.mrb[0].mxu0
        %1525 = vmatprep.mubr.bf16.mxu0 %v1238
        %1526 = vmatmul.mubr.bf16.gmra.mrb[0].mxu0 %v1237
        %v1527 = vpop.f32.mrb[0].mxu0
        %v1528 = vadd.f32 0.0, %v1527
        %v1529 = vpop.f32.mrb[0].mxu0
        %v1530 = vpop.f32.mrb[0].mxu0
        %v1531 = vadd.f32 0.0, %v1530
        %v1532 = vpop.f32.mrb[0].mxu0
        %1533 = vmatprep.mubr.bf16.mxu0 %v1241
        %1534 = vmatmul.mubr.bf16.gmra.mrb[0].mxu0 %v1240
        %v1535 = vpop.f32.mrb[0].mxu0
        %v1536 = vadd.f32 0.0, %v1535
        %v1537 = vpop.f32.mrb[0].mxu0
        %v1538 = vpop.f32.mrb[0].mxu0
        %v1539 = vadd.f32 0.0, %v1538
        %v1540 = vpop.f32.mrb[0].mxu0
        %1541 = vmatprep.mubr.bf16.mxu0 %v1244
        %1542 = vmatmul.mubr.bf16.gmra.mrb[0].mxu0 %v1243
        %v1543 = vpop.f32.mrb[0].mxu0
        %v1544 = vadd.f32 0.0, %v1543
        %v1545 = vpop.f32.mrb[0].mxu0
        %v1546 = vpop.f32.mrb[0].mxu0
        %v1547 = vadd.f32 0.0, %v1546
        %v1548 = vpop.f32.mrb[0].mxu0
        %1549 = vmatprep.mubr.bf16.mxu0 %v1247
        %1550 = vmatmul.mubr.bf16.gmra.mrb[0].mxu0 %v1246
        %v1551 = vpop.f32.mrb[0].mxu0
        %v1552 = vadd.f32 0.0, %v1551
        %v1553 = vpop.f32.mrb[0].mxu0
        %v1554 = vpop.f32.mrb[0].mxu0
        %v1555 = vadd.f32 0.0, %v1554
        %v1556 = vpop.f32.mrb[0].mxu0
        %1557 = vmatprep.mubr.bf16.mxu0 %v1250
        %1558 = vmatmul.mubr.bf16.gmra.mrb[0].mxu0 %v1249
        %v1559 = vpop.f32.mrb[0].mxu0
        %v1560 = vadd.f32 0.0, %v1559
        %v1561 = vpop.f32.mrb[0].mxu0
        %v1562 = vpop.f32.mrb[0].mxu0
        %v1563 = vadd.f32 0.0, %v1562
        %v1564 = vpop.f32.mrb[0].mxu0
        %1565 = vmatprep.mubr.bf16.mxu0 %v1253
        %1566 = vmatmul.mubr.bf16.gmra.mrb[0].mxu0 %v1252
        %v1567 = vpop.f32.mrb[0].mxu0
        %v1568 = vadd.f32 0.0, %v1567
        %v1569 = vpop.f32.mrb[0].mxu0
        %v1570 = vpop.f32.mrb[0].mxu0
        %v1571 = vadd.f32 0.0, %v1570
        %v1572 = vpop.f32.mrb[0].mxu0
        %1573 = vmatprep.mubr.bf16.mxu0 %v1256
        %1574 = vmatmul.mubr.bf16.gmra.mrb[0].mxu0 %v1255
        %v1575 = vpop.f32.mrb[0].mxu0
        %v1576 = vadd.f32 0.0, %v1575
        %v1577 = vpop.f32.mrb[0].mxu0
        %v1578 = vpop.f32.mrb[0].mxu0
        %v1579 = vadd.f32 0.0, %v1578
        %v1580 = vpop.f32.mrb[0].mxu0
        %1581 = vmatprep.mubr.bf16.mxu0 %v1259
        %1582 = vmatmul.mubr.bf16.gmra.mrb[0].mxu0 %v1258
        %v1583 = vpop.f32.mrb[0].mxu0
        %v1584 = vadd.f32 0.0, %v1583
        %v1585 = vpop.f32.mrb[0].mxu0
        %v1586 = vpop.f32.mrb[0].mxu0
        %v1587 = vadd.f32 0.0, %v1586
        %v1588 = vpop.f32.mrb[0].mxu0
        %1589 = vmatprep.mubr.bf16.mxu0 %v1262
        %1590 = vmatmul.mubr.bf16.gmra.mrb[0].mxu0 %v1261
        %v1591 = vpop.f32.mrb[0].mxu0
        %v1592 = vadd.f32 0.0, %v1591
        %v1593 = vpop.f32.mrb[0].mxu0
        %v1594 = vpop.f32.mrb[0].mxu0
        %v1595 = vadd.f32 0.0, %v1594
        %v1596 = vpop.f32.mrb[0].mxu0
        %1597 = vmatprep.mubr.bf16.mxu0 %v1265
        %1598 = vmatmul.mubr.bf16.gmra.mrb[0].mxu0 %v1264
        %v1599 = vpop.f32.mrb[0].mxu0
        %v1600 = vadd.f32 0.0, %v1599
        %v1601 = vpop.f32.mrb[0].mxu0
        %v1602 = vpop.f32.mrb[0].mxu0
        %v1603 = vadd.f32 0.0, %v1602
        %v1604 = vpop.f32.mrb[0].mxu0
        %1605 = vmatprep.mubr.bf16.mxu0 %v1268
        %1606 = vmatmul.mubr.bf16.gmra.mrb[0].mxu0 %v1267
        %v1607 = vpop.f32.mrb[0].mxu0
        %v1608 = vadd.f32 0.0, %v1607
        %v1609 = vpop.f32.mrb[0].mxu0
        %v1610 = vpop.f32.mrb[0].mxu0
        %v1611 = vadd.f32 0.0, %v1610
        %v1612 = vpop.f32.mrb[0].mxu0
        %1613 = vmatprep.mubr.bf16.mxu0 %v1271
        %1614 = vmatmul.mubr.bf16.gmra.mrb[0].mxu0 %v1270
        %v1615 = vpop.f32.mrb[0].mxu0
        %v1616 = vadd.f32 0.0, %v1615
        %v1617 = vpop.f32.mrb[0].mxu0
        %v1618 = vpop.f32.mrb[0].mxu0
        %v1619 = vadd.f32 0.0, %v1618
        %v1620 = vpop.f32.mrb[0].mxu0
        %1621 = vmatprep.mubr.bf16.mxu0 %v1274
        %1622 = vmatmul.mubr.bf16.gmra.mrb[0].mxu0 %v1273
        %v1623 = vpop.f32.mrb[0].mxu0
        %v1624 = vadd.f32 0.0, %v1623
        %v1625 = vpop.f32.mrb[0].mxu0
        %v1626 = vpop.f32.mrb[0].mxu0
        %v1627 = vadd.f32 0.0, %v1626
        %v1628 = vpop.f32.mrb[0].mxu0
        %1629 = vdwg.mxu0
        %1630 = vmatprep.subr.bf16.mxu0 0
        %1631 = vmatpush1.bf16.msra.mxu0 %v1437
        %1632 = vmatprep.subr.bf16.mxu0 0
        %1633 = vmatpush1.bf16.msra.mxu0 %v1438
        %1634 = vmatprep.subr.bf16.mxu0 0
        %1635 = vmatpush1.bf16.msra.mxu0 %v1439
        %1636 = vmatprep.subr.bf16.mxu0 0
        %1637 = vmatpush1.bf16.msra.mxu0 %v1440
        %1638 = vmatprep.subr.bf16.mxu0 0
        %1639 = vmatpush1.bf16.msra.mxu0 %v1441
        %1640 = vmatprep.subr.bf16.mxu0 0
        %1641 = vmatpush1.bf16.msra.mxu0 %v1442
        %1642 = vmatprep.subr.bf16.mxu0 0
        %1643 = vmatpush1.bf16.msra.mxu0 %v1443
        %1644 = vmatprep.subr.bf16.mxu0 0
        %1645 = vmatpush1.bf16.msra.mxu0 %v1444
        %1646 = vmatprep.subr.bf16.mxu0 0
        %1647 = vmatpush1.bf16.msra.mxu0 0
        %1648 = vmatprep.subr.bf16.mxu0 0
        %1649 = vmatpush1.bf16.msra.mxu0 0
        %1650 = vmatprep.subr.bf16.mxu0 0
        %1651 = vmatpush1.bf16.msra.mxu0 0
        %1652 = vmatprep.subr.bf16.mxu0 0
        %1653 = vmatpush1.bf16.msra.mxu0 0
        %1654 = vmatprep.subr.bf16.mxu0 0
        %1655 = vmatpush1.bf16.msra.mxu0 0
        %1656 = vmatprep.subr.bf16.mxu0 0
        %1657 = vmatpush1.bf16.msra.mxu0 0
        %1658 = vmatprep.subr.bf16.mxu0 0
        %1659 = vmatpush1.bf16.msra.mxu0 0
        %1660 = vmatprep.subr.bf16.mxu0 0
        %1661 = vmatpush1.bf16.msra.mxu0 0
        %1662 = vmatprep.mubr.bf16.mxu0 0
        %1663 = vmatmul.mubr.bf16.gmra.mrb[0].mxu0 %v1230
        %v1664 = vpop.f32.mrb[0].mxu0
        %v1665 = vadd.f32 %v1504, %v1664
        %v1666 = vpop.f32.mrb[0].mxu0
        %v1667 = vpop.f32.mrb[0].mxu0
        %v1668 = vadd.f32 %v1507, %v1667
        %v1669 = vpop.f32.mrb[0].mxu0
        %1670 = vmatprep.mubr.bf16.mxu0 0
        %1671 = vmatmul.mubr.bf16.gmra.mrb[0].mxu0 %v1233
        %v1672 = vpop.f32.mrb[0].mxu0
        %v1673 = vadd.f32 %v1512, %v1672
        %v1674 = vpop.f32.mrb[0].mxu0
        %v1675 = vpop.f32.mrb[0].mxu0
        %v1676 = vadd.f32 %v1515, %v1675
        %v1677 = vpop.f32.mrb[0].mxu0
        %1678 = vmatprep.mubr.bf16.mxu0 0
        %1679 = vmatmul.mubr.bf16.gmra.mrb[0].mxu0 %v1236
        %v1680 = vpop.f32.mrb[0].mxu0
        %v1681 = vadd.f32 %v1520, %v1680
        %v1682 = vpop.f32.mrb[0].mxu0
        %v1683 = vpop.f32.mrb[0].mxu0
        %v1684 = vadd.f32 %v1523, %v1683
        %v1685 = vpop.f32.mrb[0].mxu0
        %1686 = vmatprep.mubr.bf16.mxu0 0
        %1687 = vmatmul.mubr.bf16.gmra.mrb[0].mxu0 %v1239
        %v1688 = vpop.f32.mrb[0].mxu0
        %v1689 = vadd.f32 %v1528, %v1688
        %v1690 = vpop.f32.mrb[0].mxu0
        %v1691 = vpop.f32.mrb[0].mxu0
        %v1692 = vadd.f32 %v1531, %v1691
        %v1693 = vpop.f32.mrb[0].mxu0
        %1694 = vmatprep.mubr.bf16.mxu0 0
        %1695 = vmatmul.mubr.bf16.gmra.mrb[0].mxu0 %v1242
        %v1696 = vpop.f32.mrb[0].mxu0
        %v1697 = vadd.f32 %v1536, %v1696
        %v1698 = vpop.f32.mrb[0].mxu0
        %v1699 = vpop.f32.mrb[0].mxu0
        %v1700 = vadd.f32 %v1539, %v1699
        %v1701 = vpop.f32.mrb[0].mxu0
        %1702 = vmatprep.mubr.bf16.mxu0 0
        %1703 = vmatmul.mubr.bf16.gmra.mrb[0].mxu0 %v1245
        %v1704 = vpop.f32.mrb[0].mxu0
        %v1705 = vadd.f32 %v1544, %v1704
        %v1706 = vpop.f32.mrb[0].mxu0
        %v1707 = vpop.f32.mrb[0].mxu0
        %v1708 = vadd.f32 %v1547, %v1707
        %v1709 = vpop.f32.mrb[0].mxu0
        %1710 = vmatprep.mubr.bf16.mxu0 0
        %1711 = vmatmul.mubr.bf16.gmra.mrb[0].mxu0 %v1248
        %v1712 = vpop.f32.mrb[0].mxu0
        %v1713 = vadd.f32 %v1552, %v1712
        %v1714 = vpop.f32.mrb[0].mxu0
        %v1715 = vpop.f32.mrb[0].mxu0
        %v1716 = vadd.f32 %v1555, %v1715
        %v1717 = vpop.f32.mrb[0].mxu0
        %1718 = vmatprep.mubr.bf16.mxu0 0
        %1719 = vmatmul.mubr.bf16.gmra.mrb[0].mxu0 %v1251
        %v1720 = vpop.f32.mrb[0].mxu0
        %v1721 = vadd.f32 %v1560, %v1720
        %v1722 = vpop.f32.mrb[0].mxu0
        %v1723 = vpop.f32.mrb[0].mxu0
        %v1724 = vadd.f32 %v1563, %v1723
        %v1725 = vpop.f32.mrb[0].mxu0
        %1726 = vmatprep.mubr.bf16.mxu0 0
        %1727 = vmatmul.mubr.bf16.gmra.mrb[0].mxu0 %v1254
        %v1728 = vpop.f32.mrb[0].mxu0
        %v1729 = vadd.f32 %v1568, %v1728
        %v1730 = vpop.f32.mrb[0].mxu0
        %v1731 = vpop.f32.mrb[0].mxu0
        %v1732 = vadd.f32 %v1571, %v1731
        %v1733 = vpop.f32.mrb[0].mxu0
        %1734 = vmatprep.mubr.bf16.mxu0 0
        %1735 = vmatmul.mubr.bf16.gmra.mrb[0].mxu0 %v1257
        %v1736 = vpop.f32.mrb[0].mxu0
        %v1737 = vadd.f32 %v1576, %v1736
        %v1738 = vpop.f32.mrb[0].mxu0
        %v1739 = vpop.f32.mrb[0].mxu0
        %v1740 = vadd.f32 %v1579, %v1739
        %v1741 = vpop.f32.mrb[0].mxu0
        %1742 = vmatprep.mubr.bf16.mxu0 0
        %1743 = vmatmul.mubr.bf16.gmra.mrb[0].mxu0 %v1260
        %v1744 = vpop.f32.mrb[0].mxu0
        %v1745 = vadd.f32 %v1584, %v1744
        %v1746 = vpop.f32.mrb[0].mxu0
        %v1747 = vpop.f32.mrb[0].mxu0
        %v1748 = vadd.f32 %v1587, %v1747
        %v1749 = vpop.f32.mrb[0].mxu0
        %1750 = vmatprep.mubr.bf16.mxu0 0
        %1751 = vmatmul.mubr.bf16.gmra.mrb[0].mxu0 %v1263
        %v1752 = vpop.f32.mrb[0].mxu0
        %v1753 = vadd.f32 %v1592, %v1752
        %v1754 = vpop.f32.mrb[0].mxu0
        %v1755 = vpop.f32.mrb[0].mxu0
        %v1756 = vadd.f32 %v1595, %v1755
        %v1757 = vpop.f32.mrb[0].mxu0
        %1758 = vmatprep.mubr.bf16.mxu0 0
        %1759 = vmatmul.mubr.bf16.gmra.mrb[0].mxu0 %v1266
        %v1760 = vpop.f32.mrb[0].mxu0
        %v1761 = vadd.f32 %v1600, %v1760
        %v1762 = vpop.f32.mrb[0].mxu0
        %v1763 = vpop.f32.mrb[0].mxu0
        %v1764 = vadd.f32 %v1603, %v1763
        %v1765 = vpop.f32.mrb[0].mxu0
        %1766 = vmatprep.mubr.bf16.mxu0 0
        %1767 = vmatmul.mubr.bf16.gmra.mrb[0].mxu0 %v1269
        %v1768 = vpop.f32.mrb[0].mxu0
        %v1769 = vadd.f32 %v1608, %v1768
        %v1770 = vpop.f32.mrb[0].mxu0
        %v1771 = vpop.f32.mrb[0].mxu0
        %v1772 = vadd.f32 %v1611, %v1771
        %v1773 = vpop.f32.mrb[0].mxu0
        %1774 = vmatprep.mubr.bf16.mxu0 0
        %1775 = vmatmul.mubr.bf16.gmra.mrb[0].mxu0 %v1272
        %v1776 = vpop.f32.mrb[0].mxu0
        %v1777 = vadd.f32 %v1616, %v1776
        %v1778 = vpop.f32.mrb[0].mxu0
        %v1779 = vpop.f32.mrb[0].mxu0
        %v1780 = vadd.f32 %v1619, %v1779
        %v1781 = vpop.f32.mrb[0].mxu0
        %1782 = vmatprep.mubr.bf16.mxu0 0
        %1783 = vmatmul.mubr.bf16.gmra.mrb[0].mxu0 %v1275
        %v1784 = vpop.f32.mrb[0].mxu0
        %v1785 = vadd.f32 %v1624, %v1784
        %v1786 = vpop.f32.mrb[0].mxu0
        %v1787 = vpop.f32.mrb[0].mxu0
        %v1788 = vadd.f32 %v1627, %v1787
        %v1789 = vpop.f32.mrb[0].mxu0
        %1790 = vdwg.mxu0
        %v1839 = vunpack.c.l.b16 %v1179
        %v1840 = vunpack.c.l.b16 %v1180
        %v1841 = vunpack.c.l.b16 %v1181
        %v1842 = vunpack.c.l.b16 %v1182
        %v1843 = vunpack.c.l.b16 %v1183
        %v1844 = vunpack.c.l.b16 %v1184
        %v1845 = vunpack.c.l.b16 %v1185
        %v1846 = vunpack.c.l.b16 %v1186
        %v1847 = vunpack.c.l.b16 %v1187
        %v1848 = vunpack.c.l.b16 %v1188
        %v1849 = vunpack.c.l.b16 %v1189
        %v1850 = vunpack.c.l.b16 %v1190
        %v1851 = vunpack.c.l.b16 %v1191
        %v1852 = vunpack.c.l.b16 %v1192
        %v1853 = vunpack.c.l.b16 %v1193
        %v1854 = vunpack.c.l.b16 %v1194
        %v1855 = vunpack.c.l.b16 %v1195
        %v1856 = vunpack.c.l.b16 %v1196
        %v1857 = vunpack.c.l.b16 %v1197
        %v1858 = vunpack.c.l.b16 %v1198
        %v1859 = vunpack.c.l.b16 %v1199
        %v1860 = vunpack.c.l.b16 %v1200
        %v1861 = vunpack.c.l.b16 %v1201
        %v1862 = vunpack.c.l.b16 %v1202
        %v1863 = vunpack.c.l.b16 %v1203
        %v1864 = vunpack.c.l.b16 %v1204
        %v1865 = vunpack.c.l.b16 %v1205
        %v1866 = vunpack.c.l.b16 %v1206
        %v1867 = vunpack.c.l.b16 %v1207
        %v1868 = vunpack.c.l.b16 %v1208
        %v1869 = vunpack.c.l.b16 %v1209
        %v1870 = vunpack.c.l.b16 %v1210
        %v1871 = vunpack.c.l.b16 %v1211
        %v1872 = vunpack.c.l.b16 %v1212
        %v1873 = vunpack.c.l.b16 %v1213
        %v1874 = vunpack.c.l.b16 %v1214
        %v1875 = vunpack.c.l.b16 %v1215
        %v1876 = vunpack.c.l.b16 %v1216
        %v1877 = vunpack.c.l.b16 %v1217
        %v1878 = vunpack.c.l.b16 %v1218
        %v1879 = vunpack.c.l.b16 %v1219
        %v1880 = vunpack.c.l.b16 %v1220
        %v1881 = vunpack.c.l.b16 %v1221
        %v1882 = vunpack.c.l.b16 %v1222
        %v1883 = vunpack.c.l.b16 %v1223
        %v1884 = vunpack.c.l.b16 %v1224
        %v1885 = vunpack.c.l.b16 %v1225
        %v1886 = vunpack.c.l.b16 %v1226
        %v1887 = vpack.c.b16 %v1840, %v1839
        %v1888 = vpack.c.b16 %v1842, %v1841
        %v1889 = vpack.c.b16 %v1844, %v1843
        %v1890 = vpack.c.b16 %v1846, %v1845
        %v1891 = vpack.c.b16 %v1848, %v1847
        %v1892 = vpack.c.b16 %v1850, %v1849
        %v1893 = vpack.c.b16 %v1852, %v1851
        %v1894 = vpack.c.b16 %v1854, %v1853
        %v1895 = vpack.c.b16 %v1856, %v1855
        %v1896 = vpack.c.b16 %v1858, %v1857
        %v1897 = vpack.c.b16 %v1860, %v1859
        %v1898 = vpack.c.b16 %v1862, %v1861
        %v1899 = vpack.c.b16 %v1864, %v1863
        %v1900 = vpack.c.b16 %v1866, %v1865
        %v1901 = vpack.c.b16 %v1868, %v1867
        %v1902 = vpack.c.b16 %v1870, %v1869
        %v1903 = vpack.c.b16 %v1872, %v1871
        %v1904 = vpack.c.b16 %v1874, %v1873
        %v1905 = vpack.c.b16 %v1876, %v1875
        %v1906 = vpack.c.b16 %v1878, %v1877
        %v1907 = vpack.c.b16 %v1880, %v1879
        %v1908 = vpack.c.b16 %v1882, %v1881
        %v1909 = vpack.c.b16 %v1884, %v1883
        %v1910 = vpack.c.b16 %v1886, %v1885
        %1935 = vmatprep.subr.bf16.mxu0 0
        %1936 = vmatpush1.bf16.msra.mxu0 %v1887
        %1937 = vmatprep.subr.bf16.mxu0 0
        %1938 = vmatpush1.bf16.msra.mxu0 %v1888
        %1939 = vmatprep.subr.bf16.mxu0 0
        %1940 = vmatpush1.bf16.msra.mxu0 %v1889
        %1941 = vmatprep.subr.bf16.mxu0 0
        %1942 = vmatpush1.bf16.msra.mxu0 %v1890
        %1943 = vmatprep.subr.bf16.mxu0 0
        %1944 = vmatpush1.bf16.msra.mxu0 %v1891
        %1945 = vmatprep.subr.bf16.mxu0 0
        %1946 = vmatpush1.bf16.msra.mxu0 %v1892
        %1947 = vmatprep.subr.bf16.mxu0 0
        %1948 = vmatpush1.bf16.msra.mxu0 %v1893
        %1949 = vmatprep.subr.bf16.mxu0 0
        %1950 = vmatpush1.bf16.msra.mxu0 %v1894
        %1951 = vmatprep.subr.bf16.mxu0 0
        %1952 = vmatpush1.bf16.msra.mxu0 %v1895
        %1953 = vmatprep.subr.bf16.mxu0 0
        %1954 = vmatpush1.bf16.msra.mxu0 %v1896
        %1955 = vmatprep.subr.bf16.mxu0 0
        %1956 = vmatpush1.bf16.msra.mxu0 %v1897
        %1957 = vmatprep.subr.bf16.mxu0 0
        %1958 = vmatpush1.bf16.msra.mxu0 %v1898
        %1959 = vmatprep.subr.bf16.mxu0 0
        %1960 = vmatpush1.bf16.msra.mxu0 %v1899
        %1961 = vmatprep.subr.bf16.mxu0 0
        %1962 = vmatpush1.bf16.msra.mxu0 %v1900
        %1963 = vmatprep.subr.bf16.mxu0 0
        %1964 = vmatpush1.bf16.msra.mxu0 %v1901
        %1965 = vmatprep.subr.bf16.mxu0 0
        %1966 = vmatpush1.bf16.msra.mxu0 %v1902
        %1967 = vmatprep.mubr.bf16.mxu0 %v1132
        %1968 = vmatmul.mubr.bf16.gmra.mrb[0].mxu0 %v1131
        %v1969 = vpop.f32.mrb[0].mxu0
        %v1970 = vadd.f32 %v1665, %v1969
        %v1971 = vpop.f32.mrb[0].mxu0
        %v1972 = vpop.f32.mrb[0].mxu0
        %v1973 = vadd.f32 %v1668, %v1972
        %v1974 = vpop.f32.mrb[0].mxu0
        %1975 = vmatprep.mubr.bf16.mxu0 %v1135
        %1976 = vmatmul.mubr.bf16.gmra.mrb[0].mxu0 %v1134
        %v1977 = vpop.f32.mrb[0].mxu0
        %v1978 = vadd.f32 %v1673, %v1977
        %v1979 = vpop.f32.mrb[0].mxu0
        %v1980 = vpop.f32.mrb[0].mxu0
        %v1981 = vadd.f32 %v1676, %v1980
        %v1982 = vpop.f32.mrb[0].mxu0
        %1983 = vmatprep.mubr.bf16.mxu0 %v1138
        %1984 = vmatmul.mubr.bf16.gmra.mrb[0].mxu0 %v1137
        %v1985 = vpop.f32.mrb[0].mxu0
        %v1986 = vadd.f32 %v1681, %v1985
        %v1987 = vpop.f32.mrb[0].mxu0
        %v1988 = vpop.f32.mrb[0].mxu0
        %v1989 = vadd.f32 %v1684, %v1988
        %v1990 = vpop.f32.mrb[0].mxu0
        %1991 = vmatprep.mubr.bf16.mxu0 %v1141
        %1992 = vmatmul.mubr.bf16.gmra.mrb[0].mxu0 %v1140
        %v1993 = vpop.f32.mrb[0].mxu0
        %v1994 = vadd.f32 %v1689, %v1993
        %v1995 = vpop.f32.mrb[0].mxu0
        %v1996 = vpop.f32.mrb[0].mxu0
        %v1997 = vadd.f32 %v1692, %v1996
        %v1998 = vpop.f32.mrb[0].mxu0
        %1999 = vmatprep.mubr.bf16.mxu0 %v1144
        %2000 = vmatmul.mubr.bf16.gmra.mrb[0].mxu0 %v1143
        %v2001 = vpop.f32.mrb[0].mxu0
        %v2002 = vadd.f32 %v1697, %v2001
        %v2003 = vpop.f32.mrb[0].mxu0
        %v2004 = vpop.f32.mrb[0].mxu0
        %v2005 = vadd.f32 %v1700, %v2004
        %v2006 = vpop.f32.mrb[0].mxu0
        %2007 = vmatprep.mubr.bf16.mxu0 %v1147
        %2008 = vmatmul.mubr.bf16.gmra.mrb[0].mxu0 %v1146
        %v2009 = vpop.f32.mrb[0].mxu0
        %v2010 = vadd.f32 %v1705, %v2009
        %v2011 = vpop.f32.mrb[0].mxu0
        %v2012 = vpop.f32.mrb[0].mxu0
        %v2013 = vadd.f32 %v1708, %v2012
        %v2014 = vpop.f32.mrb[0].mxu0
        %2015 = vmatprep.mubr.bf16.mxu0 %v1150
        %2016 = vmatmul.mubr.bf16.gmra.mrb[0].mxu0 %v1149
        %v2017 = vpop.f32.mrb[0].mxu0
        %v2018 = vadd.f32 %v1713, %v2017
        %v2019 = vpop.f32.mrb[0].mxu0
        %v2020 = vpop.f32.mrb[0].mxu0
        %v2021 = vadd.f32 %v1716, %v2020
        %v2022 = vpop.f32.mrb[0].mxu0
        %2023 = vmatprep.mubr.bf16.mxu0 %v1153
        %2024 = vmatmul.mubr.bf16.gmra.mrb[0].mxu0 %v1152
        %v2025 = vpop.f32.mrb[0].mxu0
        %v2026 = vadd.f32 %v1721, %v2025
        %v2027 = vpop.f32.mrb[0].mxu0
        %v2028 = vpop.f32.mrb[0].mxu0
        %v2029 = vadd.f32 %v1724, %v2028
        %v2030 = vpop.f32.mrb[0].mxu0
        %2031 = vmatprep.mubr.bf16.mxu0 %v1156
        %2032 = vmatmul.mubr.bf16.gmra.mrb[0].mxu0 %v1155
        %v2033 = vpop.f32.mrb[0].mxu0
        %v2034 = vadd.f32 %v1729, %v2033
        %v2035 = vpop.f32.mrb[0].mxu0
        %v2036 = vpop.f32.mrb[0].mxu0
        %v2037 = vadd.f32 %v1732, %v2036
        %v2038 = vpop.f32.mrb[0].mxu0
        %2039 = vmatprep.mubr.bf16.mxu0 %v1159
        %2040 = vmatmul.mubr.bf16.gmra.mrb[0].mxu0 %v1158
        %v2041 = vpop.f32.mrb[0].mxu0
        %v2042 = vadd.f32 %v1737, %v2041
        %v2043 = vpop.f32.mrb[0].mxu0
        %v2044 = vpop.f32.mrb[0].mxu0
        %v2045 = vadd.f32 %v1740, %v2044
        %v2046 = vpop.f32.mrb[0].mxu0
        %2047 = vmatprep.mubr.bf16.mxu0 %v1162
        %2048 = vmatmul.mubr.bf16.gmra.mrb[0].mxu0 %v1161
        %v2049 = vpop.f32.mrb[0].mxu0
        %v2050 = vadd.f32 %v1745, %v2049
        %v2051 = vpop.f32.mrb[0].mxu0
        %v2052 = vpop.f32.mrb[0].mxu0
        %v2053 = vadd.f32 %v1748, %v2052
        %v2054 = vpop.f32.mrb[0].mxu0
        %2055 = vmatprep.mubr.bf16.mxu0 %v1165
        %2056 = vmatmul.mubr.bf16.gmra.mrb[0].mxu0 %v1164
        %v2057 = vpop.f32.mrb[0].mxu0
        %v2058 = vadd.f32 %v1753, %v2057
        %v2059 = vpop.f32.mrb[0].mxu0
        %v2060 = vpop.f32.mrb[0].mxu0
        %v2061 = vadd.f32 %v1756, %v2060
        %v2062 = vpop.f32.mrb[0].mxu0
        %2063 = vmatprep.mubr.bf16.mxu0 %v1168
        %2064 = vmatmul.mubr.bf16.gmra.mrb[0].mxu0 %v1167
        %v2065 = vpop.f32.mrb[0].mxu0
        %v2066 = vadd.f32 %v1761, %v2065
        %v2067 = vpop.f32.mrb[0].mxu0
        %v2068 = vpop.f32.mrb[0].mxu0
        %v2069 = vadd.f32 %v1764, %v2068
        %v2070 = vpop.f32.mrb[0].mxu0
        %2071 = vmatprep.mubr.bf16.mxu0 %v1171
        %2072 = vmatmul.mubr.bf16.gmra.mrb[0].mxu0 %v1170
        %v2073 = vpop.f32.mrb[0].mxu0
        %v2074 = vadd.f32 %v1769, %v2073
        %v2075 = vpop.f32.mrb[0].mxu0
        %v2076 = vpop.f32.mrb[0].mxu0
        %v2077 = vadd.f32 %v1772, %v2076
        %v2078 = vpop.f32.mrb[0].mxu0
        %2079 = vmatprep.mubr.bf16.mxu0 %v1174
        %2080 = vmatmul.mubr.bf16.gmra.mrb[0].mxu0 %v1173
        %v2081 = vpop.f32.mrb[0].mxu0
        %v2082 = vadd.f32 %v1777, %v2081
        %v2083 = vpop.f32.mrb[0].mxu0
        %v2084 = vpop.f32.mrb[0].mxu0
        %v2085 = vadd.f32 %v1780, %v2084
        %v2086 = vpop.f32.mrb[0].mxu0
        %2087 = vmatprep.mubr.bf16.mxu0 %v1177
        %2088 = vmatmul.mubr.bf16.gmra.mrb[0].mxu0 %v1176
        %v2089 = vpop.f32.mrb[0].mxu0
        %v2090 = vadd.f32 %v1785, %v2089
        %v2091 = vpop.f32.mrb[0].mxu0
        %v2092 = vpop.f32.mrb[0].mxu0
        %v2093 = vadd.f32 %v1788, %v2092
        %v2094 = vpop.f32.mrb[0].mxu0
        %2095 = vdwg.mxu0
        %2096 = vmatprep.subr.bf16.mxu0 0
        %2097 = vmatpush1.bf16.msra.mxu0 %v1903
        %2098 = vmatprep.subr.bf16.mxu0 0
        %2099 = vmatpush1.bf16.msra.mxu0 %v1904
        %2100 = vmatprep.subr.bf16.mxu0 0
        %2101 = vmatpush1.bf16.msra.mxu0 %v1905
        %2102 = vmatprep.subr.bf16.mxu0 0
        %2103 = vmatpush1.bf16.msra.mxu0 %v1906
        %2104 = vmatprep.subr.bf16.mxu0 0
        %2105 = vmatpush1.bf16.msra.mxu0 %v1907
        %2106 = vmatprep.subr.bf16.mxu0 0
        %2107 = vmatpush1.bf16.msra.mxu0 %v1908
        %2108 = vmatprep.subr.bf16.mxu0 0
        %2109 = vmatpush1.bf16.msra.mxu0 %v1909
        %2110 = vmatprep.subr.bf16.mxu0 0
        %2111 = vmatpush1.bf16.msra.mxu0 %v1910
        %2112 = vmatprep.subr.bf16.mxu0 0
        %2113 = vmatpush1.bf16.msra.mxu0 0
        %2114 = vmatprep.subr.bf16.mxu0 0
        %2115 = vmatpush1.bf16.msra.mxu0 0
        %2116 = vmatprep.subr.bf16.mxu0 0
        %2117 = vmatpush1.bf16.msra.mxu0 0
        %2118 = vmatprep.subr.bf16.mxu0 0
        %2119 = vmatpush1.bf16.msra.mxu0 0
        %2120 = vmatprep.subr.bf16.mxu0 0
        %2121 = vmatpush1.bf16.msra.mxu0 0
        %2122 = vmatprep.subr.bf16.mxu0 0
        %2123 = vmatpush1.bf16.msra.mxu0 0
        %2124 = vmatprep.subr.bf16.mxu0 0
        %2125 = vmatpush1.bf16.msra.mxu0 0
        %2126 = vmatprep.subr.bf16.mxu0 0
        %2127 = vmatpush1.bf16.msra.mxu0 0
        %2128 = vmatprep.mubr.bf16.mxu0 0
        %2129 = vmatmul.mubr.bf16.gmra.mrb[0].mxu0 %v1133
        %v2130 = vpop.f32.mrb[0].mxu0
        %v2131 = vadd.f32 %v1970, %v2130
        %v2132 = vpop.f32.mrb[0].mxu0
        %v2133 = vpop.f32.mrb[0].mxu0
        %v2134 = vadd.f32 %v1973, %v2133
        %v2135 = vpop.f32.mrb[0].mxu0
        %2136 = vmatprep.mubr.bf16.mxu0 0
        %2137 = vmatmul.mubr.bf16.gmra.mrb[0].mxu0 %v1136
        %v2138 = vpop.f32.mrb[0].mxu0
        %v2139 = vadd.f32 %v1978, %v2138
        %v2140 = vpop.f32.mrb[0].mxu0
        %v2141 = vpop.f32.mrb[0].mxu0
        %v2142 = vadd.f32 %v1981, %v2141
        %v2143 = vpop.f32.mrb[0].mxu0
        %2144 = vmatprep.mubr.bf16.mxu0 0
        %2145 = vmatmul.mubr.bf16.gmra.mrb[0].mxu0 %v1139
        %v2146 = vpop.f32.mrb[0].mxu0
        %v2147 = vadd.f32 %v1986, %v2146
        %v2148 = vpop.f32.mrb[0].mxu0
        %v2149 = vpop.f32.mrb[0].mxu0
        %v2150 = vadd.f32 %v1989, %v2149
        %v2151 = vpop.f32.mrb[0].mxu0
        %2152 = vmatprep.mubr.bf16.mxu0 0
        %2153 = vmatmul.mubr.bf16.gmra.mrb[0].mxu0 %v1142
        %v2154 = vpop.f32.mrb[0].mxu0
        %v2155 = vadd.f32 %v1994, %v2154
        %v2156 = vpop.f32.mrb[0].mxu0
        %v2157 = vpop.f32.mrb[0].mxu0
        %v2158 = vadd.f32 %v1997, %v2157
        %v2159 = vpop.f32.mrb[0].mxu0
        %2160 = vmatprep.mubr.bf16.mxu0 0
        %2161 = vmatmul.mubr.bf16.gmra.mrb[0].mxu0 %v1145
        %v2162 = vpop.f32.mrb[0].mxu0
        %v2163 = vadd.f32 %v2002, %v2162
        %v2164 = vpop.f32.mrb[0].mxu0
        %v2165 = vpop.f32.mrb[0].mxu0
        %v2166 = vadd.f32 %v2005, %v2165
        %v2167 = vpop.f32.mrb[0].mxu0
        %2168 = vmatprep.mubr.bf16.mxu0 0
        %2169 = vmatmul.mubr.bf16.gmra.mrb[0].mxu0 %v1148
        %v2170 = vpop.f32.mrb[0].mxu0
        %v2171 = vadd.f32 %v2010, %v2170
        %v2172 = vpop.f32.mrb[0].mxu0
        %v2173 = vpop.f32.mrb[0].mxu0
        %v2174 = vadd.f32 %v2013, %v2173
        %v2175 = vpop.f32.mrb[0].mxu0
        %2176 = vmatprep.mubr.bf16.mxu0 0
        %2177 = vmatmul.mubr.bf16.gmra.mrb[0].mxu0 %v1151
        %v2178 = vpop.f32.mrb[0].mxu0
        %v2179 = vadd.f32 %v2018, %v2178
        %v2180 = vpop.f32.mrb[0].mxu0
        %v2181 = vpop.f32.mrb[0].mxu0
        %v2182 = vadd.f32 %v2021, %v2181
        %v2183 = vpop.f32.mrb[0].mxu0
        %2184 = vmatprep.mubr.bf16.mxu0 0
        %2185 = vmatmul.mubr.bf16.gmra.mrb[0].mxu0 %v1154
        %v2186 = vpop.f32.mrb[0].mxu0
        %v2187 = vadd.f32 %v2026, %v2186
        %v2188 = vpop.f32.mrb[0].mxu0
        %v2189 = vpop.f32.mrb[0].mxu0
        %v2190 = vadd.f32 %v2029, %v2189
        %v2191 = vpop.f32.mrb[0].mxu0
        %2192 = vmatprep.mubr.bf16.mxu0 0
        %2193 = vmatmul.mubr.bf16.gmra.mrb[0].mxu0 %v1157
        %v2194 = vpop.f32.mrb[0].mxu0
        %v2195 = vadd.f32 %v2034, %v2194
        %v2196 = vpop.f32.mrb[0].mxu0
        %v2197 = vpop.f32.mrb[0].mxu0
        %v2198 = vadd.f32 %v2037, %v2197
        %v2199 = vpop.f32.mrb[0].mxu0
        %2200 = vmatprep.mubr.bf16.mxu0 0
        %2201 = vmatmul.mubr.bf16.gmra.mrb[0].mxu0 %v1160
        %v2202 = vpop.f32.mrb[0].mxu0
        %v2203 = vadd.f32 %v2042, %v2202
        %v2204 = vpop.f32.mrb[0].mxu0
        %v2205 = vpop.f32.mrb[0].mxu0
        %v2206 = vadd.f32 %v2045, %v2205
        %v2207 = vpop.f32.mrb[0].mxu0
        %2208 = vmatprep.mubr.bf16.mxu0 0
        %2209 = vmatmul.mubr.bf16.gmra.mrb[0].mxu0 %v1163
        %v2210 = vpop.f32.mrb[0].mxu0
        %v2211 = vadd.f32 %v2050, %v2210
        %v2212 = vpop.f32.mrb[0].mxu0
        %v2213 = vpop.f32.mrb[0].mxu0
        %v2214 = vadd.f32 %v2053, %v2213
        %v2215 = vpop.f32.mrb[0].mxu0
        %2216 = vmatprep.mubr.bf16.mxu0 0
        %2217 = vmatmul.mubr.bf16.gmra.mrb[0].mxu0 %v1166
        %v2218 = vpop.f32.mrb[0].mxu0
        %v2219 = vadd.f32 %v2058, %v2218
        %v2220 = vpop.f32.mrb[0].mxu0
        %v2221 = vpop.f32.mrb[0].mxu0
        %v2222 = vadd.f32 %v2061, %v2221
        %v2223 = vpop.f32.mrb[0].mxu0
        %2224 = vmatprep.mubr.bf16.mxu0 0
        %2225 = vmatmul.mubr.bf16.gmra.mrb[0].mxu0 %v1169
        %v2226 = vpop.f32.mrb[0].mxu0
        %v2227 = vadd.f32 %v2066, %v2226
        %v2228 = vpop.f32.mrb[0].mxu0
        %v2229 = vpop.f32.mrb[0].mxu0
        %v2230 = vadd.f32 %v2069, %v2229
        %v2231 = vpop.f32.mrb[0].mxu0
        %2232 = vmatprep.mubr.bf16.mxu0 0
        %2233 = vmatmul.mubr.bf16.gmra.mrb[0].mxu0 %v1172
        %v2234 = vpop.f32.mrb[0].mxu0
        %v2235 = vadd.f32 %v2074, %v2234
        %v2236 = vpop.f32.mrb[0].mxu0
        %v2237 = vpop.f32.mrb[0].mxu0
        %v2238 = vadd.f32 %v2077, %v2237
        %v2239 = vpop.f32.mrb[0].mxu0
        %2240 = vmatprep.mubr.bf16.mxu0 0
        %2241 = vmatmul.mubr.bf16.gmra.mrb[0].mxu0 %v1175
        %v2242 = vpop.f32.mrb[0].mxu0
        %v2243 = vadd.f32 %v2082, %v2242
        %v2244 = vpop.f32.mrb[0].mxu0
        %v2245 = vpop.f32.mrb[0].mxu0
        %v2246 = vadd.f32 %v2085, %v2245
        %v2247 = vpop.f32.mrb[0].mxu0
        %2248 = vmatprep.mubr.bf16.mxu0 0
        %2249 = vmatmul.mubr.bf16.gmra.mrb[0].mxu0 %v1178
        %v2250 = vpop.f32.mrb[0].mxu0
        %v2251 = vadd.f32 %v2090, %v2250
        %v2252 = vpop.f32.mrb[0].mxu0
        %v2253 = vpop.f32.mrb[0].mxu0
        %v2254 = vadd.f32 %v2093, %v2253
        %v2255 = vpop.f32.mrb[0].mxu0
        %2256 = vdwg.mxu0
        %s2257 = scalar_lea.vmem [#allocation4], 48
        %v2258 = vld [vmem:[%s2257] sm:$0xff]
        %v2259 = vld [vmem:[%s2257 + $0x8] sm:$0xff]
        %v2260 = vld [vmem:[%s2257 + $0x10] sm:$0xff]
        %v2261 = vld [vmem:[%s2257 + $0x18] sm:$0xff]
        %v2262 = vld [vmem:[%s2257 + $0x20] sm:$0xff]
        %v2263 = vld [vmem:[%s2257 + $0x28] sm:$0xff]
        %v2264 = vld [vmem:[%s2257 + $0x30] sm:$0xff]
        %v2265 = vld [vmem:[%s2257 + $0x38] sm:$0xff]
        %v2266 = vld [vmem:[%s2257 + $0x40] sm:$0xff]
        %v2267 = vld [vmem:[%s2257 + $0x48] sm:$0xff]
        %v2268 = vld [vmem:[%s2257 + $0x50] sm:$0xff]
        %v2269 = vld [vmem:[%s2257 + $0x58] sm:$0xff]
        %v2270 = vld [vmem:[%s2257 + $0x60] sm:$0xff]
        %v2271 = vld [vmem:[%s2257 + $0x68] sm:$0xff]
        %v2272 = vld [vmem:[%s2257 + $0x70] sm:$0xff]
        %v2273 = vld [vmem:[%s2257 + $0x78] sm:$0xff]
        %v2274 = vld [vmem:[%s2257 + $0x80] sm:$0xff]
        %v2275 = vld [vmem:[%s2257 + $0x88] sm:$0xff]
        %v2276 = vld [vmem:[%s2257 + $0x90] sm:$0xff]
        %v2277 = vld [vmem:[%s2257 + $0x98] sm:$0xff]
        %v2278 = vld [vmem:[%s2257 + $0xa0] sm:$0xff]
        %v2279 = vld [vmem:[%s2257 + $0xa8] sm:$0xff]
        %v2280 = vld [vmem:[%s2257 + $0xb0] sm:$0xff]
        %v2281 = vld [vmem:[%s2257 + $0xb8] sm:$0xff]
        %v2282 = vld [vmem:[%s2257 + $0xc0] sm:$0xff]
        %v2283 = vld [vmem:[%s2257 + $0xc8] sm:$0xff]
        %v2284 = vld [vmem:[%s2257 + $0xd0] sm:$0xff]
        %v2285 = vld [vmem:[%s2257 + $0xd8] sm:$0xff]
        %v2286 = vld [vmem:[%s2257 + $0xe0] sm:$0xff]
        %v2287 = vld [vmem:[%s2257 + $0xe8] sm:$0xff]
        %v2288 = vld [vmem:[%s2257 + $0xf0] sm:$0xff]
        %v2289 = vld [vmem:[%s2257 + $0xf8] sm:$0xff]
        %v2290 = vld [vmem:[%s2257 + $0x100] sm:$0xff]
        %v2291 = vld [vmem:[%s2257 + $0x108] sm:$0xff]
        %v2292 = vld [vmem:[%s2257 + $0x110] sm:$0xff]
        %v2293 = vld [vmem:[%s2257 + $0x118] sm:$0xff]
        %v2294 = vld [vmem:[%s2257 + $0x120] sm:$0xff]
        %v2295 = vld [vmem:[%s2257 + $0x128] sm:$0xff]
        %v2296 = vld [vmem:[%s2257 + $0x130] sm:$0xff]
        %v2297 = vld [vmem:[%s2257 + $0x138] sm:$0xff]
        %v2298 = vld [vmem:[%s2257 + $0x140] sm:$0xff]
        %v2299 = vld [vmem:[%s2257 + $0x148] sm:$0xff]
        %v2300 = vld [vmem:[%s2257 + $0x150] sm:$0xff]
        %v2301 = vld [vmem:[%s2257 + $0x158] sm:$0xff]
        %v2302 = vld [vmem:[%s2257 + $0x160] sm:$0xff]
        %v2303 = vld [vmem:[%s2257 + $0x168] sm:$0xff]
        %v2304 = vld [vmem:[%s2257 + $0x170] sm:$0xff]
        %v2305 = vld [vmem:[%s2257 + $0x178] sm:$0xff]
        %s2306 = scalar_lea.vmem [#allocation7], 384
        %v2307 = vld [vmem:[%s2306] sm:$0xf]
        %v2308 = vld [vmem:[%s2306 + $0x4] sm:$0xf]
        %v2309 = vld [vmem:[%s2306 + $0x8] sm:$0xf]
        %v2310 = vld [vmem:[%s2306 + $0xc] sm:$0xf]
        %v2311 = vld [vmem:[%s2306 + $0x10] sm:$0xf]
        %v2312 = vld [vmem:[%s2306 + $0x14] sm:$0xf]
        %v2313 = vld [vmem:[%s2306 + $0x18] sm:$0xf]
        %v2314 = vld [vmem:[%s2306 + $0x1c] sm:$0xf]
        %v2315 = vld [vmem:[%s2306 + $0x20] sm:$0xf]
        %v2316 = vld [vmem:[%s2306 + $0x24] sm:$0xf]
        %v2317 = vld [vmem:[%s2306 + $0x28] sm:$0xf]
        %v2318 = vld [vmem:[%s2306 + $0x2c] sm:$0xf]
        %v2319 = vld [vmem:[%s2306 + $0x30] sm:$0xf]
        %v2320 = vld [vmem:[%s2306 + $0x34] sm:$0xf]
        %v2321 = vld [vmem:[%s2306 + $0x38] sm:$0xf]
        %v2322 = vld [vmem:[%s2306 + $0x3c] sm:$0xf]
        %v2323 = vld [vmem:[%s2306 + $0x40] sm:$0xf]
        %v2324 = vld [vmem:[%s2306 + $0x44] sm:$0xf]
        %v2325 = vld [vmem:[%s2306 + $0x48] sm:$0xf]
        %v2326 = vld [vmem:[%s2306 + $0x4c] sm:$0xf]
        %v2327 = vld [vmem:[%s2306 + $0x50] sm:$0xf]
        %v2328 = vld [vmem:[%s2306 + $0x54] sm:$0xf]
        %v2329 = vld [vmem:[%s2306 + $0x58] sm:$0xf]
        %v2330 = vld [vmem:[%s2306 + $0x5c] sm:$0xf]
        %v2331 = vld [vmem:[%s2306 + $0x60] sm:$0xf]
        %v2332 = vld [vmem:[%s2306 + $0x64] sm:$0xf]
        %v2333 = vld [vmem:[%s2306 + $0x68] sm:$0xf]
        %v2334 = vld [vmem:[%s2306 + $0x6c] sm:$0xf]
        %v2335 = vld [vmem:[%s2306 + $0x70] sm:$0xf]
        %v2336 = vld [vmem:[%s2306 + $0x74] sm:$0xf]
        %v2337 = vld [vmem:[%s2306 + $0x78] sm:$0xf]
        %v2338 = vld [vmem:[%s2306 + $0x7c] sm:$0xf]
        %v2339 = vld [vmem:[%s2306 + $0x80] sm:$0xf]
        %v2340 = vld [vmem:[%s2306 + $0x84] sm:$0xf]
        %v2341 = vld [vmem:[%s2306 + $0x88] sm:$0xf]
        %v2342 = vld [vmem:[%s2306 + $0x8c] sm:$0xf]
        %v2343 = vld [vmem:[%s2306 + $0x90] sm:$0xf]
        %v2344 = vld [vmem:[%s2306 + $0x94] sm:$0xf]
        %v2345 = vld [vmem:[%s2306 + $0x98] sm:$0xf]
        %v2346 = vld [vmem:[%s2306 + $0x9c] sm:$0xf]
        %v2347 = vld [vmem:[%s2306 + $0xa0] sm:$0xf]
        %v2348 = vld [vmem:[%s2306 + $0xa4] sm:$0xf]
        %v2349 = vld [vmem:[%s2306 + $0xa8] sm:$0xf]
        %v2350 = vld [vmem:[%s2306 + $0xac] sm:$0xf]
        %v2351 = vld [vmem:[%s2306 + $0xb0] sm:$0xf]
        %v2352 = vld [vmem:[%s2306 + $0xb4] sm:$0xf]
        %v2353 = vld [vmem:[%s2306 + $0xb8] sm:$0xf]
        %v2354 = vld [vmem:[%s2306 + $0xbc] sm:$0xf]
        %v2403 = vunpack.c.l.b16 %v2307
        %v2404 = vunpack.c.l.b16 %v2308
        %v2405 = vunpack.c.l.b16 %v2309
        %v2406 = vunpack.c.l.b16 %v2310
        %v2407 = vunpack.c.l.b16 %v2311
        %v2408 = vunpack.c.l.b16 %v2312
        %v2409 = vunpack.c.l.b16 %v2313
        %v2410 = vunpack.c.l.b16 %v2314
        %v2411 = vunpack.c.l.b16 %v2315
        %v2412 = vunpack.c.l.b16 %v2316
        %v2413 = vunpack.c.l.b16 %v2317
        %v2414 = vunpack.c.l.b16 %v2318
        %v2415 = vunpack.c.l.b16 %v2319
        %v2416 = vunpack.c.l.b16 %v2320
        %v2417 = vunpack.c.l.b16 %v2321
        %v2418 = vunpack.c.l.b16 %v2322
        %v2419 = vunpack.c.l.b16 %v2323
        %v2420 = vunpack.c.l.b16 %v2324
        %v2421 = vunpack.c.l.b16 %v2325
        %v2422 = vunpack.c.l.b16 %v2326
        %v2423 = vunpack.c.l.b16 %v2327
        %v2424 = vunpack.c.l.b16 %v2328
        %v2425 = vunpack.c.l.b16 %v2329
        %v2426 = vunpack.c.l.b16 %v2330
        %v2427 = vunpack.c.l.b16 %v2331
        %v2428 = vunpack.c.l.b16 %v2332
        %v2429 = vunpack.c.l.b16 %v2333
        %v2430 = vunpack.c.l.b16 %v2334
        %v2431 = vunpack.c.l.b16 %v2335
        %v2432 = vunpack.c.l.b16 %v2336
        %v2433 = vunpack.c.l.b16 %v2337
        %v2434 = vunpack.c.l.b16 %v2338
        %v2435 = vunpack.c.l.b16 %v2339
        %v2436 = vunpack.c.l.b16 %v2340
        %v2437 = vunpack.c.l.b16 %v2341
        %v2438 = vunpack.c.l.b16 %v2342
        %v2439 = vunpack.c.l.b16 %v2343
        %v2440 = vunpack.c.l.b16 %v2344
        %v2441 = vunpack.c.l.b16 %v2345
        %v2442 = vunpack.c.l.b16 %v2346
        %v2443 = vunpack.c.l.b16 %v2347
        %v2444 = vunpack.c.l.b16 %v2348
        %v2445 = vunpack.c.l.b16 %v2349
        %v2446 = vunpack.c.l.b16 %v2350
        %v2447 = vunpack.c.l.b16 %v2351
        %v2448 = vunpack.c.l.b16 %v2352
        %v2449 = vunpack.c.l.b16 %v2353
        %v2450 = vunpack.c.l.b16 %v2354
        %v2451 = vpack.c.b16 %v2404, %v2403
        %v2452 = vpack.c.b16 %v2406, %v2405
        %v2453 = vpack.c.b16 %v2408, %v2407
        %v2454 = vpack.c.b16 %v2410, %v2409
        %v2455 = vpack.c.b16 %v2412, %v2411
        %v2456 = vpack.c.b16 %v2414, %v2413
        %v2457 = vpack.c.b16 %v2416, %v2415
        %v2458 = vpack.c.b16 %v2418, %v2417
        %v2459 = vpack.c.b16 %v2420, %v2419
        %v2460 = vpack.c.b16 %v2422, %v2421
        %v2461 = vpack.c.b16 %v2424, %v2423
        %v2462 = vpack.c.b16 %v2426, %v2425
        %v2463 = vpack.c.b16 %v2428, %v2427
        %v2464 = vpack.c.b16 %v2430, %v2429
        %v2465 = vpack.c.b16 %v2432, %v2431
        %v2466 = vpack.c.b16 %v2434, %v2433
        %v2467 = vpack.c.b16 %v2436, %v2435
        %v2468 = vpack.c.b16 %v2438, %v2437
        %v2469 = vpack.c.b16 %v2440, %v2439
        %v2470 = vpack.c.b16 %v2442, %v2441
        %v2471 = vpack.c.b16 %v2444, %v2443
        %v2472 = vpack.c.b16 %v2446, %v2445
        %v2473 = vpack.c.b16 %v2448, %v2447
        %v2474 = vpack.c.b16 %v2450, %v2449
        %2499 = vmatprep.subr.bf16.mxu0 0
        %2500 = vmatpush1.bf16.msra.mxu0 %v2451
        %2501 = vmatprep.subr.bf16.mxu0 0
        %2502 = vmatpush1.bf16.msra.mxu0 %v2452
        %2503 = vmatprep.subr.bf16.mxu0 0
        %2504 = vmatpush1.bf16.msra.mxu0 %v2453
        %2505 = vmatprep.subr.bf16.mxu0 0
        %2506 = vmatpush1.bf16.msra.mxu0 %v2454
        %2507 = vmatprep.subr.bf16.mxu0 0
        %2508 = vmatpush1.bf16.msra.mxu0 %v2455
        %2509 = vmatprep.subr.bf16.mxu0 0
        %2510 = vmatpush1.bf16.msra.mxu0 %v2456
        %2511 = vmatprep.subr.bf16.mxu0 0
        %2512 = vmatpush1.bf16.msra.mxu0 %v2457
        %2513 = vmatprep.subr.bf16.mxu0 0
        %2514 = vmatpush1.bf16.msra.mxu0 %v2458
        %2515 = vmatprep.subr.bf16.mxu0 0
        %2516 = vmatpush1.bf16.msra.mxu0 %v2459
        %2517 = vmatprep.subr.bf16.mxu0 0
        %2518 = vmatpush1.bf16.msra.mxu0 %v2460
        %2519 = vmatprep.subr.bf16.mxu0 0
        %2520 = vmatpush1.bf16.msra.mxu0 %v2461
        %2521 = vmatprep.subr.bf16.mxu0 0
        %2522 = vmatpush1.bf16.msra.mxu0 %v2462
        %2523 = vmatprep.subr.bf16.mxu0 0
        %2524 = vmatpush1.bf16.msra.mxu0 %v2463
        %2525 = vmatprep.subr.bf16.mxu0 0
        %2526 = vmatpush1.bf16.msra.mxu0 %v2464
        %2527 = vmatprep.subr.bf16.mxu0 0
        %2528 = vmatpush1.bf16.msra.mxu0 %v2465
        %2529 = vmatprep.subr.bf16.mxu0 0
        %2530 = vmatpush1.bf16.msra.mxu0 %v2466
        %2531 = vmatprep.mubr.bf16.mxu0 %v2259
        %2532 = vmatmul.mubr.bf16.gmra.mrb[0].mxu0 %v2258
        %v2533 = vpop.f32.mrb[0].mxu0
        %v2534 = vadd.f32 0.0, %v2533
        %v2535 = vpop.f32.mrb[0].mxu0
        %v2536 = vpop.f32.mrb[0].mxu0
        %v2537 = vadd.f32 0.0, %v2536
        %v2538 = vpop.f32.mrb[0].mxu0
        %2539 = vmatprep.mubr.bf16.mxu0 %v2262
        %2540 = vmatmul.mubr.bf16.gmra.mrb[0].mxu0 %v2261
        %v2541 = vpop.f32.mrb[0].mxu0
        %v2542 = vadd.f32 0.0, %v2541
        %v2543 = vpop.f32.mrb[0].mxu0
        %v2544 = vpop.f32.mrb[0].mxu0
        %v2545 = vadd.f32 0.0, %v2544
        %v2546 = vpop.f32.mrb[0].mxu0
        %2547 = vmatprep.mubr.bf16.mxu0 %v2265
        %2548 = vmatmul.mubr.bf16.gmra.mrb[0].mxu0 %v2264
        %v2549 = vpop.f32.mrb[0].mxu0
        %v2550 = vadd.f32 0.0, %v2549
        %v2551 = vpop.f32.mrb[0].mxu0
        %v2552 = vpop.f32.mrb[0].mxu0
        %v2553 = vadd.f32 0.0, %v2552
        %v2554 = vpop.f32.mrb[0].mxu0
        %2555 = vmatprep.mubr.bf16.mxu0 %v2268
        %2556 = vmatmul.mubr.bf16.gmra.mrb[0].mxu0 %v2267
        %v2557 = vpop.f32.mrb[0].mxu0
        %v2558 = vadd.f32 0.0, %v2557
        %v2559 = vpop.f32.mrb[0].mxu0
        %v2560 = vpop.f32.mrb[0].mxu0
        %v2561 = vadd.f32 0.0, %v2560
        %v2562 = vpop.f32.mrb[0].mxu0
        %2563 = vmatprep.mubr.bf16.mxu0 %v2271
        %2564 = vmatmul.mubr.bf16.gmra.mrb[0].mxu0 %v2270
        %v2565 = vpop.f32.mrb[0].mxu0
        %v2566 = vadd.f32 0.0, %v2565
        %v2567 = vpop.f32.mrb[0].mxu0
        %v2568 = vpop.f32.mrb[0].mxu0
        %v2569 = vadd.f32 0.0, %v2568
        %v2570 = vpop.f32.mrb[0].mxu0
        %2571 = vmatprep.mubr.bf16.mxu0 %v2274
        %2572 = vmatmul.mubr.bf16.gmra.mrb[0].mxu0 %v2273
        %v2573 = vpop.f32.mrb[0].mxu0
        %v2574 = vadd.f32 0.0, %v2573
        %v2575 = vpop.f32.mrb[0].mxu0
        %v2576 = vpop.f32.mrb[0].mxu0
        %v2577 = vadd.f32 0.0, %v2576
        %v2578 = vpop.f32.mrb[0].mxu0
        %2579 = vmatprep.mubr.bf16.mxu0 %v2277
        %2580 = vmatmul.mubr.bf16.gmra.mrb[0].mxu0 %v2276
        %v2581 = vpop.f32.mrb[0].mxu0
        %v2582 = vadd.f32 0.0, %v2581
        %v2583 = vpop.f32.mrb[0].mxu0
        %v2584 = vpop.f32.mrb[0].mxu0
        %v2585 = vadd.f32 0.0, %v2584
        %v2586 = vpop.f32.mrb[0].mxu0
        %2587 = vmatprep.mubr.bf16.mxu0 %v2280
        %2588 = vmatmul.mubr.bf16.gmra.mrb[0].mxu0 %v2279
        %v2589 = vpop.f32.mrb[0].mxu0
        %v2590 = vadd.f32 0.0, %v2589
        %v2591 = vpop.f32.mrb[0].mxu0
        %v2592 = vpop.f32.mrb[0].mxu0
        %v2593 = vadd.f32 0.0, %v2592
        %v2594 = vpop.f32.mrb[0].mxu0
        %2595 = vmatprep.mubr.bf16.mxu0 %v2283
        %2596 = vmatmul.mubr.bf16.gmra.mrb[0].mxu0 %v2282
        %v2597 = vpop.f32.mrb[0].mxu0
        %v2598 = vadd.f32 0.0, %v2597
        %v2599 = vpop.f32.mrb[0].mxu0
        %v2600 = vpop.f32.mrb[0].mxu0
        %v2601 = vadd.f32 0.0, %v2600
        %v2602 = vpop.f32.mrb[0].mxu0
        %2603 = vmatprep.mubr.bf16.mxu0 %v2286
        %2604 = vmatmul.mubr.bf16.gmra.mrb[0].mxu0 %v2285
        %v2605 = vpop.f32.mrb[0].mxu0
        %v2606 = vadd.f32 0.0, %v2605
        %v2607 = vpop.f32.mrb[0].mxu0
        %v2608 = vpop.f32.mrb[0].mxu0
        %v2609 = vadd.f32 0.0, %v2608
        %v2610 = vpop.f32.mrb[0].mxu0
        %2611 = vmatprep.mubr.bf16.mxu0 %v2289
        %2612 = vmatmul.mubr.bf16.gmra.mrb[0].mxu0 %v2288
        %v2613 = vpop.f32.mrb[0].mxu0
        %v2614 = vadd.f32 0.0, %v2613
        %v2615 = vpop.f32.mrb[0].mxu0
        %v2616 = vpop.f32.mrb[0].mxu0
        %v2617 = vadd.f32 0.0, %v2616
        %v2618 = vpop.f32.mrb[0].mxu0
        %2619 = vmatprep.mubr.bf16.mxu0 %v2292
        %2620 = vmatmul.mubr.bf16.gmra.mrb[0].mxu0 %v2291
        %v2621 = vpop.f32.mrb[0].mxu0
        %v2622 = vadd.f32 0.0, %v2621
        %v2623 = vpop.f32.mrb[0].mxu0
        %v2624 = vpop.f32.mrb[0].mxu0
        %v2625 = vadd.f32 0.0, %v2624
        %v2626 = vpop.f32.mrb[0].mxu0
        %2627 = vmatprep.mubr.bf16.mxu0 %v2295
        %2628 = vmatmul.mubr.bf16.gmra.mrb[0].mxu0 %v2294
        %v2629 = vpop.f32.mrb[0].mxu0
        %v2630 = vadd.f32 0.0, %v2629
        %v2631 = vpop.f32.mrb[0].mxu0
        %v2632 = vpop.f32.mrb[0].mxu0
        %v2633 = vadd.f32 0.0, %v2632
        %v2634 = vpop.f32.mrb[0].mxu0
        %2635 = vmatprep.mubr.bf16.mxu0 %v2298
        %2636 = vmatmul.mubr.bf16.gmra.mrb[0].mxu0 %v2297
        %v2637 = vpop.f32.mrb[0].mxu0
        %v2638 = vadd.f32 0.0, %v2637
        %v2639 = vpop.f32.mrb[0].mxu0
        %v2640 = vpop.f32.mrb[0].mxu0
        %v2641 = vadd.f32 0.0, %v2640
        %v2642 = vpop.f32.mrb[0].mxu0
        %2643 = vmatprep.mubr.bf16.mxu0 %v2301
        %2644 = vmatmul.mubr.bf16.gmra.mrb[0].mxu0 %v2300
        %v2645 = vpop.f32.mrb[0].mxu0
        %v2646 = vadd.f32 0.0, %v2645
        %v2647 = vpop.f32.mrb[0].mxu0
        %v2648 = vpop.f32.mrb[0].mxu0
        %v2649 = vadd.f32 0.0, %v2648
        %v2650 = vpop.f32.mrb[0].mxu0
        %2651 = vmatprep.mubr.bf16.mxu0 %v2304
        %2652 = vmatmul.mubr.bf16.gmra.mrb[0].mxu0 %v2303
        %v2653 = vpop.f32.mrb[0].mxu0
        %v2654 = vadd.f32 0.0, %v2653
        %v2655 = vpop.f32.mrb[0].mxu0
        %v2656 = vpop.f32.mrb[0].mxu0
        %v2657 = vadd.f32 0.0, %v2656
        %v2658 = vpop.f32.mrb[0].mxu0
        %2659 = vdwg.mxu0
        %2660 = vmatprep.subr.bf16.mxu0 0
        %2661 = vmatpush1.bf16.msra.mxu0 %v2467
        %2662 = vmatprep.subr.bf16.mxu0 0
        %2663 = vmatpush1.bf16.msra.mxu0 %v2468
        %2664 = vmatprep.subr.bf16.mxu0 0
        %2665 = vmatpush1.bf16.msra.mxu0 %v2469
        %2666 = vmatprep.subr.bf16.mxu0 0
        %2667 = vmatpush1.bf16.msra.mxu0 %v2470
        %2668 = vmatprep.subr.bf16.mxu0 0
        %2669 = vmatpush1.bf16.msra.mxu0 %v2471
        %2670 = vmatprep.subr.bf16.mxu0 0
        %2671 = vmatpush1.bf16.msra.mxu0 %v2472
        %2672 = vmatprep.subr.bf16.mxu0 0
        %2673 = vmatpush1.bf16.msra.mxu0 %v2473
        %2674 = vmatprep.subr.bf16.mxu0 0
        %2675 = vmatpush1.bf16.msra.mxu0 %v2474
        %2676 = vmatprep.subr.bf16.mxu0 0
        %2677 = vmatpush1.bf16.msra.mxu0 0
        %2678 = vmatprep.subr.bf16.mxu0 0
        %2679 = vmatpush1.bf16.msra.mxu0 0
        %2680 = vmatprep.subr.bf16.mxu0 0
        %2681 = vmatpush1.bf16.msra.mxu0 0
        %2682 = vmatprep.subr.bf16.mxu0 0
        %2683 = vmatpush1.bf16.msra.mxu0 0
        %2684 = vmatprep.subr.bf16.mxu0 0
        %2685 = vmatpush1.bf16.msra.mxu0 0
        %2686 = vmatprep.subr.bf16.mxu0 0
        %2687 = vmatpush1.bf16.msra.mxu0 0
        %2688 = vmatprep.subr.bf16.mxu0 0
        %2689 = vmatpush1.bf16.msra.mxu0 0
        %2690 = vmatprep.subr.bf16.mxu0 0
        %2691 = vmatpush1.bf16.msra.mxu0 0
        %2692 = vmatprep.mubr.bf16.mxu0 0
        %2693 = vmatmul.mubr.bf16.gmra.mrb[0].mxu0 %v2260
        %v2694 = vpop.f32.mrb[0].mxu0
        %v2695 = vadd.f32 %v2534, %v2694
        %v2696 = vpop.f32.mrb[0].mxu0
        %v2697 = vpop.f32.mrb[0].mxu0
        %v2698 = vadd.f32 %v2537, %v2697
        %v2699 = vpop.f32.mrb[0].mxu0
        %2700 = vmatprep.mubr.bf16.mxu0 0
        %2701 = vmatmul.mubr.bf16.gmra.mrb[0].mxu0 %v2263
        %v2702 = vpop.f32.mrb[0].mxu0
        %v2703 = vadd.f32 %v2542, %v2702
        %v2704 = vpop.f32.mrb[0].mxu0
        %v2705 = vpop.f32.mrb[0].mxu0
        %v2706 = vadd.f32 %v2545, %v2705
        %v2707 = vpop.f32.mrb[0].mxu0
        %2708 = vmatprep.mubr.bf16.mxu0 0
        %2709 = vmatmul.mubr.bf16.gmra.mrb[0].mxu0 %v2266
        %v2710 = vpop.f32.mrb[0].mxu0
        %v2711 = vadd.f32 %v2550, %v2710
        %v2712 = vpop.f32.mrb[0].mxu0
        %v2713 = vpop.f32.mrb[0].mxu0
        %v2714 = vadd.f32 %v2553, %v2713
        %v2715 = vpop.f32.mrb[0].mxu0
        %2716 = vmatprep.mubr.bf16.mxu0 0
        %2717 = vmatmul.mubr.bf16.gmra.mrb[0].mxu0 %v2269
        %v2718 = vpop.f32.mrb[0].mxu0
        %v2719 = vadd.f32 %v2558, %v2718
        %v2720 = vpop.f32.mrb[0].mxu0
        %v2721 = vpop.f32.mrb[0].mxu0
        %v2722 = vadd.f32 %v2561, %v2721
        %v2723 = vpop.f32.mrb[0].mxu0
        %2724 = vmatprep.mubr.bf16.mxu0 0
        %2725 = vmatmul.mubr.bf16.gmra.mrb[0].mxu0 %v2272
        %v2726 = vpop.f32.mrb[0].mxu0
        %v2727 = vadd.f32 %v2566, %v2726
        %v2728 = vpop.f32.mrb[0].mxu0
        %v2729 = vpop.f32.mrb[0].mxu0
        %v2730 = vadd.f32 %v2569, %v2729
        %v2731 = vpop.f32.mrb[0].mxu0
        %2732 = vmatprep.mubr.bf16.mxu0 0
        %2733 = vmatmul.mubr.bf16.gmra.mrb[0].mxu0 %v2275
        %v2734 = vpop.f32.mrb[0].mxu0
        %v2735 = vadd.f32 %v2574, %v2734
        %v2736 = vpop.f32.mrb[0].mxu0
        %v2737 = vpop.f32.mrb[0].mxu0
        %v2738 = vadd.f32 %v2577, %v2737
        %v2739 = vpop.f32.mrb[0].mxu0
        %2740 = vmatprep.mubr.bf16.mxu0 0
        %2741 = vmatmul.mubr.bf16.gmra.mrb[0].mxu0 %v2278
        %v2742 = vpop.f32.mrb[0].mxu0
        %v2743 = vadd.f32 %v2582, %v2742
        %v2744 = vpop.f32.mrb[0].mxu0
        %v2745 = vpop.f32.mrb[0].mxu0
        %v2746 = vadd.f32 %v2585, %v2745
        %v2747 = vpop.f32.mrb[0].mxu0
        %2748 = vmatprep.mubr.bf16.mxu0 0
        %2749 = vmatmul.mubr.bf16.gmra.mrb[0].mxu0 %v2281
        %v2750 = vpop.f32.mrb[0].mxu0
        %v2751 = vadd.f32 %v2590, %v2750
        %v2752 = vpop.f32.mrb[0].mxu0
        %v2753 = vpop.f32.mrb[0].mxu0
        %v2754 = vadd.f32 %v2593, %v2753
        %v2755 = vpop.f32.mrb[0].mxu0
        %2756 = vmatprep.mubr.bf16.mxu0 0
        %2757 = vmatmul.mubr.bf16.gmra.mrb[0].mxu0 %v2284
        %v2758 = vpop.f32.mrb[0].mxu0
        %v2759 = vadd.f32 %v2598, %v2758
        %v2760 = vpop.f32.mrb[0].mxu0
        %v2761 = vpop.f32.mrb[0].mxu0
        %v2762 = vadd.f32 %v2601, %v2761
        %v2763 = vpop.f32.mrb[0].mxu0
        %2764 = vmatprep.mubr.bf16.mxu0 0
        %2765 = vmatmul.mubr.bf16.gmra.mrb[0].mxu0 %v2287
        %v2766 = vpop.f32.mrb[0].mxu0
        %v2767 = vadd.f32 %v2606, %v2766
        %v2768 = vpop.f32.mrb[0].mxu0
        %v2769 = vpop.f32.mrb[0].mxu0
        %v2770 = vadd.f32 %v2609, %v2769
        %v2771 = vpop.f32.mrb[0].mxu0
        %2772 = vmatprep.mubr.bf16.mxu0 0
        %2773 = vmatmul.mubr.bf16.gmra.mrb[0].mxu0 %v2290
        %v2774 = vpop.f32.mrb[0].mxu0
        %v2775 = vadd.f32 %v2614, %v2774
        %v2776 = vpop.f32.mrb[0].mxu0
        %v2777 = vpop.f32.mrb[0].mxu0
        %v2778 = vadd.f32 %v2617, %v2777
        %v2779 = vpop.f32.mrb[0].mxu0
        %2780 = vmatprep.mubr.bf16.mxu0 0
        %2781 = vmatmul.mubr.bf16.gmra.mrb[0].mxu0 %v2293
        %v2782 = vpop.f32.mrb[0].mxu0
        %v2783 = vadd.f32 %v2622, %v2782
        %v2784 = vpop.f32.mrb[0].mxu0
        %v2785 = vpop.f32.mrb[0].mxu0
        %v2786 = vadd.f32 %v2625, %v2785
        %v2787 = vpop.f32.mrb[0].mxu0
        %2788 = vmatprep.mubr.bf16.mxu0 0
        %2789 = vmatmul.mubr.bf16.gmra.mrb[0].mxu0 %v2296
        %v2790 = vpop.f32.mrb[0].mxu0
        %v2791 = vadd.f32 %v2630, %v2790
        %v2792 = vpop.f32.mrb[0].mxu0
        %v2793 = vpop.f32.mrb[0].mxu0
        %v2794 = vadd.f32 %v2633, %v2793
        %v2795 = vpop.f32.mrb[0].mxu0
        %2796 = vmatprep.mubr.bf16.mxu0 0
        %2797 = vmatmul.mubr.bf16.gmra.mrb[0].mxu0 %v2299
        %v2798 = vpop.f32.mrb[0].mxu0
        %v2799 = vadd.f32 %v2638, %v2798
        %v2800 = vpop.f32.mrb[0].mxu0
        %v2801 = vpop.f32.mrb[0].mxu0
        %v2802 = vadd.f32 %v2641, %v2801
        %v2803 = vpop.f32.mrb[0].mxu0
        %2804 = vmatprep.mubr.bf16.mxu0 0
        %2805 = vmatmul.mubr.bf16.gmra.mrb[0].mxu0 %v2302
        %v2806 = vpop.f32.mrb[0].mxu0
        %v2807 = vadd.f32 %v2646, %v2806
        %v2808 = vpop.f32.mrb[0].mxu0
        %v2809 = vpop.f32.mrb[0].mxu0
        %v2810 = vadd.f32 %v2649, %v2809
        %v2811 = vpop.f32.mrb[0].mxu0
        %2812 = vmatprep.mubr.bf16.mxu0 0
        %2813 = vmatmul.mubr.bf16.gmra.mrb[0].mxu0 %v2305
        %v2814 = vpop.f32.mrb[0].mxu0
        %v2815 = vadd.f32 %v2654, %v2814
        %v2816 = vpop.f32.mrb[0].mxu0
        %v2817 = vpop.f32.mrb[0].mxu0
        %v2818 = vadd.f32 %v2657, %v2817
        %v2819 = vpop.f32.mrb[0].mxu0
        %2820 = vdwg.mxu0
        %v2821 = vadd.f32 %v2131, %v2695
        %v2822 = vadd.f32 %v2134, %v2698
        %v2823 = vadd.f32 %v2139, %v2703
        %v2824 = vadd.f32 %v2142, %v2706
        %v2825 = vadd.f32 %v2147, %v2711
        %v2826 = vadd.f32 %v2150, %v2714
        %v2827 = vadd.f32 %v2155, %v2719
        %v2828 = vadd.f32 %v2158, %v2722
        %v2829 = vadd.f32 %v2163, %v2727
        %v2830 = vadd.f32 %v2166, %v2730
        %v2831 = vadd.f32 %v2171, %v2735
        %v2832 = vadd.f32 %v2174, %v2738
        %v2833 = vadd.f32 %v2179, %v2743
        %v2834 = vadd.f32 %v2182, %v2746
        %v2835 = vadd.f32 %v2187, %v2751
        %v2836 = vadd.f32 %v2190, %v2754
        %v2837 = vadd.f32 %v2195, %v2759
        %v2838 = vadd.f32 %v2198, %v2762
        %v2839 = vadd.f32 %v2203, %v2767
        %v2840 = vadd.f32 %v2206, %v2770
        %v2841 = vadd.f32 %v2211, %v2775
        %v2842 = vadd.f32 %v2214, %v2778
        %v2843 = vadd.f32 %v2219, %v2783
        %v2844 = vadd.f32 %v2222, %v2786
        %v2845 = vadd.f32 %v2227, %v2791
        %v2846 = vadd.f32 %v2230, %v2794
        %v2847 = vadd.f32 %v2235, %v2799
        %v2848 = vadd.f32 %v2238, %v2802
        %v2849 = vadd.f32 %v2243, %v2807
        %v2850 = vadd.f32 %v2246, %v2810
        %v2851 = vadd.f32 %v2251, %v2815
        %v2852 = vadd.f32 %v2254, %v2818
        %v2853 = vld [vmem:[%s4] sm:$0x1]
        %v2855 = vlaneseq
        %v2856 = vshrl.u32 %v2855, 7
        %v2857 = vsub.s32 0, %v2856
        %v2858 = vrot.slane %v2853, %v2857
        %v2860 = vadd.f32 %v2821, %v2858
        %v2861 = vadd.f32 %v2822, %v2858
        %v2862 = vadd.f32 %v2823, %v2858
        %v2863 = vadd.f32 %v2824, %v2858
        %v2864 = vadd.f32 %v2825, %v2858
        %v2865 = vadd.f32 %v2826, %v2858
        %v2866 = vadd.f32 %v2827, %v2858
        %v2867 = vadd.f32 %v2828, %v2858
        %v2868 = vadd.f32 %v2829, %v2858
        %v2869 = vadd.f32 %v2830, %v2858
        %v2870 = vadd.f32 %v2831, %v2858
        %v2871 = vadd.f32 %v2832, %v2858
        %v2872 = vadd.f32 %v2833, %v2858
        %v2873 = vadd.f32 %v2834, %v2858
        %v2874 = vadd.f32 %v2835, %v2858
        %v2875 = vadd.f32 %v2836, %v2858
        %v2876 = vadd.f32 %v2837, %v2858
        %v2877 = vadd.f32 %v2838, %v2858
        %v2878 = vadd.f32 %v2839, %v2858
        %v2879 = vadd.f32 %v2840, %v2858
        %v2880 = vadd.f32 %v2841, %v2858
        %v2881 = vadd.f32 %v2842, %v2858
        %v2882 = vadd.f32 %v2843, %v2858
        %v2883 = vadd.f32 %v2844, %v2858
        %v2884 = vadd.f32 %v2845, %v2858
        %v2885 = vadd.f32 %v2846, %v2858
        %v2886 = vadd.f32 %v2847, %v2858
        %v2887 = vadd.f32 %v2848, %v2858
        %v2888 = vadd.f32 %v2849, %v2858
        %v2889 = vadd.f32 %v2850, %v2858
        %v2890 = vadd.f32 %v2851, %v2858
        %v2891 = vadd.f32 %v2852, %v2858
        %v2892 = vmax.f32 %v2860, 0.0
        %v2893 = vmax.f32 %v2861, 0.0
        %v2894 = vmax.f32 %v2862, 0.0
        %v2895 = vmax.f32 %v2863, 0.0
        %v2896 = vmax.f32 %v2864, 0.0
        %v2897 = vmax.f32 %v2865, 0.0
        %v2898 = vmax.f32 %v2866, 0.0
        %v2899 = vmax.f32 %v2867, 0.0
        %v2900 = vmax.f32 %v2868, 0.0
        %v2901 = vmax.f32 %v2869, 0.0
        %v2902 = vmax.f32 %v2870, 0.0
        %v2903 = vmax.f32 %v2871, 0.0
        %v2904 = vmax.f32 %v2872, 0.0
        %v2905 = vmax.f32 %v2873, 0.0
        %v2906 = vmax.f32 %v2874, 0.0
        %v2907 = vmax.f32 %v2875, 0.0
        %v2908 = vmax.f32 %v2876, 0.0
        %v2909 = vmax.f32 %v2877, 0.0
        %v2910 = vmax.f32 %v2878, 0.0
        %v2911 = vmax.f32 %v2879, 0.0
        %v2912 = vmax.f32 %v2880, 0.0
        %v2913 = vmax.f32 %v2881, 0.0
        %v2914 = vmax.f32 %v2882, 0.0
        %v2915 = vmax.f32 %v2883, 0.0
        %v2916 = vmax.f32 %v2884, 0.0
        %v2917 = vmax.f32 %v2885, 0.0
        %v2918 = vmax.f32 %v2886, 0.0
        %v2919 = vmax.f32 %v2887, 0.0
        %v2920 = vmax.f32 %v2888, 0.0
        %v2921 = vmax.f32 %v2889, 0.0
        %v2922 = vmax.f32 %v2890, 0.0
        %v2923 = vmax.f32 %v2891, 0.0
        %v2924 = vpack.c.bf16 %v2893, %v2892
        %v2925 = vpack.c.bf16 %v2895, %v2894
        %v2926 = vpack.c.bf16 %v2897, %v2896
        %v2927 = vpack.c.bf16 %v2899, %v2898
        %v2928 = vpack.c.bf16 %v2901, %v2900
        %v2929 = vpack.c.bf16 %v2903, %v2902
        %v2930 = vpack.c.bf16 %v2905, %v2904
        %v2931 = vpack.c.bf16 %v2907, %v2906
        %v2932 = vpack.c.bf16 %v2909, %v2908
        %v2933 = vpack.c.bf16 %v2911, %v2910
        %v2934 = vpack.c.bf16 %v2913, %v2912
        %v2935 = vpack.c.bf16 %v2915, %v2914
        %v2936 = vpack.c.bf16 %v2917, %v2916
        %v2937 = vpack.c.bf16 %v2919, %v2918
        %v2938 = vpack.c.bf16 %v2921, %v2920
        %v2939 = vpack.c.bf16 %v2923, %v2922
        %v2940 = vld [vmem:[#allocation9] sm:$0xf]
        %v2941 = vld [vmem:[#allocation9 + $0x4] sm:$0xf]
        %v2942 = vld [vmem:[#allocation9 + $0x8] sm:$0xf]
        %v2943 = vld [vmem:[#allocation9 + $0xc] sm:$0xf]
        %v2944 = vld [vmem:[#allocation9 + $0x10] sm:$0xf]
        %v2945 = vld [vmem:[#allocation9 + $0x14] sm:$0xf]
        %v2946 = vld [vmem:[#allocation9 + $0x18] sm:$0xf]
        %v2947 = vld [vmem:[#allocation9 + $0x1c] sm:$0xf]
        %v2948 = vld [vmem:[#allocation9 + $0x20] sm:$0xf]
        %v2949 = vld [vmem:[#allocation9 + $0x24] sm:$0xf]
        %v2950 = vld [vmem:[#allocation9 + $0x28] sm:$0xf]
        %v2951 = vld [vmem:[#allocation9 + $0x2c] sm:$0xf]
        %v2952 = vld [vmem:[#allocation9 + $0x30] sm:$0xf]
        %v2953 = vld [vmem:[#allocation9 + $0x34] sm:$0xf]
        %v2954 = vld [vmem:[#allocation9 + $0x38] sm:$0xf]
        %v2955 = vld [vmem:[#allocation9 + $0x3c] sm:$0xf]
        %v2956 = vld [vmem:[%s6] sm:$0x1]
        %v2958 = vlaneseq
        %v2959 = vshrl.u32 %v2958, 7
        %v2960 = vsub.s32 0, %v2959
        %v2961 = vrot.slane %v2956, %v2960
        %v2979 = vunpack.c.l.b16 %v2940
        %v2980 = vunpack.c.l.b16 %v2941
        %v2981 = vunpack.c.l.b16 %v2942
        %v2982 = vunpack.c.l.b16 %v2943
        %v2983 = vunpack.c.l.b16 %v2944
        %v2984 = vunpack.c.l.b16 %v2945
        %v2985 = vunpack.c.l.b16 %v2946
        %v2986 = vunpack.c.l.b16 %v2947
        %v2987 = vunpack.c.l.b16 %v2948
        %v2988 = vunpack.c.l.b16 %v2949
        %v2989 = vunpack.c.l.b16 %v2950
        %v2990 = vunpack.c.l.b16 %v2951
        %v2991 = vunpack.c.l.b16 %v2952
        %v2992 = vunpack.c.l.b16 %v2953
        %v2993 = vunpack.c.l.b16 %v2954
        %v2994 = vunpack.c.l.b16 %v2955
        %v2995 = vpack.c.b16 %v2980, %v2979
        %v2996 = vpack.c.b16 %v2982, %v2981
        %v2997 = vpack.c.b16 %v2984, %v2983
        %v2998 = vpack.c.b16 %v2986, %v2985
        %v2999 = vpack.c.b16 %v2988, %v2987
        %v3000 = vpack.c.b16 %v2990, %v2989
        %v3001 = vpack.c.b16 %v2992, %v2991
        %v3002 = vpack.c.b16 %v2994, %v2993
        %3011 = vmatprep.subr.bf16.mxu0 0
        %3012 = vmatpush1.bf16.msra.mxu0 %v2995
        %3013 = vmatprep.subr.bf16.mxu0 0
        %3014 = vmatpush1.bf16.msra.mxu0 %v2996
        %3015 = vmatprep.subr.bf16.mxu0 0
        %3016 = vmatpush1.bf16.msra.mxu0 %v2997
        %3017 = vmatprep.subr.bf16.mxu0 0
        %3018 = vmatpush1.bf16.msra.mxu0 %v2998
        %3019 = vmatprep.subr.bf16.mxu0 0
        %3020 = vmatpush1.bf16.msra.mxu0 %v2999
        %3021 = vmatprep.subr.bf16.mxu0 0
        %3022 = vmatpush1.bf16.msra.mxu0 %v3000
        %3023 = vmatprep.subr.bf16.mxu0 0
        %3024 = vmatpush1.bf16.msra.mxu0 %v3001
        %3025 = vmatprep.subr.bf16.mxu0 0
        %3026 = vmatpush1.bf16.msra.mxu0 %v3002
        %3027 = vmatprep.subr.bf16.mxu0 0
        %3028 = vmatpush1.bf16.msra.mxu0 0
        %3029 = vmatprep.subr.bf16.mxu0 0
        %3030 = vmatpush1.bf16.msra.mxu0 0
        %3031 = vmatprep.subr.bf16.mxu0 0
        %3032 = vmatpush1.bf16.msra.mxu0 0
        %3033 = vmatprep.subr.bf16.mxu0 0
        %3034 = vmatpush1.bf16.msra.mxu0 0
        %3035 = vmatprep.subr.bf16.mxu0 0
        %3036 = vmatpush1.bf16.msra.mxu0 0
        %3037 = vmatprep.subr.bf16.mxu0 0
        %3038 = vmatpush1.bf16.msra.mxu0 0
        %3039 = vmatprep.subr.bf16.mxu0 0
        %3040 = vmatpush1.bf16.msra.mxu0 0
        %3041 = vmatprep.subr.bf16.mxu0 0
        %3042 = vmatpush1.bf16.msra.mxu0 0
        %3043 = vmatprep.mubr.bf16.mxu0 0
        %3044 = vmatmul.mubr.bf16.gmra.mrb[0].mxu0 %v2924
        %v3045 = vpop.f32.mrb[0].mxu0
        %v3046 = vadd.f32 %v2961, %v3045
        %v3047 = vpop.f32.mrb[0].mxu0
        %v3048 = vpop.f32.mrb[0].mxu0
        %v3049 = vadd.f32 %v2961, %v3048
        %v3050 = vpop.f32.mrb[0].mxu0
        %3051 = vmatprep.mubr.bf16.mxu0 0
        %3052 = vmatmul.mubr.bf16.gmra.mrb[0].mxu0 %v2925
        %v3053 = vpop.f32.mrb[0].mxu0
        %v3054 = vadd.f32 %v2961, %v3053
        %v3055 = vpop.f32.mrb[0].mxu0
        %v3056 = vpop.f32.mrb[0].mxu0
        %v3057 = vadd.f32 %v2961, %v3056
        %v3058 = vpop.f32.mrb[0].mxu0
        %3059 = vmatprep.mubr.bf16.mxu0 0
        %3060 = vmatmul.mubr.bf16.gmra.mrb[0].mxu0 %v2926
        %v3061 = vpop.f32.mrb[0].mxu0
        %v3062 = vadd.f32 %v2961, %v3061
        %v3063 = vpop.f32.mrb[0].mxu0
        %v3064 = vpop.f32.mrb[0].mxu0
        %v3065 = vadd.f32 %v2961, %v3064
        %v3066 = vpop.f32.mrb[0].mxu0
        %3067 = vmatprep.mubr.bf16.mxu0 0
        %3068 = vmatmul.mubr.bf16.gmra.mrb[0].mxu0 %v2927
        %v3069 = vpop.f32.mrb[0].mxu0
        %v3070 = vadd.f32 %v2961, %v3069
        %v3071 = vpop.f32.mrb[0].mxu0
        %v3072 = vpop.f32.mrb[0].mxu0
        %v3073 = vadd.f32 %v2961, %v3072
        %v3074 = vpop.f32.mrb[0].mxu0
        %3075 = vmatprep.mubr.bf16.mxu0 0
        %3076 = vmatmul.mubr.bf16.gmra.mrb[0].mxu0 %v2928
        %v3077 = vpop.f32.mrb[0].mxu0
        %v3078 = vadd.f32 %v2961, %v3077
        %v3079 = vpop.f32.mrb[0].mxu0
        %v3080 = vpop.f32.mrb[0].mxu0
        %v3081 = vadd.f32 %v2961, %v3080
        %v3082 = vpop.f32.mrb[0].mxu0
        %3083 = vmatprep.mubr.bf16.mxu0 0
        %3084 = vmatmul.mubr.bf16.gmra.mrb[0].mxu0 %v2929
        %v3085 = vpop.f32.mrb[0].mxu0
        %v3086 = vadd.f32 %v2961, %v3085
        %v3087 = vpop.f32.mrb[0].mxu0
        %v3088 = vpop.f32.mrb[0].mxu0
        %v3089 = vadd.f32 %v2961, %v3088
        %v3090 = vpop.f32.mrb[0].mxu0
        %3091 = vmatprep.mubr.bf16.mxu0 0
        %3092 = vmatmul.mubr.bf16.gmra.mrb[0].mxu0 %v2930
        %v3093 = vpop.f32.mrb[0].mxu0
        %v3094 = vadd.f32 %v2961, %v3093
        %v3095 = vpop.f32.mrb[0].mxu0
        %v3096 = vpop.f32.mrb[0].mxu0
        %v3097 = vadd.f32 %v2961, %v3096
        %v3098 = vpop.f32.mrb[0].mxu0
        %3099 = vmatprep.mubr.bf16.mxu0 0
        %3100 = vmatmul.mubr.bf16.gmra.mrb[0].mxu0 %v2931
        %v3101 = vpop.f32.mrb[0].mxu0
        %v3102 = vadd.f32 %v2961, %v3101
        %v3103 = vpop.f32.mrb[0].mxu0
        %v3104 = vpop.f32.mrb[0].mxu0
        %v3105 = vadd.f32 %v2961, %v3104
        %v3106 = vpop.f32.mrb[0].mxu0
        %3107 = vmatprep.mubr.bf16.mxu0 0
        %3108 = vmatmul.mubr.bf16.gmra.mrb[0].mxu0 %v2932
        %v3109 = vpop.f32.mrb[0].mxu0
        %v3110 = vadd.f32 %v2961, %v3109
        %v3111 = vpop.f32.mrb[0].mxu0
        %v3112 = vpop.f32.mrb[0].mxu0
        %v3113 = vadd.f32 %v2961, %v3112
        %v3114 = vpop.f32.mrb[0].mxu0
        %3115 = vmatprep.mubr.bf16.mxu0 0
        %3116 = vmatmul.mubr.bf16.gmra.mrb[0].mxu0 %v2933
        %v3117 = vpop.f32.mrb[0].mxu0
        %v3118 = vadd.f32 %v2961, %v3117
        %v3119 = vpop.f32.mrb[0].mxu0
        %v3120 = vpop.f32.mrb[0].mxu0
        %v3121 = vadd.f32 %v2961, %v3120
        %v3122 = vpop.f32.mrb[0].mxu0
        %3123 = vmatprep.mubr.bf16.mxu0 0
        %3124 = vmatmul.mubr.bf16.gmra.mrb[0].mxu0 %v2934
        %v3125 = vpop.f32.mrb[0].mxu0
        %v3126 = vadd.f32 %v2961, %v3125
        %v3127 = vpop.f32.mrb[0].mxu0
        %v3128 = vpop.f32.mrb[0].mxu0
        %v3129 = vadd.f32 %v2961, %v3128
        %v3130 = vpop.f32.mrb[0].mxu0
        %3131 = vmatprep.mubr.bf16.mxu0 0
        %3132 = vmatmul.mubr.bf16.gmra.mrb[0].mxu0 %v2935
        %v3133 = vpop.f32.mrb[0].mxu0
        %v3134 = vadd.f32 %v2961, %v3133
        %v3135 = vpop.f32.mrb[0].mxu0
        %v3136 = vpop.f32.mrb[0].mxu0
        %v3137 = vadd.f32 %v2961, %v3136
        %v3138 = vpop.f32.mrb[0].mxu0
        %3139 = vmatprep.mubr.bf16.mxu0 0
        %3140 = vmatmul.mubr.bf16.gmra.mrb[0].mxu0 %v2936
        %v3141 = vpop.f32.mrb[0].mxu0
        %v3142 = vadd.f32 %v2961, %v3141
        %v3143 = vpop.f32.mrb[0].mxu0
        %v3144 = vpop.f32.mrb[0].mxu0
        %v3145 = vadd.f32 %v2961, %v3144
        %v3146 = vpop.f32.mrb[0].mxu0
        %3147 = vmatprep.mubr.bf16.mxu0 0
        %3148 = vmatmul.mubr.bf16.gmra.mrb[0].mxu0 %v2937
        %v3149 = vpop.f32.mrb[0].mxu0
        %v3150 = vadd.f32 %v2961, %v3149
        %v3151 = vpop.f32.mrb[0].mxu0
        %v3152 = vpop.f32.mrb[0].mxu0
        %v3153 = vadd.f32 %v2961, %v3152
        %v3154 = vpop.f32.mrb[0].mxu0
        %3155 = vmatprep.mubr.bf16.mxu0 0
        %3156 = vmatmul.mubr.bf16.gmra.mrb[0].mxu0 %v2938
        %v3157 = vpop.f32.mrb[0].mxu0
        %v3158 = vadd.f32 %v2961, %v3157
        %v3159 = vpop.f32.mrb[0].mxu0
        %v3160 = vpop.f32.mrb[0].mxu0
        %v3161 = vadd.f32 %v2961, %v3160
        %v3162 = vpop.f32.mrb[0].mxu0
        %3163 = vmatprep.mubr.bf16.mxu0 0
        %3164 = vmatmul.mubr.bf16.gmra.mrb[0].mxu0 %v2939
        %v3165 = vpop.f32.mrb[0].mxu0
        %v3166 = vadd.f32 %v2961, %v3165
        %v3167 = vpop.f32.mrb[0].mxu0
        %v3168 = vpop.f32.mrb[0].mxu0
        %v3169 = vadd.f32 %v2961, %v3168
        %v3170 = vpop.f32.mrb[0].mxu0
        %3171 = vdwg.mxu0
        %v3172 = vunpack.c.l.bf16 %v359
        %v3173 = vunpack.c.h.bf16 %v359
        %v3174 = vunpack.c.l.bf16 %v360
        %v3175 = vunpack.c.h.bf16 %v360
        %v3176 = vunpack.c.l.bf16 %v361
        %v3177 = vunpack.c.h.bf16 %v361
        %v3178 = vunpack.c.l.bf16 %v362
        %v3179 = vunpack.c.h.bf16 %v362
        %v3180 = vunpack.c.l.bf16 %v363
        %v3181 = vunpack.c.h.bf16 %v363
        %v3182 = vunpack.c.l.bf16 %v364
        %v3183 = vunpack.c.h.bf16 %v364
        %v3184 = vunpack.c.l.bf16 %v365
        %v3185 = vunpack.c.h.bf16 %v365
        %v3186 = vunpack.c.l.bf16 %v366
        %v3187 = vunpack.c.h.bf16 %v366
        %v3188 = vunpack.c.l.bf16 %v367
        %v3189 = vunpack.c.h.bf16 %v367
        %v3190 = vunpack.c.l.bf16 %v368
        %v3191 = vunpack.c.h.bf16 %v368
        %v3192 = vunpack.c.l.bf16 %v369
        %v3193 = vunpack.c.h.bf16 %v369
        %v3194 = vunpack.c.l.bf16 %v370
        %v3195 = vunpack.c.h.bf16 %v370
        %v3196 = vunpack.c.l.bf16 %v371
        %v3197 = vunpack.c.h.bf16 %v371
        %v3198 = vunpack.c.l.bf16 %v372
        %v3199 = vunpack.c.h.bf16 %v372
        %v3200 = vunpack.c.l.bf16 %v373
        %v3201 = vunpack.c.h.bf16 %v373
        %v3202 = vunpack.c.l.bf16 %v374
        %v3203 = vunpack.c.h.bf16 %v374
        %v3204 = vadd.f32 %v3046, %v3172
        %v3205 = vadd.f32 %v3049, %v3173
        %v3206 = vadd.f32 %v3054, %v3174
        %v3207 = vadd.f32 %v3057, %v3175
        %v3208 = vadd.f32 %v3062, %v3176
        %v3209 = vadd.f32 %v3065, %v3177
        %v3210 = vadd.f32 %v3070, %v3178
        %v3211 = vadd.f32 %v3073, %v3179
        %v3212 = vadd.f32 %v3078, %v3180
        %v3213 = vadd.f32 %v3081, %v3181
        %v3214 = vadd.f32 %v3086, %v3182
        %v3215 = vadd.f32 %v3089, %v3183
        %v3216 = vadd.f32 %v3094, %v3184
        %v3217 = vadd.f32 %v3097, %v3185
        %v3218 = vadd.f32 %v3102, %v3186
        %v3219 = vadd.f32 %v3105, %v3187
        %v3220 = vadd.f32 %v3110, %v3188
        %v3221 = vadd.f32 %v3113, %v3189
        %v3222 = vadd.f32 %v3118, %v3190
        %v3223 = vadd.f32 %v3121, %v3191
        %v3224 = vadd.f32 %v3126, %v3192
        %v3225 = vadd.f32 %v3129, %v3193
        %v3226 = vadd.f32 %v3134, %v3194
        %v3227 = vadd.f32 %v3137, %v3195
        %v3228 = vadd.f32 %v3142, %v3196
        %v3229 = vadd.f32 %v3145, %v3197
        %v3230 = vadd.f32 %v3150, %v3198
        %v3231 = vadd.f32 %v3153, %v3199
        %v3232 = vadd.f32 %v3158, %v3200
        %v3233 = vadd.f32 %v3161, %v3201
        %v3234 = vadd.f32 %v3166, %v3202
        %v3235 = vadd.f32 %v3169, %v3203
        %v3236 = vmax.f32 %v3204, 0.0
        %v3237 = vmax.f32 %v3205, 0.0
        %v3238 = vmax.f32 %v3206, 0.0
        %v3239 = vmax.f32 %v3207, 0.0
        %v3240 = vmax.f32 %v3208, 0.0
        %v3241 = vmax.f32 %v3209, 0.0
        %v3242 = vmax.f32 %v3210, 0.0
        %v3243 = vmax.f32 %v3211, 0.0
        %v3244 = vmax.f32 %v3212, 0.0
        %v3245 = vmax.f32 %v3213, 0.0
        %v3246 = vmax.f32 %v3214, 0.0
        %v3247 = vmax.f32 %v3215, 0.0
        %v3248 = vmax.f32 %v3216, 0.0
        %v3249 = vmax.f32 %v3217, 0.0
        %v3250 = vmax.f32 %v3218, 0.0
        %v3251 = vmax.f32 %v3219, 0.0
        %v3252 = vmax.f32 %v3220, 0.0
        %v3253 = vmax.f32 %v3221, 0.0
        %v3254 = vmax.f32 %v3222, 0.0
        %v3255 = vmax.f32 %v3223, 0.0
        %v3256 = vmax.f32 %v3224, 0.0
        %v3257 = vmax.f32 %v3225, 0.0
        %v3258 = vmax.f32 %v3226, 0.0
        %v3259 = vmax.f32 %v3227, 0.0
        %v3260 = vmax.f32 %v3228, 0.0
        %v3261 = vmax.f32 %v3229, 0.0
        %v3262 = vmax.f32 %v3230, 0.0
        %v3263 = vmax.f32 %v3231, 0.0
        %v3264 = vmax.f32 %v3232, 0.0
        %v3265 = vmax.f32 %v3233, 0.0
        %v3266 = vmax.f32 %v3234, 0.0
        %v3267 = vmax.f32 %v3235, 0.0
        %v3268 = vpack.c.bf16 %v3237, %v3236
        %v3269 = vpack.c.bf16 %v3239, %v3238
        %v3270 = vpack.c.bf16 %v3241, %v3240
        %v3271 = vpack.c.bf16 %v3243, %v3242
        %v3272 = vpack.c.bf16 %v3245, %v3244
        %v3273 = vpack.c.bf16 %v3247, %v3246
        %v3274 = vpack.c.bf16 %v3249, %v3248
        %v3275 = vpack.c.bf16 %v3251, %v3250
        %v3276 = vpack.c.bf16 %v3253, %v3252
        %v3277 = vpack.c.bf16 %v3255, %v3254
        %v3278 = vpack.c.bf16 %v3257, %v3256
        %v3279 = vpack.c.bf16 %v3259, %v3258
        %v3280 = vpack.c.bf16 %v3261, %v3260
        %v3281 = vpack.c.bf16 %v3263, %v3262
        %v3282 = vpack.c.bf16 %v3265, %v3264
        %v3283 = vpack.c.bf16 %v3267, %v3266
        %v3300 = vunpack.c.l.b16 %v3268
        %v3301 = vunpack.c.h.b16 %v3268
        %v3302 = vunpack.c.l.b16 %v3269
        %v3303 = vunpack.c.h.b16 %v3269
        %v3304 = vunpack.c.l.b16 %v3270
        %v3305 = vunpack.c.h.b16 %v3270
        %v3306 = vunpack.c.l.b16 %v3271
        %v3307 = vunpack.c.h.b16 %v3271
        %v3308 = vunpack.c.l.b16 %v3272
        %v3309 = vunpack.c.h.b16 %v3272
        %v3310 = vunpack.c.l.b16 %v3273
        %v3311 = vunpack.c.h.b16 %v3273
        %v3312 = vunpack.c.l.b16 %v3274
        %v3313 = vunpack.c.h.b16 %v3274
        %v3314 = vunpack.c.l.b16 %v3275
        %v3315 = vunpack.c.h.b16 %v3275
        %v3316 = vunpack.c.l.b16 %v3276
        %v3317 = vunpack.c.h.b16 %v3276
        %v3318 = vunpack.c.l.b16 %v3277
        %v3319 = vunpack.c.h.b16 %v3277
        %v3320 = vunpack.c.l.b16 %v3278
        %v3321 = vunpack.c.h.b16 %v3278
        %v3322 = vunpack.c.l.b16 %v3279
        %v3323 = vunpack.c.h.b16 %v3279
        %v3324 = vunpack.c.l.b16 %v3280
        %v3325 = vunpack.c.h.b16 %v3280
        %v3326 = vunpack.c.l.b16 %v3281
        %v3327 = vunpack.c.h.b16 %v3281
        %v3328 = vunpack.c.l.b16 %v3282
        %v3329 = vunpack.c.h.b16 %v3282
        %v3330 = vunpack.c.l.b16 %v3283
        %v3331 = vunpack.c.h.b16 %v3283
        %v3332 = vpack.c.b16 %v3300, %v3300
        %v3333 = vpack.c.b16 %v3301, %v3301
        %v3334 = vpack.c.b16 %v3302, %v3302
        %v3335 = vpack.c.b16 %v3303, %v3303
        %v3336 = vpack.c.b16 %v3304, %v3304
        %v3337 = vpack.c.b16 %v3305, %v3305
        %v3338 = vpack.c.b16 %v3306, %v3306
        %v3339 = vpack.c.b16 %v3307, %v3307
        %v3340 = vpack.c.b16 %v3308, %v3308
        %v3341 = vpack.c.b16 %v3309, %v3309
        %v3342 = vpack.c.b16 %v3310, %v3310
        %v3343 = vpack.c.b16 %v3311, %v3311
        %v3344 = vpack.c.b16 %v3312, %v3312
        %v3345 = vpack.c.b16 %v3313, %v3313
        %v3346 = vpack.c.b16 %v3314, %v3314
        %v3347 = vpack.c.b16 %v3315, %v3315
        %v3348 = vpack.c.b16 %v3316, %v3316
        %v3349 = vpack.c.b16 %v3317, %v3317
        %v3350 = vpack.c.b16 %v3318, %v3318
        %v3351 = vpack.c.b16 %v3319, %v3319
        %v3352 = vpack.c.b16 %v3320, %v3320
        %v3353 = vpack.c.b16 %v3321, %v3321
        %v3354 = vpack.c.b16 %v3322, %v3322
        %v3355 = vpack.c.b16 %v3323, %v3323
        %v3356 = vpack.c.b16 %v3324, %v3324
        %v3357 = vpack.c.b16 %v3325, %v3325
        %v3358 = vpack.c.b16 %v3326, %v3326
        %v3359 = vpack.c.b16 %v3327, %v3327
        %v3360 = vpack.c.b16 %v3328, %v3328
        %v3361 = vpack.c.b16 %v3329, %v3329
        %v3362 = vpack.c.b16 %v3330, %v3330
        %v3363 = vpack.c.b16 %v3331, %v3331
        %vm3396 = vcmask 27648
        %3397 = vst.msk [vmem:[%s300] sm:$0xf] %vm3396, %v3332
        %3398 = vst.msk [vmem:[%s300 + $0x4] sm:$0xf] %vm3396, %v3333
        %3399 = vst.msk [vmem:[%s300 + $0x8] sm:$0xf] %vm3396, %v3334
        %3400 = vst.msk [vmem:[%s300 + $0xc] sm:$0xf] %vm3396, %v3335
        %3401 = vst.msk [vmem:[%s300 + $0x10] sm:$0xf] %vm3396, %v3336
        %3402 = vst.msk [vmem:[%s300 + $0x14] sm:$0xf] %vm3396, %v3337
        %3403 = vst.msk [vmem:[%s300 + $0x18] sm:$0xf] %vm3396, %v3338
        %3404 = vst.msk [vmem:[%s300 + $0x1c] sm:$0xf] %vm3396, %v3339
        %3405 = vst.msk [vmem:[%s300 + $0x20] sm:$0xf] %vm3396, %v3340
        %3406 = vst.msk [vmem:[%s300 + $0x24] sm:$0xf] %vm3396, %v3341
        %3407 = vst.msk [vmem:[%s300 + $0x28] sm:$0xf] %vm3396, %v3342
        %3408 = vst.msk [vmem:[%s300 + $0x2c] sm:$0xf] %vm3396, %v3343
        %3409 = vst.msk [vmem:[%s300 + $0x30] sm:$0xf] %vm3396, %v3344
        %3410 = vst.msk [vmem:[%s300 + $0x34] sm:$0xf] %vm3396, %v3345
        %3411 = vst.msk [vmem:[%s300 + $0x38] sm:$0xf] %vm3396, %v3346
        %3412 = vst.msk [vmem:[%s300 + $0x3c] sm:$0xf] %vm3396, %v3347
        %3413 = vst.msk [vmem:[%s300 + $0x40] sm:$0xf] %vm3396, %v3348
        %3414 = vst.msk [vmem:[%s300 + $0x44] sm:$0xf] %vm3396, %v3349
        %3415 = vst.msk [vmem:[%s300 + $0x48] sm:$0xf] %vm3396, %v3350
        %3416 = vst.msk [vmem:[%s300 + $0x4c] sm:$0xf] %vm3396, %v3351
        %3417 = vst.msk [vmem:[%s300 + $0x50] sm:$0xf] %vm3396, %v3352
        %3418 = vst.msk [vmem:[%s300 + $0x54] sm:$0xf] %vm3396, %v3353
        %3419 = vst.msk [vmem:[%s300 + $0x58] sm:$0xf] %vm3396, %v3354
        %3420 = vst.msk [vmem:[%s300 + $0x5c] sm:$0xf] %vm3396, %v3355
        %3421 = vst.msk [vmem:[%s300 + $0x60] sm:$0xf] %vm3396, %v3356
        %3422 = vst.msk [vmem:[%s300 + $0x64] sm:$0xf] %vm3396, %v3357
        %3423 = vst.msk [vmem:[%s300 + $0x68] sm:$0xf] %vm3396, %v3358
        %3424 = vst.msk [vmem:[%s300 + $0x6c] sm:$0xf] %vm3396, %v3359
        %3425 = vst.msk [vmem:[%s300 + $0x70] sm:$0xf] %vm3396, %v3360
        %3426 = vst.msk [vmem:[%s300 + $0x74] sm:$0xf] %vm3396, %v3361
        %3427 = vst.msk [vmem:[%s300 + $0x78] sm:$0xf] %vm3396, %v3362
        %3428 = vst.msk [vmem:[%s300 + $0x7c] sm:$0xf] %vm3396, %v3363
        %s3429 = smul.u32 16, %s25
        %p3430 = scmp.lt.s32.totalorder %s24, 1
        %s3431 = scalar_select %p3430, %s24, 1
        %p3432 = scmp.lt.s32.totalorder %s3429, 15
        %s3433 = scalar_select %p3432, %s3429, 15
        %s3434 = smul.addr %s3433, 2
        %s3435 = smul.addr %s3431, 32
        %s3436 = sadd.s32 %s3434, %s3435
        %s3437 = smul.addr %s3436, 4
        %s3438 = scalar_lea.vmem %s7, %s3437
        // Predicated region
        $region77: #{tpu_custom_call.1} parent=43 // pred_check
          %p3439 = pneg %p178
        $region78: #{tpu_custom_call.1} parent=43 // pred_check_branch
          %3441 = sbr.rel (%p3439) target = $region80
        $region79: #{tpu_custom_call.1} parent=43 // pred_region
          %s3442 = smul.u32 16, %s25
        $region80: #{tpu_custom_call.1} parent=43 // pred_fallthru
          _
      $region44: #{tpu_custom_call.1} parent=5 // pred_fallthru
        _
      %p3443 = scmp.le.s32.totalorder 2, %s15
      // Predicated region
      $region81: #{tpu_custom_call.1} parent=5 // pred_check
        %p3444 = pneg %p3443
      $region82: #{tpu_custom_call.1} parent=5 // pred_check_branch
        %3446 = sbr.rel (%p3444) target = $region84
      $region83: #{tpu_custom_call.1} parent=5 // pred_region
        %s3447 = ssub.s32 %s15, 2
        // Predicated region
        $region85: #{tpu_custom_call.1} parent=83 // pred_check
          %p3448 = pneg %p184
        $region86: #{tpu_custom_call.1} parent=83 // pred_check_branch
          %3450 = sbr.rel (%p3448) target = $region88
        $region87: #{tpu_custom_call.1} parent=83 // pred_region
          %s3451 = smul.u32 16, %s27
          %p3452 = scmp.lt.s32.totalorder %s26, 1
          %s3453 = scalar_select %p3452, %s26, 1
          %p3454 = scmp.lt.s32.totalorder %s3451, 15
          %s3455 = scalar_select %p3454, %s3451, 15
          %s3456 = smul.addr %s3455, 2
          %s3457 = smul.addr %s3453, 32
          %s3458 = sadd.s32 %s3456, %s3457
          %s3459 = smul.addr %s3458, 4
          %s3460 = scalar_lea.vmem %s7, %s3459
        $region88: #{tpu_custom_call.1} parent=83 // pred_fallthru
          _
      $region84: #{tpu_custom_call.1} parent=5 // pred_fallthru
        _
    $region6: #{tpu_custom_call.1} parent=1 // loop_footer
      %s19 = sadd.s32 1, %s15
    $region7: #{tpu_custom_call.1} parent=1 // loop_footer_branch
      %14 = sbr.rel target = $region3
    $region8: #{tpu_custom_call.1} parent=1 // loop_exit
      _
    %3461 = vsyncpa [#allocation6], 1
    %s3462 = scalar_lea.sflag [#allocation6], 1
    %3463 = vsyncpa %s3462, 1
    %3464 = vsyncpa [#allocation8], 1
  %3465 = vsyncmov [#allocation3]
  %s3466 = vpop.sfrf %3465
  %p3467 = scmp.eq.s32.totalorder %s3466, 0
  %p3468 = pneg %p3467
  %3470 = shalt.err (%p3468)
  %s3471 = scalar_lea.sflag [#allocation3], 1
  %3472 = vsyncmov %s3471
  %s3473 = vpop.sfrf %3472
  %p3474 = scmp.eq.s32.totalorder %s3473, 0
  %p3475 = pneg %p3474
  %3477 = shalt.err (%p3475)

</llo_original>
